<compile_context>
chip_gen: v7x
topology: tpu7x:2x2x1
jax: 0.10.0
libtpu: 0.0.40
codegen_flags: <defaults>
</compile_context>

<pallas_src>
import numpy as np
import jax
import jax.numpy as jnp
from jax import lax
from jax.experimental import pallas as pl
from jax.experimental.pallas import tpu as pltpu


# ----------------------------- static geometry ------------------------------ #
# Per layer: padded width Wp = W + 2, padded rows Rp = (H+2)*Wp,
# conv-output rows Rout = H*Wp - 2 (centers hp in [1, H], plus ignored borders).
#   layer1: H=W=16  Wp=18  Rp=324  Rout=286   Cout=64   next padded rows=100
#   layer2: H=W=8   Wp=10  Rp=100  Rout=78    Cout=128  next padded rows=36
#   layer3: H=W=4   Wp=6   Rp=36   Rout=22    Cout=256  next compact rows=4


def make_pool_select(H, W, pad_next):
    """(4, Rn, Rout) one-hot matrices: pick the 4 taps of every 2x2 pool window
    from the conv-output rows and scatter the pooled map into the next layer's
    (zero-padded) row layout.  All-zero rows produce the zero padding border."""
    assert H % 2 == 0 and W % 2 == 0
    Wp = W + 2
    Rout = H * Wp - 2
    H2, W2 = H // 2, W // 2
    if pad_next:
        Wpn, Rn = W2 + 2, (H2 + 2) * (W2 + 2)
    else:
        Wpn, Rn = W2, H2 * W2
    S = np.zeros((4, Rn, Rout), np.float32)
    for dy in range(2):
        for dx in range(2):
            q = 2 * dy + dx
            for i in range(H2):
                for j in range(W2):
                    src = (2 * i + dy) * Wp + (2 * j + dx)
                    dst = (i + 1) * Wpn + (j + 1) if pad_next else i * W2 + j
                    S[q, dst, src] = 1.0
    return S


# ------------------------------- Pallas kernel ------------------------------ #

def fused_cnn_kernel(x_ref, w1_ref, b1_ref, s1_ref, w2_ref, b2_ref, s2_ref,
                     w3_ref, b3_ref, s3_ref, wfc_ref, bfc_ref, o_ref,
                     a2_ref, a3_ref):
    def conv_relu_pool(tap, w_ref, b_ref, s_ref):
        # conv3x3: 9 shifted-slice matmuls, f32 accumulation
        acc = None
        for t in range(9):                                    # static unroll
            d = jnp.dot(tap(t).astype(jnp.bfloat16), w_ref[t],
                        preferred_element_type=jnp.float32)
            acc = d if acc is None else acc + d
        y = jnp.maximum(acc + b_ref[...], 0.0).astype(jnp.bfloat16)
        # 2x2 max-pool (+ re-pad for next layer) via 4 one-hot selection matmuls
        p = jnp.dot(s_ref[0], y, preferred_element_type=jnp.float32)
        for q in range(1, 4):
            p = jnp.maximum(p, jnp.dot(s_ref[q], y,
                                       preferred_element_type=jnp.float32))
        return p                                              # f32, next layout

    # layer 1: 16x16x3 -> 8x8x64, stored zero-padded as 10*10 = 100 rows
    a2_ref[...] = conv_relu_pool(
        lambda t: x_ref[pl.ds((t // 3) * 18 + (t % 3), 286), :],
        w1_ref, b1_ref, s1_ref)

    # layer 2: 8x8x64 -> 4x4x128, stored zero-padded as 6*6 = 36 rows
    a3_ref[...] = conv_relu_pool(
        lambda t: a2_ref[pl.ds((t // 3) * 10 + (t % 3), 78), :],
        w2_ref, b2_ref, s2_ref)

    # layer 3: 4x4x128 -> 2x2x256, compact 4 rows
    p3 = conv_relu_pool(
        lambda t: a3_ref[pl.ds((t // 3) * 6 + (t % 3), 22), :],
        w3_ref, b3_ref, s3_ref)

    # head: global average pool + Linear(256 -> 1) on the VPU (skip MXU for N=1)
    pooled = jnp.sum(p3, axis=0, keepdims=True) * 0.25            # (1, 256)
    out = jnp.sum(pooled * wfc_ref[...], axis=-1, keepdims=True) + bfc_ref[...]
    o_ref[...] = out                                              # (1, 1)


# ----------------------------- JAX glue / wrappers -------------------------- #

def prepare_params(params):
    """One-time weight layout transforms (kept out of the jitted forward)."""
    def conv_w(w):  # (Cout, Cin, 3, 3) -> (9, Cin, Cout), bf16 for the MXU
        co, ci = w.shape[0], w.shape[1]
        return jnp.transpose(w, (2, 3, 1, 0)).reshape(9, ci, co).astype(jnp.bfloat16)

    return dict(
        w1=conv_w(params["w1"]), b1=params["b1"].reshape(1, -1).astype(jnp.float32),
        w2=conv_w(params["w2"]), b2=params["b2"].reshape(1, -1).astype(jnp.float32),
        w3=conv_w(params["w3"]), b3=params["b3"].reshape(1, -1).astype(jnp.float32),
        s1=jnp.asarray(make_pool_select(16, 16, True), jnp.bfloat16),
        s2=jnp.asarray(make_pool_select(8, 8, True), jnp.bfloat16),
        s3=jnp.asarray(make_pool_select(4, 4, False), jnp.bfloat16),
        wfc=params["w_fc"].astype(jnp.float32),                   # (1, 256)
        bfc=params["b_fc"].reshape(1, 1).astype(jnp.float32),     # (1, 1)
    )


def _full_spec(a):
    zeros = (0,) * a.ndim
    def index_map(b):
        return zeros
    return pl.BlockSpec(a.shape, index_map)


@jax.jit
def model_forward(x_nchw, prep):
    B = x_nchw.shape[0]
    x = jnp.transpose(x_nchw, (0, 2, 3, 1))                     # NCHW -> NHWC
    x = jnp.pad(x, ((0, 0), (1, 1), (1, 1), (0, 0)))            # zero pad H, W
    x = x.reshape(B, 18 * 18, 3).astype(jnp.float32)            # (B, 324, 3)

    operands = (x, prep["w1"], prep["b1"], prep["s1"],
                prep["w2"], prep["b2"], prep["s2"],
                prep["w3"], prep["b3"], prep["s3"],
                prep["wfc"], prep["bfc"])

    in_specs = [pl.BlockSpec((None, 324, 3), lambda b: (b, 0, 0))]
    in_specs += [_full_spec(a) for a in operands[1:]]

    out = pl.pallas_call(
        fused_cnn_kernel,
        out_shape=jax.ShapeDtypeStruct((B, 1, 1), jnp.float32),
        grid_spec=pltpu.PrefetchScalarGridSpec(
            num_scalar_prefetch=0,
            grid=(B,),
            in_specs=in_specs,
            out_specs=pl.BlockSpec((None, 1, 1), lambda b: (b, 0, 0)),
            scratch_shapes=[pltpu.VMEM((100, 64), jnp.float32),   # layer-2 input
                            pltpu.VMEM((36, 128), jnp.float32)],  # layer-3 input
        ),
        compiler_params=pltpu.CompilerParams(
            dimension_semantics=("parallel",)),
    )(*operands)
    return out.reshape(B, 1)


# ----------------------------- pure-JAX reference --------------------------- #

def reference_forward(x_nchw, params):
    x = x_nchw
    for w, b in ((params["w1"], params["b1"]),
                 (params["w2"], params["b2"]),
                 (params["w3"], params["b3"])):
        x = lax.conv_general_dilated(
            x, w, window_strides=(1, 1), padding=((1, 1), (1, 1)),
            dimension_numbers=("NCHW", "OIHW", "NCHW"))
        x = jnp.maximum(x + b[None, :, None, None], 0.0)
        x = lax.reduce_window(x, -jnp.inf, lax.max,
                              (1, 1, 2, 2), (1, 1, 2, 2), "VALID")
    pooled = jnp.mean(x, axis=(2, 3))                           # (B, 256)
    return pooled @ params["w_fc"].T + params["b_fc"]


# ----------------------------------- main ----------------------------------- #

def init_params(key):
    ks = jax.random.split(key, 8)

    def conv_init(kw, kb, cout, cin):
        scale = 1.0 / np.sqrt(cin * 9)
        return (jax.random.normal(kw, (cout, cin, 3, 3), jnp.float32) * scale,
                jax.random.normal(kb, (cout,), jnp.float32) * scale)

    w1, b1 = conv_init(ks[0], ks[1], 64, 3)
    w2, b2 = conv_init(ks[2], ks[3], 128, 64)
    w3, b3 = conv_init(ks[4], ks[5], 256, 128)
    w_fc = jax.random.normal(ks[6], (1, 256), jnp.float32) / np.sqrt(256)
    b_fc = jax.random.normal(ks[7], (1,), jnp.float32) * 0.01
    return dict(w1=w1, b1=b1, w2=w2, b2=b2, w3=w3, b3=b3, w_fc=w_fc, b_fc=b_fc)


if __name__ == "__main__":
    key = jax.random.PRNGKey(0)
    k_x, k_p = jax.random.split(key)
    params = init_params(k_p)
    x = jax.random.normal(k_x, (2, 3, 16, 16), jnp.float32)     # NCHW, like PyTorch

    prep = prepare_params(params)                               # one-time transforms
    out = jax.block_until_ready(model_forward(x, prep))
    assert out.shape == (2, 1), out.shape

    ref = jax.block_until_ready(reference_forward(x, params))
    np.testing.assert_allclose(np.asarray(out), np.asarray(ref),
                               rtol=5e-2, atol=5e-2)
    print("KERNEL_OK")
</pallas_src>

<mosaic_0001>
module attributes {stable_mosaic.version = 11 : i64} {
  func.func @fused_cnn_kernel(%arg0: i32, %arg1: memref<1x324x3xf32, #tpu.memory_space<vmem>>, %arg2: memref<9x3x64xbf16, #tpu.memory_space<vmem>>, %arg3: memref<1x64xf32, #tpu.memory_space<vmem>>, %arg4: memref<4x100x286xbf16, #tpu.memory_space<vmem>>, %arg5: memref<9x64x128xbf16, #tpu.memory_space<vmem>>, %arg6: memref<1x128xf32, #tpu.memory_space<vmem>>, %arg7: memref<4x36x78xbf16, #tpu.memory_space<vmem>>, %arg8: memref<9x128x256xbf16, #tpu.memory_space<vmem>>, %arg9: memref<1x256xf32, #tpu.memory_space<vmem>>, %arg10: memref<4x4x22xbf16, #tpu.memory_space<vmem>>, %arg11: memref<1x256xf32, #tpu.memory_space<vmem>>, %arg12: memref<1x1xf32, #tpu.memory_space<vmem>>, %arg13: memref<1x1x1xf32, #tpu.memory_space<vmem>>, %arg14: memref<100x64xf32, #tpu.memory_space<vmem>>, %arg15: memref<36x128xf32, #tpu.memory_space<vmem>>) attributes {dimension_semantics = [#tpu.dimension_semantics<parallel>], iteration_bounds = array<i64: 2>, scalar_prefetch = 0 : i64, scratch_operands = 2 : i64, tpu.core_type = #tpu.core_type<tc>, window_params = [{transform_indices = @transform_0, window_bounds = array<i64: 1, 324, 3>}, {pipeline_mode = #tpu.pipeline_mode<synchronous>, transform_indices = @transform_1, window_bounds = array<i64: 9, 3, 64>}, {pipeline_mode = #tpu.pipeline_mode<synchronous>, transform_indices = @transform_2, window_bounds = array<i64: 1, 64>}, {pipeline_mode = #tpu.pipeline_mode<synchronous>, transform_indices = @transform_3, window_bounds = array<i64: 4, 100, 286>}, {pipeline_mode = #tpu.pipeline_mode<synchronous>, transform_indices = @transform_4, window_bounds = array<i64: 9, 64, 128>}, {pipeline_mode = #tpu.pipeline_mode<synchronous>, transform_indices = @transform_5, window_bounds = array<i64: 1, 128>}, {pipeline_mode = #tpu.pipeline_mode<synchronous>, transform_indices = @transform_6, window_bounds = array<i64: 4, 36, 78>}, {pipeline_mode = #tpu.pipeline_mode<synchronous>, transform_indices = @transform_7, window_bounds = array<i64: 9, 128, 256>}, {pipeline_mode = #tpu.pipeline_mode<synchronous>, transform_indices = @transform_8, window_bounds = array<i64: 1, 256>}, {pipeline_mode = #tpu.pipeline_mode<synchronous>, transform_indices = @transform_9, window_bounds = array<i64: 4, 4, 22>}, {pipeline_mode = #tpu.pipeline_mode<synchronous>, transform_indices = @transform_10, window_bounds = array<i64: 1, 256>}, {pipeline_mode = #tpu.pipeline_mode<synchronous>, transform_indices = @transform_11, window_bounds = array<i64: 1, 1>}, {transform_indices = @transform_12, window_bounds = array<i64: 1, 1, 1>}]} {
    %c0 = arith.constant 0 : index
    %c0_0 = arith.constant 0 : index
    %c0_1 = arith.constant 0 : index
    %0 = vector.load %arg1[%c0, %c0_0, %c0_1] : memref<1x324x3xf32, #tpu.memory_space<vmem>>, vector<1x286x3xf32>
    %1 = vector.shape_cast %0 : vector<1x286x3xf32> to vector<286x3xf32>
    %2 = arith.truncf %1 : vector<286x3xf32> to vector<286x3xbf16>
    %c0_2 = arith.constant 0 : index
    %c0_3 = arith.constant 0 : index
    %c0_4 = arith.constant 0 : index
    %3 = vector.load %arg2[%c0_2, %c0_3, %c0_4] : memref<9x3x64xbf16, #tpu.memory_space<vmem>>, vector<1x3x64xbf16>
    %4 = vector.shape_cast %3 : vector<1x3x64xbf16> to vector<3x64xbf16>
    %cst = arith.constant dense<0.000000e+00> : vector<286x64xf32>
    %5 = tpu.matmul %2, %4, %cst {dimension_numbers = #tpu.dot_dimension_numbers<[1], [0], [0], [1], [0, 0, 1, 1], [], []>} : vector<286x3xbf16>, vector<3x64xbf16>, vector<286x64xf32> -> vector<286x64xf32>
    %c0_5 = arith.constant 0 : index
    %c1 = arith.constant 1 : index
    %c0_6 = arith.constant 0 : index
    %6 = vector.load %arg1[%c0_5, %c1, %c0_6] : memref<1x324x3xf32, #tpu.memory_space<vmem>>, vector<1x286x3xf32>
    %7 = vector.shape_cast %6 : vector<1x286x3xf32> to vector<286x3xf32>
    %8 = arith.truncf %7 : vector<286x3xf32> to vector<286x3xbf16>
    %c1_7 = arith.constant 1 : index
    %c0_8 = arith.constant 0 : index
    %c0_9 = arith.constant 0 : index
    %9 = vector.load %arg2[%c1_7, %c0_8, %c0_9] : memref<9x3x64xbf16, #tpu.memory_space<vmem>>, vector<1x3x64xbf16>
    %10 = vector.shape_cast %9 : vector<1x3x64xbf16> to vector<3x64xbf16>
    %cst_10 = arith.constant dense<0.000000e+00> : vector<286x64xf32>
    %11 = tpu.matmul %8, %10, %cst_10 {dimension_numbers = #tpu.dot_dimension_numbers<[1], [0], [0], [1], [0, 0, 1, 1], [], []>} : vector<286x3xbf16>, vector<3x64xbf16>, vector<286x64xf32> -> vector<286x64xf32>
    %12 = arith.addf %5, %11 : vector<286x64xf32>
    %c0_11 = arith.constant 0 : index
    %c2 = arith.constant 2 : index
    %c0_12 = arith.constant 0 : index
    %13 = vector.load %arg1[%c0_11, %c2, %c0_12] : memref<1x324x3xf32, #tpu.memory_space<vmem>>, vector<1x286x3xf32>
    %14 = vector.shape_cast %13 : vector<1x286x3xf32> to vector<286x3xf32>
    %15 = arith.truncf %14 : vector<286x3xf32> to vector<286x3xbf16>
    %c2_13 = arith.constant 2 : index
    %c0_14 = arith.constant 0 : index
    %c0_15 = arith.constant 0 : index
    %16 = vector.load %arg2[%c2_13, %c0_14, %c0_15] : memref<9x3x64xbf16, #tpu.memory_space<vmem>>, vector<1x3x64xbf16>
    %17 = vector.shape_cast %16 : vector<1x3x64xbf16> to vector<3x64xbf16>
    %cst_16 = arith.constant dense<0.000000e+00> : vector<286x64xf32>
    %18 = tpu.matmul %15, %17, %cst_16 {dimension_numbers = #tpu.dot_dimension_numbers<[1], [0], [0], [1], [0, 0, 1, 1], [], []>} : vector<286x3xbf16>, vector<3x64xbf16>, vector<286x64xf32> -> vector<286x64xf32>
    %19 = arith.addf %12, %18 : vector<286x64xf32>
    %c0_17 = arith.constant 0 : index
    %c18 = arith.constant 18 : index
    %c0_18 = arith.constant 0 : index
    %20 = vector.load %arg1[%c0_17, %c18, %c0_18] : memref<1x324x3xf32, #tpu.memory_space<vmem>>, vector<1x286x3xf32>
    %21 = vector.shape_cast %20 : vector<1x286x3xf32> to vector<286x3xf32>
    %22 = arith.truncf %21 : vector<286x3xf32> to vector<286x3xbf16>
    %c3 = arith.constant 3 : index
    %c0_19 = arith.constant 0 : index
    %c0_20 = arith.constant 0 : index
    %23 = vector.load %arg2[%c3, %c0_19, %c0_20] : memref<9x3x64xbf16, #tpu.memory_space<vmem>>, vector<1x3x64xbf16>
    %24 = vector.shape_cast %23 : vector<1x3x64xbf16> to vector<3x64xbf16>
    %cst_21 = arith.constant dense<0.000000e+00> : vector<286x64xf32>
    %25 = tpu.matmul %22, %24, %cst_21 {dimension_numbers = #tpu.dot_dimension_numbers<[1], [0], [0], [1], [0, 0, 1, 1], [], []>} : vector<286x3xbf16>, vector<3x64xbf16>, vector<286x64xf32> -> vector<286x64xf32>
    %26 = arith.addf %19, %25 : vector<286x64xf32>
    %c0_22 = arith.constant 0 : index
    %c19 = arith.constant 19 : index
    %c0_23 = arith.constant 0 : index
    %27 = vector.load %arg1[%c0_22, %c19, %c0_23] : memref<1x324x3xf32, #tpu.memory_space<vmem>>, vector<1x286x3xf32>
    %28 = vector.shape_cast %27 : vector<1x286x3xf32> to vector<286x3xf32>
    %29 = arith.truncf %28 : vector<286x3xf32> to vector<286x3xbf16>
    %c4 = arith.constant 4 : index
    %c0_24 = arith.constant 0 : index
    %c0_25 = arith.constant 0 : index
    %30 = vector.load %arg2[%c4, %c0_24, %c0_25] : memref<9x3x64xbf16, #tpu.memory_space<vmem>>, vector<1x3x64xbf16>
    %31 = vector.shape_cast %30 : vector<1x3x64xbf16> to vector<3x64xbf16>
    %cst_26 = arith.constant dense<0.000000e+00> : vector<286x64xf32>
    %32 = tpu.matmul %29, %31, %cst_26 {dimension_numbers = #tpu.dot_dimension_numbers<[1], [0], [0], [1], [0, 0, 1, 1], [], []>} : vector<286x3xbf16>, vector<3x64xbf16>, vector<286x64xf32> -> vector<286x64xf32>
    %33 = arith.addf %26, %32 : vector<286x64xf32>
    %c0_27 = arith.constant 0 : index
    %c20 = arith.constant 20 : index
    %c0_28 = arith.constant 0 : index
    %34 = vector.load %arg1[%c0_27, %c20, %c0_28] : memref<1x324x3xf32, #tpu.memory_space<vmem>>, vector<1x286x3xf32>
    %35 = vector.shape_cast %34 : vector<1x286x3xf32> to vector<286x3xf32>
    %36 = arith.truncf %35 : vector<286x3xf32> to vector<286x3xbf16>
    %c5 = arith.constant 5 : index
    %c0_29 = arith.constant 0 : index
    %c0_30 = arith.constant 0 : index
    %37 = vector.load %arg2[%c5, %c0_29, %c0_30] : memref<9x3x64xbf16, #tpu.memory_space<vmem>>, vector<1x3x64xbf16>
    %38 = vector.shape_cast %37 : vector<1x3x64xbf16> to vector<3x64xbf16>
    %cst_31 = arith.constant dense<0.000000e+00> : vector<286x64xf32>
    %39 = tpu.matmul %36, %38, %cst_31 {dimension_numbers = #tpu.dot_dimension_numbers<[1], [0], [0], [1], [0, 0, 1, 1], [], []>} : vector<286x3xbf16>, vector<3x64xbf16>, vector<286x64xf32> -> vector<286x64xf32>
    %40 = arith.addf %33, %39 : vector<286x64xf32>
    %c0_32 = arith.constant 0 : index
    %c36 = arith.constant 36 : index
    %c0_33 = arith.constant 0 : index
    %41 = vector.load %arg1[%c0_32, %c36, %c0_33] : memref<1x324x3xf32, #tpu.memory_space<vmem>>, vector<1x286x3xf32>
    %42 = vector.shape_cast %41 : vector<1x286x3xf32> to vector<286x3xf32>
    %43 = arith.truncf %42 : vector<286x3xf32> to vector<286x3xbf16>
    %c6 = arith.constant 6 : index
    %c0_34 = arith.constant 0 : index
    %c0_35 = arith.constant 0 : index
    %44 = vector.load %arg2[%c6, %c0_34, %c0_35] : memref<9x3x64xbf16, #tpu.memory_space<vmem>>, vector<1x3x64xbf16>
    %45 = vector.shape_cast %44 : vector<1x3x64xbf16> to vector<3x64xbf16>
    %cst_36 = arith.constant dense<0.000000e+00> : vector<286x64xf32>
    %46 = tpu.matmul %43, %45, %cst_36 {dimension_numbers = #tpu.dot_dimension_numbers<[1], [0], [0], [1], [0, 0, 1, 1], [], []>} : vector<286x3xbf16>, vector<3x64xbf16>, vector<286x64xf32> -> vector<286x64xf32>
    %47 = arith.addf %40, %46 : vector<286x64xf32>
    %c0_37 = arith.constant 0 : index
    %c37 = arith.constant 37 : index
    %c0_38 = arith.constant 0 : index
    %48 = vector.load %arg1[%c0_37, %c37, %c0_38] : memref<1x324x3xf32, #tpu.memory_space<vmem>>, vector<1x286x3xf32>
    %49 = vector.shape_cast %48 : vector<1x286x3xf32> to vector<286x3xf32>
    %50 = arith.truncf %49 : vector<286x3xf32> to vector<286x3xbf16>
    %c7 = arith.constant 7 : index
    %c0_39 = arith.constant 0 : index
    %c0_40 = arith.constant 0 : index
    %51 = vector.load %arg2[%c7, %c0_39, %c0_40] : memref<9x3x64xbf16, #tpu.memory_space<vmem>>, vector<1x3x64xbf16>
    %52 = vector.shape_cast %51 : vector<1x3x64xbf16> to vector<3x64xbf16>
    %cst_41 = arith.constant dense<0.000000e+00> : vector<286x64xf32>
    %53 = tpu.matmul %50, %52, %cst_41 {dimension_numbers = #tpu.dot_dimension_numbers<[1], [0], [0], [1], [0, 0, 1, 1], [], []>} : vector<286x3xbf16>, vector<3x64xbf16>, vector<286x64xf32> -> vector<286x64xf32>
    %54 = arith.addf %47, %53 : vector<286x64xf32>
    %c0_42 = arith.constant 0 : index
    %c38 = arith.constant 38 : index
    %c0_43 = arith.constant 0 : index
    %55 = vector.load %arg1[%c0_42, %c38, %c0_43] : memref<1x324x3xf32, #tpu.memory_space<vmem>>, vector<1x286x3xf32>
    %56 = vector.shape_cast %55 : vector<1x286x3xf32> to vector<286x3xf32>
    %57 = arith.truncf %56 : vector<286x3xf32> to vector<286x3xbf16>
    %c8 = arith.constant 8 : index
    %c0_44 = arith.constant 0 : index
    %c0_45 = arith.constant 0 : index
    %58 = vector.load %arg2[%c8, %c0_44, %c0_45] : memref<9x3x64xbf16, #tpu.memory_space<vmem>>, vector<1x3x64xbf16>
    %59 = vector.shape_cast %58 : vector<1x3x64xbf16> to vector<3x64xbf16>
    %cst_46 = arith.constant dense<0.000000e+00> : vector<286x64xf32>
    %60 = tpu.matmul %57, %59, %cst_46 {dimension_numbers = #tpu.dot_dimension_numbers<[1], [0], [0], [1], [0, 0, 1, 1], [], []>} : vector<286x3xbf16>, vector<3x64xbf16>, vector<286x64xf32> -> vector<286x64xf32>
    %61 = arith.addf %54, %60 : vector<286x64xf32>
    %c0_47 = arith.constant 0 : index
    %c0_48 = arith.constant 0 : index
    %62 = vector.load %arg3[%c0_47, %c0_48] : memref<1x64xf32, #tpu.memory_space<vmem>>, vector<1x64xf32>
    %63 = vector.broadcast %62 : vector<1x64xf32> to vector<286x64xf32>
    %64 = arith.addf %61, %63 : vector<286x64xf32>
    %cst_49 = arith.constant 0.000000e+00 : f32
    %65 = vector.broadcast %cst_49 : f32 to vector<286x64xf32>
    %66 = arith.maximumf %64, %65 : vector<286x64xf32>
    %67 = arith.truncf %66 : vector<286x64xf32> to vector<286x64xbf16>
    %c0_50 = arith.constant 0 : index
    %c0_51 = arith.constant 0 : index
    %c0_52 = arith.constant 0 : index
    %68 = vector.load %arg4[%c0_50, %c0_51, %c0_52] : memref<4x100x286xbf16, #tpu.memory_space<vmem>>, vector<1x100x286xbf16>
    %69 = vector.shape_cast %68 : vector<1x100x286xbf16> to vector<100x286xbf16>
    %cst_53 = arith.constant dense<0.000000e+00> : vector<100x64xf32>
    %70 = tpu.matmul %69, %67, %cst_53 {dimension_numbers = #tpu.dot_dimension_numbers<[1], [0], [0], [1], [0, 0, 1, 1], [], []>} : vector<100x286xbf16>, vector<286x64xbf16>, vector<100x64xf32> -> vector<100x64xf32>
    %c1_54 = arith.constant 1 : index
    %c0_55 = arith.constant 0 : index
    %c0_56 = arith.constant 0 : index
    %71 = vector.load %arg4[%c1_54, %c0_55, %c0_56] : memref<4x100x286xbf16, #tpu.memory_space<vmem>>, vector<1x100x286xbf16>
    %72 = vector.shape_cast %71 : vector<1x100x286xbf16> to vector<100x286xbf16>
    %cst_57 = arith.constant dense<0.000000e+00> : vector<100x64xf32>
    %73 = tpu.matmul %72, %67, %cst_57 {dimension_numbers = #tpu.dot_dimension_numbers<[1], [0], [0], [1], [0, 0, 1, 1], [], []>} : vector<100x286xbf16>, vector<286x64xbf16>, vector<100x64xf32> -> vector<100x64xf32>
    %74 = arith.maximumf %70, %73 : vector<100x64xf32>
    %c2_58 = arith.constant 2 : index
    %c0_59 = arith.constant 0 : index
    %c0_60 = arith.constant 0 : index
    %75 = vector.load %arg4[%c2_58, %c0_59, %c0_60] : memref<4x100x286xbf16, #tpu.memory_space<vmem>>, vector<1x100x286xbf16>
    %76 = vector.shape_cast %75 : vector<1x100x286xbf16> to vector<100x286xbf16>
    %cst_61 = arith.constant dense<0.000000e+00> : vector<100x64xf32>
    %77 = tpu.matmul %76, %67, %cst_61 {dimension_numbers = #tpu.dot_dimension_numbers<[1], [0], [0], [1], [0, 0, 1, 1], [], []>} : vector<100x286xbf16>, vector<286x64xbf16>, vector<100x64xf32> -> vector<100x64xf32>
    %78 = arith.maximumf %74, %77 : vector<100x64xf32>
    %c3_62 = arith.constant 3 : index
    %c0_63 = arith.constant 0 : index
    %c0_64 = arith.constant 0 : index
    %79 = vector.load %arg4[%c3_62, %c0_63, %c0_64] : memref<4x100x286xbf16, #tpu.memory_space<vmem>>, vector<1x100x286xbf16>
    %80 = vector.shape_cast %79 : vector<1x100x286xbf16> to vector<100x286xbf16>
    %cst_65 = arith.constant dense<0.000000e+00> : vector<100x64xf32>
    %81 = tpu.matmul %80, %67, %cst_65 {dimension_numbers = #tpu.dot_dimension_numbers<[1], [0], [0], [1], [0, 0, 1, 1], [], []>} : vector<100x286xbf16>, vector<286x64xbf16>, vector<100x64xf32> -> vector<100x64xf32>
    %82 = arith.maximumf %78, %81 : vector<100x64xf32>
    %c0_66 = arith.constant 0 : index
    %c0_67 = arith.constant 0 : index
    %83 = vector.load %arg14[%c0_66, %c0_67] : memref<100x64xf32, #tpu.memory_space<vmem>>, vector<100x64xf32>
    tpu.vector_store %arg14[%c0_66, %c0_67], %82 {strides = array<i32>} : memref<100x64xf32, #tpu.memory_space<vmem>>, vector<100x64xf32>,
    %c0_68 = arith.constant 0 : index
    %c0_69 = arith.constant 0 : index
    %84 = vector.load %arg14[%c0_68, %c0_69] : memref<100x64xf32, #tpu.memory_space<vmem>>, vector<78x64xf32>
    %85 = arith.truncf %84 : vector<78x64xf32> to vector<78x64xbf16>
    %c0_70 = arith.constant 0 : index
    %c0_71 = arith.constant 0 : index
    %c0_72 = arith.constant 0 : index
    %86 = vector.load %arg5[%c0_70, %c0_71, %c0_72] : memref<9x64x128xbf16, #tpu.memory_space<vmem>>, vector<1x64x128xbf16>
    %87 = vector.shape_cast %86 : vector<1x64x128xbf16> to vector<64x128xbf16>
    %cst_73 = arith.constant dense<0.000000e+00> : vector<78x128xf32>
    %88 = tpu.matmul %85, %87, %cst_73 {dimension_numbers = #tpu.dot_dimension_numbers<[1], [0], [0], [1], [0, 0, 1, 1], [], []>} : vector<78x64xbf16>, vector<64x128xbf16>, vector<78x128xf32> -> vector<78x128xf32>
    %c1_74 = arith.constant 1 : index
    %c0_75 = arith.constant 0 : index
    %89 = vector.load %arg14[%c1_74, %c0_75] : memref<100x64xf32, #tpu.memory_space<vmem>>, vector<78x64xf32>
    %90 = arith.truncf %89 : vector<78x64xf32> to vector<78x64xbf16>
    %c1_76 = arith.constant 1 : index
    %c0_77 = arith.constant 0 : index
    %c0_78 = arith.constant 0 : index
    %91 = vector.load %arg5[%c1_76, %c0_77, %c0_78] : memref<9x64x128xbf16, #tpu.memory_space<vmem>>, vector<1x64x128xbf16>
    %92 = vector.shape_cast %91 : vector<1x64x128xbf16> to vector<64x128xbf16>
    %cst_79 = arith.constant dense<0.000000e+00> : vector<78x128xf32>
    %93 = tpu.matmul %90, %92, %cst_79 {dimension_numbers = #tpu.dot_dimension_numbers<[1], [0], [0], [1], [0, 0, 1, 1], [], []>} : vector<78x64xbf16>, vector<64x128xbf16>, vector<78x128xf32> -> vector<78x128xf32>
    %94 = arith.addf %88, %93 : vector<78x128xf32>
    %c2_80 = arith.constant 2 : index
    %c0_81 = arith.constant 0 : index
    %95 = vector.load %arg14[%c2_80, %c0_81] : memref<100x64xf32, #tpu.memory_space<vmem>>, vector<78x64xf32>
    %96 = arith.truncf %95 : vector<78x64xf32> to vector<78x64xbf16>
    %c2_82 = arith.constant 2 : index
    %c0_83 = arith.constant 0 : index
    %c0_84 = arith.constant 0 : index
    %97 = vector.load %arg5[%c2_82, %c0_83, %c0_84] : memref<9x64x128xbf16, #tpu.memory_space<vmem>>, vector<1x64x128xbf16>
    %98 = vector.shape_cast %97 : vector<1x64x128xbf16> to vector<64x128xbf16>
    %cst_85 = arith.constant dense<0.000000e+00> : vector<78x128xf32>
    %99 = tpu.matmul %96, %98, %cst_85 {dimension_numbers = #tpu.dot_dimension_numbers<[1], [0], [0], [1], [0, 0, 1, 1], [], []>} : vector<78x64xbf16>, vector<64x128xbf16>, vector<78x128xf32> -> vector<78x128xf32>
    %100 = arith.addf %94, %99 : vector<78x128xf32>
    %c10 = arith.constant 10 : index
    %c0_86 = arith.constant 0 : index
    %101 = vector.load %arg14[%c10, %c0_86] : memref<100x64xf32, #tpu.memory_space<vmem>>, vector<78x64xf32>
    %102 = arith.truncf %101 : vector<78x64xf32> to vector<78x64xbf16>
    %c3_87 = arith.constant 3 : index
    %c0_88 = arith.constant 0 : index
    %c0_89 = arith.constant 0 : index
    %103 = vector.load %arg5[%c3_87, %c0_88, %c0_89] : memref<9x64x128xbf16, #tpu.memory_space<vmem>>, vector<1x64x128xbf16>
    %104 = vector.shape_cast %103 : vector<1x64x128xbf16> to vector<64x128xbf16>
    %cst_90 = arith.constant dense<0.000000e+00> : vector<78x128xf32>
    %105 = tpu.matmul %102, %104, %cst_90 {dimension_numbers = #tpu.dot_dimension_numbers<[1], [0], [0], [1], [0, 0, 1, 1], [], []>} : vector<78x64xbf16>, vector<64x128xbf16>, vector<78x128xf32> -> vector<78x128xf32>
    %106 = arith.addf %100, %105 : vector<78x128xf32>
    %c11 = arith.constant 11 : index
    %c0_91 = arith.constant 0 : index
    %107 = vector.load %arg14[%c11, %c0_91] : memref<100x64xf32, #tpu.memory_space<vmem>>, vector<78x64xf32>
    %108 = arith.truncf %107 : vector<78x64xf32> to vector<78x64xbf16>
    %c4_92 = arith.constant 4 : index
    %c0_93 = arith.constant 0 : index
    %c0_94 = arith.constant 0 : index
    %109 = vector.load %arg5[%c4_92, %c0_93, %c0_94] : memref<9x64x128xbf16, #tpu.memory_space<vmem>>, vector<1x64x128xbf16>
    %110 = vector.shape_cast %109 : vector<1x64x128xbf16> to vector<64x128xbf16>
    %cst_95 = arith.constant dense<0.000000e+00> : vector<78x128xf32>
    %111 = tpu.matmul %108, %110, %cst_95 {dimension_numbers = #tpu.dot_dimension_numbers<[1], [0], [0], [1], [0, 0, 1, 1], [], []>} : vector<78x64xbf16>, vector<64x128xbf16>, vector<78x128xf32> -> vector<78x128xf32>
    %112 = arith.addf %106, %111 : vector<78x128xf32>
    %c12 = arith.constant 12 : index
    %c0_96 = arith.constant 0 : index
    %113 = vector.load %arg14[%c12, %c0_96] : memref<100x64xf32, #tpu.memory_space<vmem>>, vector<78x64xf32>
    %114 = arith.truncf %113 : vector<78x64xf32> to vector<78x64xbf16>
    %c5_97 = arith.constant 5 : index
    %c0_98 = arith.constant 0 : index
    %c0_99 = arith.constant 0 : index
    %115 = vector.load %arg5[%c5_97, %c0_98, %c0_99] : memref<9x64x128xbf16, #tpu.memory_space<vmem>>, vector<1x64x128xbf16>
    %116 = vector.shape_cast %115 : vector<1x64x128xbf16> to vector<64x128xbf16>
    %cst_100 = arith.constant dense<0.000000e+00> : vector<78x128xf32>
    %117 = tpu.matmul %114, %116, %cst_100 {dimension_numbers = #tpu.dot_dimension_numbers<[1], [0], [0], [1], [0, 0, 1, 1], [], []>} : vector<78x64xbf16>, vector<64x128xbf16>, vector<78x128xf32> -> vector<78x128xf32>
    %118 = arith.addf %112, %117 : vector<78x128xf32>
    %c20_101 = arith.constant 20 : index
    %c0_102 = arith.constant 0 : index
    %119 = vector.load %arg14[%c20_101, %c0_102] : memref<100x64xf32, #tpu.memory_space<vmem>>, vector<78x64xf32>
    %120 = arith.truncf %119 : vector<78x64xf32> to vector<78x64xbf16>
    %c6_103 = arith.constant 6 : index
    %c0_104 = arith.constant 0 : index
    %c0_105 = arith.constant 0 : index
    %121 = vector.load %arg5[%c6_103, %c0_104, %c0_105] : memref<9x64x128xbf16, #tpu.memory_space<vmem>>, vector<1x64x128xbf16>
    %122 = vector.shape_cast %121 : vector<1x64x128xbf16> to vector<64x128xbf16>
    %cst_106 = arith.constant dense<0.000000e+00> : vector<78x128xf32>
    %123 = tpu.matmul %120, %122, %cst_106 {dimension_numbers = #tpu.dot_dimension_numbers<[1], [0], [0], [1], [0, 0, 1, 1], [], []>} : vector<78x64xbf16>, vector<64x128xbf16>, vector<78x128xf32> -> vector<78x128xf32>
    %124 = arith.addf %118, %123 : vector<78x128xf32>
    %c21 = arith.constant 21 : index
    %c0_107 = arith.constant 0 : index
    %125 = vector.load %arg14[%c21, %c0_107] : memref<100x64xf32, #tpu.memory_space<vmem>>, vector<78x64xf32>
    %126 = arith.truncf %125 : vector<78x64xf32> to vector<78x64xbf16>
    %c7_108 = arith.constant 7 : index
    %c0_109 = arith.constant 0 : index
    %c0_110 = arith.constant 0 : index
    %127 = vector.load %arg5[%c7_108, %c0_109, %c0_110] : memref<9x64x128xbf16, #tpu.memory_space<vmem>>, vector<1x64x128xbf16>
    %128 = vector.shape_cast %127 : vector<1x64x128xbf16> to vector<64x128xbf16>
    %cst_111 = arith.constant dense<0.000000e+00> : vector<78x128xf32>
    %129 = tpu.matmul %126, %128, %cst_111 {dimension_numbers = #tpu.dot_dimension_numbers<[1], [0], [0], [1], [0, 0, 1, 1], [], []>} : vector<78x64xbf16>, vector<64x128xbf16>, vector<78x128xf32> -> vector<78x128xf32>
    %130 = arith.addf %124, %129 : vector<78x128xf32>
    %c22 = arith.constant 22 : index
    %c0_112 = arith.constant 0 : index
    %131 = vector.load %arg14[%c22, %c0_112] : memref<100x64xf32, #tpu.memory_space<vmem>>, vector<78x64xf32>
    %132 = arith.truncf %131 : vector<78x64xf32> to vector<78x64xbf16>
    %c8_113 = arith.constant 8 : index
    %c0_114 = arith.constant 0 : index
    %c0_115 = arith.constant 0 : index
    %133 = vector.load %arg5[%c8_113, %c0_114, %c0_115] : memref<9x64x128xbf16, #tpu.memory_space<vmem>>, vector<1x64x128xbf16>
    %134 = vector.shape_cast %133 : vector<1x64x128xbf16> to vector<64x128xbf16>
    %cst_116 = arith.constant dense<0.000000e+00> : vector<78x128xf32>
    %135 = tpu.matmul %132, %134, %cst_116 {dimension_numbers = #tpu.dot_dimension_numbers<[1], [0], [0], [1], [0, 0, 1, 1], [], []>} : vector<78x64xbf16>, vector<64x128xbf16>, vector<78x128xf32> -> vector<78x128xf32>
    %136 = arith.addf %130, %135 : vector<78x128xf32>
    %c0_117 = arith.constant 0 : index
    %c0_118 = arith.constant 0 : index
    %137 = vector.load %arg6[%c0_117, %c0_118] : memref<1x128xf32, #tpu.memory_space<vmem>>, vector<1x128xf32>
    %138 = vector.broadcast %137 : vector<1x128xf32> to vector<78x128xf32>
    %139 = arith.addf %136, %138 : vector<78x128xf32>
    %cst_119 = arith.constant 0.000000e+00 : f32
    %140 = vector.broadcast %cst_119 : f32 to vector<78x128xf32>
    %141 = arith.maximumf %139, %140 : vector<78x128xf32>
    %142 = arith.truncf %141 : vector<78x128xf32> to vector<78x128xbf16>
    %c0_120 = arith.constant 0 : index
    %c0_121 = arith.constant 0 : index
    %c0_122 = arith.constant 0 : index
    %143 = vector.load %arg7[%c0_120, %c0_121, %c0_122] : memref<4x36x78xbf16, #tpu.memory_space<vmem>>, vector<1x36x78xbf16>
    %144 = vector.shape_cast %143 : vector<1x36x78xbf16> to vector<36x78xbf16>
    %cst_123 = arith.constant dense<0.000000e+00> : vector<36x128xf32>
    %145 = tpu.matmul %144, %142, %cst_123 {dimension_numbers = #tpu.dot_dimension_numbers<[1], [0], [0], [1], [0, 0, 1, 1], [], []>} : vector<36x78xbf16>, vector<78x128xbf16>, vector<36x128xf32> -> vector<36x128xf32>
    %c1_124 = arith.constant 1 : index
    %c0_125 = arith.constant 0 : index
    %c0_126 = arith.constant 0 : index
    %146 = vector.load %arg7[%c1_124, %c0_125, %c0_126] : memref<4x36x78xbf16, #tpu.memory_space<vmem>>, vector<1x36x78xbf16>
    %147 = vector.shape_cast %146 : vector<1x36x78xbf16> to vector<36x78xbf16>
    %cst_127 = arith.constant dense<0.000000e+00> : vector<36x128xf32>
    %148 = tpu.matmul %147, %142, %cst_127 {dimension_numbers = #tpu.dot_dimension_numbers<[1], [0], [0], [1], [0, 0, 1, 1], [], []>} : vector<36x78xbf16>, vector<78x128xbf16>, vector<36x128xf32> -> vector<36x128xf32>
    %149 = arith.maximumf %145, %148 : vector<36x128xf32>
    %c2_128 = arith.constant 2 : index
    %c0_129 = arith.constant 0 : index
    %c0_130 = arith.constant 0 : index
    %150 = vector.load %arg7[%c2_128, %c0_129, %c0_130] : memref<4x36x78xbf16, #tpu.memory_space<vmem>>, vector<1x36x78xbf16>
    %151 = vector.shape_cast %150 : vector<1x36x78xbf16> to vector<36x78xbf16>
    %cst_131 = arith.constant dense<0.000000e+00> : vector<36x128xf32>
    %152 = tpu.matmul %151, %142, %cst_131 {dimension_numbers = #tpu.dot_dimension_numbers<[1], [0], [0], [1], [0, 0, 1, 1], [], []>} : vector<36x78xbf16>, vector<78x128xbf16>, vector<36x128xf32> -> vector<36x128xf32>
    %153 = arith.maximumf %149, %152 : vector<36x128xf32>
    %c3_132 = arith.constant 3 : index
    %c0_133 = arith.constant 0 : index
    %c0_134 = arith.constant 0 : index
    %154 = vector.load %arg7[%c3_132, %c0_133, %c0_134] : memref<4x36x78xbf16, #tpu.memory_space<vmem>>, vector<1x36x78xbf16>
    %155 = vector.shape_cast %154 : vector<1x36x78xbf16> to vector<36x78xbf16>
    %cst_135 = arith.constant dense<0.000000e+00> : vector<36x128xf32>
    %156 = tpu.matmul %155, %142, %cst_135 {dimension_numbers = #tpu.dot_dimension_numbers<[1], [0], [0], [1], [0, 0, 1, 1], [], []>} : vector<36x78xbf16>, vector<78x128xbf16>, vector<36x128xf32> -> vector<36x128xf32>
    %157 = arith.maximumf %153, %156 : vector<36x128xf32>
    %c0_136 = arith.constant 0 : index
    %c0_137 = arith.constant 0 : index
    %158 = vector.load %arg15[%c0_136, %c0_137] : memref<36x128xf32, #tpu.memory_space<vmem>>, vector<36x128xf32>
    tpu.vector_store %arg15[%c0_136, %c0_137], %157 {strides = array<i32>} : memref<36x128xf32, #tpu.memory_space<vmem>>, vector<36x128xf32>,
    %c0_138 = arith.constant 0 : index
    %c0_139 = arith.constant 0 : index
    %159 = vector.load %arg15[%c0_138, %c0_139] : memref<36x128xf32, #tpu.memory_space<vmem>>, vector<22x128xf32>
    %160 = arith.truncf %159 : vector<22x128xf32> to vector<22x128xbf16>
    %c0_140 = arith.constant 0 : index
    %c0_141 = arith.constant 0 : index
    %c0_142 = arith.constant 0 : index
    %161 = vector.load %arg8[%c0_140, %c0_141, %c0_142] : memref<9x128x256xbf16, #tpu.memory_space<vmem>>, vector<1x128x256xbf16>
    %162 = vector.shape_cast %161 : vector<1x128x256xbf16> to vector<128x256xbf16>
    %cst_143 = arith.constant dense<0.000000e+00> : vector<22x256xf32>
    %163 = tpu.matmul %160, %162, %cst_143 {dimension_numbers = #tpu.dot_dimension_numbers<[1], [0], [0], [1], [0, 0, 1, 1], [], []>} : vector<22x128xbf16>, vector<128x256xbf16>, vector<22x256xf32> -> vector<22x256xf32>
    %c1_144 = arith.constant 1 : index
    %c0_145 = arith.constant 0 : index
    %164 = vector.load %arg15[%c1_144, %c0_145] : memref<36x128xf32, #tpu.memory_space<vmem>>, vector<22x128xf32>
    %165 = arith.truncf %164 : vector<22x128xf32> to vector<22x128xbf16>
    %c1_146 = arith.constant 1 : index
    %c0_147 = arith.constant 0 : index
    %c0_148 = arith.constant 0 : index
    %166 = vector.load %arg8[%c1_146, %c0_147, %c0_148] : memref<9x128x256xbf16, #tpu.memory_space<vmem>>, vector<1x128x256xbf16>
    %167 = vector.shape_cast %166 : vector<1x128x256xbf16> to vector<128x256xbf16>
    %cst_149 = arith.constant dense<0.000000e+00> : vector<22x256xf32>
    %168 = tpu.matmul %165, %167, %cst_149 {dimension_numbers = #tpu.dot_dimension_numbers<[1], [0], [0], [1], [0, 0, 1, 1], [], []>} : vector<22x128xbf16>, vector<128x256xbf16>, vector<22x256xf32> -> vector<22x256xf32>
    %169 = arith.addf %163, %168 : vector<22x256xf32>
    %c2_150 = arith.constant 2 : index
    %c0_151 = arith.constant 0 : index
    %170 = vector.load %arg15[%c2_150, %c0_151] : memref<36x128xf32, #tpu.memory_space<vmem>>, vector<22x128xf32>
    %171 = arith.truncf %170 : vector<22x128xf32> to vector<22x128xbf16>
    %c2_152 = arith.constant 2 : index
    %c0_153 = arith.constant 0 : index
    %c0_154 = arith.constant 0 : index
    %172 = vector.load %arg8[%c2_152, %c0_153, %c0_154] : memref<9x128x256xbf16, #tpu.memory_space<vmem>>, vector<1x128x256xbf16>
    %173 = vector.shape_cast %172 : vector<1x128x256xbf16> to vector<128x256xbf16>
    %cst_155 = arith.constant dense<0.000000e+00> : vector<22x256xf32>
    %174 = tpu.matmul %171, %173, %cst_155 {dimension_numbers = #tpu.dot_dimension_numbers<[1], [0], [0], [1], [0, 0, 1, 1], [], []>} : vector<22x128xbf16>, vector<128x256xbf16>, vector<22x256xf32> -> vector<22x256xf32>
    %175 = arith.addf %169, %174 : vector<22x256xf32>
    %c6_156 = arith.constant 6 : index
    %c0_157 = arith.constant 0 : index
    %176 = vector.load %arg15[%c6_156, %c0_157] : memref<36x128xf32, #tpu.memory_space<vmem>>, vector<22x128xf32>
    %177 = arith.truncf %176 : vector<22x128xf32> to vector<22x128xbf16>
    %c3_158 = arith.constant 3 : index
    %c0_159 = arith.constant 0 : index
    %c0_160 = arith.constant 0 : index
    %178 = vector.load %arg8[%c3_158, %c0_159, %c0_160] : memref<9x128x256xbf16, #tpu.memory_space<vmem>>, vector<1x128x256xbf16>
    %179 = vector.shape_cast %178 : vector<1x128x256xbf16> to vector<128x256xbf16>
    %cst_161 = arith.constant dense<0.000000e+00> : vector<22x256xf32>
    %180 = tpu.matmul %177, %179, %cst_161 {dimension_numbers = #tpu.dot_dimension_numbers<[1], [0], [0], [1], [0, 0, 1, 1], [], []>} : vector<22x128xbf16>, vector<128x256xbf16>, vector<22x256xf32> -> vector<22x256xf32>
    %181 = arith.addf %175, %180 : vector<22x256xf32>
    %c7_162 = arith.constant 7 : index
    %c0_163 = arith.constant 0 : index
    %182 = vector.load %arg15[%c7_162, %c0_163] : memref<36x128xf32, #tpu.memory_space<vmem>>, vector<22x128xf32>
    %183 = arith.truncf %182 : vector<22x128xf32> to vector<22x128xbf16>
    %c4_164 = arith.constant 4 : index
    %c0_165 = arith.constant 0 : index
    %c0_166 = arith.constant 0 : index
    %184 = vector.load %arg8[%c4_164, %c0_165, %c0_166] : memref<9x128x256xbf16, #tpu.memory_space<vmem>>, vector<1x128x256xbf16>
    %185 = vector.shape_cast %184 : vector<1x128x256xbf16> to vector<128x256xbf16>
    %cst_167 = arith.constant dense<0.000000e+00> : vector<22x256xf32>
    %186 = tpu.matmul %183, %185, %cst_167 {dimension_numbers = #tpu.dot_dimension_numbers<[1], [0], [0], [1], [0, 0, 1, 1], [], []>} : vector<22x128xbf16>, vector<128x256xbf16>, vector<22x256xf32> -> vector<22x256xf32>
    %187 = arith.addf %181, %186 : vector<22x256xf32>
    %c8_168 = arith.constant 8 : index
    %c0_169 = arith.constant 0 : index
    %188 = vector.load %arg15[%c8_168, %c0_169] : memref<36x128xf32, #tpu.memory_space<vmem>>, vector<22x128xf32>
    %189 = arith.truncf %188 : vector<22x128xf32> to vector<22x128xbf16>
    %c5_170 = arith.constant 5 : index
    %c0_171 = arith.constant 0 : index
    %c0_172 = arith.constant 0 : index
    %190 = vector.load %arg8[%c5_170, %c0_171, %c0_172] : memref<9x128x256xbf16, #tpu.memory_space<vmem>>, vector<1x128x256xbf16>
    %191 = vector.shape_cast %190 : vector<1x128x256xbf16> to vector<128x256xbf16>
    %cst_173 = arith.constant dense<0.000000e+00> : vector<22x256xf32>
    %192 = tpu.matmul %189, %191, %cst_173 {dimension_numbers = #tpu.dot_dimension_numbers<[1], [0], [0], [1], [0, 0, 1, 1], [], []>} : vector<22x128xbf16>, vector<128x256xbf16>, vector<22x256xf32> -> vector<22x256xf32>
    %193 = arith.addf %187, %192 : vector<22x256xf32>
    %c12_174 = arith.constant 12 : index
    %c0_175 = arith.constant 0 : index
    %194 = vector.load %arg15[%c12_174, %c0_175] : memref<36x128xf32, #tpu.memory_space<vmem>>, vector<22x128xf32>
    %195 = arith.truncf %194 : vector<22x128xf32> to vector<22x128xbf16>
    %c6_176 = arith.constant 6 : index
    %c0_177 = arith.constant 0 : index
    %c0_178 = arith.constant 0 : index
    %196 = vector.load %arg8[%c6_176, %c0_177, %c0_178] : memref<9x128x256xbf16, #tpu.memory_space<vmem>>, vector<1x128x256xbf16>
    %197 = vector.shape_cast %196 : vector<1x128x256xbf16> to vector<128x256xbf16>
    %cst_179 = arith.constant dense<0.000000e+00> : vector<22x256xf32>
    %198 = tpu.matmul %195, %197, %cst_179 {dimension_numbers = #tpu.dot_dimension_numbers<[1], [0], [0], [1], [0, 0, 1, 1], [], []>} : vector<22x128xbf16>, vector<128x256xbf16>, vector<22x256xf32> -> vector<22x256xf32>
    %199 = arith.addf %193, %198 : vector<22x256xf32>
    %c13 = arith.constant 13 : index
    %c0_180 = arith.constant 0 : index
    %200 = vector.load %arg15[%c13, %c0_180] : memref<36x128xf32, #tpu.memory_space<vmem>>, vector<22x128xf32>
    %201 = arith.truncf %200 : vector<22x128xf32> to vector<22x128xbf16>
    %c7_181 = arith.constant 7 : index
    %c0_182 = arith.constant 0 : index
    %c0_183 = arith.constant 0 : index
    %202 = vector.load %arg8[%c7_181, %c0_182, %c0_183] : memref<9x128x256xbf16, #tpu.memory_space<vmem>>, vector<1x128x256xbf16>
    %203 = vector.shape_cast %202 : vector<1x128x256xbf16> to vector<128x256xbf16>
    %cst_184 = arith.constant dense<0.000000e+00> : vector<22x256xf32>
    %204 = tpu.matmul %201, %203, %cst_184 {dimension_numbers = #tpu.dot_dimension_numbers<[1], [0], [0], [1], [0, 0, 1, 1], [], []>} : vector<22x128xbf16>, vector<128x256xbf16>, vector<22x256xf32> -> vector<22x256xf32>
    %205 = arith.addf %199, %204 : vector<22x256xf32>
    %c14 = arith.constant 14 : index
    %c0_185 = arith.constant 0 : index
    %206 = vector.load %arg15[%c14, %c0_185] : memref<36x128xf32, #tpu.memory_space<vmem>>, vector<22x128xf32>
    %207 = arith.truncf %206 : vector<22x128xf32> to vector<22x128xbf16>
    %c8_186 = arith.constant 8 : index
    %c0_187 = arith.constant 0 : index
    %c0_188 = arith.constant 0 : index
    %208 = vector.load %arg8[%c8_186, %c0_187, %c0_188] : memref<9x128x256xbf16, #tpu.memory_space<vmem>>, vector<1x128x256xbf16>
    %209 = vector.shape_cast %208 : vector<1x128x256xbf16> to vector<128x256xbf16>
    %cst_189 = arith.constant dense<0.000000e+00> : vector<22x256xf32>
    %210 = tpu.matmul %207, %209, %cst_189 {dimension_numbers = #tpu.dot_dimension_numbers<[1], [0], [0], [1], [0, 0, 1, 1], [], []>} : vector<22x128xbf16>, vector<128x256xbf16>, vector<22x256xf32> -> vector<22x256xf32>
    %211 = arith.addf %205, %210 : vector<22x256xf32>
    %c0_190 = arith.constant 0 : index
    %c0_191 = arith.constant 0 : index
    %212 = vector.load %arg9[%c0_190, %c0_191] : memref<1x256xf32, #tpu.memory_space<vmem>>, vector<1x256xf32>
    %213 = vector.broadcast %212 : vector<1x256xf32> to vector<22x256xf32>
    %214 = arith.addf %211, %213 : vector<22x256xf32>
    %cst_192 = arith.constant 0.000000e+00 : f32
    %215 = vector.broadcast %cst_192 : f32 to vector<22x256xf32>
    %216 = arith.maximumf %214, %215 : vector<22x256xf32>
    %217 = arith.truncf %216 : vector<22x256xf32> to vector<22x256xbf16>
    %c0_193 = arith.constant 0 : index
    %c0_194 = arith.constant 0 : index
    %c0_195 = arith.constant 0 : index
    %218 = vector.load %arg10[%c0_193, %c0_194, %c0_195] : memref<4x4x22xbf16, #tpu.memory_space<vmem>>, vector<1x4x22xbf16>
    %219 = vector.shape_cast %218 : vector<1x4x22xbf16> to vector<4x22xbf16>
    %cst_196 = arith.constant dense<0.000000e+00> : vector<4x256xf32>
    %220 = tpu.matmul %219, %217, %cst_196 {dimension_numbers = #tpu.dot_dimension_numbers<[1], [0], [0], [1], [0, 0, 1, 1], [], []>} : vector<4x22xbf16>, vector<22x256xbf16>, vector<4x256xf32> -> vector<4x256xf32>
    %c1_197 = arith.constant 1 : index
    %c0_198 = arith.constant 0 : index
    %c0_199 = arith.constant 0 : index
    %221 = vector.load %arg10[%c1_197, %c0_198, %c0_199] : memref<4x4x22xbf16, #tpu.memory_space<vmem>>, vector<1x4x22xbf16>
    %222 = vector.shape_cast %221 : vector<1x4x22xbf16> to vector<4x22xbf16>
    %cst_200 = arith.constant dense<0.000000e+00> : vector<4x256xf32>
    %223 = tpu.matmul %222, %217, %cst_200 {dimension_numbers = #tpu.dot_dimension_numbers<[1], [0], [0], [1], [0, 0, 1, 1], [], []>} : vector<4x22xbf16>, vector<22x256xbf16>, vector<4x256xf32> -> vector<4x256xf32>
    %224 = arith.maximumf %220, %223 : vector<4x256xf32>
    %c2_201 = arith.constant 2 : index
    %c0_202 = arith.constant 0 : index
    %c0_203 = arith.constant 0 : index
    %225 = vector.load %arg10[%c2_201, %c0_202, %c0_203] : memref<4x4x22xbf16, #tpu.memory_space<vmem>>, vector<1x4x22xbf16>
    %226 = vector.shape_cast %225 : vector<1x4x22xbf16> to vector<4x22xbf16>
    %cst_204 = arith.constant dense<0.000000e+00> : vector<4x256xf32>
    %227 = tpu.matmul %226, %217, %cst_204 {dimension_numbers = #tpu.dot_dimension_numbers<[1], [0], [0], [1], [0, 0, 1, 1], [], []>} : vector<4x22xbf16>, vector<22x256xbf16>, vector<4x256xf32> -> vector<4x256xf32>
    %228 = arith.maximumf %224, %227 : vector<4x256xf32>
    %c3_205 = arith.constant 3 : index
    %c0_206 = arith.constant 0 : index
    %c0_207 = arith.constant 0 : index
    %229 = vector.load %arg10[%c3_205, %c0_206, %c0_207] : memref<4x4x22xbf16, #tpu.memory_space<vmem>>, vector<1x4x22xbf16>
    %230 = vector.shape_cast %229 : vector<1x4x22xbf16> to vector<4x22xbf16>
    %cst_208 = arith.constant dense<0.000000e+00> : vector<4x256xf32>
    %231 = tpu.matmul %230, %217, %cst_208 {dimension_numbers = #tpu.dot_dimension_numbers<[1], [0], [0], [1], [0, 0, 1, 1], [], []>} : vector<4x22xbf16>, vector<22x256xbf16>, vector<4x256xf32> -> vector<4x256xf32>
    %232 = arith.maximumf %228, %231 : vector<4x256xf32>
    %cst_209 = arith.constant dense<0.000000e+00> : vector<256xf32>
    %233 = vector.multi_reduction <add>, %232, %cst_209 [0] : vector<4x256xf32> to vector<256xf32>
    %234 = vector.shape_cast %233 : vector<256xf32> to vector<1x256xf32>
    %cst_210 = arith.constant 2.500000e-01 : f32
    %235 = vector.broadcast %cst_210 : f32 to vector<1x256xf32>
    %236 = arith.mulf %234, %235 : vector<1x256xf32>
    %c0_211 = arith.constant 0 : index
    %c0_212 = arith.constant 0 : index
    %237 = vector.load %arg11[%c0_211, %c0_212] : memref<1x256xf32, #tpu.memory_space<vmem>>, vector<1x256xf32>
    %238 = arith.mulf %236, %237 : vector<1x256xf32>
    %cst_213 = arith.constant dense<0.000000e+00> : vector<1xf32>
    %239 = vector.multi_reduction <add>, %238, %cst_213 [1] : vector<1x256xf32> to vector<1xf32>
    %240 = vector.shape_cast %239 : vector<1xf32> to vector<1x1xf32>
    %c0_214 = arith.constant 0 : index
    %c0_215 = arith.constant 0 : index
    %241 = vector.load %arg12[%c0_214, %c0_215] : memref<1x1xf32, #tpu.memory_space<vmem>>, vector<1x1xf32>
    %242 = arith.addf %240, %241 : vector<1x1xf32>
    %c0_216 = arith.constant 0 : index
    %c0_217 = arith.constant 0 : index
    %c0_218 = arith.constant 0 : index
    %243 = vector.load %arg13[%c0_216, %c0_217, %c0_218] : memref<1x1x1xf32, #tpu.memory_space<vmem>>, vector<1x1x1xf32>
    %244 = vector.shape_cast %243 : vector<1x1x1xf32> to vector<1x1xf32>
    %245 = vector.shape_cast %242 : vector<1x1xf32> to vector<1x1x1xf32>
    tpu.vector_store %arg13[%c0_216, %c0_217, %c0_218], %245 {strides = array<i32>} : memref<1x1x1xf32, #tpu.memory_space<vmem>>, vector<1x1x1xf32>,
    return
  }
  func.func @transform_0(%arg0: i32) -> (i32, i32, i32) {
    %c0_i32 = arith.constant 0 : i32
    %c0_i32_0 = arith.constant 0 : i32
    %c0_i32_1 = arith.constant 0 : i32
    return %arg0, %c0_i32, %c0_i32_0 : i32, i32, i32
  }
  func.func @transform_1(%arg0: i32) -> (i32, i32, i32) {
    %c0_i32 = arith.constant 0 : i32
    %c0_i32_0 = arith.constant 0 : i32
    %c0_i32_1 = arith.constant 0 : i32
    %c0_i32_2 = arith.constant 0 : i32
    return %c0_i32, %c0_i32_0, %c0_i32_1 : i32, i32, i32
  }
  func.func @transform_2(%arg0: i32) -> (i32, i32) {
    %c0_i32 = arith.constant 0 : i32
    %c0_i32_0 = arith.constant 0 : i32
    %c0_i32_1 = arith.constant 0 : i32
    return %c0_i32, %c0_i32_0 : i32, i32
  }
  func.func @transform_3(%arg0: i32) -> (i32, i32, i32) {
    %c0_i32 = arith.constant 0 : i32
    %c0_i32_0 = arith.constant 0 : i32
    %c0_i32_1 = arith.constant 0 : i32
    %c0_i32_2 = arith.constant 0 : i32
    return %c0_i32, %c0_i32_0, %c0_i32_1 : i32, i32, i32
  }
  func.func @transform_4(%arg0: i32) -> (i32, i32, i32) {
    %c0_i32 = arith.constant 0 : i32
    %c0_i32_0 = arith.constant 0 : i32
    %c0_i32_1 = arith.constant 0 : i32
    %c0_i32_2 = arith.constant 0 : i32
    return %c0_i32, %c0_i32_0, %c0_i32_1 : i32, i32, i32
  }
  func.func @transform_5(%arg0: i32) -> (i32, i32) {
    %c0_i32 = arith.constant 0 : i32
    %c0_i32_0 = arith.constant 0 : i32
    %c0_i32_1 = arith.constant 0 : i32
    return %c0_i32, %c0_i32_0 : i32, i32
  }
  func.func @transform_6(%arg0: i32) -> (i32, i32, i32) {
    %c0_i32 = arith.constant 0 : i32
    %c0_i32_0 = arith.constant 0 : i32
    %c0_i32_1 = arith.constant 0 : i32
    %c0_i32_2 = arith.constant 0 : i32
    return %c0_i32, %c0_i32_0, %c0_i32_1 : i32, i32, i32
  }
  func.func @transform_7(%arg0: i32) -> (i32, i32, i32) {
    %c0_i32 = arith.constant 0 : i32
    %c0_i32_0 = arith.constant 0 : i32
    %c0_i32_1 = arith.constant 0 : i32
    %c0_i32_2 = arith.constant 0 : i32
    return %c0_i32, %c0_i32_0, %c0_i32_1 : i32, i32, i32
  }
  func.func @transform_8(%arg0: i32) -> (i32, i32) {
    %c0_i32 = arith.constant 0 : i32
    %c0_i32_0 = arith.constant 0 : i32
    %c0_i32_1 = arith.constant 0 : i32
    return %c0_i32, %c0_i32_0 : i32, i32
  }
  func.func @transform_9(%arg0: i32) -> (i32, i32, i32) {
    %c0_i32 = arith.constant 0 : i32
    %c0_i32_0 = arith.constant 0 : i32
    %c0_i32_1 = arith.constant 0 : i32
    %c0_i32_2 = arith.constant 0 : i32
    return %c0_i32, %c0_i32_0, %c0_i32_1 : i32, i32, i32
  }
  func.func @transform_10(%arg0: i32) -> (i32, i32) {
    %c0_i32 = arith.constant 0 : i32
    %c0_i32_0 = arith.constant 0 : i32
    %c0_i32_1 = arith.constant 0 : i32
    return %c0_i32, %c0_i32_0 : i32, i32
  }
  func.func @transform_11(%arg0: i32) -> (i32, i32) {
    %c0_i32 = arith.constant 0 : i32
    %c0_i32_0 = arith.constant 0 : i32
    %c0_i32_1 = arith.constant 0 : i32
    return %c0_i32, %c0_i32_0 : i32, i32
  }
  func.func @transform_12(%arg0: i32) -> (i32, i32, i32) {
    %c0_i32 = arith.constant 0 : i32
    %c0_i32_0 = arith.constant 0 : i32
    %c0_i32_1 = arith.constant 0 : i32
    return %arg0, %c0_i32, %c0_i32_0 : i32, i32, i32
  }
}

</mosaic_0001>

<llo_original>
// kernel: model_forward.1
$region0: #{model_forward.1}
  #allocation0 [shape = 'u32[]', space=smem, size = 0x4, offset = 0x4, fixed_abs, tag = 'smem constant byte address 0x4 - core index']
  #allocation1 [shape = 'u32[144,128]{1,0:T(1,128)}', space=vmem, size = 0x12000, scoped, tag = 'internal scratch']
  #allocation2 [shape = 'f32[100,64]{1,0:T(8,128)}', space=vmem, size = 0xd000, scoped, tag = 'scratch operand']
  #allocation3 [shape = 'f32[36,128]{1,0:T(8,128)}', space=vmem, size = 0x5000, scoped, tag = 'scratch operand']
  #allocation4 [shape = 'f32[1,1]{1,0:T(1,128)S(1)}', space=vmem, size = 0x200, scoped, tag = 'scoped memory for model_forward.1']
  %s0 = inlined_call_operand.vmem [shape: f32[2,324,3], index: 0, kind: input, shape index: {}]
  %s1 = inlined_call_operand.vmem [shape: bf16[9,3,64], index: 1, kind: input, shape index: {}]
  %s2 = inlined_call_operand.vmem [shape: f32[1,64], index: 2, kind: input, shape index: {}]
  %s3 = inlined_call_operand.vmem [shape: bf16[4,100,286], index: 3, kind: input, shape index: {}]
  %s4 = inlined_call_operand.vmem [shape: bf16[9,64,128], index: 4, kind: input, shape index: {}]
  %s5 = inlined_call_operand.vmem [shape: f32[1,128], index: 5, kind: input, shape index: {}]
  %s6 = inlined_call_operand.vmem [shape: bf16[4,36,78], index: 6, kind: input, shape index: {}]
  %s7 = inlined_call_operand.vmem [shape: bf16[9,128,256], index: 7, kind: input, shape index: {}]
  %s8 = inlined_call_operand.vmem [shape: f32[1,256], index: 8, kind: input, shape index: {}]
  %s9 = inlined_call_operand.vmem [shape: bf16[4,4,22], index: 9, kind: input, shape index: {}]
  %s10 = inlined_call_operand.vmem [shape: f32[1,256], index: 10, kind: input, shape index: {}]
  %s11 = inlined_call_operand.<no memory space> [shape: f32[1,1], index: 11, kind: input, shape index: {}]
  %s12 = inlined_call_operand.vmem [shape: f32[2,1,1], index: 12, kind: output, shape index: {}]
  %s13 = sld [smem:[#allocation0]]
  $region81: #{model_forward.1} parent=0
    _
  %s15 = ssub.s32 1, %s13
  %s16 = scalar_select 0, %s15, %s13
  %v17 = vstv %s11
  %18 = vst [vmem:[#allocation4] sm:$0x1] %v17
  loop: start=0, step=1, limit=4
  $region2: #{model_forward.1} parent=0 // loop_pre_header
    _
  $region3: #{model_forward.1} parent=0 // loop_header
    %s20 = sphi 0, %s24
    %p21 = scmp.ge.s32.totalorder %s20, 4
    %s30 = sphi 0, %s32
    %s33 = sphi 0, %s30
    %s34 = sphi 0, %s33
    %s50 = sphi 0, %s34
    %s54 = sphi 0, %s54
    %s56 = sphi 0, %s54
    %s57 = sphi 0, %s56
    %s71 = sphi 0, %s57
    %s75 = sphi 0, %s75
    %s77 = sphi 0, %s75
    %s78 = sphi 0, %s77
    %s92 = sphi 0, %s78
    %s96 = sphi 0, %s96
    %s98 = sphi 0, %s96
    %s99 = sphi 0, %s98
    %s113 = sphi 0, %s99
    %s117 = sphi 0, %s117
    %s119 = sphi 0, %s117
    %s120 = sphi 0, %s119
    %s134 = sphi 0, %s120
    %s138 = sphi 0, %s138
    %s140 = sphi 0, %s138
    %s141 = sphi 0, %s140
    %s155 = sphi 0, %s141
    %s159 = sphi 0, %s159
    %s161 = sphi 0, %s159
    %s162 = sphi 0, %s161
    %s176 = sphi 0, %s162
    %s180 = sphi 0, %s180
    %s182 = sphi 0, %s180
    %s183 = sphi 0, %s182
    %s197 = sphi 0, %s183
    %s201 = sphi 0, %s201
    %s203 = sphi 0, %s201
    %s204 = sphi 0, %s203
    %s218 = sphi 0, %s204
    %s222 = sphi 0, %s222
    %s224 = sphi 0, %s222
    %s225 = sphi 0, %s224
    %s239 = sphi 0, %s225
    %s243 = sphi 0, %s243
    %s245 = sphi 0, %s243
    %s246 = sphi 0, %s245
    %s260 = sphi 0, %s246
    %s264 = sphi 0, %s264
    %s266 = sphi 0, %s264
    %s267 = sphi 0, %s266
    %s281 = sphi 0, %s267
    %s287 = sphi 0, %s289
    %s290 = sphi 0, %s287
    %s291 = sphi 0, %s290
    %s307 = sphi 0, %s291
  $region4: #{model_forward.1} parent=0 // loop_header_branch
    %23 = sbr.rel (%p21) target = $region8
  $region5: #{model_forward.1} parent=0 // loop_body
    %s25 = ssub.s32 %s20, 1
    %s26 = ssub.s32 %s20, 2
    %s27 = sadd.s32 %s20, 1
    %s28 = ssub.s32 %s20, %s27
    %p29 = scmp.eq.s32.totalorder %s28, 0
    %s31 = sadd.s32 %s30, 1
    %s32 = scalar_select %p29, %s30, %s31
    %p35 = pneg %p29
    %p36 = scmp.eq.s32.totalorder %s20, 1
    %p37 = por %p35, %p36
    %p38 = scmp.ne.s32.totalorder %s30, %s33
    %p39 = scmp.eq.s32.totalorder %s20, 0
    %p40 = por %p38, %p39
    %p41 = scmp.ne.s32.totalorder %s30, %s33
    %p42 = scmp.eq.s32.totalorder %s25, 1
    %p43 = por %p41, %p42
    %p44 = scmp.ne.s32.totalorder %s33, %s34
    %p45 = scmp.eq.s32.totalorder %s25, 0
    %p46 = por %p44, %p45
    %p47 = scmp.ne.s32.totalorder %s33, %s34
    %p48 = scmp.eq.s32.totalorder %s26, 1
    %p49 = por %p47, %p48
    %p51 = scmp.ne.s32.totalorder %s34, %s50
    %p52 = scmp.eq.s32.totalorder %s26, 0
    %p53 = por %p51, %p52
    %s55 = sadd.s32 %s54, 1
    %p58 = scmp.eq.s32.totalorder %s20, 1
    %p59 = scmp.ne.s32.totalorder %s54, %s56
    %p60 = scmp.eq.s32.totalorder %s20, 0
    %p61 = por %p59, %p60
    %p62 = scmp.ne.s32.totalorder %s54, %s56
    %p63 = scmp.eq.s32.totalorder %s25, 1
    %p64 = por %p62, %p63
    %p65 = scmp.ne.s32.totalorder %s56, %s57
    %p66 = scmp.eq.s32.totalorder %s25, 0
    %p67 = por %p65, %p66
    %p68 = scmp.ne.s32.totalorder %s56, %s57
    %p69 = scmp.eq.s32.totalorder %s26, 1
    %p70 = por %p68, %p69
    %p72 = scmp.ne.s32.totalorder %s57, %s71
    %p73 = scmp.eq.s32.totalorder %s26, 0
    %p74 = por %p72, %p73
    %s76 = sadd.s32 %s75, 1
    %p79 = scmp.eq.s32.totalorder %s20, 1
    %p80 = scmp.ne.s32.totalorder %s75, %s77
    %p81 = scmp.eq.s32.totalorder %s20, 0
    %p82 = por %p80, %p81
    %p83 = scmp.ne.s32.totalorder %s75, %s77
    %p84 = scmp.eq.s32.totalorder %s25, 1
    %p85 = por %p83, %p84
    %p86 = scmp.ne.s32.totalorder %s77, %s78
    %p87 = scmp.eq.s32.totalorder %s25, 0
    %p88 = por %p86, %p87
    %p89 = scmp.ne.s32.totalorder %s77, %s78
    %p90 = scmp.eq.s32.totalorder %s26, 1
    %p91 = por %p89, %p90
    %p93 = scmp.ne.s32.totalorder %s78, %s92
    %p94 = scmp.eq.s32.totalorder %s26, 0
    %p95 = por %p93, %p94
    %s97 = sadd.s32 %s96, 1
    %p100 = scmp.eq.s32.totalorder %s20, 1
    %p101 = scmp.ne.s32.totalorder %s96, %s98
    %p102 = scmp.eq.s32.totalorder %s20, 0
    %p103 = por %p101, %p102
    %p104 = scmp.ne.s32.totalorder %s96, %s98
    %p105 = scmp.eq.s32.totalorder %s25, 1
    %p106 = por %p104, %p105
    %p107 = scmp.ne.s32.totalorder %s98, %s99
    %p108 = scmp.eq.s32.totalorder %s25, 0
    %p109 = por %p107, %p108
    %p110 = scmp.ne.s32.totalorder %s98, %s99
    %p111 = scmp.eq.s32.totalorder %s26, 1
    %p112 = por %p110, %p111
    %p114 = scmp.ne.s32.totalorder %s99, %s113
    %p115 = scmp.eq.s32.totalorder %s26, 0
    %p116 = por %p114, %p115
    %s118 = sadd.s32 %s117, 1
    %p121 = scmp.eq.s32.totalorder %s20, 1
    %p122 = scmp.ne.s32.totalorder %s117, %s119
    %p123 = scmp.eq.s32.totalorder %s20, 0
    %p124 = por %p122, %p123
    %p125 = scmp.ne.s32.totalorder %s117, %s119
    %p126 = scmp.eq.s32.totalorder %s25, 1
    %p127 = por %p125, %p126
    %p128 = scmp.ne.s32.totalorder %s119, %s120
    %p129 = scmp.eq.s32.totalorder %s25, 0
    %p130 = por %p128, %p129
    %p131 = scmp.ne.s32.totalorder %s119, %s120
    %p132 = scmp.eq.s32.totalorder %s26, 1
    %p133 = por %p131, %p132
    %p135 = scmp.ne.s32.totalorder %s120, %s134
    %p136 = scmp.eq.s32.totalorder %s26, 0
    %p137 = por %p135, %p136
    %s139 = sadd.s32 %s138, 1
    %p142 = scmp.eq.s32.totalorder %s20, 1
    %p143 = scmp.ne.s32.totalorder %s138, %s140
    %p144 = scmp.eq.s32.totalorder %s20, 0
    %p145 = por %p143, %p144
    %p146 = scmp.ne.s32.totalorder %s138, %s140
    %p147 = scmp.eq.s32.totalorder %s25, 1
    %p148 = por %p146, %p147
    %p149 = scmp.ne.s32.totalorder %s140, %s141
    %p150 = scmp.eq.s32.totalorder %s25, 0
    %p151 = por %p149, %p150
    %p152 = scmp.ne.s32.totalorder %s140, %s141
    %p153 = scmp.eq.s32.totalorder %s26, 1
    %p154 = por %p152, %p153
    %p156 = scmp.ne.s32.totalorder %s141, %s155
    %p157 = scmp.eq.s32.totalorder %s26, 0
    %p158 = por %p156, %p157
    %s160 = sadd.s32 %s159, 1
    %p163 = scmp.eq.s32.totalorder %s20, 1
    %p164 = scmp.ne.s32.totalorder %s159, %s161
    %p165 = scmp.eq.s32.totalorder %s20, 0
    %p166 = por %p164, %p165
    %p167 = scmp.ne.s32.totalorder %s159, %s161
    %p168 = scmp.eq.s32.totalorder %s25, 1
    %p169 = por %p167, %p168
    %p170 = scmp.ne.s32.totalorder %s161, %s162
    %p171 = scmp.eq.s32.totalorder %s25, 0
    %p172 = por %p170, %p171
    %p173 = scmp.ne.s32.totalorder %s161, %s162
    %p174 = scmp.eq.s32.totalorder %s26, 1
    %p175 = por %p173, %p174
    %p177 = scmp.ne.s32.totalorder %s162, %s176
    %p178 = scmp.eq.s32.totalorder %s26, 0
    %p179 = por %p177, %p178
    %s181 = sadd.s32 %s180, 1
    %p184 = scmp.eq.s32.totalorder %s20, 1
    %p185 = scmp.ne.s32.totalorder %s180, %s182
    %p186 = scmp.eq.s32.totalorder %s20, 0
    %p187 = por %p185, %p186
    %p188 = scmp.ne.s32.totalorder %s180, %s182
    %p189 = scmp.eq.s32.totalorder %s25, 1
    %p190 = por %p188, %p189
    %p191 = scmp.ne.s32.totalorder %s182, %s183
    %p192 = scmp.eq.s32.totalorder %s25, 0
    %p193 = por %p191, %p192
    %p194 = scmp.ne.s32.totalorder %s182, %s183
    %p195 = scmp.eq.s32.totalorder %s26, 1
    %p196 = por %p194, %p195
    %p198 = scmp.ne.s32.totalorder %s183, %s197
    %p199 = scmp.eq.s32.totalorder %s26, 0
    %p200 = por %p198, %p199
    %s202 = sadd.s32 %s201, 1
    %p205 = scmp.eq.s32.totalorder %s20, 1
    %p206 = scmp.ne.s32.totalorder %s201, %s203
    %p207 = scmp.eq.s32.totalorder %s20, 0
    %p208 = por %p206, %p207
    %p209 = scmp.ne.s32.totalorder %s201, %s203
    %p210 = scmp.eq.s32.totalorder %s25, 1
    %p211 = por %p209, %p210
    %p212 = scmp.ne.s32.totalorder %s203, %s204
    %p213 = scmp.eq.s32.totalorder %s25, 0
    %p214 = por %p212, %p213
    %p215 = scmp.ne.s32.totalorder %s203, %s204
    %p216 = scmp.eq.s32.totalorder %s26, 1
    %p217 = por %p215, %p216
    %p219 = scmp.ne.s32.totalorder %s204, %s218
    %p220 = scmp.eq.s32.totalorder %s26, 0
    %p221 = por %p219, %p220
    %s223 = sadd.s32 %s222, 1
    %p226 = scmp.eq.s32.totalorder %s20, 1
    %p227 = scmp.ne.s32.totalorder %s222, %s224
    %p228 = scmp.eq.s32.totalorder %s20, 0
    %p229 = por %p227, %p228
    %p230 = scmp.ne.s32.totalorder %s222, %s224
    %p231 = scmp.eq.s32.totalorder %s25, 1
    %p232 = por %p230, %p231
    %p233 = scmp.ne.s32.totalorder %s224, %s225
    %p234 = scmp.eq.s32.totalorder %s25, 0
    %p235 = por %p233, %p234
    %p236 = scmp.ne.s32.totalorder %s224, %s225
    %p237 = scmp.eq.s32.totalorder %s26, 1
    %p238 = por %p236, %p237
    %p240 = scmp.ne.s32.totalorder %s225, %s239
    %p241 = scmp.eq.s32.totalorder %s26, 0
    %p242 = por %p240, %p241
    %s244 = sadd.s32 %s243, 1
    %p247 = scmp.eq.s32.totalorder %s20, 1
    %p248 = scmp.ne.s32.totalorder %s243, %s245
    %p249 = scmp.eq.s32.totalorder %s20, 0
    %p250 = por %p248, %p249
    %p251 = scmp.ne.s32.totalorder %s243, %s245
    %p252 = scmp.eq.s32.totalorder %s25, 1
    %p253 = por %p251, %p252
    %p254 = scmp.ne.s32.totalorder %s245, %s246
    %p255 = scmp.eq.s32.totalorder %s25, 0
    %p256 = por %p254, %p255
    %p257 = scmp.ne.s32.totalorder %s245, %s246
    %p258 = scmp.eq.s32.totalorder %s26, 1
    %p259 = por %p257, %p258
    %p261 = scmp.ne.s32.totalorder %s246, %s260
    %p262 = scmp.eq.s32.totalorder %s26, 0
    %p263 = por %p261, %p262
    %s265 = sadd.s32 %s264, 1
    %p268 = scmp.eq.s32.totalorder %s20, 1
    %p269 = scmp.ne.s32.totalorder %s264, %s266
    %p270 = scmp.eq.s32.totalorder %s20, 0
    %p271 = por %p269, %p270
    %p272 = scmp.ne.s32.totalorder %s264, %s266
    %p273 = scmp.eq.s32.totalorder %s25, 1
    %p274 = por %p272, %p273
    %p275 = scmp.ne.s32.totalorder %s266, %s267
    %p276 = scmp.eq.s32.totalorder %s25, 0
    %p277 = por %p275, %p276
    %p278 = scmp.ne.s32.totalorder %s266, %s267
    %p279 = scmp.eq.s32.totalorder %s26, 1
    %p280 = por %p278, %p279
    %p282 = scmp.ne.s32.totalorder %s267, %s281
    %p283 = scmp.eq.s32.totalorder %s26, 0
    %p284 = por %p282, %p283
    %s285 = ssub.s32 %s20, %s27
    %p286 = scmp.eq.s32.totalorder %s285, 0
    %s288 = sadd.s32 %s287, 1
    %s289 = scalar_select %p286, %s287, %s288
    %p292 = pneg %p286
    %p293 = scmp.eq.s32.totalorder %s20, 1
    %p294 = por %p292, %p293
    %p295 = scmp.ne.s32.totalorder %s287, %s290
    %p296 = scmp.eq.s32.totalorder %s20, 0
    %p297 = por %p295, %p296
    %p298 = scmp.ne.s32.totalorder %s287, %s290
    %p299 = scmp.eq.s32.totalorder %s25, 1
    %p300 = por %p298, %p299
    %p301 = scmp.ne.s32.totalorder %s290, %s291
    %p302 = scmp.eq.s32.totalorder %s25, 0
    %p303 = por %p301, %p302
    %p304 = scmp.ne.s32.totalorder %s290, %s291
    %p305 = scmp.eq.s32.totalorder %s26, 1
    %p306 = por %p304, %p305
    %p308 = scmp.ne.s32.totalorder %s291, %s307
    %p309 = scmp.eq.s32.totalorder %s26, 0
    %p310 = por %p308, %p309
    %p311 = scmp.le.s32.totalorder 1, %s20
    %p312 = scmp.lt.s32.totalorder %s20, 3
    %p313 = pnand %p311, %p312
    %p314 = pneg %p313
    // Predicated region
    $region9: #{model_forward.1} parent=5 // pred_check
      _
    $region10: #{model_forward.1} parent=5 // pred_check_branch
      %316 = sbr.rel (%p313) target = $region12
    $region11: #{model_forward.1} parent=5 // pred_region
      %s317 = ssub.s32 %s20, 1
      // Predicated region
      $region13: #{model_forward.1} parent=11 // pred_check
        %p318 = pneg %p67
      $region14: #{model_forward.1} parent=11 // pred_check_branch
        %320 = sbr.rel (%p318) target = $region16
      $region15: #{model_forward.1} parent=11 // pred_region
        _
      $region16: #{model_forward.1} parent=11 // pred_fallthru
        _
      // Predicated region
      $region17: #{model_forward.1} parent=11 // pred_check
        %p321 = pneg %p88
      $region18: #{model_forward.1} parent=11 // pred_check_branch
        %323 = sbr.rel (%p321) target = $region20
      $region19: #{model_forward.1} parent=11 // pred_region
        _
      $region20: #{model_forward.1} parent=11 // pred_fallthru
        _
      // Predicated region
      $region21: #{model_forward.1} parent=11 // pred_check
        %p324 = pneg %p109
      $region22: #{model_forward.1} parent=11 // pred_check_branch
        %326 = sbr.rel (%p324) target = $region24
      $region23: #{model_forward.1} parent=11 // pred_region
        _
      $region24: #{model_forward.1} parent=11 // pred_fallthru
        _
      // Predicated region
      $region25: #{model_forward.1} parent=11 // pred_check
        %p327 = pneg %p130
      $region26: #{model_forward.1} parent=11 // pred_check_branch
        %329 = sbr.rel (%p327) target = $region28
      $region27: #{model_forward.1} parent=11 // pred_region
        _
      $region28: #{model_forward.1} parent=11 // pred_fallthru
        _
      // Predicated region
      $region29: #{model_forward.1} parent=11 // pred_check
        %p330 = pneg %p151
      $region30: #{model_forward.1} parent=11 // pred_check_branch
        %332 = sbr.rel (%p330) target = $region32
      $region31: #{model_forward.1} parent=11 // pred_region
        _
      $region32: #{model_forward.1} parent=11 // pred_fallthru
        _
      // Predicated region
      $region33: #{model_forward.1} parent=11 // pred_check
        %p333 = pneg %p172
      $region34: #{model_forward.1} parent=11 // pred_check_branch
        %335 = sbr.rel (%p333) target = $region36
      $region35: #{model_forward.1} parent=11 // pred_region
        _
      $region36: #{model_forward.1} parent=11 // pred_fallthru
        _
      // Predicated region
      $region37: #{model_forward.1} parent=11 // pred_check
        %p336 = pneg %p193
      $region38: #{model_forward.1} parent=11 // pred_check_branch
        %338 = sbr.rel (%p336) target = $region40
      $region39: #{model_forward.1} parent=11 // pred_region
        _
      $region40: #{model_forward.1} parent=11 // pred_fallthru
        _
      // Predicated region
      $region41: #{model_forward.1} parent=11 // pred_check
        %p339 = pneg %p214
      $region42: #{model_forward.1} parent=11 // pred_check_branch
        %341 = sbr.rel (%p339) target = $region44
      $region43: #{model_forward.1} parent=11 // pred_region
        _
      $region44: #{model_forward.1} parent=11 // pred_fallthru
        _
      // Predicated region
      $region45: #{model_forward.1} parent=11 // pred_check
        %p342 = pneg %p235
      $region46: #{model_forward.1} parent=11 // pred_check_branch
        %344 = sbr.rel (%p342) target = $region48
      $region47: #{model_forward.1} parent=11 // pred_region
        _
      $region48: #{model_forward.1} parent=11 // pred_fallthru
        _
      // Predicated region
      $region49: #{model_forward.1} parent=11 // pred_check
        %p345 = pneg %p256
      $region50: #{model_forward.1} parent=11 // pred_check_branch
        %347 = sbr.rel (%p345) target = $region52
      $region51: #{model_forward.1} parent=11 // pred_region
        _
      $region52: #{model_forward.1} parent=11 // pred_fallthru
        _
      // Predicated region
      $region53: #{model_forward.1} parent=11 // pred_check
        %p348 = pneg %p277
      $region54: #{model_forward.1} parent=11 // pred_check_branch
        %350 = sbr.rel (%p348) target = $region56
      $region55: #{model_forward.1} parent=11 // pred_region
        _
      $region56: #{model_forward.1} parent=11 // pred_fallthru
        _
    $region12: #{model_forward.1} parent=5 // pred_fallthru
      _
    %p351 = scmp.lt.s32.totalorder %s20, 2
    // Predicated region
    $region57: #{model_forward.1} parent=5 // pred_check
      %p352 = pneg %p351
    $region58: #{model_forward.1} parent=5 // pred_check_branch
      %354 = sbr.rel (%p352) target = $region60
    $region59: #{model_forward.1} parent=5 // pred_region
      // Predicated region
      $region61: #{model_forward.1} parent=59 // pred_check
        %p355 = pneg %p40
      $region62: #{model_forward.1} parent=59 // pred_check_branch
        %357 = sbr.rel (%p355) target = $region64
      $region63: #{model_forward.1} parent=59 // pred_region
        %p358 = scmp.lt.s32.totalorder %s20, 1
        %s359 = scalar_select %p358, %s20, 1
        %s360 = smul.addr %s359, 41
        %s361 = smul.addr %s360, 8
        %s362 = scalar_lea.vmem %s0, %s361
      $region64: #{model_forward.1} parent=59 // pred_fallthru
        _
    $region60: #{model_forward.1} parent=5 // pred_fallthru
      _
    %p363 = scmp.le.s32.totalorder 1, %s20
    %p364 = scmp.lt.s32.totalorder %s20, 3
    %p365 = pnand %p363, %p364
    %p366 = pneg %p365
    // Predicated region
    $region65: #{model_forward.1} parent=5 // pred_check
      _
    $region66: #{model_forward.1} parent=5 // pred_check_branch
      %368 = sbr.rel (%p365) target = $region68
    $region67: #{model_forward.1} parent=5 // pred_region
      %s369 = ssub.s32 %s20, 1
      %p370 = scmp.lt.s32.totalorder %s25, 1
      %s371 = scalar_select %p370, %s25, 1
      %s372 = smul.addr %s371, 41
      %s373 = smul.addr %s372, 8
      %s374 = scalar_lea.vmem %s0, %s373
      %p375 = pneg %p46
      %p376 = pneg %p43
      %p377 = pneg %p67
      %p378 = pneg %p64
      %p379 = pneg %p88
      %p380 = pneg %p85
      %p381 = pneg %p109
      %p382 = pneg %p106
      %p383 = pneg %p130
      %p384 = pneg %p127
      %p385 = pneg %p151
      %p386 = pneg %p148
      %p387 = pneg %p172
      %p388 = pneg %p169
      %p389 = pneg %p193
      %p390 = pneg %p190
      %p391 = pneg %p214
      %p392 = pneg %p211
      %p393 = pneg %p235
      %p394 = pneg %p232
      %p395 = pneg %p256
      %p396 = pneg %p253
      %p397 = pneg %p277
      %p398 = pneg %p274
      %p399 = pneg %p303
      %p400 = pneg %p300
      %p401 = scmp.lt.s32.totalorder %s25, 1
      %s402 = scalar_select %p401, %s25, 1
      %s403 = scalar_lea.vmem %s12, %s402
      %p404 = scmp.lt.s32.totalorder %s25, 1
      %s405 = scalar_select %p404, %s25, 1
      %s406 = smul.addr %s405, 41
      %s407 = smul.addr %s406, 8
      %s408 = scalar_lea.vmem %s0, %s407
      %p409 = scmp.lt.s32.totalorder %s25, 1
      %s410 = scalar_select %p409, %s25, 1
      %s411 = scalar_lea.vmem %s12, %s410
      %v413 = vld [vmem:[%s408] sm:$0xff]
      %v414 = vld [vmem:[%s408 + $0x8] sm:$0xff]
      %v415 = vld [vmem:[%s408 + $0x10] sm:$0xff]
      %v416 = vld [vmem:[%s408 + $0x18] sm:$0xff]
      %v417 = vld [vmem:[%s408 + $0x20] sm:$0xff]
      %v418 = vld [vmem:[%s408 + $0x28] sm:$0xff]
      %v419 = vld [vmem:[%s408 + $0x30] sm:$0xff]
      %v420 = vld [vmem:[%s408 + $0x38] sm:$0xff]
      %v421 = vld [vmem:[%s408 + $0x40] sm:$0xff]
      %v422 = vld [vmem:[%s408 + $0x48] sm:$0xff]
      %v423 = vld [vmem:[%s408 + $0x50] sm:$0xff]
      %v424 = vld [vmem:[%s408 + $0x58] sm:$0xff]
      %v425 = vld [vmem:[%s408 + $0x60] sm:$0xff]
      %v426 = vld [vmem:[%s408 + $0x68] sm:$0xff]
      %v427 = vld [vmem:[%s408 + $0x70] sm:$0xff]
      %v428 = vld [vmem:[%s408 + $0x78] sm:$0xff]
      %v429 = vld [vmem:[%s408 + $0x80] sm:$0xff]
      %v430 = vld [vmem:[%s408 + $0x88] sm:$0xff]
      %v431 = vld [vmem:[%s408 + $0x90] sm:$0xff]
      %v432 = vld [vmem:[%s408 + $0x98] sm:$0xff]
      %v433 = vld [vmem:[%s408 + $0xa0] sm:$0xff]
      %v434 = vld [vmem:[%s408 + $0xa8] sm:$0xff]
      %v435 = vld [vmem:[%s408 + $0xb0] sm:$0xff]
      %v436 = vld [vmem:[%s408 + $0xb8] sm:$0xff]
      %v437 = vld [vmem:[%s408 + $0xc0] sm:$0xff]
      %v438 = vld [vmem:[%s408 + $0xc8] sm:$0xff]
      %v439 = vld [vmem:[%s408 + $0xd0] sm:$0xff]
      %v440 = vld [vmem:[%s408 + $0xd8] sm:$0xff]
      %v441 = vld [vmem:[%s408 + $0xe0] sm:$0xff]
      %v442 = vld [vmem:[%s408 + $0xe8] sm:$0xff]
      %v443 = vld [vmem:[%s408 + $0xf0] sm:$0xff]
      %v444 = vld [vmem:[%s408 + $0xf8] sm:$0xff]
      %v445 = vld [vmem:[%s408 + $0x100] sm:$0xff]
      %v446 = vld [vmem:[%s408 + $0x108] sm:$0xff]
      %v447 = vld [vmem:[%s408 + $0x110] sm:$0xff]
      %v448 = vld [vmem:[%s408 + $0x118] sm:$0x3f]
      %v449 = vpack.c.bf16 %v414, %v413
      %v450 = vpack.c.bf16 %v416, %v415
      %v451 = vpack.c.bf16 %v418, %v417
      %v452 = vpack.c.bf16 %v420, %v419
      %v453 = vpack.c.bf16 %v422, %v421
      %v454 = vpack.c.bf16 %v424, %v423
      %v455 = vpack.c.bf16 %v426, %v425
      %v456 = vpack.c.bf16 %v428, %v427
      %v457 = vpack.c.bf16 %v430, %v429
      %v458 = vpack.c.bf16 %v432, %v431
      %v459 = vpack.c.bf16 %v434, %v433
      %v460 = vpack.c.bf16 %v436, %v435
      %v461 = vpack.c.bf16 %v438, %v437
      %v462 = vpack.c.bf16 %v440, %v439
      %v463 = vpack.c.bf16 %v442, %v441
      %v464 = vpack.c.bf16 %v444, %v443
      %v465 = vpack.c.bf16 %v446, %v445
      %v466 = vpack.c.bf16 %v448, %v447
      %v467 = vld [vmem:[%s1] sm:$0x3]
      %v468 = vld [vmem:[%s408 + $0x1] sm:$0xff]
      %v469 = vld [vmem:[%s408 + $0x9] sm:$0xff]
      %v470 = vld [vmem:[%s408 + $0x11] sm:$0xff]
      %v471 = vld [vmem:[%s408 + $0x19] sm:$0xff]
      %v472 = vld [vmem:[%s408 + $0x21] sm:$0xff]
      %v473 = vld [vmem:[%s408 + $0x29] sm:$0xff]
      %v474 = vld [vmem:[%s408 + $0x31] sm:$0xff]
      %v475 = vld [vmem:[%s408 + $0x39] sm:$0xff]
      %v476 = vld [vmem:[%s408 + $0x41] sm:$0xff]
      %v477 = vld [vmem:[%s408 + $0x49] sm:$0xff]
      %v478 = vld [vmem:[%s408 + $0x51] sm:$0xff]
      %v479 = vld [vmem:[%s408 + $0x59] sm:$0xff]
      %v480 = vld [vmem:[%s408 + $0x61] sm:$0xff]
      %v481 = vld [vmem:[%s408 + $0x69] sm:$0xff]
      %v482 = vld [vmem:[%s408 + $0x71] sm:$0xff]
      %v483 = vld [vmem:[%s408 + $0x79] sm:$0xff]
      %v484 = vld [vmem:[%s408 + $0x81] sm:$0xff]
      %v485 = vld [vmem:[%s408 + $0x89] sm:$0xff]
      %v486 = vld [vmem:[%s408 + $0x91] sm:$0xff]
      %v487 = vld [vmem:[%s408 + $0x99] sm:$0xff]
      %v488 = vld [vmem:[%s408 + $0xa1] sm:$0xff]
      %v489 = vld [vmem:[%s408 + $0xa9] sm:$0xff]
      %v490 = vld [vmem:[%s408 + $0xb1] sm:$0xff]
      %v491 = vld [vmem:[%s408 + $0xb9] sm:$0xff]
      %v492 = vld [vmem:[%s408 + $0xc1] sm:$0xff]
      %v493 = vld [vmem:[%s408 + $0xc9] sm:$0xff]
      %v494 = vld [vmem:[%s408 + $0xd1] sm:$0xff]
      %v495 = vld [vmem:[%s408 + $0xd9] sm:$0xff]
      %v496 = vld [vmem:[%s408 + $0xe1] sm:$0xff]
      %v497 = vld [vmem:[%s408 + $0xe9] sm:$0xff]
      %v498 = vld [vmem:[%s408 + $0xf1] sm:$0xff]
      %v499 = vld [vmem:[%s408 + $0xf9] sm:$0xff]
      %v500 = vld [vmem:[%s408 + $0x101] sm:$0xff]
      %v501 = vld [vmem:[%s408 + $0x109] sm:$0xff]
      %v502 = vld [vmem:[%s408 + $0x111] sm:$0xff]
      %v503 = vld [vmem:[%s408 + $0x119] sm:$0x3f]
      %v504 = vpack.c.bf16 %v469, %v468
      %v505 = vpack.c.bf16 %v471, %v470
      %v506 = vpack.c.bf16 %v473, %v472
      %v507 = vpack.c.bf16 %v475, %v474
      %v508 = vpack.c.bf16 %v477, %v476
      %v509 = vpack.c.bf16 %v479, %v478
      %v510 = vpack.c.bf16 %v481, %v480
      %v511 = vpack.c.bf16 %v483, %v482
      %v512 = vpack.c.bf16 %v485, %v484
      %v513 = vpack.c.bf16 %v487, %v486
      %v514 = vpack.c.bf16 %v489, %v488
      %v515 = vpack.c.bf16 %v491, %v490
      %v516 = vpack.c.bf16 %v493, %v492
      %v517 = vpack.c.bf16 %v495, %v494
      %v518 = vpack.c.bf16 %v497, %v496
      %v519 = vpack.c.bf16 %v499, %v498
      %v520 = vpack.c.bf16 %v501, %v500
      %v521 = vpack.c.bf16 %v503, %v502
      %s522 = scalar_lea.vmem %s1, 2
      %v523 = vld [vmem:[%s522] sm:$0x3]
      %vm524 = vcmask 23552
      %v526 = vsel %vm524, %v504, 0
      %v529 = vsel %vm524, %v505, 0
      %v532 = vsel %vm524, %v506, 0
      %v535 = vsel %vm524, %v507, 0
      %v538 = vsel %vm524, %v508, 0
      %v541 = vsel %vm524, %v509, 0
      %v544 = vsel %vm524, %v510, 0
      %v547 = vsel %vm524, %v511, 0
      %v550 = vsel %vm524, %v512, 0
      %v553 = vsel %vm524, %v513, 0
      %v556 = vsel %vm524, %v514, 0
      %v559 = vsel %vm524, %v515, 0
      %v562 = vsel %vm524, %v516, 0
      %v565 = vsel %vm524, %v517, 0
      %v568 = vsel %vm524, %v518, 0
      %v571 = vsel %vm524, %v519, 0
      %v574 = vsel %vm524, %v520, 0
      %v577 = vsel %vm524, %v521, 0
      %vm579 = vcmask 1040384
      %vm580 = vcmask 1041408
      %v581 = vsel %vm579, 4294967295, 65535
      %v582 = vsel %vm580, %v581, 0
      %v584 = vand.u32 %v523, %v582
      %586 = vmatprep.subr.bf16.mxu0 0
      %587 = vmatpush1.bf16.msra.mxu0 %v584
      %588 = vmatprep.subr.bf16.mxu0 0
      %589 = vmatpush1.bf16.msra.mxu0 0
      %590 = vmatprep.subr.bf16.mxu0 0
      %591 = vmatpush1.bf16.msra.mxu0 0
      %592 = vmatprep.subr.bf16.mxu0 0
      %593 = vmatpush1.bf16.msra.mxu0 0
      %594 = vmatprep.subr.bf16.mxu0 0
      %595 = vmatpush1.bf16.msra.mxu0 0
      %596 = vmatprep.subr.bf16.mxu0 0
      %597 = vmatpush1.bf16.msra.mxu0 0
      %598 = vmatprep.subr.bf16.mxu0 0
      %599 = vmatpush1.bf16.msra.mxu0 0
      %600 = vmatprep.subr.bf16.mxu0 0
      %601 = vmatpush1.bf16.msra.mxu0 0
      %602 = vmatprep.subr.bf16.mxu0 0
      %603 = vmatpush1.bf16.msra.mxu0 0
      %604 = vmatprep.subr.bf16.mxu0 0
      %605 = vmatpush1.bf16.msra.mxu0 0
      %606 = vmatprep.subr.bf16.mxu0 0
      %607 = vmatpush1.bf16.msra.mxu0 0
      %608 = vmatprep.subr.bf16.mxu0 0
      %609 = vmatpush1.bf16.msra.mxu0 0
      %610 = vmatprep.subr.bf16.mxu0 0
      %611 = vmatpush1.bf16.msra.mxu0 0
      %612 = vmatprep.subr.bf16.mxu0 0
      %613 = vmatpush1.bf16.msra.mxu0 0
      %614 = vmatprep.subr.bf16.mxu0 0
      %615 = vmatpush1.bf16.msra.mxu0 0
      %616 = vmatprep.subr.bf16.mxu0 0
      %617 = vmatpush1.bf16.msra.mxu0 0
      %618 = vmatprep.mubr.bf16.mxu0 0
      %619 = vmatmul.mubr.bf16.gmra.mrb[0].mxu0 %v526
      %v620 = vpop.f32.mrb[0].mxu0
      %v621 = vadd.f32 0.0, %v620
      %v622 = vpop.f32.mrb[0].mxu0
      %v623 = vpop.f32.mrb[0].mxu0
      %v624 = vadd.f32 0.0, %v623
      %v625 = vpop.f32.mrb[0].mxu0
      %626 = vmatprep.mubr.bf16.mxu0 0
      %627 = vmatmul.mubr.bf16.gmra.mrb[0].mxu0 %v529
      %v628 = vpop.f32.mrb[0].mxu0
      %v629 = vadd.f32 0.0, %v628
      %v630 = vpop.f32.mrb[0].mxu0
      %v631 = vpop.f32.mrb[0].mxu0
      %v632 = vadd.f32 0.0, %v631
      %v633 = vpop.f32.mrb[0].mxu0
      %634 = vmatprep.mubr.bf16.mxu0 0
      %635 = vmatmul.mubr.bf16.gmra.mrb[0].mxu0 %v532
      %v636 = vpop.f32.mrb[0].mxu0
      %v637 = vadd.f32 0.0, %v636
      %v638 = vpop.f32.mrb[0].mxu0
      %v639 = vpop.f32.mrb[0].mxu0
      %v640 = vadd.f32 0.0, %v639
      %v641 = vpop.f32.mrb[0].mxu0
      %642 = vmatprep.mubr.bf16.mxu0 0
      %643 = vmatmul.mubr.bf16.gmra.mrb[0].mxu0 %v535
      %v644 = vpop.f32.mrb[0].mxu0
      %v645 = vadd.f32 0.0, %v644
      %v646 = vpop.f32.mrb[0].mxu0
      %v647 = vpop.f32.mrb[0].mxu0
      %v648 = vadd.f32 0.0, %v647
      %v649 = vpop.f32.mrb[0].mxu0
      %650 = vmatprep.mubr.bf16.mxu0 0
      %651 = vmatmul.mubr.bf16.gmra.mrb[0].mxu0 %v538
      %v652 = vpop.f32.mrb[0].mxu0
      %v653 = vadd.f32 0.0, %v652
      %v654 = vpop.f32.mrb[0].mxu0
      %v655 = vpop.f32.mrb[0].mxu0
      %v656 = vadd.f32 0.0, %v655
      %v657 = vpop.f32.mrb[0].mxu0
      %658 = vmatprep.mubr.bf16.mxu0 0
      %659 = vmatmul.mubr.bf16.gmra.mrb[0].mxu0 %v541
      %v660 = vpop.f32.mrb[0].mxu0
      %v661 = vadd.f32 0.0, %v660
      %v662 = vpop.f32.mrb[0].mxu0
      %v663 = vpop.f32.mrb[0].mxu0
      %v664 = vadd.f32 0.0, %v663
      %v665 = vpop.f32.mrb[0].mxu0
      %666 = vmatprep.mubr.bf16.mxu0 0
      %667 = vmatmul.mubr.bf16.gmra.mrb[0].mxu0 %v544
      %v668 = vpop.f32.mrb[0].mxu0
      %v669 = vadd.f32 0.0, %v668
      %v670 = vpop.f32.mrb[0].mxu0
      %v671 = vpop.f32.mrb[0].mxu0
      %v672 = vadd.f32 0.0, %v671
      %v673 = vpop.f32.mrb[0].mxu0
      %674 = vmatprep.mubr.bf16.mxu0 0
      %675 = vmatmul.mubr.bf16.gmra.mrb[0].mxu0 %v547
      %v676 = vpop.f32.mrb[0].mxu0
      %v677 = vadd.f32 0.0, %v676
      %v678 = vpop.f32.mrb[0].mxu0
      %v679 = vpop.f32.mrb[0].mxu0
      %v680 = vadd.f32 0.0, %v679
      %v681 = vpop.f32.mrb[0].mxu0
      %682 = vmatprep.mubr.bf16.mxu0 0
      %683 = vmatmul.mubr.bf16.gmra.mrb[0].mxu0 %v550
      %v684 = vpop.f32.mrb[0].mxu0
      %v685 = vadd.f32 0.0, %v684
      %v686 = vpop.f32.mrb[0].mxu0
      %v687 = vpop.f32.mrb[0].mxu0
      %v688 = vadd.f32 0.0, %v687
      %v689 = vpop.f32.mrb[0].mxu0
      %690 = vmatprep.mubr.bf16.mxu0 0
      %691 = vmatmul.mubr.bf16.gmra.mrb[0].mxu0 %v553
      %v692 = vpop.f32.mrb[0].mxu0
      %v693 = vadd.f32 0.0, %v692
      %v694 = vpop.f32.mrb[0].mxu0
      %v695 = vpop.f32.mrb[0].mxu0
      %v696 = vadd.f32 0.0, %v695
      %v697 = vpop.f32.mrb[0].mxu0
      %698 = vmatprep.mubr.bf16.mxu0 0
      %699 = vmatmul.mubr.bf16.gmra.mrb[0].mxu0 %v556
      %v700 = vpop.f32.mrb[0].mxu0
      %v701 = vadd.f32 0.0, %v700
      %v702 = vpop.f32.mrb[0].mxu0
      %v703 = vpop.f32.mrb[0].mxu0
      %v704 = vadd.f32 0.0, %v703
      %v705 = vpop.f32.mrb[0].mxu0
      %706 = vmatprep.mubr.bf16.mxu0 0
      %707 = vmatmul.mubr.bf16.gmra.mrb[0].mxu0 %v559
      %v708 = vpop.f32.mrb[0].mxu0
      %v709 = vadd.f32 0.0, %v708
      %v710 = vpop.f32.mrb[0].mxu0
      %v711 = vpop.f32.mrb[0].mxu0
      %v712 = vadd.f32 0.0, %v711
      %v713 = vpop.f32.mrb[0].mxu0
      %714 = vmatprep.mubr.bf16.mxu0 0
      %715 = vmatmul.mubr.bf16.gmra.mrb[0].mxu0 %v562
      %v716 = vpop.f32.mrb[0].mxu0
      %v717 = vadd.f32 0.0, %v716
      %v718 = vpop.f32.mrb[0].mxu0
      %v719 = vpop.f32.mrb[0].mxu0
      %v720 = vadd.f32 0.0, %v719
      %v721 = vpop.f32.mrb[0].mxu0
      %722 = vmatprep.mubr.bf16.mxu0 0
      %723 = vmatmul.mubr.bf16.gmra.mrb[0].mxu0 %v565
      %v724 = vpop.f32.mrb[0].mxu0
      %v725 = vadd.f32 0.0, %v724
      %v726 = vpop.f32.mrb[0].mxu0
      %v727 = vpop.f32.mrb[0].mxu0
      %v728 = vadd.f32 0.0, %v727
      %v729 = vpop.f32.mrb[0].mxu0
      %730 = vmatprep.mubr.bf16.mxu0 0
      %731 = vmatmul.mubr.bf16.gmra.mrb[0].mxu0 %v568
      %v732 = vpop.f32.mrb[0].mxu0
      %v733 = vadd.f32 0.0, %v732
      %v734 = vpop.f32.mrb[0].mxu0
      %v735 = vpop.f32.mrb[0].mxu0
      %v736 = vadd.f32 0.0, %v735
      %v737 = vpop.f32.mrb[0].mxu0
      %738 = vmatprep.mubr.bf16.mxu0 0
      %739 = vmatmul.mubr.bf16.gmra.mrb[0].mxu0 %v571
      %v740 = vpop.f32.mrb[0].mxu0
      %v741 = vadd.f32 0.0, %v740
      %v742 = vpop.f32.mrb[0].mxu0
      %v743 = vpop.f32.mrb[0].mxu0
      %v744 = vadd.f32 0.0, %v743
      %v745 = vpop.f32.mrb[0].mxu0
      %746 = vmatprep.mubr.bf16.mxu0 0
      %747 = vmatmul.mubr.bf16.gmra.mrb[0].mxu0 %v574
      %v748 = vpop.f32.mrb[0].mxu0
      %v749 = vadd.f32 0.0, %v748
      %v750 = vpop.f32.mrb[0].mxu0
      %v751 = vpop.f32.mrb[0].mxu0
      %v752 = vadd.f32 0.0, %v751
      %v753 = vpop.f32.mrb[0].mxu0
      %754 = vmatprep.mubr.bf16.mxu0 0
      %755 = vmatmul.mubr.bf16.gmra.mrb[0].mxu0 %v577
      %v756 = vpop.f32.mrb[0].mxu0
      %v757 = vadd.f32 0.0, %v756
      %v758 = vpop.f32.mrb[0].mxu0
      %v759 = vpop.f32.mrb[0].mxu0
      %v760 = vadd.f32 0.0, %v759
      %v761 = vpop.f32.mrb[0].mxu0
      %762 = vdwg.mxu0
      %v764 = vsel %vm524, %v449, 0
      %v767 = vsel %vm524, %v450, 0
      %v770 = vsel %vm524, %v451, 0
      %v773 = vsel %vm524, %v452, 0
      %v776 = vsel %vm524, %v453, 0
      %v779 = vsel %vm524, %v454, 0
      %v782 = vsel %vm524, %v455, 0
      %v785 = vsel %vm524, %v456, 0
      %v788 = vsel %vm524, %v457, 0
      %v791 = vsel %vm524, %v458, 0
      %v794 = vsel %vm524, %v459, 0
      %v797 = vsel %vm524, %v460, 0
      %v800 = vsel %vm524, %v461, 0
      %v803 = vsel %vm524, %v462, 0
      %v806 = vsel %vm524, %v463, 0
      %v809 = vsel %vm524, %v464, 0
      %v812 = vsel %vm524, %v465, 0
      %v815 = vsel %vm524, %v466, 0
      %v818 = vand.u32 %v467, %v582
      %820 = vmatprep.subr.bf16.mxu0 0
      %821 = vmatpush1.bf16.msra.mxu0 %v818
      %822 = vmatprep.subr.bf16.mxu0 0
      %823 = vmatpush1.bf16.msra.mxu0 0
      %824 = vmatprep.subr.bf16.mxu0 0
      %825 = vmatpush1.bf16.msra.mxu0 0
      %826 = vmatprep.subr.bf16.mxu0 0
      %827 = vmatpush1.bf16.msra.mxu0 0
      %828 = vmatprep.subr.bf16.mxu0 0
      %829 = vmatpush1.bf16.msra.mxu0 0
      %830 = vmatprep.subr.bf16.mxu0 0
      %831 = vmatpush1.bf16.msra.mxu0 0
      %832 = vmatprep.subr.bf16.mxu0 0
      %833 = vmatpush1.bf16.msra.mxu0 0
      %834 = vmatprep.subr.bf16.mxu0 0
      %835 = vmatpush1.bf16.msra.mxu0 0
      %836 = vmatprep.subr.bf16.mxu0 0
      %837 = vmatpush1.bf16.msra.mxu0 0
      %838 = vmatprep.subr.bf16.mxu0 0
      %839 = vmatpush1.bf16.msra.mxu0 0
      %840 = vmatprep.subr.bf16.mxu0 0
      %841 = vmatpush1.bf16.msra.mxu0 0
      %842 = vmatprep.subr.bf16.mxu0 0
      %843 = vmatpush1.bf16.msra.mxu0 0
      %844 = vmatprep.subr.bf16.mxu0 0
      %845 = vmatpush1.bf16.msra.mxu0 0
      %846 = vmatprep.subr.bf16.mxu0 0
      %847 = vmatpush1.bf16.msra.mxu0 0
      %848 = vmatprep.subr.bf16.mxu0 0
      %849 = vmatpush1.bf16.msra.mxu0 0
      %850 = vmatprep.subr.bf16.mxu0 0
      %851 = vmatpush1.bf16.msra.mxu0 0
      %852 = vmatprep.mubr.bf16.mxu0 0
      %853 = vmatmul.mubr.bf16.gmra.mrb[0].mxu0 %v764
      %v854 = vpop.f32.mrb[0].mxu0
      %v855 = vadd.f32 %v621, %v854
      %v856 = vpop.f32.mrb[0].mxu0
      %v857 = vpop.f32.mrb[0].mxu0
      %v858 = vadd.f32 %v624, %v857
      %v859 = vpop.f32.mrb[0].mxu0
      %860 = vmatprep.mubr.bf16.mxu0 0
      %861 = vmatmul.mubr.bf16.gmra.mrb[0].mxu0 %v767
      %v862 = vpop.f32.mrb[0].mxu0
      %v863 = vadd.f32 %v629, %v862
      %v864 = vpop.f32.mrb[0].mxu0
      %v865 = vpop.f32.mrb[0].mxu0
      %v866 = vadd.f32 %v632, %v865
      %v867 = vpop.f32.mrb[0].mxu0
      %868 = vmatprep.mubr.bf16.mxu0 0
      %869 = vmatmul.mubr.bf16.gmra.mrb[0].mxu0 %v770
      %v870 = vpop.f32.mrb[0].mxu0
      %v871 = vadd.f32 %v637, %v870
      %v872 = vpop.f32.mrb[0].mxu0
      %v873 = vpop.f32.mrb[0].mxu0
      %v874 = vadd.f32 %v640, %v873
      %v875 = vpop.f32.mrb[0].mxu0
      %876 = vmatprep.mubr.bf16.mxu0 0
      %877 = vmatmul.mubr.bf16.gmra.mrb[0].mxu0 %v773
      %v878 = vpop.f32.mrb[0].mxu0
      %v879 = vadd.f32 %v645, %v878
      %v880 = vpop.f32.mrb[0].mxu0
      %v881 = vpop.f32.mrb[0].mxu0
      %v882 = vadd.f32 %v648, %v881
      %v883 = vpop.f32.mrb[0].mxu0
      %884 = vmatprep.mubr.bf16.mxu0 0
      %885 = vmatmul.mubr.bf16.gmra.mrb[0].mxu0 %v776
      %v886 = vpop.f32.mrb[0].mxu0
      %v887 = vadd.f32 %v653, %v886
      %v888 = vpop.f32.mrb[0].mxu0
      %v889 = vpop.f32.mrb[0].mxu0
      %v890 = vadd.f32 %v656, %v889
      %v891 = vpop.f32.mrb[0].mxu0
      %892 = vmatprep.mubr.bf16.mxu0 0
      %893 = vmatmul.mubr.bf16.gmra.mrb[0].mxu0 %v779
      %v894 = vpop.f32.mrb[0].mxu0
      %v895 = vadd.f32 %v661, %v894
      %v896 = vpop.f32.mrb[0].mxu0
      %v897 = vpop.f32.mrb[0].mxu0
      %v898 = vadd.f32 %v664, %v897
      %v899 = vpop.f32.mrb[0].mxu0
      %900 = vmatprep.mubr.bf16.mxu0 0
      %901 = vmatmul.mubr.bf16.gmra.mrb[0].mxu0 %v782
      %v902 = vpop.f32.mrb[0].mxu0
      %v903 = vadd.f32 %v669, %v902
      %v904 = vpop.f32.mrb[0].mxu0
      %v905 = vpop.f32.mrb[0].mxu0
      %v906 = vadd.f32 %v672, %v905
      %v907 = vpop.f32.mrb[0].mxu0
      %908 = vmatprep.mubr.bf16.mxu0 0
      %909 = vmatmul.mubr.bf16.gmra.mrb[0].mxu0 %v785
      %v910 = vpop.f32.mrb[0].mxu0
      %v911 = vadd.f32 %v677, %v910
      %v912 = vpop.f32.mrb[0].mxu0
      %v913 = vpop.f32.mrb[0].mxu0
      %v914 = vadd.f32 %v680, %v913
      %v915 = vpop.f32.mrb[0].mxu0
      %916 = vmatprep.mubr.bf16.mxu0 0
      %917 = vmatmul.mubr.bf16.gmra.mrb[0].mxu0 %v788
      %v918 = vpop.f32.mrb[0].mxu0
      %v919 = vadd.f32 %v685, %v918
      %v920 = vpop.f32.mrb[0].mxu0
      %v921 = vpop.f32.mrb[0].mxu0
      %v922 = vadd.f32 %v688, %v921
      %v923 = vpop.f32.mrb[0].mxu0
      %924 = vmatprep.mubr.bf16.mxu0 0
      %925 = vmatmul.mubr.bf16.gmra.mrb[0].mxu0 %v791
      %v926 = vpop.f32.mrb[0].mxu0
      %v927 = vadd.f32 %v693, %v926
      %v928 = vpop.f32.mrb[0].mxu0
      %v929 = vpop.f32.mrb[0].mxu0
      %v930 = vadd.f32 %v696, %v929
      %v931 = vpop.f32.mrb[0].mxu0
      %932 = vmatprep.mubr.bf16.mxu0 0
      %933 = vmatmul.mubr.bf16.gmra.mrb[0].mxu0 %v794
      %v934 = vpop.f32.mrb[0].mxu0
      %v935 = vadd.f32 %v701, %v934
      %v936 = vpop.f32.mrb[0].mxu0
      %v937 = vpop.f32.mrb[0].mxu0
      %v938 = vadd.f32 %v704, %v937
      %v939 = vpop.f32.mrb[0].mxu0
      %940 = vmatprep.mubr.bf16.mxu0 0
      %941 = vmatmul.mubr.bf16.gmra.mrb[0].mxu0 %v797
      %v942 = vpop.f32.mrb[0].mxu0
      %v943 = vadd.f32 %v709, %v942
      %v944 = vpop.f32.mrb[0].mxu0
      %v945 = vpop.f32.mrb[0].mxu0
      %v946 = vadd.f32 %v712, %v945
      %v947 = vpop.f32.mrb[0].mxu0
      %948 = vmatprep.mubr.bf16.mxu0 0
      %949 = vmatmul.mubr.bf16.gmra.mrb[0].mxu0 %v800
      %v950 = vpop.f32.mrb[0].mxu0
      %v951 = vadd.f32 %v717, %v950
      %v952 = vpop.f32.mrb[0].mxu0
      %v953 = vpop.f32.mrb[0].mxu0
      %v954 = vadd.f32 %v720, %v953
      %v955 = vpop.f32.mrb[0].mxu0
      %956 = vmatprep.mubr.bf16.mxu0 0
      %957 = vmatmul.mubr.bf16.gmra.mrb[0].mxu0 %v803
      %v958 = vpop.f32.mrb[0].mxu0
      %v959 = vadd.f32 %v725, %v958
      %v960 = vpop.f32.mrb[0].mxu0
      %v961 = vpop.f32.mrb[0].mxu0
      %v962 = vadd.f32 %v728, %v961
      %v963 = vpop.f32.mrb[0].mxu0
      %964 = vmatprep.mubr.bf16.mxu0 0
      %965 = vmatmul.mubr.bf16.gmra.mrb[0].mxu0 %v806
      %v966 = vpop.f32.mrb[0].mxu0
      %v967 = vadd.f32 %v733, %v966
      %v968 = vpop.f32.mrb[0].mxu0
      %v969 = vpop.f32.mrb[0].mxu0
      %v970 = vadd.f32 %v736, %v969
      %v971 = vpop.f32.mrb[0].mxu0
      %972 = vmatprep.mubr.bf16.mxu0 0
      %973 = vmatmul.mubr.bf16.gmra.mrb[0].mxu0 %v809
      %v974 = vpop.f32.mrb[0].mxu0
      %v975 = vadd.f32 %v741, %v974
      %v976 = vpop.f32.mrb[0].mxu0
      %v977 = vpop.f32.mrb[0].mxu0
      %v978 = vadd.f32 %v744, %v977
      %v979 = vpop.f32.mrb[0].mxu0
      %980 = vmatprep.mubr.bf16.mxu0 0
      %981 = vmatmul.mubr.bf16.gmra.mrb[0].mxu0 %v812
      %v982 = vpop.f32.mrb[0].mxu0
      %v983 = vadd.f32 %v749, %v982
      %v984 = vpop.f32.mrb[0].mxu0
      %v985 = vpop.f32.mrb[0].mxu0
      %v986 = vadd.f32 %v752, %v985
      %v987 = vpop.f32.mrb[0].mxu0
      %988 = vmatprep.mubr.bf16.mxu0 0
      %989 = vmatmul.mubr.bf16.gmra.mrb[0].mxu0 %v815
      %v990 = vpop.f32.mrb[0].mxu0
      %v991 = vadd.f32 %v757, %v990
      %v992 = vpop.f32.mrb[0].mxu0
      %v993 = vpop.f32.mrb[0].mxu0
      %v994 = vadd.f32 %v760, %v993
      %v995 = vpop.f32.mrb[0].mxu0
      %996 = vdwg.mxu0
      %v997 = vld [vmem:[%s408 + $0x2] sm:$0xff]
      %v998 = vld [vmem:[%s408 + $0xa] sm:$0xff]
      %v999 = vld [vmem:[%s408 + $0x12] sm:$0xff]
      %v1000 = vld [vmem:[%s408 + $0x1a] sm:$0xff]
      %v1001 = vld [vmem:[%s408 + $0x22] sm:$0xff]
      %v1002 = vld [vmem:[%s408 + $0x2a] sm:$0xff]
      %v1003 = vld [vmem:[%s408 + $0x32] sm:$0xff]
      %v1004 = vld [vmem:[%s408 + $0x3a] sm:$0xff]
      %v1005 = vld [vmem:[%s408 + $0x42] sm:$0xff]
      %v1006 = vld [vmem:[%s408 + $0x4a] sm:$0xff]
      %v1007 = vld [vmem:[%s408 + $0x52] sm:$0xff]
      %v1008 = vld [vmem:[%s408 + $0x5a] sm:$0xff]
      %v1009 = vld [vmem:[%s408 + $0x62] sm:$0xff]
      %v1010 = vld [vmem:[%s408 + $0x6a] sm:$0xff]
      %v1011 = vld [vmem:[%s408 + $0x72] sm:$0xff]
      %v1012 = vld [vmem:[%s408 + $0x7a] sm:$0xff]
      %v1013 = vld [vmem:[%s408 + $0x82] sm:$0xff]
      %v1014 = vld [vmem:[%s408 + $0x8a] sm:$0xff]
      %v1015 = vld [vmem:[%s408 + $0x92] sm:$0xff]
      %v1016 = vld [vmem:[%s408 + $0x9a] sm:$0xff]
      %v1017 = vld [vmem:[%s408 + $0xa2] sm:$0xff]
      %v1018 = vld [vmem:[%s408 + $0xaa] sm:$0xff]
      %v1019 = vld [vmem:[%s408 + $0xb2] sm:$0xff]
      %v1020 = vld [vmem:[%s408 + $0xba] sm:$0xff]
      %v1021 = vld [vmem:[%s408 + $0xc2] sm:$0xff]
      %v1022 = vld [vmem:[%s408 + $0xca] sm:$0xff]
      %v1023 = vld [vmem:[%s408 + $0xd2] sm:$0xff]
      %v1024 = vld [vmem:[%s408 + $0xda] sm:$0xff]
      %v1025 = vld [vmem:[%s408 + $0xe2] sm:$0xff]
      %v1026 = vld [vmem:[%s408 + $0xea] sm:$0xff]
      %v1027 = vld [vmem:[%s408 + $0xf2] sm:$0xff]
      %v1028 = vld [vmem:[%s408 + $0xfa] sm:$0xff]
      %v1029 = vld [vmem:[%s408 + $0x102] sm:$0xff]
      %v1030 = vld [vmem:[%s408 + $0x10a] sm:$0xff]
      %v1031 = vld [vmem:[%s408 + $0x112] sm:$0xff]
      %v1032 = vld [vmem:[%s408 + $0x11a] sm:$0x3f]
      %v1033 = vpack.c.bf16 %v998, %v997
      %v1034 = vpack.c.bf16 %v1000, %v999
      %v1035 = vpack.c.bf16 %v1002, %v1001
      %v1036 = vpack.c.bf16 %v1004, %v1003
      %v1037 = vpack.c.bf16 %v1006, %v1005
      %v1038 = vpack.c.bf16 %v1008, %v1007
      %v1039 = vpack.c.bf16 %v1010, %v1009
      %v1040 = vpack.c.bf16 %v1012, %v1011
      %v1041 = vpack.c.bf16 %v1014, %v1013
      %v1042 = vpack.c.bf16 %v1016, %v1015
      %v1043 = vpack.c.bf16 %v1018, %v1017
      %v1044 = vpack.c.bf16 %v1020, %v1019
      %v1045 = vpack.c.bf16 %v1022, %v1021
      %v1046 = vpack.c.bf16 %v1024, %v1023
      %v1047 = vpack.c.bf16 %v1026, %v1025
      %v1048 = vpack.c.bf16 %v1028, %v1027
      %v1049 = vpack.c.bf16 %v1030, %v1029
      %v1050 = vpack.c.bf16 %v1032, %v1031
      %s1051 = scalar_lea.vmem %s1, 4
      %v1052 = vld [vmem:[%s1051] sm:$0x3]
      %v1054 = vsel %vm524, %v1033, 0
      %v1057 = vsel %vm524, %v1034, 0
      %v1060 = vsel %vm524, %v1035, 0
      %v1063 = vsel %vm524, %v1036, 0
      %v1066 = vsel %vm524, %v1037, 0
      %v1069 = vsel %vm524, %v1038, 0
      %v1072 = vsel %vm524, %v1039, 0
      %v1075 = vsel %vm524, %v1040, 0
      %v1078 = vsel %vm524, %v1041, 0
      %v1081 = vsel %vm524, %v1042, 0
      %v1084 = vsel %vm524, %v1043, 0
      %v1087 = vsel %vm524, %v1044, 0
      %v1090 = vsel %vm524, %v1045, 0
      %v1093 = vsel %vm524, %v1046, 0
      %v1096 = vsel %vm524, %v1047, 0
      %v1099 = vsel %vm524, %v1048, 0
      %v1102 = vsel %vm524, %v1049, 0
      %v1105 = vsel %vm524, %v1050, 0
      %v1108 = vand.u32 %v1052, %v582
      %1110 = vmatprep.subr.bf16.mxu0 0
      %1111 = vmatpush1.bf16.msra.mxu0 %v1108
      %1112 = vmatprep.subr.bf16.mxu0 0
      %1113 = vmatpush1.bf16.msra.mxu0 0
      %1114 = vmatprep.subr.bf16.mxu0 0
      %1115 = vmatpush1.bf16.msra.mxu0 0
      %1116 = vmatprep.subr.bf16.mxu0 0
      %1117 = vmatpush1.bf16.msra.mxu0 0
      %1118 = vmatprep.subr.bf16.mxu0 0
      %1119 = vmatpush1.bf16.msra.mxu0 0
      %1120 = vmatprep.subr.bf16.mxu0 0
      %1121 = vmatpush1.bf16.msra.mxu0 0
      %1122 = vmatprep.subr.bf16.mxu0 0
      %1123 = vmatpush1.bf16.msra.mxu0 0
      %1124 = vmatprep.subr.bf16.mxu0 0
      %1125 = vmatpush1.bf16.msra.mxu0 0
      %1126 = vmatprep.subr.bf16.mxu0 0
      %1127 = vmatpush1.bf16.msra.mxu0 0
      %1128 = vmatprep.subr.bf16.mxu0 0
      %1129 = vmatpush1.bf16.msra.mxu0 0
      %1130 = vmatprep.subr.bf16.mxu0 0
      %1131 = vmatpush1.bf16.msra.mxu0 0
      %1132 = vmatprep.subr.bf16.mxu0 0
      %1133 = vmatpush1.bf16.msra.mxu0 0
      %1134 = vmatprep.subr.bf16.mxu0 0
      %1135 = vmatpush1.bf16.msra.mxu0 0
      %1136 = vmatprep.subr.bf16.mxu0 0
      %1137 = vmatpush1.bf16.msra.mxu0 0
      %1138 = vmatprep.subr.bf16.mxu0 0
      %1139 = vmatpush1.bf16.msra.mxu0 0
      %1140 = vmatprep.subr.bf16.mxu0 0
      %1141 = vmatpush1.bf16.msra.mxu0 0
      %1142 = vmatprep.mubr.bf16.mxu0 0
      %1143 = vmatmul.mubr.bf16.gmra.mrb[0].mxu0 %v1054
      %v1144 = vpop.f32.mrb[0].mxu0
      %v1145 = vadd.f32 0.0, %v1144
      %v1146 = vpop.f32.mrb[0].mxu0
      %v1147 = vpop.f32.mrb[0].mxu0
      %v1148 = vadd.f32 0.0, %v1147
      %v1149 = vpop.f32.mrb[0].mxu0
      %1150 = vmatprep.mubr.bf16.mxu0 0
      %1151 = vmatmul.mubr.bf16.gmra.mrb[0].mxu0 %v1057
      %v1152 = vpop.f32.mrb[0].mxu0
      %v1153 = vadd.f32 0.0, %v1152
      %v1154 = vpop.f32.mrb[0].mxu0
      %v1155 = vpop.f32.mrb[0].mxu0
      %v1156 = vadd.f32 0.0, %v1155
      %v1157 = vpop.f32.mrb[0].mxu0
      %1158 = vmatprep.mubr.bf16.mxu0 0
      %1159 = vmatmul.mubr.bf16.gmra.mrb[0].mxu0 %v1060
      %v1160 = vpop.f32.mrb[0].mxu0
      %v1161 = vadd.f32 0.0, %v1160
      %v1162 = vpop.f32.mrb[0].mxu0
      %v1163 = vpop.f32.mrb[0].mxu0
      %v1164 = vadd.f32 0.0, %v1163
      %v1165 = vpop.f32.mrb[0].mxu0
      %1166 = vmatprep.mubr.bf16.mxu0 0
      %1167 = vmatmul.mubr.bf16.gmra.mrb[0].mxu0 %v1063
      %v1168 = vpop.f32.mrb[0].mxu0
      %v1169 = vadd.f32 0.0, %v1168
      %v1170 = vpop.f32.mrb[0].mxu0
      %v1171 = vpop.f32.mrb[0].mxu0
      %v1172 = vadd.f32 0.0, %v1171
      %v1173 = vpop.f32.mrb[0].mxu0
      %1174 = vmatprep.mubr.bf16.mxu0 0
      %1175 = vmatmul.mubr.bf16.gmra.mrb[0].mxu0 %v1066
      %v1176 = vpop.f32.mrb[0].mxu0
      %v1177 = vadd.f32 0.0, %v1176
      %v1178 = vpop.f32.mrb[0].mxu0
      %v1179 = vpop.f32.mrb[0].mxu0
      %v1180 = vadd.f32 0.0, %v1179
      %v1181 = vpop.f32.mrb[0].mxu0
      %1182 = vmatprep.mubr.bf16.mxu0 0
      %1183 = vmatmul.mubr.bf16.gmra.mrb[0].mxu0 %v1069
      %v1184 = vpop.f32.mrb[0].mxu0
      %v1185 = vadd.f32 0.0, %v1184
      %v1186 = vpop.f32.mrb[0].mxu0
      %v1187 = vpop.f32.mrb[0].mxu0
      %v1188 = vadd.f32 0.0, %v1187
      %v1189 = vpop.f32.mrb[0].mxu0
      %1190 = vmatprep.mubr.bf16.mxu0 0
      %1191 = vmatmul.mubr.bf16.gmra.mrb[0].mxu0 %v1072
      %v1192 = vpop.f32.mrb[0].mxu0
      %v1193 = vadd.f32 0.0, %v1192
      %v1194 = vpop.f32.mrb[0].mxu0
      %v1195 = vpop.f32.mrb[0].mxu0
      %v1196 = vadd.f32 0.0, %v1195
      %v1197 = vpop.f32.mrb[0].mxu0
      %1198 = vmatprep.mubr.bf16.mxu0 0
      %1199 = vmatmul.mubr.bf16.gmra.mrb[0].mxu0 %v1075
      %v1200 = vpop.f32.mrb[0].mxu0
      %v1201 = vadd.f32 0.0, %v1200
      %v1202 = vpop.f32.mrb[0].mxu0
      %v1203 = vpop.f32.mrb[0].mxu0
      %v1204 = vadd.f32 0.0, %v1203
      %v1205 = vpop.f32.mrb[0].mxu0
      %1206 = vmatprep.mubr.bf16.mxu0 0
      %1207 = vmatmul.mubr.bf16.gmra.mrb[0].mxu0 %v1078
      %v1208 = vpop.f32.mrb[0].mxu0
      %v1209 = vadd.f32 0.0, %v1208
      %v1210 = vpop.f32.mrb[0].mxu0
      %v1211 = vpop.f32.mrb[0].mxu0
      %v1212 = vadd.f32 0.0, %v1211
      %v1213 = vpop.f32.mrb[0].mxu0
      %1214 = vmatprep.mubr.bf16.mxu0 0
      %1215 = vmatmul.mubr.bf16.gmra.mrb[0].mxu0 %v1081
      %v1216 = vpop.f32.mrb[0].mxu0
      %v1217 = vadd.f32 0.0, %v1216
      %v1218 = vpop.f32.mrb[0].mxu0
      %v1219 = vpop.f32.mrb[0].mxu0
      %v1220 = vadd.f32 0.0, %v1219
      %v1221 = vpop.f32.mrb[0].mxu0
      %1222 = vmatprep.mubr.bf16.mxu0 0
      %1223 = vmatmul.mubr.bf16.gmra.mrb[0].mxu0 %v1084
      %v1224 = vpop.f32.mrb[0].mxu0
      %v1225 = vadd.f32 0.0, %v1224
      %v1226 = vpop.f32.mrb[0].mxu0
      %v1227 = vpop.f32.mrb[0].mxu0
      %v1228 = vadd.f32 0.0, %v1227
      %v1229 = vpop.f32.mrb[0].mxu0
      %1230 = vmatprep.mubr.bf16.mxu0 0
      %1231 = vmatmul.mubr.bf16.gmra.mrb[0].mxu0 %v1087
      %v1232 = vpop.f32.mrb[0].mxu0
      %v1233 = vadd.f32 0.0, %v1232
      %v1234 = vpop.f32.mrb[0].mxu0
      %v1235 = vpop.f32.mrb[0].mxu0
      %v1236 = vadd.f32 0.0, %v1235
      %v1237 = vpop.f32.mrb[0].mxu0
      %1238 = vmatprep.mubr.bf16.mxu0 0
      %1239 = vmatmul.mubr.bf16.gmra.mrb[0].mxu0 %v1090
      %v1240 = vpop.f32.mrb[0].mxu0
      %v1241 = vadd.f32 0.0, %v1240
      %v1242 = vpop.f32.mrb[0].mxu0
      %v1243 = vpop.f32.mrb[0].mxu0
      %v1244 = vadd.f32 0.0, %v1243
      %v1245 = vpop.f32.mrb[0].mxu0
      %1246 = vmatprep.mubr.bf16.mxu0 0
      %1247 = vmatmul.mubr.bf16.gmra.mrb[0].mxu0 %v1093
      %v1248 = vpop.f32.mrb[0].mxu0
      %v1249 = vadd.f32 0.0, %v1248
      %v1250 = vpop.f32.mrb[0].mxu0
      %v1251 = vpop.f32.mrb[0].mxu0
      %v1252 = vadd.f32 0.0, %v1251
      %v1253 = vpop.f32.mrb[0].mxu0
      %1254 = vmatprep.mubr.bf16.mxu0 0
      %1255 = vmatmul.mubr.bf16.gmra.mrb[0].mxu0 %v1096
      %v1256 = vpop.f32.mrb[0].mxu0
      %v1257 = vadd.f32 0.0, %v1256
      %v1258 = vpop.f32.mrb[0].mxu0
      %v1259 = vpop.f32.mrb[0].mxu0
      %v1260 = vadd.f32 0.0, %v1259
      %v1261 = vpop.f32.mrb[0].mxu0
      %1262 = vmatprep.mubr.bf16.mxu0 0
      %1263 = vmatmul.mubr.bf16.gmra.mrb[0].mxu0 %v1099
      %v1264 = vpop.f32.mrb[0].mxu0
      %v1265 = vadd.f32 0.0, %v1264
      %v1266 = vpop.f32.mrb[0].mxu0
      %v1267 = vpop.f32.mrb[0].mxu0
      %v1268 = vadd.f32 0.0, %v1267
      %v1269 = vpop.f32.mrb[0].mxu0
      %1270 = vmatprep.mubr.bf16.mxu0 0
      %1271 = vmatmul.mubr.bf16.gmra.mrb[0].mxu0 %v1102
      %v1272 = vpop.f32.mrb[0].mxu0
      %v1273 = vadd.f32 0.0, %v1272
      %v1274 = vpop.f32.mrb[0].mxu0
      %v1275 = vpop.f32.mrb[0].mxu0
      %v1276 = vadd.f32 0.0, %v1275
      %v1277 = vpop.f32.mrb[0].mxu0
      %1278 = vmatprep.mubr.bf16.mxu0 0
      %1279 = vmatmul.mubr.bf16.gmra.mrb[0].mxu0 %v1105
      %v1280 = vpop.f32.mrb[0].mxu0
      %v1281 = vadd.f32 0.0, %v1280
      %v1282 = vpop.f32.mrb[0].mxu0
      %v1283 = vpop.f32.mrb[0].mxu0
      %v1284 = vadd.f32 0.0, %v1283
      %v1285 = vpop.f32.mrb[0].mxu0
      %1286 = vdwg.mxu0
      %v1287 = vadd.f32 %v855, %v1145
      %v1288 = vadd.f32 %v858, %v1148
      %v1289 = vadd.f32 %v863, %v1153
      %v1290 = vadd.f32 %v866, %v1156
      %v1291 = vadd.f32 %v871, %v1161
      %v1292 = vadd.f32 %v874, %v1164
      %v1293 = vadd.f32 %v879, %v1169
      %v1294 = vadd.f32 %v882, %v1172
      %v1295 = vadd.f32 %v887, %v1177
      %v1296 = vadd.f32 %v890, %v1180
      %v1297 = vadd.f32 %v895, %v1185
      %v1298 = vadd.f32 %v898, %v1188
      %v1299 = vadd.f32 %v903, %v1193
      %v1300 = vadd.f32 %v906, %v1196
      %v1301 = vadd.f32 %v911, %v1201
      %v1302 = vadd.f32 %v914, %v1204
      %v1303 = vadd.f32 %v919, %v1209
      %v1304 = vadd.f32 %v922, %v1212
      %v1305 = vadd.f32 %v927, %v1217
      %v1306 = vadd.f32 %v930, %v1220
      %v1307 = vadd.f32 %v935, %v1225
      %v1308 = vadd.f32 %v938, %v1228
      %v1309 = vadd.f32 %v943, %v1233
      %v1310 = vadd.f32 %v946, %v1236
      %v1311 = vadd.f32 %v951, %v1241
      %v1312 = vadd.f32 %v954, %v1244
      %v1313 = vadd.f32 %v959, %v1249
      %v1314 = vadd.f32 %v962, %v1252
      %v1315 = vadd.f32 %v967, %v1257
      %v1316 = vadd.f32 %v970, %v1260
      %v1317 = vadd.f32 %v975, %v1265
      %v1318 = vadd.f32 %v978, %v1268
      %v1319 = vadd.f32 %v983, %v1273
      %v1320 = vadd.f32 %v986, %v1276
      %v1321 = vadd.f32 %v991, %v1281
      %v1322 = vadd.f32 %v994, %v1284
      %v1323 = vld [vmem:[%s408 + $0x12] sm:$0xff]
      %v1324 = vld [vmem:[%s408 + $0x1a] sm:$0xff]
      %v1325 = vld [vmem:[%s408 + $0x22] sm:$0xff]
      %v1326 = vld [vmem:[%s408 + $0x2a] sm:$0xff]
      %v1327 = vld [vmem:[%s408 + $0x32] sm:$0xff]
      %v1328 = vld [vmem:[%s408 + $0x3a] sm:$0xff]
      %v1329 = vld [vmem:[%s408 + $0x42] sm:$0xff]
      %v1330 = vld [vmem:[%s408 + $0x4a] sm:$0xff]
      %v1331 = vld [vmem:[%s408 + $0x52] sm:$0xff]
      %v1332 = vld [vmem:[%s408 + $0x5a] sm:$0xff]
      %v1333 = vld [vmem:[%s408 + $0x62] sm:$0xff]
      %v1334 = vld [vmem:[%s408 + $0x6a] sm:$0xff]
      %v1335 = vld [vmem:[%s408 + $0x72] sm:$0xff]
      %v1336 = vld [vmem:[%s408 + $0x7a] sm:$0xff]
      %v1337 = vld [vmem:[%s408 + $0x82] sm:$0xff]
      %v1338 = vld [vmem:[%s408 + $0x8a] sm:$0xff]
      %v1339 = vld [vmem:[%s408 + $0x92] sm:$0xff]
      %v1340 = vld [vmem:[%s408 + $0x9a] sm:$0xff]
      %v1341 = vld [vmem:[%s408 + $0xa2] sm:$0xff]
      %v1342 = vld [vmem:[%s408 + $0xaa] sm:$0xff]
      %v1343 = vld [vmem:[%s408 + $0xb2] sm:$0xff]
      %v1344 = vld [vmem:[%s408 + $0xba] sm:$0xff]
      %v1345 = vld [vmem:[%s408 + $0xc2] sm:$0xff]
      %v1346 = vld [vmem:[%s408 + $0xca] sm:$0xff]
      %v1347 = vld [vmem:[%s408 + $0xd2] sm:$0xff]
      %v1348 = vld [vmem:[%s408 + $0xda] sm:$0xff]
      %v1349 = vld [vmem:[%s408 + $0xe2] sm:$0xff]
      %v1350 = vld [vmem:[%s408 + $0xea] sm:$0xff]
      %v1351 = vld [vmem:[%s408 + $0xf2] sm:$0xff]
      %v1352 = vld [vmem:[%s408 + $0xfa] sm:$0xff]
      %v1353 = vld [vmem:[%s408 + $0x102] sm:$0xff]
      %v1354 = vld [vmem:[%s408 + $0x10a] sm:$0xff]
      %v1355 = vld [vmem:[%s408 + $0x112] sm:$0xff]
      %v1356 = vld [vmem:[%s408 + $0x11a] sm:$0xff]
      %v1357 = vld [vmem:[%s408 + $0x122] sm:$0xff]
      %v1358 = vld [vmem:[%s408 + $0x12a] sm:$0x3f]
      %v1359 = vpack.c.bf16 %v1324, %v1323
      %v1360 = vpack.c.bf16 %v1326, %v1325
      %v1361 = vpack.c.bf16 %v1328, %v1327
      %v1362 = vpack.c.bf16 %v1330, %v1329
      %v1363 = vpack.c.bf16 %v1332, %v1331
      %v1364 = vpack.c.bf16 %v1334, %v1333
      %v1365 = vpack.c.bf16 %v1336, %v1335
      %v1366 = vpack.c.bf16 %v1338, %v1337
      %v1367 = vpack.c.bf16 %v1340, %v1339
      %v1368 = vpack.c.bf16 %v1342, %v1341
      %v1369 = vpack.c.bf16 %v1344, %v1343
      %v1370 = vpack.c.bf16 %v1346, %v1345
      %v1371 = vpack.c.bf16 %v1348, %v1347
      %v1372 = vpack.c.bf16 %v1350, %v1349
      %v1373 = vpack.c.bf16 %v1352, %v1351
      %v1374 = vpack.c.bf16 %v1354, %v1353
      %v1375 = vpack.c.bf16 %v1356, %v1355
      %v1376 = vpack.c.bf16 %v1358, %v1357
      %s1377 = scalar_lea.vmem %s1, 6
      %v1378 = vld [vmem:[%s1377] sm:$0x3]
      %v1380 = vsel %vm524, %v1359, 0
      %v1383 = vsel %vm524, %v1360, 0
      %v1386 = vsel %vm524, %v1361, 0
      %v1389 = vsel %vm524, %v1362, 0
      %v1392 = vsel %vm524, %v1363, 0
      %v1395 = vsel %vm524, %v1364, 0
      %v1398 = vsel %vm524, %v1365, 0
      %v1401 = vsel %vm524, %v1366, 0
      %v1404 = vsel %vm524, %v1367, 0
      %v1407 = vsel %vm524, %v1368, 0
      %v1410 = vsel %vm524, %v1369, 0
      %v1413 = vsel %vm524, %v1370, 0
      %v1416 = vsel %vm524, %v1371, 0
      %v1419 = vsel %vm524, %v1372, 0
      %v1422 = vsel %vm524, %v1373, 0
      %v1425 = vsel %vm524, %v1374, 0
      %v1428 = vsel %vm524, %v1375, 0
      %v1431 = vsel %vm524, %v1376, 0
      %v1434 = vand.u32 %v1378, %v582
      %1436 = vmatprep.subr.bf16.mxu0 0
      %1437 = vmatpush1.bf16.msra.mxu0 %v1434
      %1438 = vmatprep.subr.bf16.mxu0 0
      %1439 = vmatpush1.bf16.msra.mxu0 0
      %1440 = vmatprep.subr.bf16.mxu0 0
      %1441 = vmatpush1.bf16.msra.mxu0 0
      %1442 = vmatprep.subr.bf16.mxu0 0
      %1443 = vmatpush1.bf16.msra.mxu0 0
      %1444 = vmatprep.subr.bf16.mxu0 0
      %1445 = vmatpush1.bf16.msra.mxu0 0
      %1446 = vmatprep.subr.bf16.mxu0 0
      %1447 = vmatpush1.bf16.msra.mxu0 0
      %1448 = vmatprep.subr.bf16.mxu0 0
      %1449 = vmatpush1.bf16.msra.mxu0 0
      %1450 = vmatprep.subr.bf16.mxu0 0
      %1451 = vmatpush1.bf16.msra.mxu0 0
      %1452 = vmatprep.subr.bf16.mxu0 0
      %1453 = vmatpush1.bf16.msra.mxu0 0
      %1454 = vmatprep.subr.bf16.mxu0 0
      %1455 = vmatpush1.bf16.msra.mxu0 0
      %1456 = vmatprep.subr.bf16.mxu0 0
      %1457 = vmatpush1.bf16.msra.mxu0 0
      %1458 = vmatprep.subr.bf16.mxu0 0
      %1459 = vmatpush1.bf16.msra.mxu0 0
      %1460 = vmatprep.subr.bf16.mxu0 0
      %1461 = vmatpush1.bf16.msra.mxu0 0
      %1462 = vmatprep.subr.bf16.mxu0 0
      %1463 = vmatpush1.bf16.msra.mxu0 0
      %1464 = vmatprep.subr.bf16.mxu0 0
      %1465 = vmatpush1.bf16.msra.mxu0 0
      %1466 = vmatprep.subr.bf16.mxu0 0
      %1467 = vmatpush1.bf16.msra.mxu0 0
      %1468 = vmatprep.mubr.bf16.mxu0 0
      %1469 = vmatmul.mubr.bf16.gmra.mrb[0].mxu0 %v1380
      %v1470 = vpop.f32.mrb[0].mxu0
      %v1471 = vadd.f32 0.0, %v1470
      %v1472 = vpop.f32.mrb[0].mxu0
      %v1473 = vpop.f32.mrb[0].mxu0
      %v1474 = vadd.f32 0.0, %v1473
      %v1475 = vpop.f32.mrb[0].mxu0
      %1476 = vmatprep.mubr.bf16.mxu0 0
      %1477 = vmatmul.mubr.bf16.gmra.mrb[0].mxu0 %v1383
      %v1478 = vpop.f32.mrb[0].mxu0
      %v1479 = vadd.f32 0.0, %v1478
      %v1480 = vpop.f32.mrb[0].mxu0
      %v1481 = vpop.f32.mrb[0].mxu0
      %v1482 = vadd.f32 0.0, %v1481
      %v1483 = vpop.f32.mrb[0].mxu0
      %1484 = vmatprep.mubr.bf16.mxu0 0
      %1485 = vmatmul.mubr.bf16.gmra.mrb[0].mxu0 %v1386
      %v1486 = vpop.f32.mrb[0].mxu0
      %v1487 = vadd.f32 0.0, %v1486
      %v1488 = vpop.f32.mrb[0].mxu0
      %v1489 = vpop.f32.mrb[0].mxu0
      %v1490 = vadd.f32 0.0, %v1489
      %v1491 = vpop.f32.mrb[0].mxu0
      %1492 = vmatprep.mubr.bf16.mxu0 0
      %1493 = vmatmul.mubr.bf16.gmra.mrb[0].mxu0 %v1389
      %v1494 = vpop.f32.mrb[0].mxu0
      %v1495 = vadd.f32 0.0, %v1494
      %v1496 = vpop.f32.mrb[0].mxu0
      %v1497 = vpop.f32.mrb[0].mxu0
      %v1498 = vadd.f32 0.0, %v1497
      %v1499 = vpop.f32.mrb[0].mxu0
      %1500 = vmatprep.mubr.bf16.mxu0 0
      %1501 = vmatmul.mubr.bf16.gmra.mrb[0].mxu0 %v1392
      %v1502 = vpop.f32.mrb[0].mxu0
      %v1503 = vadd.f32 0.0, %v1502
      %v1504 = vpop.f32.mrb[0].mxu0
      %v1505 = vpop.f32.mrb[0].mxu0
      %v1506 = vadd.f32 0.0, %v1505
      %v1507 = vpop.f32.mrb[0].mxu0
      %1508 = vmatprep.mubr.bf16.mxu0 0
      %1509 = vmatmul.mubr.bf16.gmra.mrb[0].mxu0 %v1395
      %v1510 = vpop.f32.mrb[0].mxu0
      %v1511 = vadd.f32 0.0, %v1510
      %v1512 = vpop.f32.mrb[0].mxu0
      %v1513 = vpop.f32.mrb[0].mxu0
      %v1514 = vadd.f32 0.0, %v1513
      %v1515 = vpop.f32.mrb[0].mxu0
      %1516 = vmatprep.mubr.bf16.mxu0 0
      %1517 = vmatmul.mubr.bf16.gmra.mrb[0].mxu0 %v1398
      %v1518 = vpop.f32.mrb[0].mxu0
      %v1519 = vadd.f32 0.0, %v1518
      %v1520 = vpop.f32.mrb[0].mxu0
      %v1521 = vpop.f32.mrb[0].mxu0
      %v1522 = vadd.f32 0.0, %v1521
      %v1523 = vpop.f32.mrb[0].mxu0
      %1524 = vmatprep.mubr.bf16.mxu0 0
      %1525 = vmatmul.mubr.bf16.gmra.mrb[0].mxu0 %v1401
      %v1526 = vpop.f32.mrb[0].mxu0
      %v1527 = vadd.f32 0.0, %v1526
      %v1528 = vpop.f32.mrb[0].mxu0
      %v1529 = vpop.f32.mrb[0].mxu0
      %v1530 = vadd.f32 0.0, %v1529
      %v1531 = vpop.f32.mrb[0].mxu0
      %1532 = vmatprep.mubr.bf16.mxu0 0
      %1533 = vmatmul.mubr.bf16.gmra.mrb[0].mxu0 %v1404
      %v1534 = vpop.f32.mrb[0].mxu0
      %v1535 = vadd.f32 0.0, %v1534
      %v1536 = vpop.f32.mrb[0].mxu0
      %v1537 = vpop.f32.mrb[0].mxu0
      %v1538 = vadd.f32 0.0, %v1537
      %v1539 = vpop.f32.mrb[0].mxu0
      %1540 = vmatprep.mubr.bf16.mxu0 0
      %1541 = vmatmul.mubr.bf16.gmra.mrb[0].mxu0 %v1407
      %v1542 = vpop.f32.mrb[0].mxu0
      %v1543 = vadd.f32 0.0, %v1542
      %v1544 = vpop.f32.mrb[0].mxu0
      %v1545 = vpop.f32.mrb[0].mxu0
      %v1546 = vadd.f32 0.0, %v1545
      %v1547 = vpop.f32.mrb[0].mxu0
      %1548 = vmatprep.mubr.bf16.mxu0 0
      %1549 = vmatmul.mubr.bf16.gmra.mrb[0].mxu0 %v1410
      %v1550 = vpop.f32.mrb[0].mxu0
      %v1551 = vadd.f32 0.0, %v1550
      %v1552 = vpop.f32.mrb[0].mxu0
      %v1553 = vpop.f32.mrb[0].mxu0
      %v1554 = vadd.f32 0.0, %v1553
      %v1555 = vpop.f32.mrb[0].mxu0
      %1556 = vmatprep.mubr.bf16.mxu0 0
      %1557 = vmatmul.mubr.bf16.gmra.mrb[0].mxu0 %v1413
      %v1558 = vpop.f32.mrb[0].mxu0
      %v1559 = vadd.f32 0.0, %v1558
      %v1560 = vpop.f32.mrb[0].mxu0
      %v1561 = vpop.f32.mrb[0].mxu0
      %v1562 = vadd.f32 0.0, %v1561
      %v1563 = vpop.f32.mrb[0].mxu0
      %1564 = vmatprep.mubr.bf16.mxu0 0
      %1565 = vmatmul.mubr.bf16.gmra.mrb[0].mxu0 %v1416
      %v1566 = vpop.f32.mrb[0].mxu0
      %v1567 = vadd.f32 0.0, %v1566
      %v1568 = vpop.f32.mrb[0].mxu0
      %v1569 = vpop.f32.mrb[0].mxu0
      %v1570 = vadd.f32 0.0, %v1569
      %v1571 = vpop.f32.mrb[0].mxu0
      %1572 = vmatprep.mubr.bf16.mxu0 0
      %1573 = vmatmul.mubr.bf16.gmra.mrb[0].mxu0 %v1419
      %v1574 = vpop.f32.mrb[0].mxu0
      %v1575 = vadd.f32 0.0, %v1574
      %v1576 = vpop.f32.mrb[0].mxu0
      %v1577 = vpop.f32.mrb[0].mxu0
      %v1578 = vadd.f32 0.0, %v1577
      %v1579 = vpop.f32.mrb[0].mxu0
      %1580 = vmatprep.mubr.bf16.mxu0 0
      %1581 = vmatmul.mubr.bf16.gmra.mrb[0].mxu0 %v1422
      %v1582 = vpop.f32.mrb[0].mxu0
      %v1583 = vadd.f32 0.0, %v1582
      %v1584 = vpop.f32.mrb[0].mxu0
      %v1585 = vpop.f32.mrb[0].mxu0
      %v1586 = vadd.f32 0.0, %v1585
      %v1587 = vpop.f32.mrb[0].mxu0
      %1588 = vmatprep.mubr.bf16.mxu0 0
      %1589 = vmatmul.mubr.bf16.gmra.mrb[0].mxu0 %v1425
      %v1590 = vpop.f32.mrb[0].mxu0
      %v1591 = vadd.f32 0.0, %v1590
      %v1592 = vpop.f32.mrb[0].mxu0
      %v1593 = vpop.f32.mrb[0].mxu0
      %v1594 = vadd.f32 0.0, %v1593
      %v1595 = vpop.f32.mrb[0].mxu0
      %1596 = vmatprep.mubr.bf16.mxu0 0
      %1597 = vmatmul.mubr.bf16.gmra.mrb[0].mxu0 %v1428
      %v1598 = vpop.f32.mrb[0].mxu0
      %v1599 = vadd.f32 0.0, %v1598
      %v1600 = vpop.f32.mrb[0].mxu0
      %v1601 = vpop.f32.mrb[0].mxu0
      %v1602 = vadd.f32 0.0, %v1601
      %v1603 = vpop.f32.mrb[0].mxu0
      %1604 = vmatprep.mubr.bf16.mxu0 0
      %1605 = vmatmul.mubr.bf16.gmra.mrb[0].mxu0 %v1431
      %v1606 = vpop.f32.mrb[0].mxu0
      %v1607 = vadd.f32 0.0, %v1606
      %v1608 = vpop.f32.mrb[0].mxu0
      %v1609 = vpop.f32.mrb[0].mxu0
      %v1610 = vadd.f32 0.0, %v1609
      %v1611 = vpop.f32.mrb[0].mxu0
      %1612 = vdwg.mxu0
      %v1613 = vadd.f32 %v1287, %v1471
      %v1614 = vadd.f32 %v1288, %v1474
      %v1615 = vadd.f32 %v1289, %v1479
      %v1616 = vadd.f32 %v1290, %v1482
      %v1617 = vadd.f32 %v1291, %v1487
      %v1618 = vadd.f32 %v1292, %v1490
      %v1619 = vadd.f32 %v1293, %v1495
      %v1620 = vadd.f32 %v1294, %v1498
      %v1621 = vadd.f32 %v1295, %v1503
      %v1622 = vadd.f32 %v1296, %v1506
      %v1623 = vadd.f32 %v1297, %v1511
      %v1624 = vadd.f32 %v1298, %v1514
      %v1625 = vadd.f32 %v1299, %v1519
      %v1626 = vadd.f32 %v1300, %v1522
      %v1627 = vadd.f32 %v1301, %v1527
      %v1628 = vadd.f32 %v1302, %v1530
      %v1629 = vadd.f32 %v1303, %v1535
      %v1630 = vadd.f32 %v1304, %v1538
      %v1631 = vadd.f32 %v1305, %v1543
      %v1632 = vadd.f32 %v1306, %v1546
      %v1633 = vadd.f32 %v1307, %v1551
      %v1634 = vadd.f32 %v1308, %v1554
      %v1635 = vadd.f32 %v1309, %v1559
      %v1636 = vadd.f32 %v1310, %v1562
      %v1637 = vadd.f32 %v1311, %v1567
      %v1638 = vadd.f32 %v1312, %v1570
      %v1639 = vadd.f32 %v1313, %v1575
      %v1640 = vadd.f32 %v1314, %v1578
      %v1641 = vadd.f32 %v1315, %v1583
      %v1642 = vadd.f32 %v1316, %v1586
      %v1643 = vadd.f32 %v1317, %v1591
      %v1644 = vadd.f32 %v1318, %v1594
      %v1645 = vadd.f32 %v1319, %v1599
      %v1646 = vadd.f32 %v1320, %v1602
      %v1647 = vadd.f32 %v1321, %v1607
      %v1648 = vadd.f32 %v1322, %v1610
      %v1649 = vld [vmem:[%s408 + $0x13] sm:$0xff]
      %v1650 = vld [vmem:[%s408 + $0x1b] sm:$0xff]
      %v1651 = vld [vmem:[%s408 + $0x23] sm:$0xff]
      %v1652 = vld [vmem:[%s408 + $0x2b] sm:$0xff]
      %v1653 = vld [vmem:[%s408 + $0x33] sm:$0xff]
      %v1654 = vld [vmem:[%s408 + $0x3b] sm:$0xff]
      %v1655 = vld [vmem:[%s408 + $0x43] sm:$0xff]
      %v1656 = vld [vmem:[%s408 + $0x4b] sm:$0xff]
      %v1657 = vld [vmem:[%s408 + $0x53] sm:$0xff]
      %v1658 = vld [vmem:[%s408 + $0x5b] sm:$0xff]
      %v1659 = vld [vmem:[%s408 + $0x63] sm:$0xff]
      %v1660 = vld [vmem:[%s408 + $0x6b] sm:$0xff]
      %v1661 = vld [vmem:[%s408 + $0x73] sm:$0xff]
      %v1662 = vld [vmem:[%s408 + $0x7b] sm:$0xff]
      %v1663 = vld [vmem:[%s408 + $0x83] sm:$0xff]
      %v1664 = vld [vmem:[%s408 + $0x8b] sm:$0xff]
      %v1665 = vld [vmem:[%s408 + $0x93] sm:$0xff]
      %v1666 = vld [vmem:[%s408 + $0x9b] sm:$0xff]
      %v1667 = vld [vmem:[%s408 + $0xa3] sm:$0xff]
      %v1668 = vld [vmem:[%s408 + $0xab] sm:$0xff]
      %v1669 = vld [vmem:[%s408 + $0xb3] sm:$0xff]
      %v1670 = vld [vmem:[%s408 + $0xbb] sm:$0xff]
      %v1671 = vld [vmem:[%s408 + $0xc3] sm:$0xff]
      %v1672 = vld [vmem:[%s408 + $0xcb] sm:$0xff]
      %v1673 = vld [vmem:[%s408 + $0xd3] sm:$0xff]
      %v1674 = vld [vmem:[%s408 + $0xdb] sm:$0xff]
      %v1675 = vld [vmem:[%s408 + $0xe3] sm:$0xff]
      %v1676 = vld [vmem:[%s408 + $0xeb] sm:$0xff]
      %v1677 = vld [vmem:[%s408 + $0xf3] sm:$0xff]
      %v1678 = vld [vmem:[%s408 + $0xfb] sm:$0xff]
      %v1679 = vld [vmem:[%s408 + $0x103] sm:$0xff]
      %v1680 = vld [vmem:[%s408 + $0x10b] sm:$0xff]
      %v1681 = vld [vmem:[%s408 + $0x113] sm:$0xff]
      %v1682 = vld [vmem:[%s408 + $0x11b] sm:$0xff]
      %v1683 = vld [vmem:[%s408 + $0x123] sm:$0xff]
      %v1684 = vld [vmem:[%s408 + $0x12b] sm:$0x3f]
      %v1685 = vpack.c.bf16 %v1650, %v1649
      %v1686 = vpack.c.bf16 %v1652, %v1651
      %v1687 = vpack.c.bf16 %v1654, %v1653
      %v1688 = vpack.c.bf16 %v1656, %v1655
      %v1689 = vpack.c.bf16 %v1658, %v1657
      %v1690 = vpack.c.bf16 %v1660, %v1659
      %v1691 = vpack.c.bf16 %v1662, %v1661
      %v1692 = vpack.c.bf16 %v1664, %v1663
      %v1693 = vpack.c.bf16 %v1666, %v1665
      %v1694 = vpack.c.bf16 %v1668, %v1667
      %v1695 = vpack.c.bf16 %v1670, %v1669
      %v1696 = vpack.c.bf16 %v1672, %v1671
      %v1697 = vpack.c.bf16 %v1674, %v1673
      %v1698 = vpack.c.bf16 %v1676, %v1675
      %v1699 = vpack.c.bf16 %v1678, %v1677
      %v1700 = vpack.c.bf16 %v1680, %v1679
      %v1701 = vpack.c.bf16 %v1682, %v1681
      %v1702 = vpack.c.bf16 %v1684, %v1683
      %s1703 = scalar_lea.vmem %s1, 8
      %v1704 = vld [vmem:[%s1703] sm:$0x3]
      %v1706 = vsel %vm524, %v1685, 0
      %v1709 = vsel %vm524, %v1686, 0
      %v1712 = vsel %vm524, %v1687, 0
      %v1715 = vsel %vm524, %v1688, 0
      %v1718 = vsel %vm524, %v1689, 0
      %v1721 = vsel %vm524, %v1690, 0
      %v1724 = vsel %vm524, %v1691, 0
      %v1727 = vsel %vm524, %v1692, 0
      %v1730 = vsel %vm524, %v1693, 0
      %v1733 = vsel %vm524, %v1694, 0
      %v1736 = vsel %vm524, %v1695, 0
      %v1739 = vsel %vm524, %v1696, 0
      %v1742 = vsel %vm524, %v1697, 0
      %v1745 = vsel %vm524, %v1698, 0
      %v1748 = vsel %vm524, %v1699, 0
      %v1751 = vsel %vm524, %v1700, 0
      %v1754 = vsel %vm524, %v1701, 0
      %v1757 = vsel %vm524, %v1702, 0
      %v1760 = vand.u32 %v1704, %v582
      %1762 = vmatprep.subr.bf16.mxu0 0
      %1763 = vmatpush1.bf16.msra.mxu0 %v1760
      %1764 = vmatprep.subr.bf16.mxu0 0
      %1765 = vmatpush1.bf16.msra.mxu0 0
      %1766 = vmatprep.subr.bf16.mxu0 0
      %1767 = vmatpush1.bf16.msra.mxu0 0
      %1768 = vmatprep.subr.bf16.mxu0 0
      %1769 = vmatpush1.bf16.msra.mxu0 0
      %1770 = vmatprep.subr.bf16.mxu0 0
      %1771 = vmatpush1.bf16.msra.mxu0 0
      %1772 = vmatprep.subr.bf16.mxu0 0
      %1773 = vmatpush1.bf16.msra.mxu0 0
      %1774 = vmatprep.subr.bf16.mxu0 0
      %1775 = vmatpush1.bf16.msra.mxu0 0
      %1776 = vmatprep.subr.bf16.mxu0 0
      %1777 = vmatpush1.bf16.msra.mxu0 0
      %1778 = vmatprep.subr.bf16.mxu0 0
      %1779 = vmatpush1.bf16.msra.mxu0 0
      %1780 = vmatprep.subr.bf16.mxu0 0
      %1781 = vmatpush1.bf16.msra.mxu0 0
      %1782 = vmatprep.subr.bf16.mxu0 0
      %1783 = vmatpush1.bf16.msra.mxu0 0
      %1784 = vmatprep.subr.bf16.mxu0 0
      %1785 = vmatpush1.bf16.msra.mxu0 0
      %1786 = vmatprep.subr.bf16.mxu0 0
      %1787 = vmatpush1.bf16.msra.mxu0 0
      %1788 = vmatprep.subr.bf16.mxu0 0
      %1789 = vmatpush1.bf16.msra.mxu0 0
      %1790 = vmatprep.subr.bf16.mxu0 0
      %1791 = vmatpush1.bf16.msra.mxu0 0
      %1792 = vmatprep.subr.bf16.mxu0 0
      %1793 = vmatpush1.bf16.msra.mxu0 0
      %1794 = vmatprep.mubr.bf16.mxu0 0
      %1795 = vmatmul.mubr.bf16.gmra.mrb[0].mxu0 %v1706
      %v1796 = vpop.f32.mrb[0].mxu0
      %v1797 = vadd.f32 0.0, %v1796
      %v1798 = vpop.f32.mrb[0].mxu0
      %v1799 = vpop.f32.mrb[0].mxu0
      %v1800 = vadd.f32 0.0, %v1799
      %v1801 = vpop.f32.mrb[0].mxu0
      %1802 = vmatprep.mubr.bf16.mxu0 0
      %1803 = vmatmul.mubr.bf16.gmra.mrb[0].mxu0 %v1709
      %v1804 = vpop.f32.mrb[0].mxu0
      %v1805 = vadd.f32 0.0, %v1804
      %v1806 = vpop.f32.mrb[0].mxu0
      %v1807 = vpop.f32.mrb[0].mxu0
      %v1808 = vadd.f32 0.0, %v1807
      %v1809 = vpop.f32.mrb[0].mxu0
      %1810 = vmatprep.mubr.bf16.mxu0 0
      %1811 = vmatmul.mubr.bf16.gmra.mrb[0].mxu0 %v1712
      %v1812 = vpop.f32.mrb[0].mxu0
      %v1813 = vadd.f32 0.0, %v1812
      %v1814 = vpop.f32.mrb[0].mxu0
      %v1815 = vpop.f32.mrb[0].mxu0
      %v1816 = vadd.f32 0.0, %v1815
      %v1817 = vpop.f32.mrb[0].mxu0
      %1818 = vmatprep.mubr.bf16.mxu0 0
      %1819 = vmatmul.mubr.bf16.gmra.mrb[0].mxu0 %v1715
      %v1820 = vpop.f32.mrb[0].mxu0
      %v1821 = vadd.f32 0.0, %v1820
      %v1822 = vpop.f32.mrb[0].mxu0
      %v1823 = vpop.f32.mrb[0].mxu0
      %v1824 = vadd.f32 0.0, %v1823
      %v1825 = vpop.f32.mrb[0].mxu0
      %1826 = vmatprep.mubr.bf16.mxu0 0
      %1827 = vmatmul.mubr.bf16.gmra.mrb[0].mxu0 %v1718
      %v1828 = vpop.f32.mrb[0].mxu0
      %v1829 = vadd.f32 0.0, %v1828
      %v1830 = vpop.f32.mrb[0].mxu0
      %v1831 = vpop.f32.mrb[0].mxu0
      %v1832 = vadd.f32 0.0, %v1831
      %v1833 = vpop.f32.mrb[0].mxu0
      %1834 = vmatprep.mubr.bf16.mxu0 0
      %1835 = vmatmul.mubr.bf16.gmra.mrb[0].mxu0 %v1721
      %v1836 = vpop.f32.mrb[0].mxu0
      %v1837 = vadd.f32 0.0, %v1836
      %v1838 = vpop.f32.mrb[0].mxu0
      %v1839 = vpop.f32.mrb[0].mxu0
      %v1840 = vadd.f32 0.0, %v1839
      %v1841 = vpop.f32.mrb[0].mxu0
      %1842 = vmatprep.mubr.bf16.mxu0 0
      %1843 = vmatmul.mubr.bf16.gmra.mrb[0].mxu0 %v1724
      %v1844 = vpop.f32.mrb[0].mxu0
      %v1845 = vadd.f32 0.0, %v1844
      %v1846 = vpop.f32.mrb[0].mxu0
      %v1847 = vpop.f32.mrb[0].mxu0
      %v1848 = vadd.f32 0.0, %v1847
      %v1849 = vpop.f32.mrb[0].mxu0
      %1850 = vmatprep.mubr.bf16.mxu0 0
      %1851 = vmatmul.mubr.bf16.gmra.mrb[0].mxu0 %v1727
      %v1852 = vpop.f32.mrb[0].mxu0
      %v1853 = vadd.f32 0.0, %v1852
      %v1854 = vpop.f32.mrb[0].mxu0
      %v1855 = vpop.f32.mrb[0].mxu0
      %v1856 = vadd.f32 0.0, %v1855
      %v1857 = vpop.f32.mrb[0].mxu0
      %1858 = vmatprep.mubr.bf16.mxu0 0
      %1859 = vmatmul.mubr.bf16.gmra.mrb[0].mxu0 %v1730
      %v1860 = vpop.f32.mrb[0].mxu0
      %v1861 = vadd.f32 0.0, %v1860
      %v1862 = vpop.f32.mrb[0].mxu0
      %v1863 = vpop.f32.mrb[0].mxu0
      %v1864 = vadd.f32 0.0, %v1863
      %v1865 = vpop.f32.mrb[0].mxu0
      %1866 = vmatprep.mubr.bf16.mxu0 0
      %1867 = vmatmul.mubr.bf16.gmra.mrb[0].mxu0 %v1733
      %v1868 = vpop.f32.mrb[0].mxu0
      %v1869 = vadd.f32 0.0, %v1868
      %v1870 = vpop.f32.mrb[0].mxu0
      %v1871 = vpop.f32.mrb[0].mxu0
      %v1872 = vadd.f32 0.0, %v1871
      %v1873 = vpop.f32.mrb[0].mxu0
      %1874 = vmatprep.mubr.bf16.mxu0 0
      %1875 = vmatmul.mubr.bf16.gmra.mrb[0].mxu0 %v1736
      %v1876 = vpop.f32.mrb[0].mxu0
      %v1877 = vadd.f32 0.0, %v1876
      %v1878 = vpop.f32.mrb[0].mxu0
      %v1879 = vpop.f32.mrb[0].mxu0
      %v1880 = vadd.f32 0.0, %v1879
      %v1881 = vpop.f32.mrb[0].mxu0
      %1882 = vmatprep.mubr.bf16.mxu0 0
      %1883 = vmatmul.mubr.bf16.gmra.mrb[0].mxu0 %v1739
      %v1884 = vpop.f32.mrb[0].mxu0
      %v1885 = vadd.f32 0.0, %v1884
      %v1886 = vpop.f32.mrb[0].mxu0
      %v1887 = vpop.f32.mrb[0].mxu0
      %v1888 = vadd.f32 0.0, %v1887
      %v1889 = vpop.f32.mrb[0].mxu0
      %1890 = vmatprep.mubr.bf16.mxu0 0
      %1891 = vmatmul.mubr.bf16.gmra.mrb[0].mxu0 %v1742
      %v1892 = vpop.f32.mrb[0].mxu0
      %v1893 = vadd.f32 0.0, %v1892
      %v1894 = vpop.f32.mrb[0].mxu0
      %v1895 = vpop.f32.mrb[0].mxu0
      %v1896 = vadd.f32 0.0, %v1895
      %v1897 = vpop.f32.mrb[0].mxu0
      %1898 = vmatprep.mubr.bf16.mxu0 0
      %1899 = vmatmul.mubr.bf16.gmra.mrb[0].mxu0 %v1745
      %v1900 = vpop.f32.mrb[0].mxu0
      %v1901 = vadd.f32 0.0, %v1900
      %v1902 = vpop.f32.mrb[0].mxu0
      %v1903 = vpop.f32.mrb[0].mxu0
      %v1904 = vadd.f32 0.0, %v1903
      %v1905 = vpop.f32.mrb[0].mxu0
      %1906 = vmatprep.mubr.bf16.mxu0 0
      %1907 = vmatmul.mubr.bf16.gmra.mrb[0].mxu0 %v1748
      %v1908 = vpop.f32.mrb[0].mxu0
      %v1909 = vadd.f32 0.0, %v1908
      %v1910 = vpop.f32.mrb[0].mxu0
      %v1911 = vpop.f32.mrb[0].mxu0
      %v1912 = vadd.f32 0.0, %v1911
      %v1913 = vpop.f32.mrb[0].mxu0
      %1914 = vmatprep.mubr.bf16.mxu0 0
      %1915 = vmatmul.mubr.bf16.gmra.mrb[0].mxu0 %v1751
      %v1916 = vpop.f32.mrb[0].mxu0
      %v1917 = vadd.f32 0.0, %v1916
      %v1918 = vpop.f32.mrb[0].mxu0
      %v1919 = vpop.f32.mrb[0].mxu0
      %v1920 = vadd.f32 0.0, %v1919
      %v1921 = vpop.f32.mrb[0].mxu0
      %1922 = vmatprep.mubr.bf16.mxu0 0
      %1923 = vmatmul.mubr.bf16.gmra.mrb[0].mxu0 %v1754
      %v1924 = vpop.f32.mrb[0].mxu0
      %v1925 = vadd.f32 0.0, %v1924
      %v1926 = vpop.f32.mrb[0].mxu0
      %v1927 = vpop.f32.mrb[0].mxu0
      %v1928 = vadd.f32 0.0, %v1927
      %v1929 = vpop.f32.mrb[0].mxu0
      %1930 = vmatprep.mubr.bf16.mxu0 0
      %1931 = vmatmul.mubr.bf16.gmra.mrb[0].mxu0 %v1757
      %v1932 = vpop.f32.mrb[0].mxu0
      %v1933 = vadd.f32 0.0, %v1932
      %v1934 = vpop.f32.mrb[0].mxu0
      %v1935 = vpop.f32.mrb[0].mxu0
      %v1936 = vadd.f32 0.0, %v1935
      %v1937 = vpop.f32.mrb[0].mxu0
      %1938 = vdwg.mxu0
      %v1939 = vadd.f32 %v1613, %v1797
      %v1940 = vadd.f32 %v1614, %v1800
      %v1941 = vadd.f32 %v1615, %v1805
      %v1942 = vadd.f32 %v1616, %v1808
      %v1943 = vadd.f32 %v1617, %v1813
      %v1944 = vadd.f32 %v1618, %v1816
      %v1945 = vadd.f32 %v1619, %v1821
      %v1946 = vadd.f32 %v1620, %v1824
      %v1947 = vadd.f32 %v1621, %v1829
      %v1948 = vadd.f32 %v1622, %v1832
      %v1949 = vadd.f32 %v1623, %v1837
      %v1950 = vadd.f32 %v1624, %v1840
      %v1951 = vadd.f32 %v1625, %v1845
      %v1952 = vadd.f32 %v1626, %v1848
      %v1953 = vadd.f32 %v1627, %v1853
      %v1954 = vadd.f32 %v1628, %v1856
      %v1955 = vadd.f32 %v1629, %v1861
      %v1956 = vadd.f32 %v1630, %v1864
      %v1957 = vadd.f32 %v1631, %v1869
      %v1958 = vadd.f32 %v1632, %v1872
      %v1959 = vadd.f32 %v1633, %v1877
      %v1960 = vadd.f32 %v1634, %v1880
      %v1961 = vadd.f32 %v1635, %v1885
      %v1962 = vadd.f32 %v1636, %v1888
      %v1963 = vadd.f32 %v1637, %v1893
      %v1964 = vadd.f32 %v1638, %v1896
      %v1965 = vadd.f32 %v1639, %v1901
      %v1966 = vadd.f32 %v1640, %v1904
      %v1967 = vadd.f32 %v1641, %v1909
      %v1968 = vadd.f32 %v1642, %v1912
      %v1969 = vadd.f32 %v1643, %v1917
      %v1970 = vadd.f32 %v1644, %v1920
      %v1971 = vadd.f32 %v1645, %v1925
      %v1972 = vadd.f32 %v1646, %v1928
      %v1973 = vadd.f32 %v1647, %v1933
      %v1974 = vadd.f32 %v1648, %v1936
      %v1975 = vld [vmem:[%s408 + $0x14] sm:$0xff]
      %v1976 = vld [vmem:[%s408 + $0x1c] sm:$0xff]
      %v1977 = vld [vmem:[%s408 + $0x24] sm:$0xff]
      %v1978 = vld [vmem:[%s408 + $0x2c] sm:$0xff]
      %v1979 = vld [vmem:[%s408 + $0x34] sm:$0xff]
      %v1980 = vld [vmem:[%s408 + $0x3c] sm:$0xff]
      %v1981 = vld [vmem:[%s408 + $0x44] sm:$0xff]
      %v1982 = vld [vmem:[%s408 + $0x4c] sm:$0xff]
      %v1983 = vld [vmem:[%s408 + $0x54] sm:$0xff]
      %v1984 = vld [vmem:[%s408 + $0x5c] sm:$0xff]
      %v1985 = vld [vmem:[%s408 + $0x64] sm:$0xff]
      %v1986 = vld [vmem:[%s408 + $0x6c] sm:$0xff]
      %v1987 = vld [vmem:[%s408 + $0x74] sm:$0xff]
      %v1988 = vld [vmem:[%s408 + $0x7c] sm:$0xff]
      %v1989 = vld [vmem:[%s408 + $0x84] sm:$0xff]
      %v1990 = vld [vmem:[%s408 + $0x8c] sm:$0xff]
      %v1991 = vld [vmem:[%s408 + $0x94] sm:$0xff]
      %v1992 = vld [vmem:[%s408 + $0x9c] sm:$0xff]
      %v1993 = vld [vmem:[%s408 + $0xa4] sm:$0xff]
      %v1994 = vld [vmem:[%s408 + $0xac] sm:$0xff]
      %v1995 = vld [vmem:[%s408 + $0xb4] sm:$0xff]
      %v1996 = vld [vmem:[%s408 + $0xbc] sm:$0xff]
      %v1997 = vld [vmem:[%s408 + $0xc4] sm:$0xff]
      %v1998 = vld [vmem:[%s408 + $0xcc] sm:$0xff]
      %v1999 = vld [vmem:[%s408 + $0xd4] sm:$0xff]
      %v2000 = vld [vmem:[%s408 + $0xdc] sm:$0xff]
      %v2001 = vld [vmem:[%s408 + $0xe4] sm:$0xff]
      %v2002 = vld [vmem:[%s408 + $0xec] sm:$0xff]
      %v2003 = vld [vmem:[%s408 + $0xf4] sm:$0xff]
      %v2004 = vld [vmem:[%s408 + $0xfc] sm:$0xff]
      %v2005 = vld [vmem:[%s408 + $0x104] sm:$0xff]
      %v2006 = vld [vmem:[%s408 + $0x10c] sm:$0xff]
      %v2007 = vld [vmem:[%s408 + $0x114] sm:$0xff]
      %v2008 = vld [vmem:[%s408 + $0x11c] sm:$0xff]
      %v2009 = vld [vmem:[%s408 + $0x124] sm:$0xff]
      %v2010 = vld [vmem:[%s408 + $0x12c] sm:$0x3f]
      %v2011 = vpack.c.bf16 %v1976, %v1975
      %v2012 = vpack.c.bf16 %v1978, %v1977
      %v2013 = vpack.c.bf16 %v1980, %v1979
      %v2014 = vpack.c.bf16 %v1982, %v1981
      %v2015 = vpack.c.bf16 %v1984, %v1983
      %v2016 = vpack.c.bf16 %v1986, %v1985
      %v2017 = vpack.c.bf16 %v1988, %v1987
      %v2018 = vpack.c.bf16 %v1990, %v1989
      %v2019 = vpack.c.bf16 %v1992, %v1991
      %v2020 = vpack.c.bf16 %v1994, %v1993
      %v2021 = vpack.c.bf16 %v1996, %v1995
      %v2022 = vpack.c.bf16 %v1998, %v1997
      %v2023 = vpack.c.bf16 %v2000, %v1999
      %v2024 = vpack.c.bf16 %v2002, %v2001
      %v2025 = vpack.c.bf16 %v2004, %v2003
      %v2026 = vpack.c.bf16 %v2006, %v2005
      %v2027 = vpack.c.bf16 %v2008, %v2007
      %v2028 = vpack.c.bf16 %v2010, %v2009
      %s2029 = scalar_lea.vmem %s1, 10
      %v2030 = vld [vmem:[%s2029] sm:$0x3]
      %v2032 = vsel %vm524, %v2011, 0
      %v2035 = vsel %vm524, %v2012, 0
      %v2038 = vsel %vm524, %v2013, 0
      %v2041 = vsel %vm524, %v2014, 0
      %v2044 = vsel %vm524, %v2015, 0
      %v2047 = vsel %vm524, %v2016, 0
      %v2050 = vsel %vm524, %v2017, 0
      %v2053 = vsel %vm524, %v2018, 0
      %v2056 = vsel %vm524, %v2019, 0
      %v2059 = vsel %vm524, %v2020, 0
      %v2062 = vsel %vm524, %v2021, 0
      %v2065 = vsel %vm524, %v2022, 0
      %v2068 = vsel %vm524, %v2023, 0
      %v2071 = vsel %vm524, %v2024, 0
      %v2074 = vsel %vm524, %v2025, 0
      %v2077 = vsel %vm524, %v2026, 0
      %v2080 = vsel %vm524, %v2027, 0
      %v2083 = vsel %vm524, %v2028, 0
      %v2086 = vand.u32 %v2030, %v582
      %2088 = vmatprep.subr.bf16.mxu0 0
      %2089 = vmatpush1.bf16.msra.mxu0 %v2086
      %2090 = vmatprep.subr.bf16.mxu0 0
      %2091 = vmatpush1.bf16.msra.mxu0 0
      %2092 = vmatprep.subr.bf16.mxu0 0
      %2093 = vmatpush1.bf16.msra.mxu0 0
      %2094 = vmatprep.subr.bf16.mxu0 0
      %2095 = vmatpush1.bf16.msra.mxu0 0
      %2096 = vmatprep.subr.bf16.mxu0 0
      %2097 = vmatpush1.bf16.msra.mxu0 0
      %2098 = vmatprep.subr.bf16.mxu0 0
      %2099 = vmatpush1.bf16.msra.mxu0 0
      %2100 = vmatprep.subr.bf16.mxu0 0
      %2101 = vmatpush1.bf16.msra.mxu0 0
      %2102 = vmatprep.subr.bf16.mxu0 0
      %2103 = vmatpush1.bf16.msra.mxu0 0
      %2104 = vmatprep.subr.bf16.mxu0 0
      %2105 = vmatpush1.bf16.msra.mxu0 0
      %2106 = vmatprep.subr.bf16.mxu0 0
      %2107 = vmatpush1.bf16.msra.mxu0 0
      %2108 = vmatprep.subr.bf16.mxu0 0
      %2109 = vmatpush1.bf16.msra.mxu0 0
      %2110 = vmatprep.subr.bf16.mxu0 0
      %2111 = vmatpush1.bf16.msra.mxu0 0
      %2112 = vmatprep.subr.bf16.mxu0 0
      %2113 = vmatpush1.bf16.msra.mxu0 0
      %2114 = vmatprep.subr.bf16.mxu0 0
      %2115 = vmatpush1.bf16.msra.mxu0 0
      %2116 = vmatprep.subr.bf16.mxu0 0
      %2117 = vmatpush1.bf16.msra.mxu0 0
      %2118 = vmatprep.subr.bf16.mxu0 0
      %2119 = vmatpush1.bf16.msra.mxu0 0
      %2120 = vmatprep.mubr.bf16.mxu0 0
      %2121 = vmatmul.mubr.bf16.gmra.mrb[0].mxu0 %v2032
      %v2122 = vpop.f32.mrb[0].mxu0
      %v2123 = vadd.f32 0.0, %v2122
      %v2124 = vpop.f32.mrb[0].mxu0
      %v2125 = vpop.f32.mrb[0].mxu0
      %v2126 = vadd.f32 0.0, %v2125
      %v2127 = vpop.f32.mrb[0].mxu0
      %2128 = vmatprep.mubr.bf16.mxu0 0
      %2129 = vmatmul.mubr.bf16.gmra.mrb[0].mxu0 %v2035
      %v2130 = vpop.f32.mrb[0].mxu0
      %v2131 = vadd.f32 0.0, %v2130
      %v2132 = vpop.f32.mrb[0].mxu0
      %v2133 = vpop.f32.mrb[0].mxu0
      %v2134 = vadd.f32 0.0, %v2133
      %v2135 = vpop.f32.mrb[0].mxu0
      %2136 = vmatprep.mubr.bf16.mxu0 0
      %2137 = vmatmul.mubr.bf16.gmra.mrb[0].mxu0 %v2038
      %v2138 = vpop.f32.mrb[0].mxu0
      %v2139 = vadd.f32 0.0, %v2138
      %v2140 = vpop.f32.mrb[0].mxu0
      %v2141 = vpop.f32.mrb[0].mxu0
      %v2142 = vadd.f32 0.0, %v2141
      %v2143 = vpop.f32.mrb[0].mxu0
      %2144 = vmatprep.mubr.bf16.mxu0 0
      %2145 = vmatmul.mubr.bf16.gmra.mrb[0].mxu0 %v2041
      %v2146 = vpop.f32.mrb[0].mxu0
      %v2147 = vadd.f32 0.0, %v2146
      %v2148 = vpop.f32.mrb[0].mxu0
      %v2149 = vpop.f32.mrb[0].mxu0
      %v2150 = vadd.f32 0.0, %v2149
      %v2151 = vpop.f32.mrb[0].mxu0
      %2152 = vmatprep.mubr.bf16.mxu0 0
      %2153 = vmatmul.mubr.bf16.gmra.mrb[0].mxu0 %v2044
      %v2154 = vpop.f32.mrb[0].mxu0
      %v2155 = vadd.f32 0.0, %v2154
      %v2156 = vpop.f32.mrb[0].mxu0
      %v2157 = vpop.f32.mrb[0].mxu0
      %v2158 = vadd.f32 0.0, %v2157
      %v2159 = vpop.f32.mrb[0].mxu0
      %2160 = vmatprep.mubr.bf16.mxu0 0
      %2161 = vmatmul.mubr.bf16.gmra.mrb[0].mxu0 %v2047
      %v2162 = vpop.f32.mrb[0].mxu0
      %v2163 = vadd.f32 0.0, %v2162
      %v2164 = vpop.f32.mrb[0].mxu0
      %v2165 = vpop.f32.mrb[0].mxu0
      %v2166 = vadd.f32 0.0, %v2165
      %v2167 = vpop.f32.mrb[0].mxu0
      %2168 = vmatprep.mubr.bf16.mxu0 0
      %2169 = vmatmul.mubr.bf16.gmra.mrb[0].mxu0 %v2050
      %v2170 = vpop.f32.mrb[0].mxu0
      %v2171 = vadd.f32 0.0, %v2170
      %v2172 = vpop.f32.mrb[0].mxu0
      %v2173 = vpop.f32.mrb[0].mxu0
      %v2174 = vadd.f32 0.0, %v2173
      %v2175 = vpop.f32.mrb[0].mxu0
      %2176 = vmatprep.mubr.bf16.mxu0 0
      %2177 = vmatmul.mubr.bf16.gmra.mrb[0].mxu0 %v2053
      %v2178 = vpop.f32.mrb[0].mxu0
      %v2179 = vadd.f32 0.0, %v2178
      %v2180 = vpop.f32.mrb[0].mxu0
      %v2181 = vpop.f32.mrb[0].mxu0
      %v2182 = vadd.f32 0.0, %v2181
      %v2183 = vpop.f32.mrb[0].mxu0
      %2184 = vmatprep.mubr.bf16.mxu0 0
      %2185 = vmatmul.mubr.bf16.gmra.mrb[0].mxu0 %v2056
      %v2186 = vpop.f32.mrb[0].mxu0
      %v2187 = vadd.f32 0.0, %v2186
      %v2188 = vpop.f32.mrb[0].mxu0
      %v2189 = vpop.f32.mrb[0].mxu0
      %v2190 = vadd.f32 0.0, %v2189
      %v2191 = vpop.f32.mrb[0].mxu0
      %2192 = vmatprep.mubr.bf16.mxu0 0
      %2193 = vmatmul.mubr.bf16.gmra.mrb[0].mxu0 %v2059
      %v2194 = vpop.f32.mrb[0].mxu0
      %v2195 = vadd.f32 0.0, %v2194
      %v2196 = vpop.f32.mrb[0].mxu0
      %v2197 = vpop.f32.mrb[0].mxu0
      %v2198 = vadd.f32 0.0, %v2197
      %v2199 = vpop.f32.mrb[0].mxu0
      %2200 = vmatprep.mubr.bf16.mxu0 0
      %2201 = vmatmul.mubr.bf16.gmra.mrb[0].mxu0 %v2062
      %v2202 = vpop.f32.mrb[0].mxu0
      %v2203 = vadd.f32 0.0, %v2202
      %v2204 = vpop.f32.mrb[0].mxu0
      %v2205 = vpop.f32.mrb[0].mxu0
      %v2206 = vadd.f32 0.0, %v2205
      %v2207 = vpop.f32.mrb[0].mxu0
      %2208 = vmatprep.mubr.bf16.mxu0 0
      %2209 = vmatmul.mubr.bf16.gmra.mrb[0].mxu0 %v2065
      %v2210 = vpop.f32.mrb[0].mxu0
      %v2211 = vadd.f32 0.0, %v2210
      %v2212 = vpop.f32.mrb[0].mxu0
      %v2213 = vpop.f32.mrb[0].mxu0
      %v2214 = vadd.f32 0.0, %v2213
      %v2215 = vpop.f32.mrb[0].mxu0
      %2216 = vmatprep.mubr.bf16.mxu0 0
      %2217 = vmatmul.mubr.bf16.gmra.mrb[0].mxu0 %v2068
      %v2218 = vpop.f32.mrb[0].mxu0
      %v2219 = vadd.f32 0.0, %v2218
      %v2220 = vpop.f32.mrb[0].mxu0
      %v2221 = vpop.f32.mrb[0].mxu0
      %v2222 = vadd.f32 0.0, %v2221
      %v2223 = vpop.f32.mrb[0].mxu0
      %2224 = vmatprep.mubr.bf16.mxu0 0
      %2225 = vmatmul.mubr.bf16.gmra.mrb[0].mxu0 %v2071
      %v2226 = vpop.f32.mrb[0].mxu0
      %v2227 = vadd.f32 0.0, %v2226
      %v2228 = vpop.f32.mrb[0].mxu0
      %v2229 = vpop.f32.mrb[0].mxu0
      %v2230 = vadd.f32 0.0, %v2229
      %v2231 = vpop.f32.mrb[0].mxu0
      %2232 = vmatprep.mubr.bf16.mxu0 0
      %2233 = vmatmul.mubr.bf16.gmra.mrb[0].mxu0 %v2074
      %v2234 = vpop.f32.mrb[0].mxu0
      %v2235 = vadd.f32 0.0, %v2234
      %v2236 = vpop.f32.mrb[0].mxu0
      %v2237 = vpop.f32.mrb[0].mxu0
      %v2238 = vadd.f32 0.0, %v2237
      %v2239 = vpop.f32.mrb[0].mxu0
      %2240 = vmatprep.mubr.bf16.mxu0 0
      %2241 = vmatmul.mubr.bf16.gmra.mrb[0].mxu0 %v2077
      %v2242 = vpop.f32.mrb[0].mxu0
      %v2243 = vadd.f32 0.0, %v2242
      %v2244 = vpop.f32.mrb[0].mxu0
      %v2245 = vpop.f32.mrb[0].mxu0
      %v2246 = vadd.f32 0.0, %v2245
      %v2247 = vpop.f32.mrb[0].mxu0
      %2248 = vmatprep.mubr.bf16.mxu0 0
      %2249 = vmatmul.mubr.bf16.gmra.mrb[0].mxu0 %v2080
      %v2250 = vpop.f32.mrb[0].mxu0
      %v2251 = vadd.f32 0.0, %v2250
      %v2252 = vpop.f32.mrb[0].mxu0
      %v2253 = vpop.f32.mrb[0].mxu0
      %v2254 = vadd.f32 0.0, %v2253
      %v2255 = vpop.f32.mrb[0].mxu0
      %2256 = vmatprep.mubr.bf16.mxu0 0
      %2257 = vmatmul.mubr.bf16.gmra.mrb[0].mxu0 %v2083
      %v2258 = vpop.f32.mrb[0].mxu0
      %v2259 = vadd.f32 0.0, %v2258
      %v2260 = vpop.f32.mrb[0].mxu0
      %v2261 = vpop.f32.mrb[0].mxu0
      %v2262 = vadd.f32 0.0, %v2261
      %v2263 = vpop.f32.mrb[0].mxu0
      %2264 = vdwg.mxu0
      %v2265 = vadd.f32 %v1939, %v2123
      %v2266 = vadd.f32 %v1940, %v2126
      %v2267 = vadd.f32 %v1941, %v2131
      %v2268 = vadd.f32 %v1942, %v2134
      %v2269 = vadd.f32 %v1943, %v2139
      %v2270 = vadd.f32 %v1944, %v2142
      %v2271 = vadd.f32 %v1945, %v2147
      %v2272 = vadd.f32 %v1946, %v2150
      %v2273 = vadd.f32 %v1947, %v2155
      %v2274 = vadd.f32 %v1948, %v2158
      %v2275 = vadd.f32 %v1949, %v2163
      %v2276 = vadd.f32 %v1950, %v2166
      %v2277 = vadd.f32 %v1951, %v2171
      %v2278 = vadd.f32 %v1952, %v2174
      %v2279 = vadd.f32 %v1953, %v2179
      %v2280 = vadd.f32 %v1954, %v2182
      %v2281 = vadd.f32 %v1955, %v2187
      %v2282 = vadd.f32 %v1956, %v2190
      %v2283 = vadd.f32 %v1957, %v2195
      %v2284 = vadd.f32 %v1958, %v2198
      %v2285 = vadd.f32 %v1959, %v2203
      %v2286 = vadd.f32 %v1960, %v2206
      %v2287 = vadd.f32 %v1961, %v2211
      %v2288 = vadd.f32 %v1962, %v2214
      %v2289 = vadd.f32 %v1963, %v2219
      %v2290 = vadd.f32 %v1964, %v2222
      %v2291 = vadd.f32 %v1965, %v2227
      %v2292 = vadd.f32 %v1966, %v2230
      %v2293 = vadd.f32 %v1967, %v2235
      %v2294 = vadd.f32 %v1968, %v2238
      %v2295 = vadd.f32 %v1969, %v2243
      %v2296 = vadd.f32 %v1970, %v2246
      %v2297 = vadd.f32 %v1971, %v2251
      %v2298 = vadd.f32 %v1972, %v2254
      %v2299 = vadd.f32 %v1973, %v2259
      %v2300 = vadd.f32 %v1974, %v2262
      %v2301 = vld [vmem:[%s408 + $0x24] sm:$0xff]
      %v2302 = vld [vmem:[%s408 + $0x2c] sm:$0xff]
      %v2303 = vld [vmem:[%s408 + $0x34] sm:$0xff]
      %v2304 = vld [vmem:[%s408 + $0x3c] sm:$0xff]
      %v2305 = vld [vmem:[%s408 + $0x44] sm:$0xff]
      %v2306 = vld [vmem:[%s408 + $0x4c] sm:$0xff]
      %v2307 = vld [vmem:[%s408 + $0x54] sm:$0xff]
      %v2308 = vld [vmem:[%s408 + $0x5c] sm:$0xff]
      %v2309 = vld [vmem:[%s408 + $0x64] sm:$0xff]
      %v2310 = vld [vmem:[%s408 + $0x6c] sm:$0xff]
      %v2311 = vld [vmem:[%s408 + $0x74] sm:$0xff]
      %v2312 = vld [vmem:[%s408 + $0x7c] sm:$0xff]
      %v2313 = vld [vmem:[%s408 + $0x84] sm:$0xff]
      %v2314 = vld [vmem:[%s408 + $0x8c] sm:$0xff]
      %v2315 = vld [vmem:[%s408 + $0x94] sm:$0xff]
      %v2316 = vld [vmem:[%s408 + $0x9c] sm:$0xff]
      %v2317 = vld [vmem:[%s408 + $0xa4] sm:$0xff]
      %v2318 = vld [vmem:[%s408 + $0xac] sm:$0xff]
      %v2319 = vld [vmem:[%s408 + $0xb4] sm:$0xff]
      %v2320 = vld [vmem:[%s408 + $0xbc] sm:$0xff]
      %v2321 = vld [vmem:[%s408 + $0xc4] sm:$0xff]
      %v2322 = vld [vmem:[%s408 + $0xcc] sm:$0xff]
      %v2323 = vld [vmem:[%s408 + $0xd4] sm:$0xff]
      %v2324 = vld [vmem:[%s408 + $0xdc] sm:$0xff]
      %v2325 = vld [vmem:[%s408 + $0xe4] sm:$0xff]
      %v2326 = vld [vmem:[%s408 + $0xec] sm:$0xff]
      %v2327 = vld [vmem:[%s408 + $0xf4] sm:$0xff]
      %v2328 = vld [vmem:[%s408 + $0xfc] sm:$0xff]
      %v2329 = vld [vmem:[%s408 + $0x104] sm:$0xff]
      %v2330 = vld [vmem:[%s408 + $0x10c] sm:$0xff]
      %v2331 = vld [vmem:[%s408 + $0x114] sm:$0xff]
      %v2332 = vld [vmem:[%s408 + $0x11c] sm:$0xff]
      %v2333 = vld [vmem:[%s408 + $0x124] sm:$0xff]
      %v2334 = vld [vmem:[%s408 + $0x12c] sm:$0xff]
      %v2335 = vld [vmem:[%s408 + $0x134] sm:$0xff]
      %v2336 = vld [vmem:[%s408 + $0x13c] sm:$0x3f]
      %v2337 = vpack.c.bf16 %v2302, %v2301
      %v2338 = vpack.c.bf16 %v2304, %v2303
      %v2339 = vpack.c.bf16 %v2306, %v2305
      %v2340 = vpack.c.bf16 %v2308, %v2307
      %v2341 = vpack.c.bf16 %v2310, %v2309
      %v2342 = vpack.c.bf16 %v2312, %v2311
      %v2343 = vpack.c.bf16 %v2314, %v2313
      %v2344 = vpack.c.bf16 %v2316, %v2315
      %v2345 = vpack.c.bf16 %v2318, %v2317
      %v2346 = vpack.c.bf16 %v2320, %v2319
      %v2347 = vpack.c.bf16 %v2322, %v2321
      %v2348 = vpack.c.bf16 %v2324, %v2323
      %v2349 = vpack.c.bf16 %v2326, %v2325
      %v2350 = vpack.c.bf16 %v2328, %v2327
      %v2351 = vpack.c.bf16 %v2330, %v2329
      %v2352 = vpack.c.bf16 %v2332, %v2331
      %v2353 = vpack.c.bf16 %v2334, %v2333
      %v2354 = vpack.c.bf16 %v2336, %v2335
      %s2355 = scalar_lea.vmem %s1, 12
      %v2356 = vld [vmem:[%s2355] sm:$0x3]
      %v2358 = vsel %vm524, %v2337, 0
      %v2361 = vsel %vm524, %v2338, 0
      %v2364 = vsel %vm524, %v2339, 0
      %v2367 = vsel %vm524, %v2340, 0
      %v2370 = vsel %vm524, %v2341, 0
      %v2373 = vsel %vm524, %v2342, 0
      %v2376 = vsel %vm524, %v2343, 0
      %v2379 = vsel %vm524, %v2344, 0
      %v2382 = vsel %vm524, %v2345, 0
      %v2385 = vsel %vm524, %v2346, 0
      %v2388 = vsel %vm524, %v2347, 0
      %v2391 = vsel %vm524, %v2348, 0
      %v2394 = vsel %vm524, %v2349, 0
      %v2397 = vsel %vm524, %v2350, 0
      %v2400 = vsel %vm524, %v2351, 0
      %v2403 = vsel %vm524, %v2352, 0
      %v2406 = vsel %vm524, %v2353, 0
      %v2409 = vsel %vm524, %v2354, 0
      %v2412 = vand.u32 %v2356, %v582
      %2414 = vmatprep.subr.bf16.mxu0 0
      %2415 = vmatpush1.bf16.msra.mxu0 %v2412
      %2416 = vmatprep.subr.bf16.mxu0 0
      %2417 = vmatpush1.bf16.msra.mxu0 0
      %2418 = vmatprep.subr.bf16.mxu0 0
      %2419 = vmatpush1.bf16.msra.mxu0 0
      %2420 = vmatprep.subr.bf16.mxu0 0
      %2421 = vmatpush1.bf16.msra.mxu0 0
      %2422 = vmatprep.subr.bf16.mxu0 0
      %2423 = vmatpush1.bf16.msra.mxu0 0
      %2424 = vmatprep.subr.bf16.mxu0 0
      %2425 = vmatpush1.bf16.msra.mxu0 0
      %2426 = vmatprep.subr.bf16.mxu0 0
      %2427 = vmatpush1.bf16.msra.mxu0 0
      %2428 = vmatprep.subr.bf16.mxu0 0
      %2429 = vmatpush1.bf16.msra.mxu0 0
      %2430 = vmatprep.subr.bf16.mxu0 0
      %2431 = vmatpush1.bf16.msra.mxu0 0
      %2432 = vmatprep.subr.bf16.mxu0 0
      %2433 = vmatpush1.bf16.msra.mxu0 0
      %2434 = vmatprep.subr.bf16.mxu0 0
      %2435 = vmatpush1.bf16.msra.mxu0 0
      %2436 = vmatprep.subr.bf16.mxu0 0
      %2437 = vmatpush1.bf16.msra.mxu0 0
      %2438 = vmatprep.subr.bf16.mxu0 0
      %2439 = vmatpush1.bf16.msra.mxu0 0
      %2440 = vmatprep.subr.bf16.mxu0 0
      %2441 = vmatpush1.bf16.msra.mxu0 0
      %2442 = vmatprep.subr.bf16.mxu0 0
      %2443 = vmatpush1.bf16.msra.mxu0 0
      %2444 = vmatprep.subr.bf16.mxu0 0
      %2445 = vmatpush1.bf16.msra.mxu0 0
      %2446 = vmatprep.mubr.bf16.mxu0 0
      %2447 = vmatmul.mubr.bf16.gmra.mrb[0].mxu0 %v2358
      %v2448 = vpop.f32.mrb[0].mxu0
      %v2449 = vadd.f32 0.0, %v2448
      %v2450 = vpop.f32.mrb[0].mxu0
      %v2451 = vpop.f32.mrb[0].mxu0
      %v2452 = vadd.f32 0.0, %v2451
      %v2453 = vpop.f32.mrb[0].mxu0
      %2454 = vmatprep.mubr.bf16.mxu0 0
      %2455 = vmatmul.mubr.bf16.gmra.mrb[0].mxu0 %v2361
      %v2456 = vpop.f32.mrb[0].mxu0
      %v2457 = vadd.f32 0.0, %v2456
      %v2458 = vpop.f32.mrb[0].mxu0
      %v2459 = vpop.f32.mrb[0].mxu0
      %v2460 = vadd.f32 0.0, %v2459
      %v2461 = vpop.f32.mrb[0].mxu0
      %2462 = vmatprep.mubr.bf16.mxu0 0
      %2463 = vmatmul.mubr.bf16.gmra.mrb[0].mxu0 %v2364
      %v2464 = vpop.f32.mrb[0].mxu0
      %v2465 = vadd.f32 0.0, %v2464
      %v2466 = vpop.f32.mrb[0].mxu0
      %v2467 = vpop.f32.mrb[0].mxu0
      %v2468 = vadd.f32 0.0, %v2467
      %v2469 = vpop.f32.mrb[0].mxu0
      %2470 = vmatprep.mubr.bf16.mxu0 0
      %2471 = vmatmul.mubr.bf16.gmra.mrb[0].mxu0 %v2367
      %v2472 = vpop.f32.mrb[0].mxu0
      %v2473 = vadd.f32 0.0, %v2472
      %v2474 = vpop.f32.mrb[0].mxu0
      %v2475 = vpop.f32.mrb[0].mxu0
      %v2476 = vadd.f32 0.0, %v2475
      %v2477 = vpop.f32.mrb[0].mxu0
      %2478 = vmatprep.mubr.bf16.mxu0 0
      %2479 = vmatmul.mubr.bf16.gmra.mrb[0].mxu0 %v2370
      %v2480 = vpop.f32.mrb[0].mxu0
      %v2481 = vadd.f32 0.0, %v2480
      %v2482 = vpop.f32.mrb[0].mxu0
      %v2483 = vpop.f32.mrb[0].mxu0
      %v2484 = vadd.f32 0.0, %v2483
      %v2485 = vpop.f32.mrb[0].mxu0
      %2486 = vmatprep.mubr.bf16.mxu0 0
      %2487 = vmatmul.mubr.bf16.gmra.mrb[0].mxu0 %v2373
      %v2488 = vpop.f32.mrb[0].mxu0
      %v2489 = vadd.f32 0.0, %v2488
      %v2490 = vpop.f32.mrb[0].mxu0
      %v2491 = vpop.f32.mrb[0].mxu0
      %v2492 = vadd.f32 0.0, %v2491
      %v2493 = vpop.f32.mrb[0].mxu0
      %2494 = vmatprep.mubr.bf16.mxu0 0
      %2495 = vmatmul.mubr.bf16.gmra.mrb[0].mxu0 %v2376
      %v2496 = vpop.f32.mrb[0].mxu0
      %v2497 = vadd.f32 0.0, %v2496
      %v2498 = vpop.f32.mrb[0].mxu0
      %v2499 = vpop.f32.mrb[0].mxu0
      %v2500 = vadd.f32 0.0, %v2499
      %v2501 = vpop.f32.mrb[0].mxu0
      %2502 = vmatprep.mubr.bf16.mxu0 0
      %2503 = vmatmul.mubr.bf16.gmra.mrb[0].mxu0 %v2379
      %v2504 = vpop.f32.mrb[0].mxu0
      %v2505 = vadd.f32 0.0, %v2504
      %v2506 = vpop.f32.mrb[0].mxu0
      %v2507 = vpop.f32.mrb[0].mxu0
      %v2508 = vadd.f32 0.0, %v2507
      %v2509 = vpop.f32.mrb[0].mxu0
      %2510 = vmatprep.mubr.bf16.mxu0 0
      %2511 = vmatmul.mubr.bf16.gmra.mrb[0].mxu0 %v2382
      %v2512 = vpop.f32.mrb[0].mxu0
      %v2513 = vadd.f32 0.0, %v2512
      %v2514 = vpop.f32.mrb[0].mxu0
      %v2515 = vpop.f32.mrb[0].mxu0
      %v2516 = vadd.f32 0.0, %v2515
      %v2517 = vpop.f32.mrb[0].mxu0
      %2518 = vmatprep.mubr.bf16.mxu0 0
      %2519 = vmatmul.mubr.bf16.gmra.mrb[0].mxu0 %v2385
      %v2520 = vpop.f32.mrb[0].mxu0
      %v2521 = vadd.f32 0.0, %v2520
      %v2522 = vpop.f32.mrb[0].mxu0
      %v2523 = vpop.f32.mrb[0].mxu0
      %v2524 = vadd.f32 0.0, %v2523
      %v2525 = vpop.f32.mrb[0].mxu0
      %2526 = vmatprep.mubr.bf16.mxu0 0
      %2527 = vmatmul.mubr.bf16.gmra.mrb[0].mxu0 %v2388
      %v2528 = vpop.f32.mrb[0].mxu0
      %v2529 = vadd.f32 0.0, %v2528
      %v2530 = vpop.f32.mrb[0].mxu0
      %v2531 = vpop.f32.mrb[0].mxu0
      %v2532 = vadd.f32 0.0, %v2531
      %v2533 = vpop.f32.mrb[0].mxu0
      %2534 = vmatprep.mubr.bf16.mxu0 0
      %2535 = vmatmul.mubr.bf16.gmra.mrb[0].mxu0 %v2391
      %v2536 = vpop.f32.mrb[0].mxu0
      %v2537 = vadd.f32 0.0, %v2536
      %v2538 = vpop.f32.mrb[0].mxu0
      %v2539 = vpop.f32.mrb[0].mxu0
      %v2540 = vadd.f32 0.0, %v2539
      %v2541 = vpop.f32.mrb[0].mxu0
      %2542 = vmatprep.mubr.bf16.mxu0 0
      %2543 = vmatmul.mubr.bf16.gmra.mrb[0].mxu0 %v2394
      %v2544 = vpop.f32.mrb[0].mxu0
      %v2545 = vadd.f32 0.0, %v2544
      %v2546 = vpop.f32.mrb[0].mxu0
      %v2547 = vpop.f32.mrb[0].mxu0
      %v2548 = vadd.f32 0.0, %v2547
      %v2549 = vpop.f32.mrb[0].mxu0
      %2550 = vmatprep.mubr.bf16.mxu0 0
      %2551 = vmatmul.mubr.bf16.gmra.mrb[0].mxu0 %v2397
      %v2552 = vpop.f32.mrb[0].mxu0
      %v2553 = vadd.f32 0.0, %v2552
      %v2554 = vpop.f32.mrb[0].mxu0
      %v2555 = vpop.f32.mrb[0].mxu0
      %v2556 = vadd.f32 0.0, %v2555
      %v2557 = vpop.f32.mrb[0].mxu0
      %2558 = vmatprep.mubr.bf16.mxu0 0
      %2559 = vmatmul.mubr.bf16.gmra.mrb[0].mxu0 %v2400
      %v2560 = vpop.f32.mrb[0].mxu0
      %v2561 = vadd.f32 0.0, %v2560
      %v2562 = vpop.f32.mrb[0].mxu0
      %v2563 = vpop.f32.mrb[0].mxu0
      %v2564 = vadd.f32 0.0, %v2563
      %v2565 = vpop.f32.mrb[0].mxu0
      %2566 = vmatprep.mubr.bf16.mxu0 0
      %2567 = vmatmul.mubr.bf16.gmra.mrb[0].mxu0 %v2403
      %v2568 = vpop.f32.mrb[0].mxu0
      %v2569 = vadd.f32 0.0, %v2568
      %v2570 = vpop.f32.mrb[0].mxu0
      %v2571 = vpop.f32.mrb[0].mxu0
      %v2572 = vadd.f32 0.0, %v2571
      %v2573 = vpop.f32.mrb[0].mxu0
      %2574 = vmatprep.mubr.bf16.mxu0 0
      %2575 = vmatmul.mubr.bf16.gmra.mrb[0].mxu0 %v2406
      %v2576 = vpop.f32.mrb[0].mxu0
      %v2577 = vadd.f32 0.0, %v2576
      %v2578 = vpop.f32.mrb[0].mxu0
      %v2579 = vpop.f32.mrb[0].mxu0
      %v2580 = vadd.f32 0.0, %v2579
      %v2581 = vpop.f32.mrb[0].mxu0
      %2582 = vmatprep.mubr.bf16.mxu0 0
      %2583 = vmatmul.mubr.bf16.gmra.mrb[0].mxu0 %v2409
      %v2584 = vpop.f32.mrb[0].mxu0
      %v2585 = vadd.f32 0.0, %v2584
      %v2586 = vpop.f32.mrb[0].mxu0
      %v2587 = vpop.f32.mrb[0].mxu0
      %v2588 = vadd.f32 0.0, %v2587
      %v2589 = vpop.f32.mrb[0].mxu0
      %2590 = vdwg.mxu0
      %v2591 = vadd.f32 %v2265, %v2449
      %v2592 = vadd.f32 %v2266, %v2452
      %v2593 = vadd.f32 %v2267, %v2457
      %v2594 = vadd.f32 %v2268, %v2460
      %v2595 = vadd.f32 %v2269, %v2465
      %v2596 = vadd.f32 %v2270, %v2468
      %v2597 = vadd.f32 %v2271, %v2473
      %v2598 = vadd.f32 %v2272, %v2476
      %v2599 = vadd.f32 %v2273, %v2481
      %v2600 = vadd.f32 %v2274, %v2484
      %v2601 = vadd.f32 %v2275, %v2489
      %v2602 = vadd.f32 %v2276, %v2492
      %v2603 = vadd.f32 %v2277, %v2497
      %v2604 = vadd.f32 %v2278, %v2500
      %v2605 = vadd.f32 %v2279, %v2505
      %v2606 = vadd.f32 %v2280, %v2508
      %v2607 = vadd.f32 %v2281, %v2513
      %v2608 = vadd.f32 %v2282, %v2516
      %v2609 = vadd.f32 %v2283, %v2521
      %v2610 = vadd.f32 %v2284, %v2524
      %v2611 = vadd.f32 %v2285, %v2529
      %v2612 = vadd.f32 %v2286, %v2532
      %v2613 = vadd.f32 %v2287, %v2537
      %v2614 = vadd.f32 %v2288, %v2540
      %v2615 = vadd.f32 %v2289, %v2545
      %v2616 = vadd.f32 %v2290, %v2548
      %v2617 = vadd.f32 %v2291, %v2553
      %v2618 = vadd.f32 %v2292, %v2556
      %v2619 = vadd.f32 %v2293, %v2561
      %v2620 = vadd.f32 %v2294, %v2564
      %v2621 = vadd.f32 %v2295, %v2569
      %v2622 = vadd.f32 %v2296, %v2572
      %v2623 = vadd.f32 %v2297, %v2577
      %v2624 = vadd.f32 %v2298, %v2580
      %v2625 = vadd.f32 %v2299, %v2585
      %v2626 = vadd.f32 %v2300, %v2588
      %v2627 = vld [vmem:[%s408 + $0x25] sm:$0xff]
      %v2628 = vld [vmem:[%s408 + $0x2d] sm:$0xff]
      %v2629 = vld [vmem:[%s408 + $0x35] sm:$0xff]
      %v2630 = vld [vmem:[%s408 + $0x3d] sm:$0xff]
      %v2631 = vld [vmem:[%s408 + $0x45] sm:$0xff]
      %v2632 = vld [vmem:[%s408 + $0x4d] sm:$0xff]
      %v2633 = vld [vmem:[%s408 + $0x55] sm:$0xff]
      %v2634 = vld [vmem:[%s408 + $0x5d] sm:$0xff]
      %v2635 = vld [vmem:[%s408 + $0x65] sm:$0xff]
      %v2636 = vld [vmem:[%s408 + $0x6d] sm:$0xff]
      %v2637 = vld [vmem:[%s408 + $0x75] sm:$0xff]
      %v2638 = vld [vmem:[%s408 + $0x7d] sm:$0xff]
      %v2639 = vld [vmem:[%s408 + $0x85] sm:$0xff]
      %v2640 = vld [vmem:[%s408 + $0x8d] sm:$0xff]
      %v2641 = vld [vmem:[%s408 + $0x95] sm:$0xff]
      %v2642 = vld [vmem:[%s408 + $0x9d] sm:$0xff]
      %v2643 = vld [vmem:[%s408 + $0xa5] sm:$0xff]
      %v2644 = vld [vmem:[%s408 + $0xad] sm:$0xff]
      %v2645 = vld [vmem:[%s408 + $0xb5] sm:$0xff]
      %v2646 = vld [vmem:[%s408 + $0xbd] sm:$0xff]
      %v2647 = vld [vmem:[%s408 + $0xc5] sm:$0xff]
      %v2648 = vld [vmem:[%s408 + $0xcd] sm:$0xff]
      %v2649 = vld [vmem:[%s408 + $0xd5] sm:$0xff]
      %v2650 = vld [vmem:[%s408 + $0xdd] sm:$0xff]
      %v2651 = vld [vmem:[%s408 + $0xe5] sm:$0xff]
      %v2652 = vld [vmem:[%s408 + $0xed] sm:$0xff]
      %v2653 = vld [vmem:[%s408 + $0xf5] sm:$0xff]
      %v2654 = vld [vmem:[%s408 + $0xfd] sm:$0xff]
      %v2655 = vld [vmem:[%s408 + $0x105] sm:$0xff]
      %v2656 = vld [vmem:[%s408 + $0x10d] sm:$0xff]
      %v2657 = vld [vmem:[%s408 + $0x115] sm:$0xff]
      %v2658 = vld [vmem:[%s408 + $0x11d] sm:$0xff]
      %v2659 = vld [vmem:[%s408 + $0x125] sm:$0xff]
      %v2660 = vld [vmem:[%s408 + $0x12d] sm:$0xff]
      %v2661 = vld [vmem:[%s408 + $0x135] sm:$0xff]
      %v2662 = vld [vmem:[%s408 + $0x13d] sm:$0x3f]
      %v2663 = vpack.c.bf16 %v2628, %v2627
      %v2664 = vpack.c.bf16 %v2630, %v2629
      %v2665 = vpack.c.bf16 %v2632, %v2631
      %v2666 = vpack.c.bf16 %v2634, %v2633
      %v2667 = vpack.c.bf16 %v2636, %v2635
      %v2668 = vpack.c.bf16 %v2638, %v2637
      %v2669 = vpack.c.bf16 %v2640, %v2639
      %v2670 = vpack.c.bf16 %v2642, %v2641
      %v2671 = vpack.c.bf16 %v2644, %v2643
      %v2672 = vpack.c.bf16 %v2646, %v2645
      %v2673 = vpack.c.bf16 %v2648, %v2647
      %v2674 = vpack.c.bf16 %v2650, %v2649
      %v2675 = vpack.c.bf16 %v2652, %v2651
      %v2676 = vpack.c.bf16 %v2654, %v2653
      %v2677 = vpack.c.bf16 %v2656, %v2655
      %v2678 = vpack.c.bf16 %v2658, %v2657
      %v2679 = vpack.c.bf16 %v2660, %v2659
      %v2680 = vpack.c.bf16 %v2662, %v2661
      %s2681 = scalar_lea.vmem %s1, 14
      %v2682 = vld [vmem:[%s2681] sm:$0x3]
      %v2684 = vsel %vm524, %v2663, 0
      %v2687 = vsel %vm524, %v2664, 0
      %v2690 = vsel %vm524, %v2665, 0
      %v2693 = vsel %vm524, %v2666, 0
      %v2696 = vsel %vm524, %v2667, 0
      %v2699 = vsel %vm524, %v2668, 0
      %v2702 = vsel %vm524, %v2669, 0
      %v2705 = vsel %vm524, %v2670, 0
      %v2708 = vsel %vm524, %v2671, 0
      %v2711 = vsel %vm524, %v2672, 0
      %v2714 = vsel %vm524, %v2673, 0
      %v2717 = vsel %vm524, %v2674, 0
      %v2720 = vsel %vm524, %v2675, 0
      %v2723 = vsel %vm524, %v2676, 0
      %v2726 = vsel %vm524, %v2677, 0
      %v2729 = vsel %vm524, %v2678, 0
      %v2732 = vsel %vm524, %v2679, 0
      %v2735 = vsel %vm524, %v2680, 0
      %v2738 = vand.u32 %v2682, %v582
      %2740 = vmatprep.subr.bf16.mxu0 0
      %2741 = vmatpush1.bf16.msra.mxu0 %v2738
      %2742 = vmatprep.subr.bf16.mxu0 0
      %2743 = vmatpush1.bf16.msra.mxu0 0
      %2744 = vmatprep.subr.bf16.mxu0 0
      %2745 = vmatpush1.bf16.msra.mxu0 0
      %2746 = vmatprep.subr.bf16.mxu0 0
      %2747 = vmatpush1.bf16.msra.mxu0 0
      %2748 = vmatprep.subr.bf16.mxu0 0
      %2749 = vmatpush1.bf16.msra.mxu0 0
      %2750 = vmatprep.subr.bf16.mxu0 0
      %2751 = vmatpush1.bf16.msra.mxu0 0
      %2752 = vmatprep.subr.bf16.mxu0 0
      %2753 = vmatpush1.bf16.msra.mxu0 0
      %2754 = vmatprep.subr.bf16.mxu0 0
      %2755 = vmatpush1.bf16.msra.mxu0 0
      %2756 = vmatprep.subr.bf16.mxu0 0
      %2757 = vmatpush1.bf16.msra.mxu0 0
      %2758 = vmatprep.subr.bf16.mxu0 0
      %2759 = vmatpush1.bf16.msra.mxu0 0
      %2760 = vmatprep.subr.bf16.mxu0 0
      %2761 = vmatpush1.bf16.msra.mxu0 0
      %2762 = vmatprep.subr.bf16.mxu0 0
      %2763 = vmatpush1.bf16.msra.mxu0 0
      %2764 = vmatprep.subr.bf16.mxu0 0
      %2765 = vmatpush1.bf16.msra.mxu0 0
      %2766 = vmatprep.subr.bf16.mxu0 0
      %2767 = vmatpush1.bf16.msra.mxu0 0
      %2768 = vmatprep.subr.bf16.mxu0 0
      %2769 = vmatpush1.bf16.msra.mxu0 0
      %2770 = vmatprep.subr.bf16.mxu0 0
      %2771 = vmatpush1.bf16.msra.mxu0 0
      %2772 = vmatprep.mubr.bf16.mxu0 0
      %2773 = vmatmul.mubr.bf16.gmra.mrb[0].mxu0 %v2684
      %v2774 = vpop.f32.mrb[0].mxu0
      %v2775 = vadd.f32 0.0, %v2774
      %v2776 = vpop.f32.mrb[0].mxu0
      %v2777 = vpop.f32.mrb[0].mxu0
      %v2778 = vadd.f32 0.0, %v2777
      %v2779 = vpop.f32.mrb[0].mxu0
      %2780 = vmatprep.mubr.bf16.mxu0 0
      %2781 = vmatmul.mubr.bf16.gmra.mrb[0].mxu0 %v2687
      %v2782 = vpop.f32.mrb[0].mxu0
      %v2783 = vadd.f32 0.0, %v2782
      %v2784 = vpop.f32.mrb[0].mxu0
      %v2785 = vpop.f32.mrb[0].mxu0
      %v2786 = vadd.f32 0.0, %v2785
      %v2787 = vpop.f32.mrb[0].mxu0
      %2788 = vmatprep.mubr.bf16.mxu0 0
      %2789 = vmatmul.mubr.bf16.gmra.mrb[0].mxu0 %v2690
      %v2790 = vpop.f32.mrb[0].mxu0
      %v2791 = vadd.f32 0.0, %v2790
      %v2792 = vpop.f32.mrb[0].mxu0
      %v2793 = vpop.f32.mrb[0].mxu0
      %v2794 = vadd.f32 0.0, %v2793
      %v2795 = vpop.f32.mrb[0].mxu0
      %2796 = vmatprep.mubr.bf16.mxu0 0
      %2797 = vmatmul.mubr.bf16.gmra.mrb[0].mxu0 %v2693
      %v2798 = vpop.f32.mrb[0].mxu0
      %v2799 = vadd.f32 0.0, %v2798
      %v2800 = vpop.f32.mrb[0].mxu0
      %v2801 = vpop.f32.mrb[0].mxu0
      %v2802 = vadd.f32 0.0, %v2801
      %v2803 = vpop.f32.mrb[0].mxu0
      %2804 = vmatprep.mubr.bf16.mxu0 0
      %2805 = vmatmul.mubr.bf16.gmra.mrb[0].mxu0 %v2696
      %v2806 = vpop.f32.mrb[0].mxu0
      %v2807 = vadd.f32 0.0, %v2806
      %v2808 = vpop.f32.mrb[0].mxu0
      %v2809 = vpop.f32.mrb[0].mxu0
      %v2810 = vadd.f32 0.0, %v2809
      %v2811 = vpop.f32.mrb[0].mxu0
      %2812 = vmatprep.mubr.bf16.mxu0 0
      %2813 = vmatmul.mubr.bf16.gmra.mrb[0].mxu0 %v2699
      %v2814 = vpop.f32.mrb[0].mxu0
      %v2815 = vadd.f32 0.0, %v2814
      %v2816 = vpop.f32.mrb[0].mxu0
      %v2817 = vpop.f32.mrb[0].mxu0
      %v2818 = vadd.f32 0.0, %v2817
      %v2819 = vpop.f32.mrb[0].mxu0
      %2820 = vmatprep.mubr.bf16.mxu0 0
      %2821 = vmatmul.mubr.bf16.gmra.mrb[0].mxu0 %v2702
      %v2822 = vpop.f32.mrb[0].mxu0
      %v2823 = vadd.f32 0.0, %v2822
      %v2824 = vpop.f32.mrb[0].mxu0
      %v2825 = vpop.f32.mrb[0].mxu0
      %v2826 = vadd.f32 0.0, %v2825
      %v2827 = vpop.f32.mrb[0].mxu0
      %2828 = vmatprep.mubr.bf16.mxu0 0
      %2829 = vmatmul.mubr.bf16.gmra.mrb[0].mxu0 %v2705
      %v2830 = vpop.f32.mrb[0].mxu0
      %v2831 = vadd.f32 0.0, %v2830
      %v2832 = vpop.f32.mrb[0].mxu0
      %v2833 = vpop.f32.mrb[0].mxu0
      %v2834 = vadd.f32 0.0, %v2833
      %v2835 = vpop.f32.mrb[0].mxu0
      %2836 = vmatprep.mubr.bf16.mxu0 0
      %2837 = vmatmul.mubr.bf16.gmra.mrb[0].mxu0 %v2708
      %v2838 = vpop.f32.mrb[0].mxu0
      %v2839 = vadd.f32 0.0, %v2838
      %v2840 = vpop.f32.mrb[0].mxu0
      %v2841 = vpop.f32.mrb[0].mxu0
      %v2842 = vadd.f32 0.0, %v2841
      %v2843 = vpop.f32.mrb[0].mxu0
      %2844 = vmatprep.mubr.bf16.mxu0 0
      %2845 = vmatmul.mubr.bf16.gmra.mrb[0].mxu0 %v2711
      %v2846 = vpop.f32.mrb[0].mxu0
      %v2847 = vadd.f32 0.0, %v2846
      %v2848 = vpop.f32.mrb[0].mxu0
      %v2849 = vpop.f32.mrb[0].mxu0
      %v2850 = vadd.f32 0.0, %v2849
      %v2851 = vpop.f32.mrb[0].mxu0
      %2852 = vmatprep.mubr.bf16.mxu0 0
      %2853 = vmatmul.mubr.bf16.gmra.mrb[0].mxu0 %v2714
      %v2854 = vpop.f32.mrb[0].mxu0
      %v2855 = vadd.f32 0.0, %v2854
      %v2856 = vpop.f32.mrb[0].mxu0
      %v2857 = vpop.f32.mrb[0].mxu0
      %v2858 = vadd.f32 0.0, %v2857
      %v2859 = vpop.f32.mrb[0].mxu0
      %2860 = vmatprep.mubr.bf16.mxu0 0
      %2861 = vmatmul.mubr.bf16.gmra.mrb[0].mxu0 %v2717
      %v2862 = vpop.f32.mrb[0].mxu0
      %v2863 = vadd.f32 0.0, %v2862
      %v2864 = vpop.f32.mrb[0].mxu0
      %v2865 = vpop.f32.mrb[0].mxu0
      %v2866 = vadd.f32 0.0, %v2865
      %v2867 = vpop.f32.mrb[0].mxu0
      %2868 = vmatprep.mubr.bf16.mxu0 0
      %2869 = vmatmul.mubr.bf16.gmra.mrb[0].mxu0 %v2720
      %v2870 = vpop.f32.mrb[0].mxu0
      %v2871 = vadd.f32 0.0, %v2870
      %v2872 = vpop.f32.mrb[0].mxu0
      %v2873 = vpop.f32.mrb[0].mxu0
      %v2874 = vadd.f32 0.0, %v2873
      %v2875 = vpop.f32.mrb[0].mxu0
      %2876 = vmatprep.mubr.bf16.mxu0 0
      %2877 = vmatmul.mubr.bf16.gmra.mrb[0].mxu0 %v2723
      %v2878 = vpop.f32.mrb[0].mxu0
      %v2879 = vadd.f32 0.0, %v2878
      %v2880 = vpop.f32.mrb[0].mxu0
      %v2881 = vpop.f32.mrb[0].mxu0
      %v2882 = vadd.f32 0.0, %v2881
      %v2883 = vpop.f32.mrb[0].mxu0
      %2884 = vmatprep.mubr.bf16.mxu0 0
      %2885 = vmatmul.mubr.bf16.gmra.mrb[0].mxu0 %v2726
      %v2886 = vpop.f32.mrb[0].mxu0
      %v2887 = vadd.f32 0.0, %v2886
      %v2888 = vpop.f32.mrb[0].mxu0
      %v2889 = vpop.f32.mrb[0].mxu0
      %v2890 = vadd.f32 0.0, %v2889
      %v2891 = vpop.f32.mrb[0].mxu0
      %2892 = vmatprep.mubr.bf16.mxu0 0
      %2893 = vmatmul.mubr.bf16.gmra.mrb[0].mxu0 %v2729
      %v2894 = vpop.f32.mrb[0].mxu0
      %v2895 = vadd.f32 0.0, %v2894
      %v2896 = vpop.f32.mrb[0].mxu0
      %v2897 = vpop.f32.mrb[0].mxu0
      %v2898 = vadd.f32 0.0, %v2897
      %v2899 = vpop.f32.mrb[0].mxu0
      %2900 = vmatprep.mubr.bf16.mxu0 0
      %2901 = vmatmul.mubr.bf16.gmra.mrb[0].mxu0 %v2732
      %v2902 = vpop.f32.mrb[0].mxu0
      %v2903 = vadd.f32 0.0, %v2902
      %v2904 = vpop.f32.mrb[0].mxu0
      %v2905 = vpop.f32.mrb[0].mxu0
      %v2906 = vadd.f32 0.0, %v2905
      %v2907 = vpop.f32.mrb[0].mxu0
      %2908 = vmatprep.mubr.bf16.mxu0 0
      %2909 = vmatmul.mubr.bf16.gmra.mrb[0].mxu0 %v2735
      %v2910 = vpop.f32.mrb[0].mxu0
      %v2911 = vadd.f32 0.0, %v2910
      %v2912 = vpop.f32.mrb[0].mxu0
      %v2913 = vpop.f32.mrb[0].mxu0
      %v2914 = vadd.f32 0.0, %v2913
      %v2915 = vpop.f32.mrb[0].mxu0
      %2916 = vdwg.mxu0
      %v2917 = vadd.f32 %v2591, %v2775
      %v2918 = vadd.f32 %v2592, %v2778
      %v2919 = vadd.f32 %v2593, %v2783
      %v2920 = vadd.f32 %v2594, %v2786
      %v2921 = vadd.f32 %v2595, %v2791
      %v2922 = vadd.f32 %v2596, %v2794
      %v2923 = vadd.f32 %v2597, %v2799
      %v2924 = vadd.f32 %v2598, %v2802
      %v2925 = vadd.f32 %v2599, %v2807
      %v2926 = vadd.f32 %v2600, %v2810
      %v2927 = vadd.f32 %v2601, %v2815
      %v2928 = vadd.f32 %v2602, %v2818
      %v2929 = vadd.f32 %v2603, %v2823
      %v2930 = vadd.f32 %v2604, %v2826
      %v2931 = vadd.f32 %v2605, %v2831
      %v2932 = vadd.f32 %v2606, %v2834
      %v2933 = vadd.f32 %v2607, %v2839
      %v2934 = vadd.f32 %v2608, %v2842
      %v2935 = vadd.f32 %v2609, %v2847
      %v2936 = vadd.f32 %v2610, %v2850
      %v2937 = vadd.f32 %v2611, %v2855
      %v2938 = vadd.f32 %v2612, %v2858
      %v2939 = vadd.f32 %v2613, %v2863
      %v2940 = vadd.f32 %v2614, %v2866
      %v2941 = vadd.f32 %v2615, %v2871
      %v2942 = vadd.f32 %v2616, %v2874
      %v2943 = vadd.f32 %v2617, %v2879
      %v2944 = vadd.f32 %v2618, %v2882
      %v2945 = vadd.f32 %v2619, %v2887
      %v2946 = vadd.f32 %v2620, %v2890
      %v2947 = vadd.f32 %v2621, %v2895
      %v2948 = vadd.f32 %v2622, %v2898
      %v2949 = vadd.f32 %v2623, %v2903
      %v2950 = vadd.f32 %v2624, %v2906
      %v2951 = vadd.f32 %v2625, %v2911
      %v2952 = vadd.f32 %v2626, %v2914
      %v2953 = vld [vmem:[%s408 + $0x26] sm:$0xff]
      %v2954 = vld [vmem:[%s408 + $0x2e] sm:$0xff]
      %v2955 = vld [vmem:[%s408 + $0x36] sm:$0xff]
      %v2956 = vld [vmem:[%s408 + $0x3e] sm:$0xff]
      %v2957 = vld [vmem:[%s408 + $0x46] sm:$0xff]
      %v2958 = vld [vmem:[%s408 + $0x4e] sm:$0xff]
      %v2959 = vld [vmem:[%s408 + $0x56] sm:$0xff]
      %v2960 = vld [vmem:[%s408 + $0x5e] sm:$0xff]
      %v2961 = vld [vmem:[%s408 + $0x66] sm:$0xff]
      %v2962 = vld [vmem:[%s408 + $0x6e] sm:$0xff]
      %v2963 = vld [vmem:[%s408 + $0x76] sm:$0xff]
      %v2964 = vld [vmem:[%s408 + $0x7e] sm:$0xff]
      %v2965 = vld [vmem:[%s408 + $0x86] sm:$0xff]
      %v2966 = vld [vmem:[%s408 + $0x8e] sm:$0xff]
      %v2967 = vld [vmem:[%s408 + $0x96] sm:$0xff]
      %v2968 = vld [vmem:[%s408 + $0x9e] sm:$0xff]
      %v2969 = vld [vmem:[%s408 + $0xa6] sm:$0xff]
      %v2970 = vld [vmem:[%s408 + $0xae] sm:$0xff]
      %v2971 = vld [vmem:[%s408 + $0xb6] sm:$0xff]
      %v2972 = vld [vmem:[%s408 + $0xbe] sm:$0xff]
      %v2973 = vld [vmem:[%s408 + $0xc6] sm:$0xff]
      %v2974 = vld [vmem:[%s408 + $0xce] sm:$0xff]
      %v2975 = vld [vmem:[%s408 + $0xd6] sm:$0xff]
      %v2976 = vld [vmem:[%s408 + $0xde] sm:$0xff]
      %v2977 = vld [vmem:[%s408 + $0xe6] sm:$0xff]
      %v2978 = vld [vmem:[%s408 + $0xee] sm:$0xff]
      %v2979 = vld [vmem:[%s408 + $0xf6] sm:$0xff]
      %v2980 = vld [vmem:[%s408 + $0xfe] sm:$0xff]
      %v2981 = vld [vmem:[%s408 + $0x106] sm:$0xff]
      %v2982 = vld [vmem:[%s408 + $0x10e] sm:$0xff]
      %v2983 = vld [vmem:[%s408 + $0x116] sm:$0xff]
      %v2984 = vld [vmem:[%s408 + $0x11e] sm:$0xff]
      %v2985 = vld [vmem:[%s408 + $0x126] sm:$0xff]
      %v2986 = vld [vmem:[%s408 + $0x12e] sm:$0xff]
      %v2987 = vld [vmem:[%s408 + $0x136] sm:$0xff]
      %v2988 = vld [vmem:[%s408 + $0x13e] sm:$0x3f]
      %v2989 = vpack.c.bf16 %v2954, %v2953
      %v2990 = vpack.c.bf16 %v2956, %v2955
      %v2991 = vpack.c.bf16 %v2958, %v2957
      %v2992 = vpack.c.bf16 %v2960, %v2959
      %v2993 = vpack.c.bf16 %v2962, %v2961
      %v2994 = vpack.c.bf16 %v2964, %v2963
      %v2995 = vpack.c.bf16 %v2966, %v2965
      %v2996 = vpack.c.bf16 %v2968, %v2967
      %v2997 = vpack.c.bf16 %v2970, %v2969
      %v2998 = vpack.c.bf16 %v2972, %v2971
      %v2999 = vpack.c.bf16 %v2974, %v2973
      %v3000 = vpack.c.bf16 %v2976, %v2975
      %v3001 = vpack.c.bf16 %v2978, %v2977
      %v3002 = vpack.c.bf16 %v2980, %v2979
      %v3003 = vpack.c.bf16 %v2982, %v2981
      %v3004 = vpack.c.bf16 %v2984, %v2983
      %v3005 = vpack.c.bf16 %v2986, %v2985
      %v3006 = vpack.c.bf16 %v2988, %v2987
      %s3007 = scalar_lea.vmem %s1, 16
      %v3008 = vld [vmem:[%s3007] sm:$0x3]
      %v3010 = vsel %vm524, %v2989, 0
      %v3013 = vsel %vm524, %v2990, 0
      %v3016 = vsel %vm524, %v2991, 0
      %v3019 = vsel %vm524, %v2992, 0
      %v3022 = vsel %vm524, %v2993, 0
      %v3025 = vsel %vm524, %v2994, 0
      %v3028 = vsel %vm524, %v2995, 0
      %v3031 = vsel %vm524, %v2996, 0
      %v3034 = vsel %vm524, %v2997, 0
      %v3037 = vsel %vm524, %v2998, 0
      %v3040 = vsel %vm524, %v2999, 0
      %v3043 = vsel %vm524, %v3000, 0
      %v3046 = vsel %vm524, %v3001, 0
      %v3049 = vsel %vm524, %v3002, 0
      %v3052 = vsel %vm524, %v3003, 0
      %v3055 = vsel %vm524, %v3004, 0
      %v3058 = vsel %vm524, %v3005, 0
      %v3061 = vsel %vm524, %v3006, 0
      %v3064 = vand.u32 %v3008, %v582
      %3066 = vmatprep.subr.bf16.mxu0 0
      %3067 = vmatpush1.bf16.msra.mxu0 %v3064
      %3068 = vmatprep.subr.bf16.mxu0 0
      %3069 = vmatpush1.bf16.msra.mxu0 0
      %3070 = vmatprep.subr.bf16.mxu0 0
      %3071 = vmatpush1.bf16.msra.mxu0 0
      %3072 = vmatprep.subr.bf16.mxu0 0
      %3073 = vmatpush1.bf16.msra.mxu0 0
      %3074 = vmatprep.subr.bf16.mxu0 0
      %3075 = vmatpush1.bf16.msra.mxu0 0
      %3076 = vmatprep.subr.bf16.mxu0 0
      %3077 = vmatpush1.bf16.msra.mxu0 0
      %3078 = vmatprep.subr.bf16.mxu0 0
      %3079 = vmatpush1.bf16.msra.mxu0 0
      %3080 = vmatprep.subr.bf16.mxu0 0
      %3081 = vmatpush1.bf16.msra.mxu0 0
      %3082 = vmatprep.subr.bf16.mxu0 0
      %3083 = vmatpush1.bf16.msra.mxu0 0
      %3084 = vmatprep.subr.bf16.mxu0 0
      %3085 = vmatpush1.bf16.msra.mxu0 0
      %3086 = vmatprep.subr.bf16.mxu0 0
      %3087 = vmatpush1.bf16.msra.mxu0 0
      %3088 = vmatprep.subr.bf16.mxu0 0
      %3089 = vmatpush1.bf16.msra.mxu0 0
      %3090 = vmatprep.subr.bf16.mxu0 0
      %3091 = vmatpush1.bf16.msra.mxu0 0
      %3092 = vmatprep.subr.bf16.mxu0 0
      %3093 = vmatpush1.bf16.msra.mxu0 0
      %3094 = vmatprep.subr.bf16.mxu0 0
      %3095 = vmatpush1.bf16.msra.mxu0 0
      %3096 = vmatprep.subr.bf16.mxu0 0
      %3097 = vmatpush1.bf16.msra.mxu0 0
      %3098 = vmatprep.mubr.bf16.mxu0 0
      %3099 = vmatmul.mubr.bf16.gmra.mrb[0].mxu0 %v3010
      %v3100 = vpop.f32.mrb[0].mxu0
      %v3101 = vadd.f32 0.0, %v3100
      %v3102 = vpop.f32.mrb[0].mxu0
      %v3103 = vpop.f32.mrb[0].mxu0
      %v3104 = vadd.f32 0.0, %v3103
      %v3105 = vpop.f32.mrb[0].mxu0
      %3106 = vmatprep.mubr.bf16.mxu0 0
      %3107 = vmatmul.mubr.bf16.gmra.mrb[0].mxu0 %v3013
      %v3108 = vpop.f32.mrb[0].mxu0
      %v3109 = vadd.f32 0.0, %v3108
      %v3110 = vpop.f32.mrb[0].mxu0
      %v3111 = vpop.f32.mrb[0].mxu0
      %v3112 = vadd.f32 0.0, %v3111
      %v3113 = vpop.f32.mrb[0].mxu0
      %3114 = vmatprep.mubr.bf16.mxu0 0
      %3115 = vmatmul.mubr.bf16.gmra.mrb[0].mxu0 %v3016
      %v3116 = vpop.f32.mrb[0].mxu0
      %v3117 = vadd.f32 0.0, %v3116
      %v3118 = vpop.f32.mrb[0].mxu0
      %v3119 = vpop.f32.mrb[0].mxu0
      %v3120 = vadd.f32 0.0, %v3119
      %v3121 = vpop.f32.mrb[0].mxu0
      %3122 = vmatprep.mubr.bf16.mxu0 0
      %3123 = vmatmul.mubr.bf16.gmra.mrb[0].mxu0 %v3019
      %v3124 = vpop.f32.mrb[0].mxu0
      %v3125 = vadd.f32 0.0, %v3124
      %v3126 = vpop.f32.mrb[0].mxu0
      %v3127 = vpop.f32.mrb[0].mxu0
      %v3128 = vadd.f32 0.0, %v3127
      %v3129 = vpop.f32.mrb[0].mxu0
      %3130 = vmatprep.mubr.bf16.mxu0 0
      %3131 = vmatmul.mubr.bf16.gmra.mrb[0].mxu0 %v3022
      %v3132 = vpop.f32.mrb[0].mxu0
      %v3133 = vadd.f32 0.0, %v3132
      %v3134 = vpop.f32.mrb[0].mxu0
      %v3135 = vpop.f32.mrb[0].mxu0
      %v3136 = vadd.f32 0.0, %v3135
      %v3137 = vpop.f32.mrb[0].mxu0
      %3138 = vmatprep.mubr.bf16.mxu0 0
      %3139 = vmatmul.mubr.bf16.gmra.mrb[0].mxu0 %v3025
      %v3140 = vpop.f32.mrb[0].mxu0
      %v3141 = vadd.f32 0.0, %v3140
      %v3142 = vpop.f32.mrb[0].mxu0
      %v3143 = vpop.f32.mrb[0].mxu0
      %v3144 = vadd.f32 0.0, %v3143
      %v3145 = vpop.f32.mrb[0].mxu0
      %3146 = vmatprep.mubr.bf16.mxu0 0
      %3147 = vmatmul.mubr.bf16.gmra.mrb[0].mxu0 %v3028
      %v3148 = vpop.f32.mrb[0].mxu0
      %v3149 = vadd.f32 0.0, %v3148
      %v3150 = vpop.f32.mrb[0].mxu0
      %v3151 = vpop.f32.mrb[0].mxu0
      %v3152 = vadd.f32 0.0, %v3151
      %v3153 = vpop.f32.mrb[0].mxu0
      %3154 = vmatprep.mubr.bf16.mxu0 0
      %3155 = vmatmul.mubr.bf16.gmra.mrb[0].mxu0 %v3031
      %v3156 = vpop.f32.mrb[0].mxu0
      %v3157 = vadd.f32 0.0, %v3156
      %v3158 = vpop.f32.mrb[0].mxu0
      %v3159 = vpop.f32.mrb[0].mxu0
      %v3160 = vadd.f32 0.0, %v3159
      %v3161 = vpop.f32.mrb[0].mxu0
      %3162 = vmatprep.mubr.bf16.mxu0 0
      %3163 = vmatmul.mubr.bf16.gmra.mrb[0].mxu0 %v3034
      %v3164 = vpop.f32.mrb[0].mxu0
      %v3165 = vadd.f32 0.0, %v3164
      %v3166 = vpop.f32.mrb[0].mxu0
      %v3167 = vpop.f32.mrb[0].mxu0
      %v3168 = vadd.f32 0.0, %v3167
      %v3169 = vpop.f32.mrb[0].mxu0
      %3170 = vmatprep.mubr.bf16.mxu0 0
      %3171 = vmatmul.mubr.bf16.gmra.mrb[0].mxu0 %v3037
      %v3172 = vpop.f32.mrb[0].mxu0
      %v3173 = vadd.f32 0.0, %v3172
      %v3174 = vpop.f32.mrb[0].mxu0
      %v3175 = vpop.f32.mrb[0].mxu0
      %v3176 = vadd.f32 0.0, %v3175
      %v3177 = vpop.f32.mrb[0].mxu0
      %3178 = vmatprep.mubr.bf16.mxu0 0
      %3179 = vmatmul.mubr.bf16.gmra.mrb[0].mxu0 %v3040
      %v3180 = vpop.f32.mrb[0].mxu0
      %v3181 = vadd.f32 0.0, %v3180
      %v3182 = vpop.f32.mrb[0].mxu0
      %v3183 = vpop.f32.mrb[0].mxu0
      %v3184 = vadd.f32 0.0, %v3183
      %v3185 = vpop.f32.mrb[0].mxu0
      %3186 = vmatprep.mubr.bf16.mxu0 0
      %3187 = vmatmul.mubr.bf16.gmra.mrb[0].mxu0 %v3043
      %v3188 = vpop.f32.mrb[0].mxu0
      %v3189 = vadd.f32 0.0, %v3188
      %v3190 = vpop.f32.mrb[0].mxu0
      %v3191 = vpop.f32.mrb[0].mxu0
      %v3192 = vadd.f32 0.0, %v3191
      %v3193 = vpop.f32.mrb[0].mxu0
      %3194 = vmatprep.mubr.bf16.mxu0 0
      %3195 = vmatmul.mubr.bf16.gmra.mrb[0].mxu0 %v3046
      %v3196 = vpop.f32.mrb[0].mxu0
      %v3197 = vadd.f32 0.0, %v3196
      %v3198 = vpop.f32.mrb[0].mxu0
      %v3199 = vpop.f32.mrb[0].mxu0
      %v3200 = vadd.f32 0.0, %v3199
      %v3201 = vpop.f32.mrb[0].mxu0
      %3202 = vmatprep.mubr.bf16.mxu0 0
      %3203 = vmatmul.mubr.bf16.gmra.mrb[0].mxu0 %v3049
      %v3204 = vpop.f32.mrb[0].mxu0
      %v3205 = vadd.f32 0.0, %v3204
      %v3206 = vpop.f32.mrb[0].mxu0
      %v3207 = vpop.f32.mrb[0].mxu0
      %v3208 = vadd.f32 0.0, %v3207
      %v3209 = vpop.f32.mrb[0].mxu0
      %3210 = vmatprep.mubr.bf16.mxu0 0
      %3211 = vmatmul.mubr.bf16.gmra.mrb[0].mxu0 %v3052
      %v3212 = vpop.f32.mrb[0].mxu0
      %v3213 = vadd.f32 0.0, %v3212
      %v3214 = vpop.f32.mrb[0].mxu0
      %v3215 = vpop.f32.mrb[0].mxu0
      %v3216 = vadd.f32 0.0, %v3215
      %v3217 = vpop.f32.mrb[0].mxu0
      %3218 = vmatprep.mubr.bf16.mxu0 0
      %3219 = vmatmul.mubr.bf16.gmra.mrb[0].mxu0 %v3055
      %v3220 = vpop.f32.mrb[0].mxu0
      %v3221 = vadd.f32 0.0, %v3220
      %v3222 = vpop.f32.mrb[0].mxu0
      %v3223 = vpop.f32.mrb[0].mxu0
      %v3224 = vadd.f32 0.0, %v3223
      %v3225 = vpop.f32.mrb[0].mxu0
      %3226 = vmatprep.mubr.bf16.mxu0 0
      %3227 = vmatmul.mubr.bf16.gmra.mrb[0].mxu0 %v3058
      %v3228 = vpop.f32.mrb[0].mxu0
      %v3229 = vadd.f32 0.0, %v3228
      %v3230 = vpop.f32.mrb[0].mxu0
      %v3231 = vpop.f32.mrb[0].mxu0
      %v3232 = vadd.f32 0.0, %v3231
      %v3233 = vpop.f32.mrb[0].mxu0
      %3234 = vmatprep.mubr.bf16.mxu0 0
      %3235 = vmatmul.mubr.bf16.gmra.mrb[0].mxu0 %v3061
      %v3236 = vpop.f32.mrb[0].mxu0
      %v3237 = vadd.f32 0.0, %v3236
      %v3238 = vpop.f32.mrb[0].mxu0
      %v3239 = vpop.f32.mrb[0].mxu0
      %v3240 = vadd.f32 0.0, %v3239
      %v3241 = vpop.f32.mrb[0].mxu0
      %3242 = vdwg.mxu0
      %v3243 = vadd.f32 %v2917, %v3101
      %v3244 = vadd.f32 %v2918, %v3104
      %v3245 = vadd.f32 %v2919, %v3109
      %v3246 = vadd.f32 %v2920, %v3112
      %v3247 = vadd.f32 %v2921, %v3117
      %v3248 = vadd.f32 %v2922, %v3120
      %v3249 = vadd.f32 %v2923, %v3125
      %v3250 = vadd.f32 %v2924, %v3128
      %v3251 = vadd.f32 %v2925, %v3133
      %v3252 = vadd.f32 %v2926, %v3136
      %v3253 = vadd.f32 %v2927, %v3141
      %v3254 = vadd.f32 %v2928, %v3144
      %v3255 = vadd.f32 %v2929, %v3149
      %v3256 = vadd.f32 %v2930, %v3152
      %v3257 = vadd.f32 %v2931, %v3157
      %v3258 = vadd.f32 %v2932, %v3160
      %v3259 = vadd.f32 %v2933, %v3165
      %v3260 = vadd.f32 %v2934, %v3168
      %v3261 = vadd.f32 %v2935, %v3173
      %v3262 = vadd.f32 %v2936, %v3176
      %v3263 = vadd.f32 %v2937, %v3181
      %v3264 = vadd.f32 %v2938, %v3184
      %v3265 = vadd.f32 %v2939, %v3189
      %v3266 = vadd.f32 %v2940, %v3192
      %v3267 = vadd.f32 %v2941, %v3197
      %v3268 = vadd.f32 %v2942, %v3200
      %v3269 = vadd.f32 %v2943, %v3205
      %v3270 = vadd.f32 %v2944, %v3208
      %v3271 = vadd.f32 %v2945, %v3213
      %v3272 = vadd.f32 %v2946, %v3216
      %v3273 = vadd.f32 %v2947, %v3221
      %v3274 = vadd.f32 %v2948, %v3224
      %v3275 = vadd.f32 %v2949, %v3229
      %v3276 = vadd.f32 %v2950, %v3232
      %v3277 = vadd.f32 %v2951, %v3237
      %v3278 = vadd.f32 %v2952, %v3240
      %v3279 = vld [vmem:[%s2] sm:$0x1]
      %v3281 = vlaneseq
      %v3282 = vshrl.u32 %v3281, 7
      %v3283 = vsub.s32 0, %v3282
      %v3284 = vrot.slane %v3279, %v3283
      %v3286 = vadd.f32 %v3243, %v3284
      %v3287 = vadd.f32 %v3244, %v3284
      %v3288 = vadd.f32 %v3245, %v3284
      %v3289 = vadd.f32 %v3246, %v3284
      %v3290 = vadd.f32 %v3247, %v3284
      %v3291 = vadd.f32 %v3248, %v3284
      %v3292 = vadd.f32 %v3249, %v3284
      %v3293 = vadd.f32 %v3250, %v3284
      %v3294 = vadd.f32 %v3251, %v3284
      %v3295 = vadd.f32 %v3252, %v3284
      %v3296 = vadd.f32 %v3253, %v3284
      %v3297 = vadd.f32 %v3254, %v3284
      %v3298 = vadd.f32 %v3255, %v3284
      %v3299 = vadd.f32 %v3256, %v3284
      %v3300 = vadd.f32 %v3257, %v3284
      %v3301 = vadd.f32 %v3258, %v3284
      %v3302 = vadd.f32 %v3259, %v3284
      %v3303 = vadd.f32 %v3260, %v3284
      %v3304 = vadd.f32 %v3261, %v3284
      %v3305 = vadd.f32 %v3262, %v3284
      %v3306 = vadd.f32 %v3263, %v3284
      %v3307 = vadd.f32 %v3264, %v3284
      %v3308 = vadd.f32 %v3265, %v3284
      %v3309 = vadd.f32 %v3266, %v3284
      %v3310 = vadd.f32 %v3267, %v3284
      %v3311 = vadd.f32 %v3268, %v3284
      %v3312 = vadd.f32 %v3269, %v3284
      %v3313 = vadd.f32 %v3270, %v3284
      %v3314 = vadd.f32 %v3271, %v3284
      %v3315 = vadd.f32 %v3272, %v3284
      %v3316 = vadd.f32 %v3273, %v3284
      %v3317 = vadd.f32 %v3274, %v3284
      %v3318 = vadd.f32 %v3275, %v3284
      %v3319 = vadd.f32 %v3276, %v3284
      %v3320 = vadd.f32 %v3277, %v3284
      %v3321 = vadd.f32 %v3278, %v3284
      %v3322 = vmax.f32 %v3286, 0.0
      %v3323 = vmax.f32 %v3287, 0.0
      %v3324 = vmax.f32 %v3288, 0.0
      %v3325 = vmax.f32 %v3289, 0.0
      %v3326 = vmax.f32 %v3290, 0.0
      %v3327 = vmax.f32 %v3291, 0.0
      %v3328 = vmax.f32 %v3292, 0.0
      %v3329 = vmax.f32 %v3293, 0.0
      %v3330 = vmax.f32 %v3294, 0.0
      %v3331 = vmax.f32 %v3295, 0.0
      %v3332 = vmax.f32 %v3296, 0.0
      %v3333 = vmax.f32 %v3297, 0.0
      %v3334 = vmax.f32 %v3298, 0.0
      %v3335 = vmax.f32 %v3299, 0.0
      %v3336 = vmax.f32 %v3300, 0.0
      %v3337 = vmax.f32 %v3301, 0.0
      %v3338 = vmax.f32 %v3302, 0.0
      %v3339 = vmax.f32 %v3303, 0.0
      %v3340 = vmax.f32 %v3304, 0.0
      %v3341 = vmax.f32 %v3305, 0.0
      %v3342 = vmax.f32 %v3306, 0.0
      %v3343 = vmax.f32 %v3307, 0.0
      %v3344 = vmax.f32 %v3308, 0.0
      %v3345 = vmax.f32 %v3309, 0.0
      %v3346 = vmax.f32 %v3310, 0.0
      %v3347 = vmax.f32 %v3311, 0.0
      %v3348 = vmax.f32 %v3312, 0.0
      %v3349 = vmax.f32 %v3313, 0.0
      %v3350 = vmax.f32 %v3314, 0.0
      %v3351 = vmax.f32 %v3315, 0.0
      %v3352 = vmax.f32 %v3316, 0.0
      %v3353 = vmax.f32 %v3317, 0.0
      %v3354 = vmax.f32 %v3318, 0.0
      %v3355 = vmax.f32 %v3319, 0.0
      %v3356 = vmax.f32 %v3320, 0.0
      %v3357 = vmax.f32 %v3321, 0.0
      %v3358 = vpack.c.bf16 %v3323, %v3322
      %v3359 = vpack.c.bf16 %v3325, %v3324
      %v3360 = vpack.c.bf16 %v3327, %v3326
      %v3361 = vpack.c.bf16 %v3329, %v3328
      %v3362 = vpack.c.bf16 %v3331, %v3330
      %v3363 = vpack.c.bf16 %v3333, %v3332
      %v3364 = vpack.c.bf16 %v3335, %v3334
      %v3365 = vpack.c.bf16 %v3337, %v3336
      %v3366 = vpack.c.bf16 %v3339, %v3338
      %v3367 = vpack.c.bf16 %v3341, %v3340
      %v3368 = vpack.c.bf16 %v3343, %v3342
      %v3369 = vpack.c.bf16 %v3345, %v3344
      %v3370 = vpack.c.bf16 %v3347, %v3346
      %v3371 = vpack.c.bf16 %v3349, %v3348
      %v3372 = vpack.c.bf16 %v3351, %v3350
      %v3373 = vpack.c.bf16 %v3353, %v3352
      %v3374 = vpack.c.bf16 %v3355, %v3354
      %v3375 = vpack.c.bf16 %v3357, %v3356
      %v3376 = vld [vmem:[%s3] sm:$0xff]
      %v3377 = vld [vmem:[%s3 + $0x8] sm:$0xf]
      %v3378 = vld [vmem:[%s3 + $0xc] sm:$0xff]
      %v3379 = vld [vmem:[%s3 + $0x14] sm:$0xf]
      %v3380 = vld [vmem:[%s3 + $0x18] sm:$0xff]
      %v3381 = vld [vmem:[%s3 + $0x20] sm:$0xf]
      %v3382 = vld [vmem:[%s3 + $0x24] sm:$0xff]
      %v3383 = vld [vmem:[%s3 + $0x2c] sm:$0xf]
      %v3384 = vld [vmem:[%s3 + $0x30] sm:$0xff]
      %v3385 = vld [vmem:[%s3 + $0x38] sm:$0xf]
      %v3386 = vld [vmem:[%s3 + $0x3c] sm:$0xff]
      %v3387 = vld [vmem:[%s3 + $0x44] sm:$0xf]
      %v3388 = vld [vmem:[%s3 + $0x48] sm:$0xff]
      %v3389 = vld [vmem:[%s3 + $0x50] sm:$0xf]
      %v3390 = vld [vmem:[%s3 + $0x54] sm:$0xff]
      %v3391 = vld [vmem:[%s3 + $0x5c] sm:$0xf]
      %v3392 = vld [vmem:[%s3 + $0x60] sm:$0xff]
      %v3393 = vld [vmem:[%s3 + $0x68] sm:$0xf]
      %v3394 = vld [vmem:[%s3 + $0x6c] sm:$0xff]
      %v3395 = vld [vmem:[%s3 + $0x74] sm:$0xf]
      %v3396 = vld [vmem:[%s3 + $0x78] sm:$0xff]
      %v3397 = vld [vmem:[%s3 + $0x80] sm:$0xf]
      %v3398 = vld [vmem:[%s3 + $0x84] sm:$0xff]
      %v3399 = vld [vmem:[%s3 + $0x8c] sm:$0xf]
      %v3400 = vld [vmem:[%s3 + $0x90] sm:$0x33]
      %v3401 = vld [vmem:[%s3 + $0x98] sm:$0x3]
      %v3428 = vunpack.c.l.b16 %v3376
      %v3429 = vunpack.c.h.b16 %v3376
      %v3430 = vunpack.c.l.b16 %v3377
      %v3431 = vunpack.c.l.b16 %v3378
      %v3432 = vunpack.c.h.b16 %v3378
      %v3433 = vunpack.c.l.b16 %v3379
      %v3434 = vunpack.c.l.b16 %v3380
      %v3435 = vunpack.c.h.b16 %v3380
      %v3436 = vunpack.c.l.b16 %v3381
      %v3437 = vunpack.c.l.b16 %v3382
      %v3438 = vunpack.c.h.b16 %v3382
      %v3439 = vunpack.c.l.b16 %v3383
      %v3440 = vunpack.c.l.b16 %v3384
      %v3441 = vunpack.c.h.b16 %v3384
      %v3442 = vunpack.c.l.b16 %v3385
      %v3443 = vunpack.c.l.b16 %v3386
      %v3444 = vunpack.c.h.b16 %v3386
      %v3445 = vunpack.c.l.b16 %v3387
      %v3446 = vunpack.c.l.b16 %v3388
      %v3447 = vunpack.c.h.b16 %v3388
      %v3448 = vunpack.c.l.b16 %v3389
      %v3449 = vunpack.c.l.b16 %v3390
      %v3450 = vunpack.c.h.b16 %v3390
      %v3451 = vunpack.c.l.b16 %v3391
      %v3452 = vunpack.c.l.b16 %v3392
      %v3453 = vunpack.c.h.b16 %v3392
      %v3454 = vunpack.c.l.b16 %v3393
      %v3455 = vunpack.c.l.b16 %v3394
      %v3456 = vunpack.c.h.b16 %v3394
      %v3457 = vunpack.c.l.b16 %v3395
      %v3458 = vunpack.c.l.b16 %v3396
      %v3459 = vunpack.c.h.b16 %v3396
      %v3460 = vunpack.c.l.b16 %v3397
      %v3461 = vunpack.c.l.b16 %v3398
      %v3462 = vunpack.c.h.b16 %v3398
      %v3463 = vunpack.c.l.b16 %v3399
      %v3464 = vunpack.c.l.b16 %v3400
      %v3465 = vunpack.c.h.b16 %v3400
      %v3466 = vunpack.c.l.b16 %v3401
      %v3467 = vpack.c.b16 %v3431, %v3428
      %v3468 = vpack.c.b16 %v3432, %v3429
      %v3469 = vpack.c.b16 %v3433, %v3430
      %v3470 = vpack.c.b16 %v3437, %v3434
      %v3471 = vpack.c.b16 %v3438, %v3435
      %v3472 = vpack.c.b16 %v3439, %v3436
      %v3473 = vpack.c.b16 %v3443, %v3440
      %v3474 = vpack.c.b16 %v3444, %v3441
      %v3475 = vpack.c.b16 %v3445, %v3442
      %v3476 = vpack.c.b16 %v3449, %v3446
      %v3477 = vpack.c.b16 %v3450, %v3447
      %v3478 = vpack.c.b16 %v3451, %v3448
      %v3479 = vpack.c.b16 %v3455, %v3452
      %v3480 = vpack.c.b16 %v3456, %v3453
      %v3481 = vpack.c.b16 %v3457, %v3454
      %v3482 = vpack.c.b16 %v3461, %v3458
      %v3483 = vpack.c.b16 %v3462, %v3459
      %v3484 = vpack.c.b16 %v3463, %v3460
      %v3485 = vpack.c.b16 %v3464, %v3464
      %v3486 = vpack.c.b16 %v3465, %v3465
      %v3487 = vpack.c.b16 %v3466, %v3466
      %vm3502 = vcmask 244736
      %v3504 = vsel %vm3502, %v3469, 0
      %v3507 = vsel %vm3502, %v3472, 0
      %v3510 = vsel %vm3502, %v3475, 0
      %v3513 = vsel %vm3502, %v3478, 0
      %v3516 = vsel %vm3502, %v3481, 0
      %v3519 = vsel %vm3502, %v3484, 0
      %v3522 = vsel %vm3502, %v3487, 0
      %vm3524 = vcmask 1046528
      %v3526 = vsel %vm3524, %v3375, 0
      %3528 = vmatprep.subr.bf16.mxu0 0
      %3529 = vmatpush1.bf16.msra.mxu0 %v3358
      %3530 = vmatprep.subr.bf16.mxu0 0
      %3531 = vmatpush1.bf16.msra.mxu0 %v3359
      %3532 = vmatprep.subr.bf16.mxu0 0
      %3533 = vmatpush1.bf16.msra.mxu0 %v3360
      %3534 = vmatprep.subr.bf16.mxu0 0
      %3535 = vmatpush1.bf16.msra.mxu0 %v3361
      %3536 = vmatprep.subr.bf16.mxu0 0
      %3537 = vmatpush1.bf16.msra.mxu0 %v3362
      %3538 = vmatprep.subr.bf16.mxu0 0
      %3539 = vmatpush1.bf16.msra.mxu0 %v3363
      %3540 = vmatprep.subr.bf16.mxu0 0
      %3541 = vmatpush1.bf16.msra.mxu0 %v3364
      %3542 = vmatprep.subr.bf16.mxu0 0
      %3543 = vmatpush1.bf16.msra.mxu0 %v3365
      %3544 = vmatprep.subr.bf16.mxu0 0
      %3545 = vmatpush1.bf16.msra.mxu0 %v3366
      %3546 = vmatprep.subr.bf16.mxu0 0
      %3547 = vmatpush1.bf16.msra.mxu0 %v3367
      %3548 = vmatprep.subr.bf16.mxu0 0
      %3549 = vmatpush1.bf16.msra.mxu0 %v3368
      %3550 = vmatprep.subr.bf16.mxu0 0
      %3551 = vmatpush1.bf16.msra.mxu0 %v3369
      %3552 = vmatprep.subr.bf16.mxu0 0
      %3553 = vmatpush1.bf16.msra.mxu0 %v3370
      %3554 = vmatprep.subr.bf16.mxu0 0
      %3555 = vmatpush1.bf16.msra.mxu0 %v3371
      %3556 = vmatprep.subr.bf16.mxu0 0
      %3557 = vmatpush1.bf16.msra.mxu0 %v3372
      %3558 = vmatprep.subr.bf16.mxu0 0
      %3559 = vmatpush1.bf16.msra.mxu0 %v3373
      %3560 = vmatprep.mubr.bf16.mxu0 %v3468
      %3561 = vmatmul.mubr.bf16.gmra.mrb[0].mxu0 %v3467
      %v3562 = vpop.f32.mrb[0].mxu0
      %v3563 = vadd.f32 0.0, %v3562
      %v3564 = vpop.f32.mrb[0].mxu0
      %v3565 = vpop.f32.mrb[0].mxu0
      %v3566 = vadd.f32 0.0, %v3565
      %v3567 = vpop.f32.mrb[0].mxu0
      %3568 = vmatprep.mubr.bf16.mxu0 %v3471
      %3569 = vmatmul.mubr.bf16.gmra.mrb[0].mxu0 %v3470
      %v3570 = vpop.f32.mrb[0].mxu0
      %v3571 = vadd.f32 0.0, %v3570
      %v3572 = vpop.f32.mrb[0].mxu0
      %v3573 = vpop.f32.mrb[0].mxu0
      %v3574 = vadd.f32 0.0, %v3573
      %v3575 = vpop.f32.mrb[0].mxu0
      %3576 = vmatprep.mubr.bf16.mxu0 %v3474
      %3577 = vmatmul.mubr.bf16.gmra.mrb[0].mxu0 %v3473
      %v3578 = vpop.f32.mrb[0].mxu0
      %v3579 = vadd.f32 0.0, %v3578
      %v3580 = vpop.f32.mrb[0].mxu0
      %v3581 = vpop.f32.mrb[0].mxu0
      %v3582 = vadd.f32 0.0, %v3581
      %v3583 = vpop.f32.mrb[0].mxu0
      %3584 = vmatprep.mubr.bf16.mxu0 %v3477
      %3585 = vmatmul.mubr.bf16.gmra.mrb[0].mxu0 %v3476
      %v3586 = vpop.f32.mrb[0].mxu0
      %v3587 = vadd.f32 0.0, %v3586
      %v3588 = vpop.f32.mrb[0].mxu0
      %v3589 = vpop.f32.mrb[0].mxu0
      %v3590 = vadd.f32 0.0, %v3589
      %v3591 = vpop.f32.mrb[0].mxu0
      %3592 = vmatprep.mubr.bf16.mxu0 %v3480
      %3593 = vmatmul.mubr.bf16.gmra.mrb[0].mxu0 %v3479
      %v3594 = vpop.f32.mrb[0].mxu0
      %v3595 = vadd.f32 0.0, %v3594
      %v3596 = vpop.f32.mrb[0].mxu0
      %v3597 = vpop.f32.mrb[0].mxu0
      %v3598 = vadd.f32 0.0, %v3597
      %v3599 = vpop.f32.mrb[0].mxu0
      %3600 = vmatprep.mubr.bf16.mxu0 %v3483
      %3601 = vmatmul.mubr.bf16.gmra.mrb[0].mxu0 %v3482
      %v3602 = vpop.f32.mrb[0].mxu0
      %v3603 = vadd.f32 0.0, %v3602
      %v3604 = vpop.f32.mrb[0].mxu0
      %v3605 = vpop.f32.mrb[0].mxu0
      %v3606 = vadd.f32 0.0, %v3605
      %v3607 = vpop.f32.mrb[0].mxu0
      %3608 = vmatprep.mubr.bf16.mxu0 %v3486
      %3609 = vmatmul.mubr.bf16.gmra.mrb[0].mxu0 %v3485
      %v3610 = vpop.f32.mrb[0].mxu0
      %v3611 = vadd.f32 0.0, %v3610
      %v3612 = vpop.f32.mrb[0].mxu0
      %v3613 = vpop.f32.mrb[0].mxu0
      %v3614 = vpop.f32.mrb[0].mxu0
      %3615 = vdwg.mxu0
      %3616 = vmatprep.subr.bf16.mxu0 0
      %3617 = vmatpush1.bf16.msra.mxu0 %v3374
      %3618 = vmatprep.subr.bf16.mxu0 0
      %3619 = vmatpush1.bf16.msra.mxu0 %v3526
      %3620 = vmatprep.subr.bf16.mxu0 0
      %3621 = vmatpush1.bf16.msra.mxu0 0
      %3622 = vmatprep.subr.bf16.mxu0 0
      %3623 = vmatpush1.bf16.msra.mxu0 0
      %3624 = vmatprep.subr.bf16.mxu0 0
      %3625 = vmatpush1.bf16.msra.mxu0 0
      %3626 = vmatprep.subr.bf16.mxu0 0
      %3627 = vmatpush1.bf16.msra.mxu0 0
      %3628 = vmatprep.subr.bf16.mxu0 0
      %3629 = vmatpush1.bf16.msra.mxu0 0
      %3630 = vmatprep.subr.bf16.mxu0 0
      %3631 = vmatpush1.bf16.msra.mxu0 0
      %3632 = vmatprep.subr.bf16.mxu0 0
      %3633 = vmatpush1.bf16.msra.mxu0 0
      %3634 = vmatprep.subr.bf16.mxu0 0
      %3635 = vmatpush1.bf16.msra.mxu0 0
      %3636 = vmatprep.subr.bf16.mxu0 0
      %3637 = vmatpush1.bf16.msra.mxu0 0
      %3638 = vmatprep.subr.bf16.mxu0 0
      %3639 = vmatpush1.bf16.msra.mxu0 0
      %3640 = vmatprep.subr.bf16.mxu0 0
      %3641 = vmatpush1.bf16.msra.mxu0 0
      %3642 = vmatprep.subr.bf16.mxu0 0
      %3643 = vmatpush1.bf16.msra.mxu0 0
      %3644 = vmatprep.subr.bf16.mxu0 0
      %3645 = vmatpush1.bf16.msra.mxu0 0
      %3646 = vmatprep.subr.bf16.mxu0 0
      %3647 = vmatpush1.bf16.msra.mxu0 0
      %3648 = vmatprep.mubr.bf16.mxu0 0
      %3649 = vmatmul.mubr.bf16.gmra.mrb[0].mxu0 %v3504
      %v3650 = vpop.f32.mrb[0].mxu0
      %v3651 = vadd.f32 %v3563, %v3650
      %v3652 = vpop.f32.mrb[0].mxu0
      %v3653 = vpop.f32.mrb[0].mxu0
      %v3654 = vadd.f32 %v3566, %v3653
      %v3655 = vpop.f32.mrb[0].mxu0
      %3656 = vmatprep.mubr.bf16.mxu0 0
      %3657 = vmatmul.mubr.bf16.gmra.mrb[0].mxu0 %v3507
      %v3658 = vpop.f32.mrb[0].mxu0
      %v3659 = vadd.f32 %v3571, %v3658
      %v3660 = vpop.f32.mrb[0].mxu0
      %v3661 = vpop.f32.mrb[0].mxu0
      %v3662 = vadd.f32 %v3574, %v3661
      %v3663 = vpop.f32.mrb[0].mxu0
      %3664 = vmatprep.mubr.bf16.mxu0 0
      %3665 = vmatmul.mubr.bf16.gmra.mrb[0].mxu0 %v3510
      %v3666 = vpop.f32.mrb[0].mxu0
      %v3667 = vadd.f32 %v3579, %v3666
      %v3668 = vpop.f32.mrb[0].mxu0
      %v3669 = vpop.f32.mrb[0].mxu0
      %v3670 = vadd.f32 %v3582, %v3669
      %v3671 = vpop.f32.mrb[0].mxu0
      %3672 = vmatprep.mubr.bf16.mxu0 0
      %3673 = vmatmul.mubr.bf16.gmra.mrb[0].mxu0 %v3513
      %v3674 = vpop.f32.mrb[0].mxu0
      %v3675 = vadd.f32 %v3587, %v3674
      %v3676 = vpop.f32.mrb[0].mxu0
      %v3677 = vpop.f32.mrb[0].mxu0
      %v3678 = vadd.f32 %v3590, %v3677
      %v3679 = vpop.f32.mrb[0].mxu0
      %3680 = vmatprep.mubr.bf16.mxu0 0
      %3681 = vmatmul.mubr.bf16.gmra.mrb[0].mxu0 %v3516
      %v3682 = vpop.f32.mrb[0].mxu0
      %v3683 = vadd.f32 %v3595, %v3682
      %v3684 = vpop.f32.mrb[0].mxu0
      %v3685 = vpop.f32.mrb[0].mxu0
      %v3686 = vadd.f32 %v3598, %v3685
      %v3687 = vpop.f32.mrb[0].mxu0
      %3688 = vmatprep.mubr.bf16.mxu0 0
      %3689 = vmatmul.mubr.bf16.gmra.mrb[0].mxu0 %v3519
      %v3690 = vpop.f32.mrb[0].mxu0
      %v3691 = vadd.f32 %v3603, %v3690
      %v3692 = vpop.f32.mrb[0].mxu0
      %v3693 = vpop.f32.mrb[0].mxu0
      %v3694 = vadd.f32 %v3606, %v3693
      %v3695 = vpop.f32.mrb[0].mxu0
      %3696 = vmatprep.mubr.bf16.mxu0 0
      %3697 = vmatmul.mubr.bf16.gmra.mrb[0].mxu0 %v3522
      %v3698 = vpop.f32.mrb[0].mxu0
      %v3699 = vadd.f32 %v3611, %v3698
      %v3700 = vpop.f32.mrb[0].mxu0
      %v3701 = vpop.f32.mrb[0].mxu0
      %v3702 = vpop.f32.mrb[0].mxu0
      %3703 = vdwg.mxu0
      %s3704 = scalar_lea.vmem %s3, 156
      %v3705 = vld [vmem:[%s3704] sm:$0xff]
      %v3706 = vld [vmem:[%s3704 + $0x8] sm:$0xf]
      %v3707 = vld [vmem:[%s3704 + $0xc] sm:$0xff]
      %v3708 = vld [vmem:[%s3704 + $0x14] sm:$0xf]
      %v3709 = vld [vmem:[%s3704 + $0x18] sm:$0xff]
      %v3710 = vld [vmem:[%s3704 + $0x20] sm:$0xf]
      %v3711 = vld [vmem:[%s3704 + $0x24] sm:$0xff]
      %v3712 = vld [vmem:[%s3704 + $0x2c] sm:$0xf]
      %v3713 = vld [vmem:[%s3704 + $0x30] sm:$0xff]
      %v3714 = vld [vmem:[%s3704 + $0x38] sm:$0xf]
      %v3715 = vld [vmem:[%s3704 + $0x3c] sm:$0xff]
      %v3716 = vld [vmem:[%s3704 + $0x44] sm:$0xf]
      %v3717 = vld [vmem:[%s3704 + $0x48] sm:$0xff]
      %v3718 = vld [vmem:[%s3704 + $0x50] sm:$0xf]
      %v3719 = vld [vmem:[%s3704 + $0x54] sm:$0xff]
      %v3720 = vld [vmem:[%s3704 + $0x5c] sm:$0xf]
      %v3721 = vld [vmem:[%s3704 + $0x60] sm:$0xff]
      %v3722 = vld [vmem:[%s3704 + $0x68] sm:$0xf]
      %v3723 = vld [vmem:[%s3704 + $0x6c] sm:$0xff]
      %v3724 = vld [vmem:[%s3704 + $0x74] sm:$0xf]
      %v3725 = vld [vmem:[%s3704 + $0x78] sm:$0xff]
      %v3726 = vld [vmem:[%s3704 + $0x80] sm:$0xf]
      %v3727 = vld [vmem:[%s3704 + $0x84] sm:$0xff]
      %v3728 = vld [vmem:[%s3704 + $0x8c] sm:$0xf]
      %v3729 = vld [vmem:[%s3704 + $0x90] sm:$0x33]
      %v3730 = vld [vmem:[%s3704 + $0x98] sm:$0x3]
      %v3757 = vunpack.c.l.b16 %v3705
      %v3758 = vunpack.c.h.b16 %v3705
      %v3759 = vunpack.c.l.b16 %v3706
      %v3760 = vunpack.c.l.b16 %v3707
      %v3761 = vunpack.c.h.b16 %v3707
      %v3762 = vunpack.c.l.b16 %v3708
      %v3763 = vunpack.c.l.b16 %v3709
      %v3764 = vunpack.c.h.b16 %v3709
      %v3765 = vunpack.c.l.b16 %v3710
      %v3766 = vunpack.c.l.b16 %v3711
      %v3767 = vunpack.c.h.b16 %v3711
      %v3768 = vunpack.c.l.b16 %v3712
      %v3769 = vunpack.c.l.b16 %v3713
      %v3770 = vunpack.c.h.b16 %v3713
      %v3771 = vunpack.c.l.b16 %v3714
      %v3772 = vunpack.c.l.b16 %v3715
      %v3773 = vunpack.c.h.b16 %v3715
      %v3774 = vunpack.c.l.b16 %v3716
      %v3775 = vunpack.c.l.b16 %v3717
      %v3776 = vunpack.c.h.b16 %v3717
      %v3777 = vunpack.c.l.b16 %v3718
      %v3778 = vunpack.c.l.b16 %v3719
      %v3779 = vunpack.c.h.b16 %v3719
      %v3780 = vunpack.c.l.b16 %v3720
      %v3781 = vunpack.c.l.b16 %v3721
      %v3782 = vunpack.c.h.b16 %v3721
      %v3783 = vunpack.c.l.b16 %v3722
      %v3784 = vunpack.c.l.b16 %v3723
      %v3785 = vunpack.c.h.b16 %v3723
      %v3786 = vunpack.c.l.b16 %v3724
      %v3787 = vunpack.c.l.b16 %v3725
      %v3788 = vunpack.c.h.b16 %v3725
      %v3789 = vunpack.c.l.b16 %v3726
      %v3790 = vunpack.c.l.b16 %v3727
      %v3791 = vunpack.c.h.b16 %v3727
      %v3792 = vunpack.c.l.b16 %v3728
      %v3793 = vunpack.c.l.b16 %v3729
      %v3794 = vunpack.c.h.b16 %v3729
      %v3795 = vunpack.c.l.b16 %v3730
      %v3796 = vpack.c.b16 %v3760, %v3757
      %v3797 = vpack.c.b16 %v3761, %v3758
      %v3798 = vpack.c.b16 %v3762, %v3759
      %v3799 = vpack.c.b16 %v3766, %v3763
      %v3800 = vpack.c.b16 %v3767, %v3764
      %v3801 = vpack.c.b16 %v3768, %v3765
      %v3802 = vpack.c.b16 %v3772, %v3769
      %v3803 = vpack.c.b16 %v3773, %v3770
      %v3804 = vpack.c.b16 %v3774, %v3771
      %v3805 = vpack.c.b16 %v3778, %v3775
      %v3806 = vpack.c.b16 %v3779, %v3776
      %v3807 = vpack.c.b16 %v3780, %v3777
      %v3808 = vpack.c.b16 %v3784, %v3781
      %v3809 = vpack.c.b16 %v3785, %v3782
      %v3810 = vpack.c.b16 %v3786, %v3783
      %v3811 = vpack.c.b16 %v3790, %v3787
      %v3812 = vpack.c.b16 %v3791, %v3788
      %v3813 = vpack.c.b16 %v3792, %v3789
      %v3814 = vpack.c.b16 %v3793, %v3793
      %v3815 = vpack.c.b16 %v3794, %v3794
      %v3816 = vpack.c.b16 %v3795, %v3795
      %v3832 = vsel %vm3502, %v3798, 0
      %v3835 = vsel %vm3502, %v3801, 0
      %v3838 = vsel %vm3502, %v3804, 0
      %v3841 = vsel %vm3502, %v3807, 0
      %v3844 = vsel %vm3502, %v3810, 0
      %v3847 = vsel %vm3502, %v3813, 0
      %v3850 = vsel %vm3502, %v3816, 0
      %3852 = vmatprep.subr.bf16.mxu0 0
      %3853 = vmatpush1.bf16.msra.mxu0 %v3358
      %3854 = vmatprep.subr.bf16.mxu0 0
      %3855 = vmatpush1.bf16.msra.mxu0 %v3359
      %3856 = vmatprep.subr.bf16.mxu0 0
      %3857 = vmatpush1.bf16.msra.mxu0 %v3360
      %3858 = vmatprep.subr.bf16.mxu0 0
      %3859 = vmatpush1.bf16.msra.mxu0 %v3361
      %3860 = vmatprep.subr.bf16.mxu0 0
      %3861 = vmatpush1.bf16.msra.mxu0 %v3362
      %3862 = vmatprep.subr.bf16.mxu0 0
      %3863 = vmatpush1.bf16.msra.mxu0 %v3363
      %3864 = vmatprep.subr.bf16.mxu0 0
      %3865 = vmatpush1.bf16.msra.mxu0 %v3364
      %3866 = vmatprep.subr.bf16.mxu0 0
      %3867 = vmatpush1.bf16.msra.mxu0 %v3365
      %3868 = vmatprep.subr.bf16.mxu0 0
      %3869 = vmatpush1.bf16.msra.mxu0 %v3366
      %3870 = vmatprep.subr.bf16.mxu0 0
      %3871 = vmatpush1.bf16.msra.mxu0 %v3367
      %3872 = vmatprep.subr.bf16.mxu0 0
      %3873 = vmatpush1.bf16.msra.mxu0 %v3368
      %3874 = vmatprep.subr.bf16.mxu0 0
      %3875 = vmatpush1.bf16.msra.mxu0 %v3369
      %3876 = vmatprep.subr.bf16.mxu0 0
      %3877 = vmatpush1.bf16.msra.mxu0 %v3370
      %3878 = vmatprep.subr.bf16.mxu0 0
      %3879 = vmatpush1.bf16.msra.mxu0 %v3371
      %3880 = vmatprep.subr.bf16.mxu0 0
      %3881 = vmatpush1.bf16.msra.mxu0 %v3372
      %3882 = vmatprep.subr.bf16.mxu0 0
      %3883 = vmatpush1.bf16.msra.mxu0 %v3373
      %3884 = vmatprep.mubr.bf16.mxu0 %v3797
      %3885 = vmatmul.mubr.bf16.gmra.mrb[0].mxu0 %v3796
      %v3886 = vpop.f32.mrb[0].mxu0
      %v3887 = vadd.f32 0.0, %v3886
      %v3888 = vpop.f32.mrb[0].mxu0
      %v3889 = vpop.f32.mrb[0].mxu0
      %v3890 = vadd.f32 0.0, %v3889
      %v3891 = vpop.f32.mrb[0].mxu0
      %3892 = vmatprep.mubr.bf16.mxu0 %v3800
      %3893 = vmatmul.mubr.bf16.gmra.mrb[0].mxu0 %v3799
      %v3894 = vpop.f32.mrb[0].mxu0
      %v3895 = vadd.f32 0.0, %v3894
      %v3896 = vpop.f32.mrb[0].mxu0
      %v3897 = vpop.f32.mrb[0].mxu0
      %v3898 = vadd.f32 0.0, %v3897
      %v3899 = vpop.f32.mrb[0].mxu0
      %3900 = vmatprep.mubr.bf16.mxu0 %v3803
      %3901 = vmatmul.mubr.bf16.gmra.mrb[0].mxu0 %v3802
      %v3902 = vpop.f32.mrb[0].mxu0
      %v3903 = vadd.f32 0.0, %v3902
      %v3904 = vpop.f32.mrb[0].mxu0
      %v3905 = vpop.f32.mrb[0].mxu0
      %v3906 = vadd.f32 0.0, %v3905
      %v3907 = vpop.f32.mrb[0].mxu0
      %3908 = vmatprep.mubr.bf16.mxu0 %v3806
      %3909 = vmatmul.mubr.bf16.gmra.mrb[0].mxu0 %v3805
      %v3910 = vpop.f32.mrb[0].mxu0
      %v3911 = vadd.f32 0.0, %v3910
      %v3912 = vpop.f32.mrb[0].mxu0
      %v3913 = vpop.f32.mrb[0].mxu0
      %v3914 = vadd.f32 0.0, %v3913
      %v3915 = vpop.f32.mrb[0].mxu0
      %3916 = vmatprep.mubr.bf16.mxu0 %v3809
      %3917 = vmatmul.mubr.bf16.gmra.mrb[0].mxu0 %v3808
      %v3918 = vpop.f32.mrb[0].mxu0
      %v3919 = vadd.f32 0.0, %v3918
      %v3920 = vpop.f32.mrb[0].mxu0
      %v3921 = vpop.f32.mrb[0].mxu0
      %v3922 = vadd.f32 0.0, %v3921
      %v3923 = vpop.f32.mrb[0].mxu0
      %3924 = vmatprep.mubr.bf16.mxu0 %v3812
      %3925 = vmatmul.mubr.bf16.gmra.mrb[0].mxu0 %v3811
      %v3926 = vpop.f32.mrb[0].mxu0
      %v3927 = vadd.f32 0.0, %v3926
      %v3928 = vpop.f32.mrb[0].mxu0
      %v3929 = vpop.f32.mrb[0].mxu0
      %v3930 = vadd.f32 0.0, %v3929
      %v3931 = vpop.f32.mrb[0].mxu0
      %3932 = vmatprep.mubr.bf16.mxu0 %v3815
      %3933 = vmatmul.mubr.bf16.gmra.mrb[0].mxu0 %v3814
      %v3934 = vpop.f32.mrb[0].mxu0
      %v3935 = vadd.f32 0.0, %v3934
      %v3936 = vpop.f32.mrb[0].mxu0
      %v3937 = vpop.f32.mrb[0].mxu0
      %v3938 = vpop.f32.mrb[0].mxu0
      %3939 = vdwg.mxu0
      %3940 = vmatprep.subr.bf16.mxu0 0
      %3941 = vmatpush1.bf16.msra.mxu0 %v3374
      %3942 = vmatprep.subr.bf16.mxu0 0
      %3943 = vmatpush1.bf16.msra.mxu0 %v3526
      %3944 = vmatprep.subr.bf16.mxu0 0
      %3945 = vmatpush1.bf16.msra.mxu0 0
      %3946 = vmatprep.subr.bf16.mxu0 0
      %3947 = vmatpush1.bf16.msra.mxu0 0
      %3948 = vmatprep.subr.bf16.mxu0 0
      %3949 = vmatpush1.bf16.msra.mxu0 0
      %3950 = vmatprep.subr.bf16.mxu0 0
      %3951 = vmatpush1.bf16.msra.mxu0 0
      %3952 = vmatprep.subr.bf16.mxu0 0
      %3953 = vmatpush1.bf16.msra.mxu0 0
      %3954 = vmatprep.subr.bf16.mxu0 0
      %3955 = vmatpush1.bf16.msra.mxu0 0
      %3956 = vmatprep.subr.bf16.mxu0 0
      %3957 = vmatpush1.bf16.msra.mxu0 0
      %3958 = vmatprep.subr.bf16.mxu0 0
      %3959 = vmatpush1.bf16.msra.mxu0 0
      %3960 = vmatprep.subr.bf16.mxu0 0
      %3961 = vmatpush1.bf16.msra.mxu0 0
      %3962 = vmatprep.subr.bf16.mxu0 0
      %3963 = vmatpush1.bf16.msra.mxu0 0
      %3964 = vmatprep.subr.bf16.mxu0 0
      %3965 = vmatpush1.bf16.msra.mxu0 0
      %3966 = vmatprep.subr.bf16.mxu0 0
      %3967 = vmatpush1.bf16.msra.mxu0 0
      %3968 = vmatprep.subr.bf16.mxu0 0
      %3969 = vmatpush1.bf16.msra.mxu0 0
      %3970 = vmatprep.subr.bf16.mxu0 0
      %3971 = vmatpush1.bf16.msra.mxu0 0
      %3972 = vmatprep.mubr.bf16.mxu0 0
      %3973 = vmatmul.mubr.bf16.gmra.mrb[0].mxu0 %v3832
      %v3974 = vpop.f32.mrb[0].mxu0
      %v3975 = vadd.f32 %v3887, %v3974
      %v3976 = vpop.f32.mrb[0].mxu0
      %v3977 = vpop.f32.mrb[0].mxu0
      %v3978 = vadd.f32 %v3890, %v3977
      %v3979 = vpop.f32.mrb[0].mxu0
      %3980 = vmatprep.mubr.bf16.mxu0 0
      %3981 = vmatmul.mubr.bf16.gmra.mrb[0].mxu0 %v3835
      %v3982 = vpop.f32.mrb[0].mxu0
      %v3983 = vadd.f32 %v3895, %v3982
      %v3984 = vpop.f32.mrb[0].mxu0
      %v3985 = vpop.f32.mrb[0].mxu0
      %v3986 = vadd.f32 %v3898, %v3985
      %v3987 = vpop.f32.mrb[0].mxu0
      %3988 = vmatprep.mubr.bf16.mxu0 0
      %3989 = vmatmul.mubr.bf16.gmra.mrb[0].mxu0 %v3838
      %v3990 = vpop.f32.mrb[0].mxu0
      %v3991 = vadd.f32 %v3903, %v3990
      %v3992 = vpop.f32.mrb[0].mxu0
      %v3993 = vpop.f32.mrb[0].mxu0
      %v3994 = vadd.f32 %v3906, %v3993
      %v3995 = vpop.f32.mrb[0].mxu0
      %3996 = vmatprep.mubr.bf16.mxu0 0
      %3997 = vmatmul.mubr.bf16.gmra.mrb[0].mxu0 %v3841
      %v3998 = vpop.f32.mrb[0].mxu0
      %v3999 = vadd.f32 %v3911, %v3998
      %v4000 = vpop.f32.mrb[0].mxu0
      %v4001 = vpop.f32.mrb[0].mxu0
      %v4002 = vadd.f32 %v3914, %v4001
      %v4003 = vpop.f32.mrb[0].mxu0
      %4004 = vmatprep.mubr.bf16.mxu0 0
      %4005 = vmatmul.mubr.bf16.gmra.mrb[0].mxu0 %v3844
      %v4006 = vpop.f32.mrb[0].mxu0
      %v4007 = vadd.f32 %v3919, %v4006
      %v4008 = vpop.f32.mrb[0].mxu0
      %v4009 = vpop.f32.mrb[0].mxu0
      %v4010 = vadd.f32 %v3922, %v4009
      %v4011 = vpop.f32.mrb[0].mxu0
      %4012 = vmatprep.mubr.bf16.mxu0 0
      %4013 = vmatmul.mubr.bf16.gmra.mrb[0].mxu0 %v3847
      %v4014 = vpop.f32.mrb[0].mxu0
      %v4015 = vadd.f32 %v3927, %v4014
      %v4016 = vpop.f32.mrb[0].mxu0
      %v4017 = vpop.f32.mrb[0].mxu0
      %v4018 = vadd.f32 %v3930, %v4017
      %v4019 = vpop.f32.mrb[0].mxu0
      %4020 = vmatprep.mubr.bf16.mxu0 0
      %4021 = vmatmul.mubr.bf16.gmra.mrb[0].mxu0 %v3850
      %v4022 = vpop.f32.mrb[0].mxu0
      %v4023 = vadd.f32 %v3935, %v4022
      %v4024 = vpop.f32.mrb[0].mxu0
      %v4025 = vpop.f32.mrb[0].mxu0
      %v4026 = vpop.f32.mrb[0].mxu0
      %4027 = vdwg.mxu0
      %v4028 = vmax.f32 %v3651, %v3975
      %v4029 = vmax.f32 %v3654, %v3978
      %v4030 = vmax.f32 %v3659, %v3983
      %v4031 = vmax.f32 %v3662, %v3986
      %v4032 = vmax.f32 %v3667, %v3991
      %v4033 = vmax.f32 %v3670, %v3994
      %v4034 = vmax.f32 %v3675, %v3999
      %v4035 = vmax.f32 %v3678, %v4002
      %v4036 = vmax.f32 %v3683, %v4007
      %v4037 = vmax.f32 %v3686, %v4010
      %v4038 = vmax.f32 %v3691, %v4015
      %v4039 = vmax.f32 %v3694, %v4018
      %v4040 = vmax.f32 %v3699, %v4023
      %s4041 = scalar_lea.vmem %s3, 312
      %v4042 = vld [vmem:[%s4041] sm:$0xff]
      %v4043 = vld [vmem:[%s4041 + $0x8] sm:$0xf]
      %v4044 = vld [vmem:[%s4041 + $0xc] sm:$0xff]
      %v4045 = vld [vmem:[%s4041 + $0x14] sm:$0xf]
      %v4046 = vld [vmem:[%s4041 + $0x18] sm:$0xff]
      %v4047 = vld [vmem:[%s4041 + $0x20] sm:$0xf]
      %v4048 = vld [vmem:[%s4041 + $0x24] sm:$0xff]
      %v4049 = vld [vmem:[%s4041 + $0x2c] sm:$0xf]
      %v4050 = vld [vmem:[%s4041 + $0x30] sm:$0xff]
      %v4051 = vld [vmem:[%s4041 + $0x38] sm:$0xf]
      %v4052 = vld [vmem:[%s4041 + $0x3c] sm:$0xff]
      %v4053 = vld [vmem:[%s4041 + $0x44] sm:$0xf]
      %v4054 = vld [vmem:[%s4041 + $0x48] sm:$0xff]
      %v4055 = vld [vmem:[%s4041 + $0x50] sm:$0xf]
      %v4056 = vld [vmem:[%s4041 + $0x54] sm:$0xff]
      %v4057 = vld [vmem:[%s4041 + $0x5c] sm:$0xf]
      %v4058 = vld [vmem:[%s4041 + $0x60] sm:$0xff]
      %v4059 = vld [vmem:[%s4041 + $0x68] sm:$0xf]
      %v4060 = vld [vmem:[%s4041 + $0x6c] sm:$0xff]
      %v4061 = vld [vmem:[%s4041 + $0x74] sm:$0xf]
      %v4062 = vld [vmem:[%s4041 + $0x78] sm:$0xff]
      %v4063 = vld [vmem:[%s4041 + $0x80] sm:$0xf]
      %v4064 = vld [vmem:[%s4041 + $0x84] sm:$0xff]
      %v4065 = vld [vmem:[%s4041 + $0x8c] sm:$0xf]
      %v4066 = vld [vmem:[%s4041 + $0x90] sm:$0x33]
      %v4067 = vld [vmem:[%s4041 + $0x98] sm:$0x3]
      %v4094 = vunpack.c.l.b16 %v4042
      %v4095 = vunpack.c.h.b16 %v4042
      %v4096 = vunpack.c.l.b16 %v4043
      %v4097 = vunpack.c.l.b16 %v4044
      %v4098 = vunpack.c.h.b16 %v4044
      %v4099 = vunpack.c.l.b16 %v4045
      %v4100 = vunpack.c.l.b16 %v4046
      %v4101 = vunpack.c.h.b16 %v4046
      %v4102 = vunpack.c.l.b16 %v4047
      %v4103 = vunpack.c.l.b16 %v4048
      %v4104 = vunpack.c.h.b16 %v4048
      %v4105 = vunpack.c.l.b16 %v4049
      %v4106 = vunpack.c.l.b16 %v4050
      %v4107 = vunpack.c.h.b16 %v4050
      %v4108 = vunpack.c.l.b16 %v4051
      %v4109 = vunpack.c.l.b16 %v4052
      %v4110 = vunpack.c.h.b16 %v4052
      %v4111 = vunpack.c.l.b16 %v4053
      %v4112 = vunpack.c.l.b16 %v4054
      %v4113 = vunpack.c.h.b16 %v4054
      %v4114 = vunpack.c.l.b16 %v4055
      %v4115 = vunpack.c.l.b16 %v4056
      %v4116 = vunpack.c.h.b16 %v4056
      %v4117 = vunpack.c.l.b16 %v4057
      %v4118 = vunpack.c.l.b16 %v4058
      %v4119 = vunpack.c.h.b16 %v4058
      %v4120 = vunpack.c.l.b16 %v4059
      %v4121 = vunpack.c.l.b16 %v4060
      %v4122 = vunpack.c.h.b16 %v4060
      %v4123 = vunpack.c.l.b16 %v4061
      %v4124 = vunpack.c.l.b16 %v4062
      %v4125 = vunpack.c.h.b16 %v4062
      %v4126 = vunpack.c.l.b16 %v4063
      %v4127 = vunpack.c.l.b16 %v4064
      %v4128 = vunpack.c.h.b16 %v4064
      %v4129 = vunpack.c.l.b16 %v4065
      %v4130 = vunpack.c.l.b16 %v4066
      %v4131 = vunpack.c.h.b16 %v4066
      %v4132 = vunpack.c.l.b16 %v4067
      %v4133 = vpack.c.b16 %v4097, %v4094
      %v4134 = vpack.c.b16 %v4098, %v4095
      %v4135 = vpack.c.b16 %v4099, %v4096
      %v4136 = vpack.c.b16 %v4103, %v4100
      %v4137 = vpack.c.b16 %v4104, %v4101
      %v4138 = vpack.c.b16 %v4105, %v4102
      %v4139 = vpack.c.b16 %v4109, %v4106
      %v4140 = vpack.c.b16 %v4110, %v4107
      %v4141 = vpack.c.b16 %v4111, %v4108
      %v4142 = vpack.c.b16 %v4115, %v4112
      %v4143 = vpack.c.b16 %v4116, %v4113
      %v4144 = vpack.c.b16 %v4117, %v4114
      %v4145 = vpack.c.b16 %v4121, %v4118
      %v4146 = vpack.c.b16 %v4122, %v4119
      %v4147 = vpack.c.b16 %v4123, %v4120
      %v4148 = vpack.c.b16 %v4127, %v4124
      %v4149 = vpack.c.b16 %v4128, %v4125
      %v4150 = vpack.c.b16 %v4129, %v4126
      %v4151 = vpack.c.b16 %v4130, %v4130
      %v4152 = vpack.c.b16 %v4131, %v4131
      %v4153 = vpack.c.b16 %v4132, %v4132
      %v4169 = vsel %vm3502, %v4135, 0
      %v4172 = vsel %vm3502, %v4138, 0
      %v4175 = vsel %vm3502, %v4141, 0
      %v4178 = vsel %vm3502, %v4144, 0
      %v4181 = vsel %vm3502, %v4147, 0
      %v4184 = vsel %vm3502, %v4150, 0
      %v4187 = vsel %vm3502, %v4153, 0
      %4189 = vmatprep.subr.bf16.mxu0 0
      %4190 = vmatpush1.bf16.msra.mxu0 %v3358
      %4191 = vmatprep.subr.bf16.mxu0 0
      %4192 = vmatpush1.bf16.msra.mxu0 %v3359
      %4193 = vmatprep.subr.bf16.mxu0 0
      %4194 = vmatpush1.bf16.msra.mxu0 %v3360
      %4195 = vmatprep.subr.bf16.mxu0 0
      %4196 = vmatpush1.bf16.msra.mxu0 %v3361
      %4197 = vmatprep.subr.bf16.mxu0 0
      %4198 = vmatpush1.bf16.msra.mxu0 %v3362
      %4199 = vmatprep.subr.bf16.mxu0 0
      %4200 = vmatpush1.bf16.msra.mxu0 %v3363
      %4201 = vmatprep.subr.bf16.mxu0 0
      %4202 = vmatpush1.bf16.msra.mxu0 %v3364
      %4203 = vmatprep.subr.bf16.mxu0 0
      %4204 = vmatpush1.bf16.msra.mxu0 %v3365
      %4205 = vmatprep.subr.bf16.mxu0 0
      %4206 = vmatpush1.bf16.msra.mxu0 %v3366
      %4207 = vmatprep.subr.bf16.mxu0 0
      %4208 = vmatpush1.bf16.msra.mxu0 %v3367
      %4209 = vmatprep.subr.bf16.mxu0 0
      %4210 = vmatpush1.bf16.msra.mxu0 %v3368
      %4211 = vmatprep.subr.bf16.mxu0 0
      %4212 = vmatpush1.bf16.msra.mxu0 %v3369
      %4213 = vmatprep.subr.bf16.mxu0 0
      %4214 = vmatpush1.bf16.msra.mxu0 %v3370
      %4215 = vmatprep.subr.bf16.mxu0 0
      %4216 = vmatpush1.bf16.msra.mxu0 %v3371
      %4217 = vmatprep.subr.bf16.mxu0 0
      %4218 = vmatpush1.bf16.msra.mxu0 %v3372
      %4219 = vmatprep.subr.bf16.mxu0 0
      %4220 = vmatpush1.bf16.msra.mxu0 %v3373
      %4221 = vmatprep.mubr.bf16.mxu0 %v4134
      %4222 = vmatmul.mubr.bf16.gmra.mrb[0].mxu0 %v4133
      %v4223 = vpop.f32.mrb[0].mxu0
      %v4224 = vadd.f32 0.0, %v4223
      %v4225 = vpop.f32.mrb[0].mxu0
      %v4226 = vpop.f32.mrb[0].mxu0
      %v4227 = vadd.f32 0.0, %v4226
      %v4228 = vpop.f32.mrb[0].mxu0
      %4229 = vmatprep.mubr.bf16.mxu0 %v4137
      %4230 = vmatmul.mubr.bf16.gmra.mrb[0].mxu0 %v4136
      %v4231 = vpop.f32.mrb[0].mxu0
      %v4232 = vadd.f32 0.0, %v4231
      %v4233 = vpop.f32.mrb[0].mxu0
      %v4234 = vpop.f32.mrb[0].mxu0
      %v4235 = vadd.f32 0.0, %v4234
      %v4236 = vpop.f32.mrb[0].mxu0
      %4237 = vmatprep.mubr.bf16.mxu0 %v4140
      %4238 = vmatmul.mubr.bf16.gmra.mrb[0].mxu0 %v4139
      %v4239 = vpop.f32.mrb[0].mxu0
      %v4240 = vadd.f32 0.0, %v4239
      %v4241 = vpop.f32.mrb[0].mxu0
      %v4242 = vpop.f32.mrb[0].mxu0
      %v4243 = vadd.f32 0.0, %v4242
      %v4244 = vpop.f32.mrb[0].mxu0
      %4245 = vmatprep.mubr.bf16.mxu0 %v4143
      %4246 = vmatmul.mubr.bf16.gmra.mrb[0].mxu0 %v4142
      %v4247 = vpop.f32.mrb[0].mxu0
      %v4248 = vadd.f32 0.0, %v4247
      %v4249 = vpop.f32.mrb[0].mxu0
      %v4250 = vpop.f32.mrb[0].mxu0
      %v4251 = vadd.f32 0.0, %v4250
      %v4252 = vpop.f32.mrb[0].mxu0
      %4253 = vmatprep.mubr.bf16.mxu0 %v4146
      %4254 = vmatmul.mubr.bf16.gmra.mrb[0].mxu0 %v4145
      %v4255 = vpop.f32.mrb[0].mxu0
      %v4256 = vadd.f32 0.0, %v4255
      %v4257 = vpop.f32.mrb[0].mxu0
      %v4258 = vpop.f32.mrb[0].mxu0
      %v4259 = vadd.f32 0.0, %v4258
      %v4260 = vpop.f32.mrb[0].mxu0
      %4261 = vmatprep.mubr.bf16.mxu0 %v4149
      %4262 = vmatmul.mubr.bf16.gmra.mrb[0].mxu0 %v4148
      %v4263 = vpop.f32.mrb[0].mxu0
      %v4264 = vadd.f32 0.0, %v4263
      %v4265 = vpop.f32.mrb[0].mxu0
      %v4266 = vpop.f32.mrb[0].mxu0
      %v4267 = vadd.f32 0.0, %v4266
      %v4268 = vpop.f32.mrb[0].mxu0
      %4269 = vmatprep.mubr.bf16.mxu0 %v4152
      %4270 = vmatmul.mubr.bf16.gmra.mrb[0].mxu0 %v4151
      %v4271 = vpop.f32.mrb[0].mxu0
      %v4272 = vadd.f32 0.0, %v4271
      %v4273 = vpop.f32.mrb[0].mxu0
      %v4274 = vpop.f32.mrb[0].mxu0
      %v4275 = vpop.f32.mrb[0].mxu0
      %4276 = vdwg.mxu0
      %4277 = vmatprep.subr.bf16.mxu0 0
      %4278 = vmatpush1.bf16.msra.mxu0 %v3374
      %4279 = vmatprep.subr.bf16.mxu0 0
      %4280 = vmatpush1.bf16.msra.mxu0 %v3526
      %4281 = vmatprep.subr.bf16.mxu0 0
      %4282 = vmatpush1.bf16.msra.mxu0 0
      %4283 = vmatprep.subr.bf16.mxu0 0
      %4284 = vmatpush1.bf16.msra.mxu0 0
      %4285 = vmatprep.subr.bf16.mxu0 0
      %4286 = vmatpush1.bf16.msra.mxu0 0
      %4287 = vmatprep.subr.bf16.mxu0 0
      %4288 = vmatpush1.bf16.msra.mxu0 0
      %4289 = vmatprep.subr.bf16.mxu0 0
      %4290 = vmatpush1.bf16.msra.mxu0 0
      %4291 = vmatprep.subr.bf16.mxu0 0
      %4292 = vmatpush1.bf16.msra.mxu0 0
      %4293 = vmatprep.subr.bf16.mxu0 0
      %4294 = vmatpush1.bf16.msra.mxu0 0
      %4295 = vmatprep.subr.bf16.mxu0 0
      %4296 = vmatpush1.bf16.msra.mxu0 0
      %4297 = vmatprep.subr.bf16.mxu0 0
      %4298 = vmatpush1.bf16.msra.mxu0 0
      %4299 = vmatprep.subr.bf16.mxu0 0
      %4300 = vmatpush1.bf16.msra.mxu0 0
      %4301 = vmatprep.subr.bf16.mxu0 0
      %4302 = vmatpush1.bf16.msra.mxu0 0
      %4303 = vmatprep.subr.bf16.mxu0 0
      %4304 = vmatpush1.bf16.msra.mxu0 0
      %4305 = vmatprep.subr.bf16.mxu0 0
      %4306 = vmatpush1.bf16.msra.mxu0 0
      %4307 = vmatprep.subr.bf16.mxu0 0
      %4308 = vmatpush1.bf16.msra.mxu0 0
      %4309 = vmatprep.mubr.bf16.mxu0 0
      %4310 = vmatmul.mubr.bf16.gmra.mrb[0].mxu0 %v4169
      %v4311 = vpop.f32.mrb[0].mxu0
      %v4312 = vadd.f32 %v4224, %v4311
      %v4313 = vpop.f32.mrb[0].mxu0
      %v4314 = vpop.f32.mrb[0].mxu0
      %v4315 = vadd.f32 %v4227, %v4314
      %v4316 = vpop.f32.mrb[0].mxu0
      %4317 = vmatprep.mubr.bf16.mxu0 0
      %4318 = vmatmul.mubr.bf16.gmra.mrb[0].mxu0 %v4172
      %v4319 = vpop.f32.mrb[0].mxu0
      %v4320 = vadd.f32 %v4232, %v4319
      %v4321 = vpop.f32.mrb[0].mxu0
      %v4322 = vpop.f32.mrb[0].mxu0
      %v4323 = vadd.f32 %v4235, %v4322
      %v4324 = vpop.f32.mrb[0].mxu0
      %4325 = vmatprep.mubr.bf16.mxu0 0
      %4326 = vmatmul.mubr.bf16.gmra.mrb[0].mxu0 %v4175
      %v4327 = vpop.f32.mrb[0].mxu0
      %v4328 = vadd.f32 %v4240, %v4327
      %v4329 = vpop.f32.mrb[0].mxu0
      %v4330 = vpop.f32.mrb[0].mxu0
      %v4331 = vadd.f32 %v4243, %v4330
      %v4332 = vpop.f32.mrb[0].mxu0
      %4333 = vmatprep.mubr.bf16.mxu0 0
      %4334 = vmatmul.mubr.bf16.gmra.mrb[0].mxu0 %v4178
      %v4335 = vpop.f32.mrb[0].mxu0
      %v4336 = vadd.f32 %v4248, %v4335
      %v4337 = vpop.f32.mrb[0].mxu0
      %v4338 = vpop.f32.mrb[0].mxu0
      %v4339 = vadd.f32 %v4251, %v4338
      %v4340 = vpop.f32.mrb[0].mxu0
      %4341 = vmatprep.mubr.bf16.mxu0 0
      %4342 = vmatmul.mubr.bf16.gmra.mrb[0].mxu0 %v4181
      %v4343 = vpop.f32.mrb[0].mxu0
      %v4344 = vadd.f32 %v4256, %v4343
      %v4345 = vpop.f32.mrb[0].mxu0
      %v4346 = vpop.f32.mrb[0].mxu0
      %v4347 = vadd.f32 %v4259, %v4346
      %v4348 = vpop.f32.mrb[0].mxu0
      %4349 = vmatprep.mubr.bf16.mxu0 0
      %4350 = vmatmul.mubr.bf16.gmra.mrb[0].mxu0 %v4184
      %v4351 = vpop.f32.mrb[0].mxu0
      %v4352 = vadd.f32 %v4264, %v4351
      %v4353 = vpop.f32.mrb[0].mxu0
      %v4354 = vpop.f32.mrb[0].mxu0
      %v4355 = vadd.f32 %v4267, %v4354
      %v4356 = vpop.f32.mrb[0].mxu0
      %4357 = vmatprep.mubr.bf16.mxu0 0
      %4358 = vmatmul.mubr.bf16.gmra.mrb[0].mxu0 %v4187
      %v4359 = vpop.f32.mrb[0].mxu0
      %v4360 = vadd.f32 %v4272, %v4359
      %v4361 = vpop.f32.mrb[0].mxu0
      %v4362 = vpop.f32.mrb[0].mxu0
      %v4363 = vpop.f32.mrb[0].mxu0
      %4364 = vdwg.mxu0
      %v4365 = vmax.f32 %v4028, %v4312
      %v4366 = vmax.f32 %v4029, %v4315
      %v4367 = vmax.f32 %v4030, %v4320
      %v4368 = vmax.f32 %v4031, %v4323
      %v4369 = vmax.f32 %v4032, %v4328
      %v4370 = vmax.f32 %v4033, %v4331
      %v4371 = vmax.f32 %v4034, %v4336
      %v4372 = vmax.f32 %v4035, %v4339
      %v4373 = vmax.f32 %v4036, %v4344
      %v4374 = vmax.f32 %v4037, %v4347
      %v4375 = vmax.f32 %v4038, %v4352
      %v4376 = vmax.f32 %v4039, %v4355
      %v4377 = vmax.f32 %v4040, %v4360
      %s4378 = scalar_lea.vmem %s3, 468
      %v4379 = vld [vmem:[%s4378] sm:$0xff]
      %v4380 = vld [vmem:[%s4378 + $0x8] sm:$0xf]
      %v4381 = vld [vmem:[%s4378 + $0xc] sm:$0xff]
      %v4382 = vld [vmem:[%s4378 + $0x14] sm:$0xf]
      %v4383 = vld [vmem:[%s4378 + $0x18] sm:$0xff]
      %v4384 = vld [vmem:[%s4378 + $0x20] sm:$0xf]
      %v4385 = vld [vmem:[%s4378 + $0x24] sm:$0xff]
      %v4386 = vld [vmem:[%s4378 + $0x2c] sm:$0xf]
      %v4387 = vld [vmem:[%s4378 + $0x30] sm:$0xff]
      %v4388 = vld [vmem:[%s4378 + $0x38] sm:$0xf]
      %v4389 = vld [vmem:[%s4378 + $0x3c] sm:$0xff]
      %v4390 = vld [vmem:[%s4378 + $0x44] sm:$0xf]
      %v4391 = vld [vmem:[%s4378 + $0x48] sm:$0xff]
      %v4392 = vld [vmem:[%s4378 + $0x50] sm:$0xf]
      %v4393 = vld [vmem:[%s4378 + $0x54] sm:$0xff]
      %v4394 = vld [vmem:[%s4378 + $0x5c] sm:$0xf]
      %v4395 = vld [vmem:[%s4378 + $0x60] sm:$0xff]
      %v4396 = vld [vmem:[%s4378 + $0x68] sm:$0xf]
      %v4397 = vld [vmem:[%s4378 + $0x6c] sm:$0xff]
      %v4398 = vld [vmem:[%s4378 + $0x74] sm:$0xf]
      %v4399 = vld [vmem:[%s4378 + $0x78] sm:$0xff]
      %v4400 = vld [vmem:[%s4378 + $0x80] sm:$0xf]
      %v4401 = vld [vmem:[%s4378 + $0x84] sm:$0xff]
      %v4402 = vld [vmem:[%s4378 + $0x8c] sm:$0xf]
      %v4403 = vld [vmem:[%s4378 + $0x90] sm:$0x33]
      %v4404 = vld [vmem:[%s4378 + $0x98] sm:$0x3]
      %v4431 = vunpack.c.l.b16 %v4379
      %v4432 = vunpack.c.h.b16 %v4379
      %v4433 = vunpack.c.l.b16 %v4380
      %v4434 = vunpack.c.l.b16 %v4381
      %v4435 = vunpack.c.h.b16 %v4381
      %v4436 = vunpack.c.l.b16 %v4382
      %v4437 = vunpack.c.l.b16 %v4383
      %v4438 = vunpack.c.h.b16 %v4383
      %v4439 = vunpack.c.l.b16 %v4384
      %v4440 = vunpack.c.l.b16 %v4385
      %v4441 = vunpack.c.h.b16 %v4385
      %v4442 = vunpack.c.l.b16 %v4386
      %v4443 = vunpack.c.l.b16 %v4387
      %v4444 = vunpack.c.h.b16 %v4387
      %v4445 = vunpack.c.l.b16 %v4388
      %v4446 = vunpack.c.l.b16 %v4389
      %v4447 = vunpack.c.h.b16 %v4389
      %v4448 = vunpack.c.l.b16 %v4390
      %v4449 = vunpack.c.l.b16 %v4391
      %v4450 = vunpack.c.h.b16 %v4391
      %v4451 = vunpack.c.l.b16 %v4392
      %v4452 = vunpack.c.l.b16 %v4393
      %v4453 = vunpack.c.h.b16 %v4393
      %v4454 = vunpack.c.l.b16 %v4394
      %v4455 = vunpack.c.l.b16 %v4395
      %v4456 = vunpack.c.h.b16 %v4395
      %v4457 = vunpack.c.l.b16 %v4396
      %v4458 = vunpack.c.l.b16 %v4397
      %v4459 = vunpack.c.h.b16 %v4397
      %v4460 = vunpack.c.l.b16 %v4398
      %v4461 = vunpack.c.l.b16 %v4399
      %v4462 = vunpack.c.h.b16 %v4399
      %v4463 = vunpack.c.l.b16 %v4400
      %v4464 = vunpack.c.l.b16 %v4401
      %v4465 = vunpack.c.h.b16 %v4401
      %v4466 = vunpack.c.l.b16 %v4402
      %v4467 = vunpack.c.l.b16 %v4403
      %v4468 = vunpack.c.h.b16 %v4403
      %v4469 = vunpack.c.l.b16 %v4404
      %v4470 = vpack.c.b16 %v4434, %v4431
      %v4471 = vpack.c.b16 %v4435, %v4432
      %v4472 = vpack.c.b16 %v4436, %v4433
      %v4473 = vpack.c.b16 %v4440, %v4437
      %v4474 = vpack.c.b16 %v4441, %v4438
      %v4475 = vpack.c.b16 %v4442, %v4439
      %v4476 = vpack.c.b16 %v4446, %v4443
      %v4477 = vpack.c.b16 %v4447, %v4444
      %v4478 = vpack.c.b16 %v4448, %v4445
      %v4479 = vpack.c.b16 %v4452, %v4449
      %v4480 = vpack.c.b16 %v4453, %v4450
      %v4481 = vpack.c.b16 %v4454, %v4451
      %v4482 = vpack.c.b16 %v4458, %v4455
      %v4483 = vpack.c.b16 %v4459, %v4456
      %v4484 = vpack.c.b16 %v4460, %v4457
      %v4485 = vpack.c.b16 %v4464, %v4461
      %v4486 = vpack.c.b16 %v4465, %v4462
      %v4487 = vpack.c.b16 %v4466, %v4463
      %v4488 = vpack.c.b16 %v4467, %v4467
      %v4489 = vpack.c.b16 %v4468, %v4468
      %v4490 = vpack.c.b16 %v4469, %v4469
      %v4506 = vsel %vm3502, %v4472, 0
      %v4509 = vsel %vm3502, %v4475, 0
      %v4512 = vsel %vm3502, %v4478, 0
      %v4515 = vsel %vm3502, %v4481, 0
      %v4518 = vsel %vm3502, %v4484, 0
      %v4521 = vsel %vm3502, %v4487, 0
      %v4524 = vsel %vm3502, %v4490, 0
      %4526 = vmatprep.subr.bf16.mxu0 0
      %4527 = vmatpush1.bf16.msra.mxu0 %v3358
      %4528 = vmatprep.subr.bf16.mxu0 0
      %4529 = vmatpush1.bf16.msra.mxu0 %v3359
      %4530 = vmatprep.subr.bf16.mxu0 0
      %4531 = vmatpush1.bf16.msra.mxu0 %v3360
      %4532 = vmatprep.subr.bf16.mxu0 0
      %4533 = vmatpush1.bf16.msra.mxu0 %v3361
      %4534 = vmatprep.subr.bf16.mxu0 0
      %4535 = vmatpush1.bf16.msra.mxu0 %v3362
      %4536 = vmatprep.subr.bf16.mxu0 0
      %4537 = vmatpush1.bf16.msra.mxu0 %v3363
      %4538 = vmatprep.subr.bf16.mxu0 0
      %4539 = vmatpush1.bf16.msra.mxu0 %v3364
      %4540 = vmatprep.subr.bf16.mxu0 0
      %4541 = vmatpush1.bf16.msra.mxu0 %v3365
      %4542 = vmatprep.subr.bf16.mxu0 0
      %4543 = vmatpush1.bf16.msra.mxu0 %v3366
      %4544 = vmatprep.subr.bf16.mxu0 0
      %4545 = vmatpush1.bf16.msra.mxu0 %v3367
      %4546 = vmatprep.subr.bf16.mxu0 0
      %4547 = vmatpush1.bf16.msra.mxu0 %v3368
      %4548 = vmatprep.subr.bf16.mxu0 0
      %4549 = vmatpush1.bf16.msra.mxu0 %v3369
      %4550 = vmatprep.subr.bf16.mxu0 0
      %4551 = vmatpush1.bf16.msra.mxu0 %v3370
      %4552 = vmatprep.subr.bf16.mxu0 0
      %4553 = vmatpush1.bf16.msra.mxu0 %v3371
      %4554 = vmatprep.subr.bf16.mxu0 0
      %4555 = vmatpush1.bf16.msra.mxu0 %v3372
      %4556 = vmatprep.subr.bf16.mxu0 0
      %4557 = vmatpush1.bf16.msra.mxu0 %v3373
      %4558 = vmatprep.mubr.bf16.mxu0 %v4471
      %4559 = vmatmul.mubr.bf16.gmra.mrb[0].mxu0 %v4470
      %v4560 = vpop.f32.mrb[0].mxu0
      %v4561 = vadd.f32 0.0, %v4560
      %v4562 = vpop.f32.mrb[0].mxu0
      %v4563 = vpop.f32.mrb[0].mxu0
      %v4564 = vadd.f32 0.0, %v4563
      %v4565 = vpop.f32.mrb[0].mxu0
      %4566 = vmatprep.mubr.bf16.mxu0 %v4474
      %4567 = vmatmul.mubr.bf16.gmra.mrb[0].mxu0 %v4473
      %v4568 = vpop.f32.mrb[0].mxu0
      %v4569 = vadd.f32 0.0, %v4568
      %v4570 = vpop.f32.mrb[0].mxu0
      %v4571 = vpop.f32.mrb[0].mxu0
      %v4572 = vadd.f32 0.0, %v4571
      %v4573 = vpop.f32.mrb[0].mxu0
      %4574 = vmatprep.mubr.bf16.mxu0 %v4477
      %4575 = vmatmul.mubr.bf16.gmra.mrb[0].mxu0 %v4476
      %v4576 = vpop.f32.mrb[0].mxu0
      %v4577 = vadd.f32 0.0, %v4576
      %v4578 = vpop.f32.mrb[0].mxu0
      %v4579 = vpop.f32.mrb[0].mxu0
      %v4580 = vadd.f32 0.0, %v4579
      %v4581 = vpop.f32.mrb[0].mxu0
      %4582 = vmatprep.mubr.bf16.mxu0 %v4480
      %4583 = vmatmul.mubr.bf16.gmra.mrb[0].mxu0 %v4479
      %v4584 = vpop.f32.mrb[0].mxu0
      %v4585 = vadd.f32 0.0, %v4584
      %v4586 = vpop.f32.mrb[0].mxu0
      %v4587 = vpop.f32.mrb[0].mxu0
      %v4588 = vadd.f32 0.0, %v4587
      %v4589 = vpop.f32.mrb[0].mxu0
      %4590 = vmatprep.mubr.bf16.mxu0 %v4483
      %4591 = vmatmul.mubr.bf16.gmra.mrb[0].mxu0 %v4482
      %v4592 = vpop.f32.mrb[0].mxu0
      %v4593 = vadd.f32 0.0, %v4592
      %v4594 = vpop.f32.mrb[0].mxu0
      %v4595 = vpop.f32.mrb[0].mxu0
      %v4596 = vadd.f32 0.0, %v4595
      %v4597 = vpop.f32.mrb[0].mxu0
      %4598 = vmatprep.mubr.bf16.mxu0 %v4486
      %4599 = vmatmul.mubr.bf16.gmra.mrb[0].mxu0 %v4485
      %v4600 = vpop.f32.mrb[0].mxu0
      %v4601 = vadd.f32 0.0, %v4600
      %v4602 = vpop.f32.mrb[0].mxu0
      %v4603 = vpop.f32.mrb[0].mxu0
      %v4604 = vadd.f32 0.0, %v4603
      %v4605 = vpop.f32.mrb[0].mxu0
      %4606 = vmatprep.mubr.bf16.mxu0 %v4489
      %4607 = vmatmul.mubr.bf16.gmra.mrb[0].mxu0 %v4488
      %v4608 = vpop.f32.mrb[0].mxu0
      %v4609 = vadd.f32 0.0, %v4608
      %v4610 = vpop.f32.mrb[0].mxu0
      %v4611 = vpop.f32.mrb[0].mxu0
      %v4612 = vpop.f32.mrb[0].mxu0
      %4613 = vdwg.mxu0
      %4614 = vmatprep.subr.bf16.mxu0 0
      %4615 = vmatpush1.bf16.msra.mxu0 %v3374
      %4616 = vmatprep.subr.bf16.mxu0 0
      %4617 = vmatpush1.bf16.msra.mxu0 %v3526
      %4618 = vmatprep.subr.bf16.mxu0 0
      %4619 = vmatpush1.bf16.msra.mxu0 0
      %4620 = vmatprep.subr.bf16.mxu0 0
      %4621 = vmatpush1.bf16.msra.mxu0 0
      %4622 = vmatprep.subr.bf16.mxu0 0
      %4623 = vmatpush1.bf16.msra.mxu0 0
      %4624 = vmatprep.subr.bf16.mxu0 0
      %4625 = vmatpush1.bf16.msra.mxu0 0
      %4626 = vmatprep.subr.bf16.mxu0 0
      %4627 = vmatpush1.bf16.msra.mxu0 0
      %4628 = vmatprep.subr.bf16.mxu0 0
      %4629 = vmatpush1.bf16.msra.mxu0 0
      %4630 = vmatprep.subr.bf16.mxu0 0
      %4631 = vmatpush1.bf16.msra.mxu0 0
      %4632 = vmatprep.subr.bf16.mxu0 0
      %4633 = vmatpush1.bf16.msra.mxu0 0
      %4634 = vmatprep.subr.bf16.mxu0 0
      %4635 = vmatpush1.bf16.msra.mxu0 0
      %4636 = vmatprep.subr.bf16.mxu0 0
      %4637 = vmatpush1.bf16.msra.mxu0 0
      %4638 = vmatprep.subr.bf16.mxu0 0
      %4639 = vmatpush1.bf16.msra.mxu0 0
      %4640 = vmatprep.subr.bf16.mxu0 0
      %4641 = vmatpush1.bf16.msra.mxu0 0
      %4642 = vmatprep.subr.bf16.mxu0 0
      %4643 = vmatpush1.bf16.msra.mxu0 0
      %4644 = vmatprep.subr.bf16.mxu0 0
      %4645 = vmatpush1.bf16.msra.mxu0 0
      %4646 = vmatprep.mubr.bf16.mxu0 0
      %4647 = vmatmul.mubr.bf16.gmra.mrb[0].mxu0 %v4506
      %v4648 = vpop.f32.mrb[0].mxu0
      %v4649 = vadd.f32 %v4561, %v4648
      %v4650 = vpop.f32.mrb[0].mxu0
      %v4651 = vpop.f32.mrb[0].mxu0
      %v4652 = vadd.f32 %v4564, %v4651
      %v4653 = vpop.f32.mrb[0].mxu0
      %4654 = vmatprep.mubr.bf16.mxu0 0
      %4655 = vmatmul.mubr.bf16.gmra.mrb[0].mxu0 %v4509
      %v4656 = vpop.f32.mrb[0].mxu0
      %v4657 = vadd.f32 %v4569, %v4656
      %v4658 = vpop.f32.mrb[0].mxu0
      %v4659 = vpop.f32.mrb[0].mxu0
      %v4660 = vadd.f32 %v4572, %v4659
      %v4661 = vpop.f32.mrb[0].mxu0
      %4662 = vmatprep.mubr.bf16.mxu0 0
      %4663 = vmatmul.mubr.bf16.gmra.mrb[0].mxu0 %v4512
      %v4664 = vpop.f32.mrb[0].mxu0
      %v4665 = vadd.f32 %v4577, %v4664
      %v4666 = vpop.f32.mrb[0].mxu0
      %v4667 = vpop.f32.mrb[0].mxu0
      %v4668 = vadd.f32 %v4580, %v4667
      %v4669 = vpop.f32.mrb[0].mxu0
      %4670 = vmatprep.mubr.bf16.mxu0 0
      %4671 = vmatmul.mubr.bf16.gmra.mrb[0].mxu0 %v4515
      %v4672 = vpop.f32.mrb[0].mxu0
      %v4673 = vadd.f32 %v4585, %v4672
      %v4674 = vpop.f32.mrb[0].mxu0
      %v4675 = vpop.f32.mrb[0].mxu0
      %v4676 = vadd.f32 %v4588, %v4675
      %v4677 = vpop.f32.mrb[0].mxu0
      %4678 = vmatprep.mubr.bf16.mxu0 0
      %4679 = vmatmul.mubr.bf16.gmra.mrb[0].mxu0 %v4518
      %v4680 = vpop.f32.mrb[0].mxu0
      %v4681 = vadd.f32 %v4593, %v4680
      %v4682 = vpop.f32.mrb[0].mxu0
      %v4683 = vpop.f32.mrb[0].mxu0
      %v4684 = vadd.f32 %v4596, %v4683
      %v4685 = vpop.f32.mrb[0].mxu0
      %4686 = vmatprep.mubr.bf16.mxu0 0
      %4687 = vmatmul.mubr.bf16.gmra.mrb[0].mxu0 %v4521
      %v4688 = vpop.f32.mrb[0].mxu0
      %v4689 = vadd.f32 %v4601, %v4688
      %v4690 = vpop.f32.mrb[0].mxu0
      %v4691 = vpop.f32.mrb[0].mxu0
      %v4692 = vadd.f32 %v4604, %v4691
      %v4693 = vpop.f32.mrb[0].mxu0
      %4694 = vmatprep.mubr.bf16.mxu0 0
      %4695 = vmatmul.mubr.bf16.gmra.mrb[0].mxu0 %v4524
      %v4696 = vpop.f32.mrb[0].mxu0
      %v4697 = vadd.f32 %v4609, %v4696
      %v4698 = vpop.f32.mrb[0].mxu0
      %v4699 = vpop.f32.mrb[0].mxu0
      %v4700 = vpop.f32.mrb[0].mxu0
      %4701 = vdwg.mxu0
      %v4702 = vmax.f32 %v4365, %v4649
      %v4703 = vmax.f32 %v4366, %v4652
      %v4704 = vmax.f32 %v4367, %v4657
      %v4705 = vmax.f32 %v4368, %v4660
      %v4706 = vmax.f32 %v4369, %v4665
      %v4707 = vmax.f32 %v4370, %v4668
      %v4708 = vmax.f32 %v4371, %v4673
      %v4709 = vmax.f32 %v4372, %v4676
      %v4710 = vmax.f32 %v4373, %v4681
      %v4711 = vmax.f32 %v4374, %v4684
      %v4712 = vmax.f32 %v4375, %v4689
      %v4713 = vmax.f32 %v4376, %v4692
      %v4714 = vmax.f32 %v4377, %v4697
      %vm4715 = vcmask 523264
      %4716 = vst.msk [vmem:[#allocation2] sm:$0xff] %vm4715, %v4702
      %4717 = vst.msk [vmem:[#allocation2 + $0x8] sm:$0xff] %vm4715, %v4703
      %4718 = vst.msk [vmem:[#allocation2 + $0x10] sm:$0xff] %vm4715, %v4704
      %4719 = vst.msk [vmem:[#allocation2 + $0x18] sm:$0xff] %vm4715, %v4705
      %4720 = vst.msk [vmem:[#allocation2 + $0x20] sm:$0xff] %vm4715, %v4706
      %4721 = vst.msk [vmem:[#allocation2 + $0x28] sm:$0xff] %vm4715, %v4707
      %4722 = vst.msk [vmem:[#allocation2 + $0x30] sm:$0xff] %vm4715, %v4708
      %4723 = vst.msk [vmem:[#allocation2 + $0x38] sm:$0xff] %vm4715, %v4709
      %4724 = vst.msk [vmem:[#allocation2 + $0x40] sm:$0xff] %vm4715, %v4710
      %4725 = vst.msk [vmem:[#allocation2 + $0x48] sm:$0xff] %vm4715, %v4711
      %4726 = vst.msk [vmem:[#allocation2 + $0x50] sm:$0xff] %vm4715, %v4712
      %4727 = vst.msk [vmem:[#allocation2 + $0x58] sm:$0xff] %vm4715, %v4713
      %vm4728 = vcmask 519168
      %4729 = vst.msk [vmem:[#allocation2 + $0x60] sm:$0xf] %vm4728, %v4714
      %v4730 = vld [vmem:[#allocation2] sm:$0xff]
      %v4731 = vld [vmem:[#allocation2 + $0x8] sm:$0xff]
      %v4732 = vld [vmem:[#allocation2 + $0x10] sm:$0xff]
      %v4733 = vld [vmem:[#allocation2 + $0x18] sm:$0xff]
      %v4734 = vld [vmem:[#allocation2 + $0x20] sm:$0xff]
      %v4735 = vld [vmem:[#allocation2 + $0x28] sm:$0xff]
      %v4736 = vld [vmem:[#allocation2 + $0x30] sm:$0xff]
      %v4737 = vld [vmem:[#allocation2 + $0x38] sm:$0xff]
      %v4738 = vld [vmem:[#allocation2 + $0x40] sm:$0xff]
      %v4739 = vld [vmem:[#allocation2 + $0x48] sm:$0x3f]
      %v4740 = vpack.c.bf16 %v4731, %v4730
      %v4741 = vpack.c.bf16 %v4733, %v4732
      %v4742 = vpack.c.bf16 %v4735, %v4734
      %v4743 = vpack.c.bf16 %v4737, %v4736
      %v4744 = vpack.c.bf16 %v4739, %v4738
      %v4745 = vld [vmem:[%s4] sm:$0xf]
      %v4746 = vld [vmem:[%s4 + $0x4] sm:$0xf]
      %v4747 = vld [vmem:[%s4 + $0x8] sm:$0xf]
      %v4748 = vld [vmem:[%s4 + $0xc] sm:$0xf]
      %v4749 = vld [vmem:[%s4 + $0x10] sm:$0xf]
      %v4750 = vld [vmem:[%s4 + $0x14] sm:$0xf]
      %v4751 = vld [vmem:[%s4 + $0x18] sm:$0xf]
      %v4752 = vld [vmem:[%s4 + $0x1c] sm:$0xf]
      %v4753 = vld [vmem:[#allocation2 + $0x1] sm:$0xff]
      %v4754 = vld [vmem:[#allocation2 + $0x9] sm:$0xff]
      %v4755 = vld [vmem:[#allocation2 + $0x11] sm:$0xff]
      %v4756 = vld [vmem:[#allocation2 + $0x19] sm:$0xff]
      %v4757 = vld [vmem:[#allocation2 + $0x21] sm:$0xff]
      %v4758 = vld [vmem:[#allocation2 + $0x29] sm:$0xff]
      %v4759 = vld [vmem:[#allocation2 + $0x31] sm:$0xff]
      %v4760 = vld [vmem:[#allocation2 + $0x39] sm:$0xff]
      %v4761 = vld [vmem:[#allocation2 + $0x41] sm:$0xff]
      %v4762 = vld [vmem:[#allocation2 + $0x49] sm:$0x3f]
      %v4763 = vpack.c.bf16 %v4754, %v4753
      %v4764 = vpack.c.bf16 %v4756, %v4755
      %v4765 = vpack.c.bf16 %v4758, %v4757
      %v4766 = vpack.c.bf16 %v4760, %v4759
      %v4767 = vpack.c.bf16 %v4762, %v4761
      %s4768 = scalar_lea.vmem %s4, 32
      %v4769 = vld [vmem:[%s4768] sm:$0xf]
      %v4770 = vld [vmem:[%s4768 + $0x4] sm:$0xf]
      %v4771 = vld [vmem:[%s4768 + $0x8] sm:$0xf]
      %v4772 = vld [vmem:[%s4768 + $0xc] sm:$0xf]
      %v4773 = vld [vmem:[%s4768 + $0x10] sm:$0xf]
      %v4774 = vld [vmem:[%s4768 + $0x14] sm:$0xf]
      %v4775 = vld [vmem:[%s4768 + $0x18] sm:$0xf]
      %v4776 = vld [vmem:[%s4768 + $0x1c] sm:$0xf]
      %v4785 = vunpack.c.l.b16 %v4769
      %v4786 = vunpack.c.l.b16 %v4770
      %v4787 = vunpack.c.l.b16 %v4771
      %v4788 = vunpack.c.l.b16 %v4772
      %v4789 = vunpack.c.l.b16 %v4773
      %v4790 = vunpack.c.l.b16 %v4774
      %v4791 = vunpack.c.l.b16 %v4775
      %v4792 = vunpack.c.l.b16 %v4776
      %v4793 = vpack.c.b16 %v4786, %v4785
      %v4794 = vpack.c.b16 %v4788, %v4787
      %v4795 = vpack.c.b16 %v4790, %v4789
      %v4796 = vpack.c.b16 %v4792, %v4791
      %v4802 = vsel %vm4715, %v4763, 0
      %v4805 = vsel %vm4715, %v4764, 0
      %v4808 = vsel %vm4715, %v4765, 0
      %v4811 = vsel %vm4715, %v4766, 0
      %v4814 = vsel %vm4715, %v4767, 0
      %4816 = vmatprep.subr.bf16.mxu0 0
      %4817 = vmatpush1.bf16.msra.mxu0 %v4793
      %4818 = vmatprep.subr.bf16.mxu0 0
      %4819 = vmatpush1.bf16.msra.mxu0 %v4794
      %4820 = vmatprep.subr.bf16.mxu0 0
      %4821 = vmatpush1.bf16.msra.mxu0 %v4795
      %4822 = vmatprep.subr.bf16.mxu0 0
      %4823 = vmatpush1.bf16.msra.mxu0 %v4796
      %4824 = vmatprep.subr.bf16.mxu0 0
      %4825 = vmatpush1.bf16.msra.mxu0 0
      %4826 = vmatprep.subr.bf16.mxu0 0
      %4827 = vmatpush1.bf16.msra.mxu0 0
      %4828 = vmatprep.subr.bf16.mxu0 0
      %4829 = vmatpush1.bf16.msra.mxu0 0
      %4830 = vmatprep.subr.bf16.mxu0 0
      %4831 = vmatpush1.bf16.msra.mxu0 0
      %4832 = vmatprep.subr.bf16.mxu0 0
      %4833 = vmatpush1.bf16.msra.mxu0 0
      %4834 = vmatprep.subr.bf16.mxu0 0
      %4835 = vmatpush1.bf16.msra.mxu0 0
      %4836 = vmatprep.subr.bf16.mxu0 0
      %4837 = vmatpush1.bf16.msra.mxu0 0
      %4838 = vmatprep.subr.bf16.mxu0 0
      %4839 = vmatpush1.bf16.msra.mxu0 0
      %4840 = vmatprep.subr.bf16.mxu0 0
      %4841 = vmatpush1.bf16.msra.mxu0 0
      %4842 = vmatprep.subr.bf16.mxu0 0
      %4843 = vmatpush1.bf16.msra.mxu0 0
      %4844 = vmatprep.subr.bf16.mxu0 0
      %4845 = vmatpush1.bf16.msra.mxu0 0
      %4846 = vmatprep.subr.bf16.mxu0 0
      %4847 = vmatpush1.bf16.msra.mxu0 0
      %4848 = vmatprep.mubr.bf16.mxu0 0
      %4849 = vmatmul.mubr.bf16.gmra.mrb[0].mxu0 %v4802
      %v4850 = vpop.f32.mrb[0].mxu0
      %v4851 = vadd.f32 0.0, %v4850
      %v4852 = vpop.f32.mrb[0].mxu0
      %v4853 = vpop.f32.mrb[0].mxu0
      %v4854 = vadd.f32 0.0, %v4853
      %v4855 = vpop.f32.mrb[0].mxu0
      %4856 = vmatprep.mubr.bf16.mxu0 0
      %4857 = vmatmul.mubr.bf16.gmra.mrb[0].mxu0 %v4805
      %v4858 = vpop.f32.mrb[0].mxu0
      %v4859 = vadd.f32 0.0, %v4858
      %v4860 = vpop.f32.mrb[0].mxu0
      %v4861 = vpop.f32.mrb[0].mxu0
      %v4862 = vadd.f32 0.0, %v4861
      %v4863 = vpop.f32.mrb[0].mxu0
      %4864 = vmatprep.mubr.bf16.mxu0 0
      %4865 = vmatmul.mubr.bf16.gmra.mrb[0].mxu0 %v4808
      %v4866 = vpop.f32.mrb[0].mxu0
      %v4867 = vadd.f32 0.0, %v4866
      %v4868 = vpop.f32.mrb[0].mxu0
      %v4869 = vpop.f32.mrb[0].mxu0
      %v4870 = vadd.f32 0.0, %v4869
      %v4871 = vpop.f32.mrb[0].mxu0
      %4872 = vmatprep.mubr.bf16.mxu0 0
      %4873 = vmatmul.mubr.bf16.gmra.mrb[0].mxu0 %v4811
      %v4874 = vpop.f32.mrb[0].mxu0
      %v4875 = vadd.f32 0.0, %v4874
      %v4876 = vpop.f32.mrb[0].mxu0
      %v4877 = vpop.f32.mrb[0].mxu0
      %v4878 = vadd.f32 0.0, %v4877
      %v4879 = vpop.f32.mrb[0].mxu0
      %4880 = vmatprep.mubr.bf16.mxu0 0
      %4881 = vmatmul.mubr.bf16.gmra.mrb[0].mxu0 %v4814
      %v4882 = vpop.f32.mrb[0].mxu0
      %v4883 = vadd.f32 0.0, %v4882
      %v4884 = vpop.f32.mrb[0].mxu0
      %v4885 = vpop.f32.mrb[0].mxu0
      %v4886 = vadd.f32 0.0, %v4885
      %v4887 = vpop.f32.mrb[0].mxu0
      %4888 = vdwg.mxu0
      %v4897 = vunpack.c.l.b16 %v4745
      %v4898 = vunpack.c.l.b16 %v4746
      %v4899 = vunpack.c.l.b16 %v4747
      %v4900 = vunpack.c.l.b16 %v4748
      %v4901 = vunpack.c.l.b16 %v4749
      %v4902 = vunpack.c.l.b16 %v4750
      %v4903 = vunpack.c.l.b16 %v4751
      %v4904 = vunpack.c.l.b16 %v4752
      %v4905 = vpack.c.b16 %v4898, %v4897
      %v4906 = vpack.c.b16 %v4900, %v4899
      %v4907 = vpack.c.b16 %v4902, %v4901
      %v4908 = vpack.c.b16 %v4904, %v4903
      %v4914 = vsel %vm4715, %v4740, 0
      %v4917 = vsel %vm4715, %v4741, 0
      %v4920 = vsel %vm4715, %v4742, 0
      %v4923 = vsel %vm4715, %v4743, 0
      %v4926 = vsel %vm4715, %v4744, 0
      %4928 = vmatprep.subr.bf16.mxu0 0
      %4929 = vmatpush1.bf16.msra.mxu0 %v4905
      %4930 = vmatprep.subr.bf16.mxu0 0
      %4931 = vmatpush1.bf16.msra.mxu0 %v4906
      %4932 = vmatprep.subr.bf16.mxu0 0
      %4933 = vmatpush1.bf16.msra.mxu0 %v4907
      %4934 = vmatprep.subr.bf16.mxu0 0
      %4935 = vmatpush1.bf16.msra.mxu0 %v4908
      %4936 = vmatprep.subr.bf16.mxu0 0
      %4937 = vmatpush1.bf16.msra.mxu0 0
      %4938 = vmatprep.subr.bf16.mxu0 0
      %4939 = vmatpush1.bf16.msra.mxu0 0
      %4940 = vmatprep.subr.bf16.mxu0 0
      %4941 = vmatpush1.bf16.msra.mxu0 0
      %4942 = vmatprep.subr.bf16.mxu0 0
      %4943 = vmatpush1.bf16.msra.mxu0 0
      %4944 = vmatprep.subr.bf16.mxu0 0
      %4945 = vmatpush1.bf16.msra.mxu0 0
      %4946 = vmatprep.subr.bf16.mxu0 0
      %4947 = vmatpush1.bf16.msra.mxu0 0
      %4948 = vmatprep.subr.bf16.mxu0 0
      %4949 = vmatpush1.bf16.msra.mxu0 0
      %4950 = vmatprep.subr.bf16.mxu0 0
      %4951 = vmatpush1.bf16.msra.mxu0 0
      %4952 = vmatprep.subr.bf16.mxu0 0
      %4953 = vmatpush1.bf16.msra.mxu0 0
      %4954 = vmatprep.subr.bf16.mxu0 0
      %4955 = vmatpush1.bf16.msra.mxu0 0
      %4956 = vmatprep.subr.bf16.mxu0 0
      %4957 = vmatpush1.bf16.msra.mxu0 0
      %4958 = vmatprep.subr.bf16.mxu0 0
      %4959 = vmatpush1.bf16.msra.mxu0 0
      %4960 = vmatprep.mubr.bf16.mxu0 0
      %4961 = vmatmul.mubr.bf16.gmra.mrb[0].mxu0 %v4914
      %v4962 = vpop.f32.mrb[0].mxu0
      %v4963 = vadd.f32 %v4851, %v4962
      %v4964 = vpop.f32.mrb[0].mxu0
      %v4965 = vpop.f32.mrb[0].mxu0
      %v4966 = vadd.f32 %v4854, %v4965
      %v4967 = vpop.f32.mrb[0].mxu0
      %4968 = vmatprep.mubr.bf16.mxu0 0
      %4969 = vmatmul.mubr.bf16.gmra.mrb[0].mxu0 %v4917
      %v4970 = vpop.f32.mrb[0].mxu0
      %v4971 = vadd.f32 %v4859, %v4970
      %v4972 = vpop.f32.mrb[0].mxu0
      %v4973 = vpop.f32.mrb[0].mxu0
      %v4974 = vadd.f32 %v4862, %v4973
      %v4975 = vpop.f32.mrb[0].mxu0
      %4976 = vmatprep.mubr.bf16.mxu0 0
      %4977 = vmatmul.mubr.bf16.gmra.mrb[0].mxu0 %v4920
      %v4978 = vpop.f32.mrb[0].mxu0
      %v4979 = vadd.f32 %v4867, %v4978
      %v4980 = vpop.f32.mrb[0].mxu0
      %v4981 = vpop.f32.mrb[0].mxu0
      %v4982 = vadd.f32 %v4870, %v4981
      %v4983 = vpop.f32.mrb[0].mxu0
      %4984 = vmatprep.mubr.bf16.mxu0 0
      %4985 = vmatmul.mubr.bf16.gmra.mrb[0].mxu0 %v4923
      %v4986 = vpop.f32.mrb[0].mxu0
      %v4987 = vadd.f32 %v4875, %v4986
      %v4988 = vpop.f32.mrb[0].mxu0
      %v4989 = vpop.f32.mrb[0].mxu0
      %v4990 = vadd.f32 %v4878, %v4989
      %v4991 = vpop.f32.mrb[0].mxu0
      %4992 = vmatprep.mubr.bf16.mxu0 0
      %4993 = vmatmul.mubr.bf16.gmra.mrb[0].mxu0 %v4926
      %v4994 = vpop.f32.mrb[0].mxu0
      %v4995 = vadd.f32 %v4883, %v4994
      %v4996 = vpop.f32.mrb[0].mxu0
      %v4997 = vpop.f32.mrb[0].mxu0
      %v4998 = vadd.f32 %v4886, %v4997
      %v4999 = vpop.f32.mrb[0].mxu0
      %5000 = vdwg.mxu0
      %v5001 = vld [vmem:[#allocation2 + $0x2] sm:$0xff]
      %v5002 = vld [vmem:[#allocation2 + $0xa] sm:$0xff]
      %v5003 = vld [vmem:[#allocation2 + $0x12] sm:$0xff]
      %v5004 = vld [vmem:[#allocation2 + $0x1a] sm:$0xff]
      %v5005 = vld [vmem:[#allocation2 + $0x22] sm:$0xff]
      %v5006 = vld [vmem:[#allocation2 + $0x2a] sm:$0xff]
      %v5007 = vld [vmem:[#allocation2 + $0x32] sm:$0xff]
      %v5008 = vld [vmem:[#allocation2 + $0x3a] sm:$0xff]
      %v5009 = vld [vmem:[#allocation2 + $0x42] sm:$0xff]
      %v5010 = vld [vmem:[#allocation2 + $0x4a] sm:$0x3f]
      %v5011 = vpack.c.bf16 %v5002, %v5001
      %v5012 = vpack.c.bf16 %v5004, %v5003
      %v5013 = vpack.c.bf16 %v5006, %v5005
      %v5014 = vpack.c.bf16 %v5008, %v5007
      %v5015 = vpack.c.bf16 %v5010, %v5009
      %s5016 = scalar_lea.vmem %s4, 64
      %v5017 = vld [vmem:[%s5016] sm:$0xf]
      %v5018 = vld [vmem:[%s5016 + $0x4] sm:$0xf]
      %v5019 = vld [vmem:[%s5016 + $0x8] sm:$0xf]
      %v5020 = vld [vmem:[%s5016 + $0xc] sm:$0xf]
      %v5021 = vld [vmem:[%s5016 + $0x10] sm:$0xf]
      %v5022 = vld [vmem:[%s5016 + $0x14] sm:$0xf]
      %v5023 = vld [vmem:[%s5016 + $0x18] sm:$0xf]
      %v5024 = vld [vmem:[%s5016 + $0x1c] sm:$0xf]
      %v5033 = vunpack.c.l.b16 %v5017
      %v5034 = vunpack.c.l.b16 %v5018
      %v5035 = vunpack.c.l.b16 %v5019
      %v5036 = vunpack.c.l.b16 %v5020
      %v5037 = vunpack.c.l.b16 %v5021
      %v5038 = vunpack.c.l.b16 %v5022
      %v5039 = vunpack.c.l.b16 %v5023
      %v5040 = vunpack.c.l.b16 %v5024
      %v5041 = vpack.c.b16 %v5034, %v5033
      %v5042 = vpack.c.b16 %v5036, %v5035
      %v5043 = vpack.c.b16 %v5038, %v5037
      %v5044 = vpack.c.b16 %v5040, %v5039
      %v5050 = vsel %vm4715, %v5011, 0
      %v5053 = vsel %vm4715, %v5012, 0
      %v5056 = vsel %vm4715, %v5013, 0
      %v5059 = vsel %vm4715, %v5014, 0
      %v5062 = vsel %vm4715, %v5015, 0
      %5064 = vmatprep.subr.bf16.mxu0 0
      %5065 = vmatpush1.bf16.msra.mxu0 %v5041
      %5066 = vmatprep.subr.bf16.mxu0 0
      %5067 = vmatpush1.bf16.msra.mxu0 %v5042
      %5068 = vmatprep.subr.bf16.mxu0 0
      %5069 = vmatpush1.bf16.msra.mxu0 %v5043
      %5070 = vmatprep.subr.bf16.mxu0 0
      %5071 = vmatpush1.bf16.msra.mxu0 %v5044
      %5072 = vmatprep.subr.bf16.mxu0 0
      %5073 = vmatpush1.bf16.msra.mxu0 0
      %5074 = vmatprep.subr.bf16.mxu0 0
      %5075 = vmatpush1.bf16.msra.mxu0 0
      %5076 = vmatprep.subr.bf16.mxu0 0
      %5077 = vmatpush1.bf16.msra.mxu0 0
      %5078 = vmatprep.subr.bf16.mxu0 0
      %5079 = vmatpush1.bf16.msra.mxu0 0
      %5080 = vmatprep.subr.bf16.mxu0 0
      %5081 = vmatpush1.bf16.msra.mxu0 0
      %5082 = vmatprep.subr.bf16.mxu0 0
      %5083 = vmatpush1.bf16.msra.mxu0 0
      %5084 = vmatprep.subr.bf16.mxu0 0
      %5085 = vmatpush1.bf16.msra.mxu0 0
      %5086 = vmatprep.subr.bf16.mxu0 0
      %5087 = vmatpush1.bf16.msra.mxu0 0
      %5088 = vmatprep.subr.bf16.mxu0 0
      %5089 = vmatpush1.bf16.msra.mxu0 0
      %5090 = vmatprep.subr.bf16.mxu0 0
      %5091 = vmatpush1.bf16.msra.mxu0 0
      %5092 = vmatprep.subr.bf16.mxu0 0
      %5093 = vmatpush1.bf16.msra.mxu0 0
      %5094 = vmatprep.subr.bf16.mxu0 0
      %5095 = vmatpush1.bf16.msra.mxu0 0
      %5096 = vmatprep.mubr.bf16.mxu0 0
      %5097 = vmatmul.mubr.bf16.gmra.mrb[0].mxu0 %v5050
      %v5098 = vpop.f32.mrb[0].mxu0
      %v5099 = vadd.f32 0.0, %v5098
      %v5100 = vpop.f32.mrb[0].mxu0
      %v5101 = vpop.f32.mrb[0].mxu0
      %v5102 = vadd.f32 0.0, %v5101
      %v5103 = vpop.f32.mrb[0].mxu0
      %5104 = vmatprep.mubr.bf16.mxu0 0
      %5105 = vmatmul.mubr.bf16.gmra.mrb[0].mxu0 %v5053
      %v5106 = vpop.f32.mrb[0].mxu0
      %v5107 = vadd.f32 0.0, %v5106
      %v5108 = vpop.f32.mrb[0].mxu0
      %v5109 = vpop.f32.mrb[0].mxu0
      %v5110 = vadd.f32 0.0, %v5109
      %v5111 = vpop.f32.mrb[0].mxu0
      %5112 = vmatprep.mubr.bf16.mxu0 0
      %5113 = vmatmul.mubr.bf16.gmra.mrb[0].mxu0 %v5056
      %v5114 = vpop.f32.mrb[0].mxu0
      %v5115 = vadd.f32 0.0, %v5114
      %v5116 = vpop.f32.mrb[0].mxu0
      %v5117 = vpop.f32.mrb[0].mxu0
      %v5118 = vadd.f32 0.0, %v5117
      %v5119 = vpop.f32.mrb[0].mxu0
      %5120 = vmatprep.mubr.bf16.mxu0 0
      %5121 = vmatmul.mubr.bf16.gmra.mrb[0].mxu0 %v5059
      %v5122 = vpop.f32.mrb[0].mxu0
      %v5123 = vadd.f32 0.0, %v5122
      %v5124 = vpop.f32.mrb[0].mxu0
      %v5125 = vpop.f32.mrb[0].mxu0
      %v5126 = vadd.f32 0.0, %v5125
      %v5127 = vpop.f32.mrb[0].mxu0
      %5128 = vmatprep.mubr.bf16.mxu0 0
      %5129 = vmatmul.mubr.bf16.gmra.mrb[0].mxu0 %v5062
      %v5130 = vpop.f32.mrb[0].mxu0
      %v5131 = vadd.f32 0.0, %v5130
      %v5132 = vpop.f32.mrb[0].mxu0
      %v5133 = vpop.f32.mrb[0].mxu0
      %v5134 = vadd.f32 0.0, %v5133
      %v5135 = vpop.f32.mrb[0].mxu0
      %5136 = vdwg.mxu0
      %v5137 = vadd.f32 %v4963, %v5099
      %v5138 = vadd.f32 %v4966, %v5102
      %v5139 = vadd.f32 %v4971, %v5107
      %v5140 = vadd.f32 %v4974, %v5110
      %v5141 = vadd.f32 %v4979, %v5115
      %v5142 = vadd.f32 %v4982, %v5118
      %v5143 = vadd.f32 %v4987, %v5123
      %v5144 = vadd.f32 %v4990, %v5126
      %v5145 = vadd.f32 %v4995, %v5131
      %v5146 = vadd.f32 %v4998, %v5134
      %v5147 = vld [vmem:[#allocation2 + $0xa] sm:$0xff]
      %v5148 = vld [vmem:[#allocation2 + $0x12] sm:$0xff]
      %v5149 = vld [vmem:[#allocation2 + $0x1a] sm:$0xff]
      %v5150 = vld [vmem:[#allocation2 + $0x22] sm:$0xff]
      %v5151 = vld [vmem:[#allocation2 + $0x2a] sm:$0xff]
      %v5152 = vld [vmem:[#allocation2 + $0x32] sm:$0xff]
      %v5153 = vld [vmem:[#allocation2 + $0x3a] sm:$0xff]
      %v5154 = vld [vmem:[#allocation2 + $0x42] sm:$0xff]
      %v5155 = vld [vmem:[#allocation2 + $0x4a] sm:$0xff]
      %v5156 = vld [vmem:[#allocation2 + $0x52] sm:$0x3f]
      %v5157 = vpack.c.bf16 %v5148, %v5147
      %v5158 = vpack.c.bf16 %v5150, %v5149
      %v5159 = vpack.c.bf16 %v5152, %v5151
      %v5160 = vpack.c.bf16 %v5154, %v5153
      %v5161 = vpack.c.bf16 %v5156, %v5155
      %s5162 = scalar_lea.vmem %s4, 96
      %v5163 = vld [vmem:[%s5162] sm:$0xf]
      %v5164 = vld [vmem:[%s5162 + $0x4] sm:$0xf]
      %v5165 = vld [vmem:[%s5162 + $0x8] sm:$0xf]
      %v5166 = vld [vmem:[%s5162 + $0xc] sm:$0xf]
      %v5167 = vld [vmem:[%s5162 + $0x10] sm:$0xf]
      %v5168 = vld [vmem:[%s5162 + $0x14] sm:$0xf]
      %v5169 = vld [vmem:[%s5162 + $0x18] sm:$0xf]
      %v5170 = vld [vmem:[%s5162 + $0x1c] sm:$0xf]
      %v5179 = vunpack.c.l.b16 %v5163
      %v5180 = vunpack.c.l.b16 %v5164
      %v5181 = vunpack.c.l.b16 %v5165
      %v5182 = vunpack.c.l.b16 %v5166
      %v5183 = vunpack.c.l.b16 %v5167
      %v5184 = vunpack.c.l.b16 %v5168
      %v5185 = vunpack.c.l.b16 %v5169
      %v5186 = vunpack.c.l.b16 %v5170
      %v5187 = vpack.c.b16 %v5180, %v5179
      %v5188 = vpack.c.b16 %v5182, %v5181
      %v5189 = vpack.c.b16 %v5184, %v5183
      %v5190 = vpack.c.b16 %v5186, %v5185
      %v5196 = vsel %vm4715, %v5157, 0
      %v5199 = vsel %vm4715, %v5158, 0
      %v5202 = vsel %vm4715, %v5159, 0
      %v5205 = vsel %vm4715, %v5160, 0
      %v5208 = vsel %vm4715, %v5161, 0
      %5210 = vmatprep.subr.bf16.mxu0 0
      %5211 = vmatpush1.bf16.msra.mxu0 %v5187
      %5212 = vmatprep.subr.bf16.mxu0 0
      %5213 = vmatpush1.bf16.msra.mxu0 %v5188
      %5214 = vmatprep.subr.bf16.mxu0 0
      %5215 = vmatpush1.bf16.msra.mxu0 %v5189
      %5216 = vmatprep.subr.bf16.mxu0 0
      %5217 = vmatpush1.bf16.msra.mxu0 %v5190
      %5218 = vmatprep.subr.bf16.mxu0 0
      %5219 = vmatpush1.bf16.msra.mxu0 0
      %5220 = vmatprep.subr.bf16.mxu0 0
      %5221 = vmatpush1.bf16.msra.mxu0 0
      %5222 = vmatprep.subr.bf16.mxu0 0
      %5223 = vmatpush1.bf16.msra.mxu0 0
      %5224 = vmatprep.subr.bf16.mxu0 0
      %5225 = vmatpush1.bf16.msra.mxu0 0
      %5226 = vmatprep.subr.bf16.mxu0 0
      %5227 = vmatpush1.bf16.msra.mxu0 0
      %5228 = vmatprep.subr.bf16.mxu0 0
      %5229 = vmatpush1.bf16.msra.mxu0 0
      %5230 = vmatprep.subr.bf16.mxu0 0
      %5231 = vmatpush1.bf16.msra.mxu0 0
      %5232 = vmatprep.subr.bf16.mxu0 0
      %5233 = vmatpush1.bf16.msra.mxu0 0
      %5234 = vmatprep.subr.bf16.mxu0 0
      %5235 = vmatpush1.bf16.msra.mxu0 0
      %5236 = vmatprep.subr.bf16.mxu0 0
      %5237 = vmatpush1.bf16.msra.mxu0 0
      %5238 = vmatprep.subr.bf16.mxu0 0
      %5239 = vmatpush1.bf16.msra.mxu0 0
      %5240 = vmatprep.subr.bf16.mxu0 0
      %5241 = vmatpush1.bf16.msra.mxu0 0
      %5242 = vmatprep.mubr.bf16.mxu0 0
      %5243 = vmatmul.mubr.bf16.gmra.mrb[0].mxu0 %v5196
      %v5244 = vpop.f32.mrb[0].mxu0
      %v5245 = vadd.f32 0.0, %v5244
      %v5246 = vpop.f32.mrb[0].mxu0
      %v5247 = vpop.f32.mrb[0].mxu0
      %v5248 = vadd.f32 0.0, %v5247
      %v5249 = vpop.f32.mrb[0].mxu0
      %5250 = vmatprep.mubr.bf16.mxu0 0
      %5251 = vmatmul.mubr.bf16.gmra.mrb[0].mxu0 %v5199
      %v5252 = vpop.f32.mrb[0].mxu0
      %v5253 = vadd.f32 0.0, %v5252
      %v5254 = vpop.f32.mrb[0].mxu0
      %v5255 = vpop.f32.mrb[0].mxu0
      %v5256 = vadd.f32 0.0, %v5255
      %v5257 = vpop.f32.mrb[0].mxu0
      %5258 = vmatprep.mubr.bf16.mxu0 0
      %5259 = vmatmul.mubr.bf16.gmra.mrb[0].mxu0 %v5202
      %v5260 = vpop.f32.mrb[0].mxu0
      %v5261 = vadd.f32 0.0, %v5260
      %v5262 = vpop.f32.mrb[0].mxu0
      %v5263 = vpop.f32.mrb[0].mxu0
      %v5264 = vadd.f32 0.0, %v5263
      %v5265 = vpop.f32.mrb[0].mxu0
      %5266 = vmatprep.mubr.bf16.mxu0 0
      %5267 = vmatmul.mubr.bf16.gmra.mrb[0].mxu0 %v5205
      %v5268 = vpop.f32.mrb[0].mxu0
      %v5269 = vadd.f32 0.0, %v5268
      %v5270 = vpop.f32.mrb[0].mxu0
      %v5271 = vpop.f32.mrb[0].mxu0
      %v5272 = vadd.f32 0.0, %v5271
      %v5273 = vpop.f32.mrb[0].mxu0
      %5274 = vmatprep.mubr.bf16.mxu0 0
      %5275 = vmatmul.mubr.bf16.gmra.mrb[0].mxu0 %v5208
      %v5276 = vpop.f32.mrb[0].mxu0
      %v5277 = vadd.f32 0.0, %v5276
      %v5278 = vpop.f32.mrb[0].mxu0
      %v5279 = vpop.f32.mrb[0].mxu0
      %v5280 = vadd.f32 0.0, %v5279
      %v5281 = vpop.f32.mrb[0].mxu0
      %5282 = vdwg.mxu0
      %v5283 = vadd.f32 %v5137, %v5245
      %v5284 = vadd.f32 %v5138, %v5248
      %v5285 = vadd.f32 %v5139, %v5253
      %v5286 = vadd.f32 %v5140, %v5256
      %v5287 = vadd.f32 %v5141, %v5261
      %v5288 = vadd.f32 %v5142, %v5264
      %v5289 = vadd.f32 %v5143, %v5269
      %v5290 = vadd.f32 %v5144, %v5272
      %v5291 = vadd.f32 %v5145, %v5277
      %v5292 = vadd.f32 %v5146, %v5280
      %v5293 = vld [vmem:[#allocation2 + $0xb] sm:$0xff]
      %v5294 = vld [vmem:[#allocation2 + $0x13] sm:$0xff]
      %v5295 = vld [vmem:[#allocation2 + $0x1b] sm:$0xff]
      %v5296 = vld [vmem:[#allocation2 + $0x23] sm:$0xff]
      %v5297 = vld [vmem:[#allocation2 + $0x2b] sm:$0xff]
      %v5298 = vld [vmem:[#allocation2 + $0x33] sm:$0xff]
      %v5299 = vld [vmem:[#allocation2 + $0x3b] sm:$0xff]
      %v5300 = vld [vmem:[#allocation2 + $0x43] sm:$0xff]
      %v5301 = vld [vmem:[#allocation2 + $0x4b] sm:$0xff]
      %v5302 = vld [vmem:[#allocation2 + $0x53] sm:$0x3f]
      %v5303 = vpack.c.bf16 %v5294, %v5293
      %v5304 = vpack.c.bf16 %v5296, %v5295
      %v5305 = vpack.c.bf16 %v5298, %v5297
      %v5306 = vpack.c.bf16 %v5300, %v5299
      %v5307 = vpack.c.bf16 %v5302, %v5301
      %s5308 = scalar_lea.vmem %s4, 128
      %v5309 = vld [vmem:[%s5308] sm:$0xf]
      %v5310 = vld [vmem:[%s5308 + $0x4] sm:$0xf]
      %v5311 = vld [vmem:[%s5308 + $0x8] sm:$0xf]
      %v5312 = vld [vmem:[%s5308 + $0xc] sm:$0xf]
      %v5313 = vld [vmem:[%s5308 + $0x10] sm:$0xf]
      %v5314 = vld [vmem:[%s5308 + $0x14] sm:$0xf]
      %v5315 = vld [vmem:[%s5308 + $0x18] sm:$0xf]
      %v5316 = vld [vmem:[%s5308 + $0x1c] sm:$0xf]
      %v5325 = vunpack.c.l.b16 %v5309
      %v5326 = vunpack.c.l.b16 %v5310
      %v5327 = vunpack.c.l.b16 %v5311
      %v5328 = vunpack.c.l.b16 %v5312
      %v5329 = vunpack.c.l.b16 %v5313
      %v5330 = vunpack.c.l.b16 %v5314
      %v5331 = vunpack.c.l.b16 %v5315
      %v5332 = vunpack.c.l.b16 %v5316
      %v5333 = vpack.c.b16 %v5326, %v5325
      %v5334 = vpack.c.b16 %v5328, %v5327
      %v5335 = vpack.c.b16 %v5330, %v5329
      %v5336 = vpack.c.b16 %v5332, %v5331
      %v5342 = vsel %vm4715, %v5303, 0
      %v5345 = vsel %vm4715, %v5304, 0
      %v5348 = vsel %vm4715, %v5305, 0
      %v5351 = vsel %vm4715, %v5306, 0
      %v5354 = vsel %vm4715, %v5307, 0
      %5356 = vmatprep.subr.bf16.mxu0 0
      %5357 = vmatpush1.bf16.msra.mxu0 %v5333
      %5358 = vmatprep.subr.bf16.mxu0 0
      %5359 = vmatpush1.bf16.msra.mxu0 %v5334
      %5360 = vmatprep.subr.bf16.mxu0 0
      %5361 = vmatpush1.bf16.msra.mxu0 %v5335
      %5362 = vmatprep.subr.bf16.mxu0 0
      %5363 = vmatpush1.bf16.msra.mxu0 %v5336
      %5364 = vmatprep.subr.bf16.mxu0 0
      %5365 = vmatpush1.bf16.msra.mxu0 0
      %5366 = vmatprep.subr.bf16.mxu0 0
      %5367 = vmatpush1.bf16.msra.mxu0 0
      %5368 = vmatprep.subr.bf16.mxu0 0
      %5369 = vmatpush1.bf16.msra.mxu0 0
      %5370 = vmatprep.subr.bf16.mxu0 0
      %5371 = vmatpush1.bf16.msra.mxu0 0
      %5372 = vmatprep.subr.bf16.mxu0 0
      %5373 = vmatpush1.bf16.msra.mxu0 0
      %5374 = vmatprep.subr.bf16.mxu0 0
      %5375 = vmatpush1.bf16.msra.mxu0 0
      %5376 = vmatprep.subr.bf16.mxu0 0
      %5377 = vmatpush1.bf16.msra.mxu0 0
      %5378 = vmatprep.subr.bf16.mxu0 0
      %5379 = vmatpush1.bf16.msra.mxu0 0
      %5380 = vmatprep.subr.bf16.mxu0 0
      %5381 = vmatpush1.bf16.msra.mxu0 0
      %5382 = vmatprep.subr.bf16.mxu0 0
      %5383 = vmatpush1.bf16.msra.mxu0 0
      %5384 = vmatprep.subr.bf16.mxu0 0
      %5385 = vmatpush1.bf16.msra.mxu0 0
      %5386 = vmatprep.subr.bf16.mxu0 0
      %5387 = vmatpush1.bf16.msra.mxu0 0
      %5388 = vmatprep.mubr.bf16.mxu0 0
      %5389 = vmatmul.mubr.bf16.gmra.mrb[0].mxu0 %v5342
      %v5390 = vpop.f32.mrb[0].mxu0
      %v5391 = vadd.f32 0.0, %v5390
      %v5392 = vpop.f32.mrb[0].mxu0
      %v5393 = vpop.f32.mrb[0].mxu0
      %v5394 = vadd.f32 0.0, %v5393
      %v5395 = vpop.f32.mrb[0].mxu0
      %5396 = vmatprep.mubr.bf16.mxu0 0
      %5397 = vmatmul.mubr.bf16.gmra.mrb[0].mxu0 %v5345
      %v5398 = vpop.f32.mrb[0].mxu0
      %v5399 = vadd.f32 0.0, %v5398
      %v5400 = vpop.f32.mrb[0].mxu0
      %v5401 = vpop.f32.mrb[0].mxu0
      %v5402 = vadd.f32 0.0, %v5401
      %v5403 = vpop.f32.mrb[0].mxu0
      %5404 = vmatprep.mubr.bf16.mxu0 0
      %5405 = vmatmul.mubr.bf16.gmra.mrb[0].mxu0 %v5348
      %v5406 = vpop.f32.mrb[0].mxu0
      %v5407 = vadd.f32 0.0, %v5406
      %v5408 = vpop.f32.mrb[0].mxu0
      %v5409 = vpop.f32.mrb[0].mxu0
      %v5410 = vadd.f32 0.0, %v5409
      %v5411 = vpop.f32.mrb[0].mxu0
      %5412 = vmatprep.mubr.bf16.mxu0 0
      %5413 = vmatmul.mubr.bf16.gmra.mrb[0].mxu0 %v5351
      %v5414 = vpop.f32.mrb[0].mxu0
      %v5415 = vadd.f32 0.0, %v5414
      %v5416 = vpop.f32.mrb[0].mxu0
      %v5417 = vpop.f32.mrb[0].mxu0
      %v5418 = vadd.f32 0.0, %v5417
      %v5419 = vpop.f32.mrb[0].mxu0
      %5420 = vmatprep.mubr.bf16.mxu0 0
      %5421 = vmatmul.mubr.bf16.gmra.mrb[0].mxu0 %v5354
      %v5422 = vpop.f32.mrb[0].mxu0
      %v5423 = vadd.f32 0.0, %v5422
      %v5424 = vpop.f32.mrb[0].mxu0
      %v5425 = vpop.f32.mrb[0].mxu0
      %v5426 = vadd.f32 0.0, %v5425
      %v5427 = vpop.f32.mrb[0].mxu0
      %5428 = vdwg.mxu0
      %v5429 = vadd.f32 %v5283, %v5391
      %v5430 = vadd.f32 %v5284, %v5394
      %v5431 = vadd.f32 %v5285, %v5399
      %v5432 = vadd.f32 %v5286, %v5402
      %v5433 = vadd.f32 %v5287, %v5407
      %v5434 = vadd.f32 %v5288, %v5410
      %v5435 = vadd.f32 %v5289, %v5415
      %v5436 = vadd.f32 %v5290, %v5418
      %v5437 = vadd.f32 %v5291, %v5423
      %v5438 = vadd.f32 %v5292, %v5426
      %v5439 = vld [vmem:[#allocation2 + $0xc] sm:$0xff]
      %v5440 = vld [vmem:[#allocation2 + $0x14] sm:$0xff]
      %v5441 = vld [vmem:[#allocation2 + $0x1c] sm:$0xff]
      %v5442 = vld [vmem:[#allocation2 + $0x24] sm:$0xff]
      %v5443 = vld [vmem:[#allocation2 + $0x2c] sm:$0xff]
      %v5444 = vld [vmem:[#allocation2 + $0x34] sm:$0xff]
      %v5445 = vld [vmem:[#allocation2 + $0x3c] sm:$0xff]
      %v5446 = vld [vmem:[#allocation2 + $0x44] sm:$0xff]
      %v5447 = vld [vmem:[#allocation2 + $0x4c] sm:$0xff]
      %v5448 = vld [vmem:[#allocation2 + $0x54] sm:$0x3f]
      %v5449 = vpack.c.bf16 %v5440, %v5439
      %v5450 = vpack.c.bf16 %v5442, %v5441
      %v5451 = vpack.c.bf16 %v5444, %v5443
      %v5452 = vpack.c.bf16 %v5446, %v5445
      %v5453 = vpack.c.bf16 %v5448, %v5447
      %s5454 = scalar_lea.vmem %s4, 160
      %v5455 = vld [vmem:[%s5454] sm:$0xf]
      %v5456 = vld [vmem:[%s5454 + $0x4] sm:$0xf]
      %v5457 = vld [vmem:[%s5454 + $0x8] sm:$0xf]
      %v5458 = vld [vmem:[%s5454 + $0xc] sm:$0xf]
      %v5459 = vld [vmem:[%s5454 + $0x10] sm:$0xf]
      %v5460 = vld [vmem:[%s5454 + $0x14] sm:$0xf]
      %v5461 = vld [vmem:[%s5454 + $0x18] sm:$0xf]
      %v5462 = vld [vmem:[%s5454 + $0x1c] sm:$0xf]
      %v5471 = vunpack.c.l.b16 %v5455
      %v5472 = vunpack.c.l.b16 %v5456
      %v5473 = vunpack.c.l.b16 %v5457
      %v5474 = vunpack.c.l.b16 %v5458
      %v5475 = vunpack.c.l.b16 %v5459
      %v5476 = vunpack.c.l.b16 %v5460
      %v5477 = vunpack.c.l.b16 %v5461
      %v5478 = vunpack.c.l.b16 %v5462
      %v5479 = vpack.c.b16 %v5472, %v5471
      %v5480 = vpack.c.b16 %v5474, %v5473
      %v5481 = vpack.c.b16 %v5476, %v5475
      %v5482 = vpack.c.b16 %v5478, %v5477
      %v5488 = vsel %vm4715, %v5449, 0
      %v5491 = vsel %vm4715, %v5450, 0
      %v5494 = vsel %vm4715, %v5451, 0
      %v5497 = vsel %vm4715, %v5452, 0
      %v5500 = vsel %vm4715, %v5453, 0
      %5502 = vmatprep.subr.bf16.mxu0 0
      %5503 = vmatpush1.bf16.msra.mxu0 %v5479
      %5504 = vmatprep.subr.bf16.mxu0 0
      %5505 = vmatpush1.bf16.msra.mxu0 %v5480
      %5506 = vmatprep.subr.bf16.mxu0 0
      %5507 = vmatpush1.bf16.msra.mxu0 %v5481
      %5508 = vmatprep.subr.bf16.mxu0 0
      %5509 = vmatpush1.bf16.msra.mxu0 %v5482
      %5510 = vmatprep.subr.bf16.mxu0 0
      %5511 = vmatpush1.bf16.msra.mxu0 0
      %5512 = vmatprep.subr.bf16.mxu0 0
      %5513 = vmatpush1.bf16.msra.mxu0 0
      %5514 = vmatprep.subr.bf16.mxu0 0
      %5515 = vmatpush1.bf16.msra.mxu0 0
      %5516 = vmatprep.subr.bf16.mxu0 0
      %5517 = vmatpush1.bf16.msra.mxu0 0
      %5518 = vmatprep.subr.bf16.mxu0 0
      %5519 = vmatpush1.bf16.msra.mxu0 0
      %5520 = vmatprep.subr.bf16.mxu0 0
      %5521 = vmatpush1.bf16.msra.mxu0 0
      %5522 = vmatprep.subr.bf16.mxu0 0
      %5523 = vmatpush1.bf16.msra.mxu0 0
      %5524 = vmatprep.subr.bf16.mxu0 0
      %5525 = vmatpush1.bf16.msra.mxu0 0
      %5526 = vmatprep.subr.bf16.mxu0 0
      %5527 = vmatpush1.bf16.msra.mxu0 0
      %5528 = vmatprep.subr.bf16.mxu0 0
      %5529 = vmatpush1.bf16.msra.mxu0 0
      %5530 = vmatprep.subr.bf16.mxu0 0
      %5531 = vmatpush1.bf16.msra.mxu0 0
      %5532 = vmatprep.subr.bf16.mxu0 0
      %5533 = vmatpush1.bf16.msra.mxu0 0
      %5534 = vmatprep.mubr.bf16.mxu0 0
      %5535 = vmatmul.mubr.bf16.gmra.mrb[0].mxu0 %v5488
      %v5536 = vpop.f32.mrb[0].mxu0
      %v5537 = vadd.f32 0.0, %v5536
      %v5538 = vpop.f32.mrb[0].mxu0
      %v5539 = vpop.f32.mrb[0].mxu0
      %v5540 = vadd.f32 0.0, %v5539
      %v5541 = vpop.f32.mrb[0].mxu0
      %5542 = vmatprep.mubr.bf16.mxu0 0
      %5543 = vmatmul.mubr.bf16.gmra.mrb[0].mxu0 %v5491
      %v5544 = vpop.f32.mrb[0].mxu0
      %v5545 = vadd.f32 0.0, %v5544
      %v5546 = vpop.f32.mrb[0].mxu0
      %v5547 = vpop.f32.mrb[0].mxu0
      %v5548 = vadd.f32 0.0, %v5547
      %v5549 = vpop.f32.mrb[0].mxu0
      %5550 = vmatprep.mubr.bf16.mxu0 0
      %5551 = vmatmul.mubr.bf16.gmra.mrb[0].mxu0 %v5494
      %v5552 = vpop.f32.mrb[0].mxu0
      %v5553 = vadd.f32 0.0, %v5552
      %v5554 = vpop.f32.mrb[0].mxu0
      %v5555 = vpop.f32.mrb[0].mxu0
      %v5556 = vadd.f32 0.0, %v5555
      %v5557 = vpop.f32.mrb[0].mxu0
      %5558 = vmatprep.mubr.bf16.mxu0 0
      %5559 = vmatmul.mubr.bf16.gmra.mrb[0].mxu0 %v5497
      %v5560 = vpop.f32.mrb[0].mxu0
      %v5561 = vadd.f32 0.0, %v5560
      %v5562 = vpop.f32.mrb[0].mxu0
      %v5563 = vpop.f32.mrb[0].mxu0
      %v5564 = vadd.f32 0.0, %v5563
      %v5565 = vpop.f32.mrb[0].mxu0
      %5566 = vmatprep.mubr.bf16.mxu0 0
      %5567 = vmatmul.mubr.bf16.gmra.mrb[0].mxu0 %v5500
      %v5568 = vpop.f32.mrb[0].mxu0
      %v5569 = vadd.f32 0.0, %v5568
      %v5570 = vpop.f32.mrb[0].mxu0
      %v5571 = vpop.f32.mrb[0].mxu0
      %v5572 = vadd.f32 0.0, %v5571
      %v5573 = vpop.f32.mrb[0].mxu0
      %5574 = vdwg.mxu0
      %v5575 = vadd.f32 %v5429, %v5537
      %v5576 = vadd.f32 %v5430, %v5540
      %v5577 = vadd.f32 %v5431, %v5545
      %v5578 = vadd.f32 %v5432, %v5548
      %v5579 = vadd.f32 %v5433, %v5553
      %v5580 = vadd.f32 %v5434, %v5556
      %v5581 = vadd.f32 %v5435, %v5561
      %v5582 = vadd.f32 %v5436, %v5564
      %v5583 = vadd.f32 %v5437, %v5569
      %v5584 = vadd.f32 %v5438, %v5572
      %v5585 = vld [vmem:[#allocation2 + $0x14] sm:$0xff]
      %v5586 = vld [vmem:[#allocation2 + $0x1c] sm:$0xff]
      %v5587 = vld [vmem:[#allocation2 + $0x24] sm:$0xff]
      %v5588 = vld [vmem:[#allocation2 + $0x2c] sm:$0xff]
      %v5589 = vld [vmem:[#allocation2 + $0x34] sm:$0xff]
      %v5590 = vld [vmem:[#allocation2 + $0x3c] sm:$0xff]
      %v5591 = vld [vmem:[#allocation2 + $0x44] sm:$0xff]
      %v5592 = vld [vmem:[#allocation2 + $0x4c] sm:$0xff]
      %v5593 = vld [vmem:[#allocation2 + $0x54] sm:$0xff]
      %v5594 = vld [vmem:[#allocation2 + $0x5c] sm:$0x3f]
      %v5595 = vpack.c.bf16 %v5586, %v5585
      %v5596 = vpack.c.bf16 %v5588, %v5587
      %v5597 = vpack.c.bf16 %v5590, %v5589
      %v5598 = vpack.c.bf16 %v5592, %v5591
      %v5599 = vpack.c.bf16 %v5594, %v5593
      %s5600 = scalar_lea.vmem %s4, 192
      %v5601 = vld [vmem:[%s5600] sm:$0xf]
      %v5602 = vld [vmem:[%s5600 + $0x4] sm:$0xf]
      %v5603 = vld [vmem:[%s5600 + $0x8] sm:$0xf]
      %v5604 = vld [vmem:[%s5600 + $0xc] sm:$0xf]
      %v5605 = vld [vmem:[%s5600 + $0x10] sm:$0xf]
      %v5606 = vld [vmem:[%s5600 + $0x14] sm:$0xf]
      %v5607 = vld [vmem:[%s5600 + $0x18] sm:$0xf]
      %v5608 = vld [vmem:[%s5600 + $0x1c] sm:$0xf]
      %v5617 = vunpack.c.l.b16 %v5601
      %v5618 = vunpack.c.l.b16 %v5602
      %v5619 = vunpack.c.l.b16 %v5603
      %v5620 = vunpack.c.l.b16 %v5604
      %v5621 = vunpack.c.l.b16 %v5605
      %v5622 = vunpack.c.l.b16 %v5606
      %v5623 = vunpack.c.l.b16 %v5607
      %v5624 = vunpack.c.l.b16 %v5608
      %v5625 = vpack.c.b16 %v5618, %v5617
      %v5626 = vpack.c.b16 %v5620, %v5619
      %v5627 = vpack.c.b16 %v5622, %v5621
      %v5628 = vpack.c.b16 %v5624, %v5623
      %v5634 = vsel %vm4715, %v5595, 0
      %v5637 = vsel %vm4715, %v5596, 0
      %v5640 = vsel %vm4715, %v5597, 0
      %v5643 = vsel %vm4715, %v5598, 0
      %v5646 = vsel %vm4715, %v5599, 0
      %5648 = vmatprep.subr.bf16.mxu0 0
      %5649 = vmatpush1.bf16.msra.mxu0 %v5625
      %5650 = vmatprep.subr.bf16.mxu0 0
      %5651 = vmatpush1.bf16.msra.mxu0 %v5626
      %5652 = vmatprep.subr.bf16.mxu0 0
      %5653 = vmatpush1.bf16.msra.mxu0 %v5627
      %5654 = vmatprep.subr.bf16.mxu0 0
      %5655 = vmatpush1.bf16.msra.mxu0 %v5628
      %5656 = vmatprep.subr.bf16.mxu0 0
      %5657 = vmatpush1.bf16.msra.mxu0 0
      %5658 = vmatprep.subr.bf16.mxu0 0
      %5659 = vmatpush1.bf16.msra.mxu0 0
      %5660 = vmatprep.subr.bf16.mxu0 0
      %5661 = vmatpush1.bf16.msra.mxu0 0
      %5662 = vmatprep.subr.bf16.mxu0 0
      %5663 = vmatpush1.bf16.msra.mxu0 0
      %5664 = vmatprep.subr.bf16.mxu0 0
      %5665 = vmatpush1.bf16.msra.mxu0 0
      %5666 = vmatprep.subr.bf16.mxu0 0
      %5667 = vmatpush1.bf16.msra.mxu0 0
      %5668 = vmatprep.subr.bf16.mxu0 0
      %5669 = vmatpush1.bf16.msra.mxu0 0
      %5670 = vmatprep.subr.bf16.mxu0 0
      %5671 = vmatpush1.bf16.msra.mxu0 0
      %5672 = vmatprep.subr.bf16.mxu0 0
      %5673 = vmatpush1.bf16.msra.mxu0 0
      %5674 = vmatprep.subr.bf16.mxu0 0
      %5675 = vmatpush1.bf16.msra.mxu0 0
      %5676 = vmatprep.subr.bf16.mxu0 0
      %5677 = vmatpush1.bf16.msra.mxu0 0
      %5678 = vmatprep.subr.bf16.mxu0 0
      %5679 = vmatpush1.bf16.msra.mxu0 0
      %5680 = vmatprep.mubr.bf16.mxu0 0
      %5681 = vmatmul.mubr.bf16.gmra.mrb[0].mxu0 %v5634
      %v5682 = vpop.f32.mrb[0].mxu0
      %v5683 = vadd.f32 0.0, %v5682
      %v5684 = vpop.f32.mrb[0].mxu0
      %v5685 = vpop.f32.mrb[0].mxu0
      %v5686 = vadd.f32 0.0, %v5685
      %v5687 = vpop.f32.mrb[0].mxu0
      %5688 = vmatprep.mubr.bf16.mxu0 0
      %5689 = vmatmul.mubr.bf16.gmra.mrb[0].mxu0 %v5637
      %v5690 = vpop.f32.mrb[0].mxu0
      %v5691 = vadd.f32 0.0, %v5690
      %v5692 = vpop.f32.mrb[0].mxu0
      %v5693 = vpop.f32.mrb[0].mxu0
      %v5694 = vadd.f32 0.0, %v5693
      %v5695 = vpop.f32.mrb[0].mxu0
      %5696 = vmatprep.mubr.bf16.mxu0 0
      %5697 = vmatmul.mubr.bf16.gmra.mrb[0].mxu0 %v5640
      %v5698 = vpop.f32.mrb[0].mxu0
      %v5699 = vadd.f32 0.0, %v5698
      %v5700 = vpop.f32.mrb[0].mxu0
      %v5701 = vpop.f32.mrb[0].mxu0
      %v5702 = vadd.f32 0.0, %v5701
      %v5703 = vpop.f32.mrb[0].mxu0
      %5704 = vmatprep.mubr.bf16.mxu0 0
      %5705 = vmatmul.mubr.bf16.gmra.mrb[0].mxu0 %v5643
      %v5706 = vpop.f32.mrb[0].mxu0
      %v5707 = vadd.f32 0.0, %v5706
      %v5708 = vpop.f32.mrb[0].mxu0
      %v5709 = vpop.f32.mrb[0].mxu0
      %v5710 = vadd.f32 0.0, %v5709
      %v5711 = vpop.f32.mrb[0].mxu0
      %5712 = vmatprep.mubr.bf16.mxu0 0
      %5713 = vmatmul.mubr.bf16.gmra.mrb[0].mxu0 %v5646
      %v5714 = vpop.f32.mrb[0].mxu0
      %v5715 = vadd.f32 0.0, %v5714
      %v5716 = vpop.f32.mrb[0].mxu0
      %v5717 = vpop.f32.mrb[0].mxu0
      %v5718 = vadd.f32 0.0, %v5717
      %v5719 = vpop.f32.mrb[0].mxu0
      %5720 = vdwg.mxu0
      %v5721 = vadd.f32 %v5575, %v5683
      %v5722 = vadd.f32 %v5576, %v5686
      %v5723 = vadd.f32 %v5577, %v5691
      %v5724 = vadd.f32 %v5578, %v5694
      %v5725 = vadd.f32 %v5579, %v5699
      %v5726 = vadd.f32 %v5580, %v5702
      %v5727 = vadd.f32 %v5581, %v5707
      %v5728 = vadd.f32 %v5582, %v5710
      %v5729 = vadd.f32 %v5583, %v5715
      %v5730 = vadd.f32 %v5584, %v5718
      %v5731 = vld [vmem:[#allocation2 + $0x15] sm:$0xff]
      %v5732 = vld [vmem:[#allocation2 + $0x1d] sm:$0xff]
      %v5733 = vld [vmem:[#allocation2 + $0x25] sm:$0xff]
      %v5734 = vld [vmem:[#allocation2 + $0x2d] sm:$0xff]
      %v5735 = vld [vmem:[#allocation2 + $0x35] sm:$0xff]
      %v5736 = vld [vmem:[#allocation2 + $0x3d] sm:$0xff]
      %v5737 = vld [vmem:[#allocation2 + $0x45] sm:$0xff]
      %v5738 = vld [vmem:[#allocation2 + $0x4d] sm:$0xff]
      %v5739 = vld [vmem:[#allocation2 + $0x55] sm:$0xff]
      %v5740 = vld [vmem:[#allocation2 + $0x5d] sm:$0x3f]
      %v5741 = vpack.c.bf16 %v5732, %v5731
      %v5742 = vpack.c.bf16 %v5734, %v5733
      %v5743 = vpack.c.bf16 %v5736, %v5735
      %v5744 = vpack.c.bf16 %v5738, %v5737
      %v5745 = vpack.c.bf16 %v5740, %v5739
      %s5746 = scalar_lea.vmem %s4, 224
      %v5747 = vld [vmem:[%s5746] sm:$0xf]
      %v5748 = vld [vmem:[%s5746 + $0x4] sm:$0xf]
      %v5749 = vld [vmem:[%s5746 + $0x8] sm:$0xf]
      %v5750 = vld [vmem:[%s5746 + $0xc] sm:$0xf]
      %v5751 = vld [vmem:[%s5746 + $0x10] sm:$0xf]
      %v5752 = vld [vmem:[%s5746 + $0x14] sm:$0xf]
      %v5753 = vld [vmem:[%s5746 + $0x18] sm:$0xf]
      %v5754 = vld [vmem:[%s5746 + $0x1c] sm:$0xf]
      %v5763 = vunpack.c.l.b16 %v5747
      %v5764 = vunpack.c.l.b16 %v5748
      %v5765 = vunpack.c.l.b16 %v5749
      %v5766 = vunpack.c.l.b16 %v5750
      %v5767 = vunpack.c.l.b16 %v5751
      %v5768 = vunpack.c.l.b16 %v5752
      %v5769 = vunpack.c.l.b16 %v5753
      %v5770 = vunpack.c.l.b16 %v5754
      %v5771 = vpack.c.b16 %v5764, %v5763
      %v5772 = vpack.c.b16 %v5766, %v5765
      %v5773 = vpack.c.b16 %v5768, %v5767
      %v5774 = vpack.c.b16 %v5770, %v5769
      %v5780 = vsel %vm4715, %v5741, 0
      %v5783 = vsel %vm4715, %v5742, 0
      %v5786 = vsel %vm4715, %v5743, 0
      %v5789 = vsel %vm4715, %v5744, 0
      %v5792 = vsel %vm4715, %v5745, 0
      %5794 = vmatprep.subr.bf16.mxu0 0
      %5795 = vmatpush1.bf16.msra.mxu0 %v5771
      %5796 = vmatprep.subr.bf16.mxu0 0
      %5797 = vmatpush1.bf16.msra.mxu0 %v5772
      %5798 = vmatprep.subr.bf16.mxu0 0
      %5799 = vmatpush1.bf16.msra.mxu0 %v5773
      %5800 = vmatprep.subr.bf16.mxu0 0
      %5801 = vmatpush1.bf16.msra.mxu0 %v5774
      %5802 = vmatprep.subr.bf16.mxu0 0
      %5803 = vmatpush1.bf16.msra.mxu0 0
      %5804 = vmatprep.subr.bf16.mxu0 0
      %5805 = vmatpush1.bf16.msra.mxu0 0
      %5806 = vmatprep.subr.bf16.mxu0 0
      %5807 = vmatpush1.bf16.msra.mxu0 0
      %5808 = vmatprep.subr.bf16.mxu0 0
      %5809 = vmatpush1.bf16.msra.mxu0 0
      %5810 = vmatprep.subr.bf16.mxu0 0
      %5811 = vmatpush1.bf16.msra.mxu0 0
      %5812 = vmatprep.subr.bf16.mxu0 0
      %5813 = vmatpush1.bf16.msra.mxu0 0
      %5814 = vmatprep.subr.bf16.mxu0 0
      %5815 = vmatpush1.bf16.msra.mxu0 0
      %5816 = vmatprep.subr.bf16.mxu0 0
      %5817 = vmatpush1.bf16.msra.mxu0 0
      %5818 = vmatprep.subr.bf16.mxu0 0
      %5819 = vmatpush1.bf16.msra.mxu0 0
      %5820 = vmatprep.subr.bf16.mxu0 0
      %5821 = vmatpush1.bf16.msra.mxu0 0
      %5822 = vmatprep.subr.bf16.mxu0 0
      %5823 = vmatpush1.bf16.msra.mxu0 0
      %5824 = vmatprep.subr.bf16.mxu0 0
      %5825 = vmatpush1.bf16.msra.mxu0 0
      %5826 = vmatprep.mubr.bf16.mxu0 0
      %5827 = vmatmul.mubr.bf16.gmra.mrb[0].mxu0 %v5780
      %v5828 = vpop.f32.mrb[0].mxu0
      %v5829 = vadd.f32 0.0, %v5828
      %v5830 = vpop.f32.mrb[0].mxu0
      %v5831 = vpop.f32.mrb[0].mxu0
      %v5832 = vadd.f32 0.0, %v5831
      %v5833 = vpop.f32.mrb[0].mxu0
      %5834 = vmatprep.mubr.bf16.mxu0 0
      %5835 = vmatmul.mubr.bf16.gmra.mrb[0].mxu0 %v5783
      %v5836 = vpop.f32.mrb[0].mxu0
      %v5837 = vadd.f32 0.0, %v5836
      %v5838 = vpop.f32.mrb[0].mxu0
      %v5839 = vpop.f32.mrb[0].mxu0
      %v5840 = vadd.f32 0.0, %v5839
      %v5841 = vpop.f32.mrb[0].mxu0
      %5842 = vmatprep.mubr.bf16.mxu0 0
      %5843 = vmatmul.mubr.bf16.gmra.mrb[0].mxu0 %v5786
      %v5844 = vpop.f32.mrb[0].mxu0
      %v5845 = vadd.f32 0.0, %v5844
      %v5846 = vpop.f32.mrb[0].mxu0
      %v5847 = vpop.f32.mrb[0].mxu0
      %v5848 = vadd.f32 0.0, %v5847
      %v5849 = vpop.f32.mrb[0].mxu0
      %5850 = vmatprep.mubr.bf16.mxu0 0
      %5851 = vmatmul.mubr.bf16.gmra.mrb[0].mxu0 %v5789
      %v5852 = vpop.f32.mrb[0].mxu0
      %v5853 = vadd.f32 0.0, %v5852
      %v5854 = vpop.f32.mrb[0].mxu0
      %v5855 = vpop.f32.mrb[0].mxu0
      %v5856 = vadd.f32 0.0, %v5855
      %v5857 = vpop.f32.mrb[0].mxu0
      %5858 = vmatprep.mubr.bf16.mxu0 0
      %5859 = vmatmul.mubr.bf16.gmra.mrb[0].mxu0 %v5792
      %v5860 = vpop.f32.mrb[0].mxu0
      %v5861 = vadd.f32 0.0, %v5860
      %v5862 = vpop.f32.mrb[0].mxu0
      %v5863 = vpop.f32.mrb[0].mxu0
      %v5864 = vadd.f32 0.0, %v5863
      %v5865 = vpop.f32.mrb[0].mxu0
      %5866 = vdwg.mxu0
      %v5867 = vadd.f32 %v5721, %v5829
      %v5868 = vadd.f32 %v5722, %v5832
      %v5869 = vadd.f32 %v5723, %v5837
      %v5870 = vadd.f32 %v5724, %v5840
      %v5871 = vadd.f32 %v5725, %v5845
      %v5872 = vadd.f32 %v5726, %v5848
      %v5873 = vadd.f32 %v5727, %v5853
      %v5874 = vadd.f32 %v5728, %v5856
      %v5875 = vadd.f32 %v5729, %v5861
      %v5876 = vadd.f32 %v5730, %v5864
      %v5877 = vld [vmem:[#allocation2 + $0x16] sm:$0xff]
      %v5878 = vld [vmem:[#allocation2 + $0x1e] sm:$0xff]
      %v5879 = vld [vmem:[#allocation2 + $0x26] sm:$0xff]
      %v5880 = vld [vmem:[#allocation2 + $0x2e] sm:$0xff]
      %v5881 = vld [vmem:[#allocation2 + $0x36] sm:$0xff]
      %v5882 = vld [vmem:[#allocation2 + $0x3e] sm:$0xff]
      %v5883 = vld [vmem:[#allocation2 + $0x46] sm:$0xff]
      %v5884 = vld [vmem:[#allocation2 + $0x4e] sm:$0xff]
      %v5885 = vld [vmem:[#allocation2 + $0x56] sm:$0xff]
      %v5886 = vld [vmem:[#allocation2 + $0x5e] sm:$0x3f]
      %v5887 = vpack.c.bf16 %v5878, %v5877
      %v5888 = vpack.c.bf16 %v5880, %v5879
      %v5889 = vpack.c.bf16 %v5882, %v5881
      %v5890 = vpack.c.bf16 %v5884, %v5883
      %v5891 = vpack.c.bf16 %v5886, %v5885
      %s5892 = scalar_lea.vmem %s4, 256
      %v5893 = vld [vmem:[%s5892] sm:$0xf]
      %v5894 = vld [vmem:[%s5892 + $0x4] sm:$0xf]
      %v5895 = vld [vmem:[%s5892 + $0x8] sm:$0xf]
      %v5896 = vld [vmem:[%s5892 + $0xc] sm:$0xf]
      %v5897 = vld [vmem:[%s5892 + $0x10] sm:$0xf]
      %v5898 = vld [vmem:[%s5892 + $0x14] sm:$0xf]
      %v5899 = vld [vmem:[%s5892 + $0x18] sm:$0xf]
      %v5900 = vld [vmem:[%s5892 + $0x1c] sm:$0xf]
      %v5909 = vunpack.c.l.b16 %v5893
      %v5910 = vunpack.c.l.b16 %v5894
      %v5911 = vunpack.c.l.b16 %v5895
      %v5912 = vunpack.c.l.b16 %v5896
      %v5913 = vunpack.c.l.b16 %v5897
      %v5914 = vunpack.c.l.b16 %v5898
      %v5915 = vunpack.c.l.b16 %v5899
      %v5916 = vunpack.c.l.b16 %v5900
      %v5917 = vpack.c.b16 %v5910, %v5909
      %v5918 = vpack.c.b16 %v5912, %v5911
      %v5919 = vpack.c.b16 %v5914, %v5913
      %v5920 = vpack.c.b16 %v5916, %v5915
      %v5926 = vsel %vm4715, %v5887, 0
      %v5929 = vsel %vm4715, %v5888, 0
      %v5932 = vsel %vm4715, %v5889, 0
      %v5935 = vsel %vm4715, %v5890, 0
      %v5938 = vsel %vm4715, %v5891, 0
      %5940 = vmatprep.subr.bf16.mxu0 0
      %5941 = vmatpush1.bf16.msra.mxu0 %v5917
      %5942 = vmatprep.subr.bf16.mxu0 0
      %5943 = vmatpush1.bf16.msra.mxu0 %v5918
      %5944 = vmatprep.subr.bf16.mxu0 0
      %5945 = vmatpush1.bf16.msra.mxu0 %v5919
      %5946 = vmatprep.subr.bf16.mxu0 0
      %5947 = vmatpush1.bf16.msra.mxu0 %v5920
      %5948 = vmatprep.subr.bf16.mxu0 0
      %5949 = vmatpush1.bf16.msra.mxu0 0
      %5950 = vmatprep.subr.bf16.mxu0 0
      %5951 = vmatpush1.bf16.msra.mxu0 0
      %5952 = vmatprep.subr.bf16.mxu0 0
      %5953 = vmatpush1.bf16.msra.mxu0 0
      %5954 = vmatprep.subr.bf16.mxu0 0
      %5955 = vmatpush1.bf16.msra.mxu0 0
      %5956 = vmatprep.subr.bf16.mxu0 0
      %5957 = vmatpush1.bf16.msra.mxu0 0
      %5958 = vmatprep.subr.bf16.mxu0 0
      %5959 = vmatpush1.bf16.msra.mxu0 0
      %5960 = vmatprep.subr.bf16.mxu0 0
      %5961 = vmatpush1.bf16.msra.mxu0 0
      %5962 = vmatprep.subr.bf16.mxu0 0
      %5963 = vmatpush1.bf16.msra.mxu0 0
      %5964 = vmatprep.subr.bf16.mxu0 0
      %5965 = vmatpush1.bf16.msra.mxu0 0
      %5966 = vmatprep.subr.bf16.mxu0 0
      %5967 = vmatpush1.bf16.msra.mxu0 0
      %5968 = vmatprep.subr.bf16.mxu0 0
      %5969 = vmatpush1.bf16.msra.mxu0 0
      %5970 = vmatprep.subr.bf16.mxu0 0
      %5971 = vmatpush1.bf16.msra.mxu0 0
      %5972 = vmatprep.mubr.bf16.mxu0 0
      %5973 = vmatmul.mubr.bf16.gmra.mrb[0].mxu0 %v5926
      %v5974 = vpop.f32.mrb[0].mxu0
      %v5975 = vadd.f32 0.0, %v5974
      %v5976 = vpop.f32.mrb[0].mxu0
      %v5977 = vpop.f32.mrb[0].mxu0
      %v5978 = vadd.f32 0.0, %v5977
      %v5979 = vpop.f32.mrb[0].mxu0
      %5980 = vmatprep.mubr.bf16.mxu0 0
      %5981 = vmatmul.mubr.bf16.gmra.mrb[0].mxu0 %v5929
      %v5982 = vpop.f32.mrb[0].mxu0
      %v5983 = vadd.f32 0.0, %v5982
      %v5984 = vpop.f32.mrb[0].mxu0
      %v5985 = vpop.f32.mrb[0].mxu0
      %v5986 = vadd.f32 0.0, %v5985
      %v5987 = vpop.f32.mrb[0].mxu0
      %5988 = vmatprep.mubr.bf16.mxu0 0
      %5989 = vmatmul.mubr.bf16.gmra.mrb[0].mxu0 %v5932
      %v5990 = vpop.f32.mrb[0].mxu0
      %v5991 = vadd.f32 0.0, %v5990
      %v5992 = vpop.f32.mrb[0].mxu0
      %v5993 = vpop.f32.mrb[0].mxu0
      %v5994 = vadd.f32 0.0, %v5993
      %v5995 = vpop.f32.mrb[0].mxu0
      %5996 = vmatprep.mubr.bf16.mxu0 0
      %5997 = vmatmul.mubr.bf16.gmra.mrb[0].mxu0 %v5935
      %v5998 = vpop.f32.mrb[0].mxu0
      %v5999 = vadd.f32 0.0, %v5998
      %v6000 = vpop.f32.mrb[0].mxu0
      %v6001 = vpop.f32.mrb[0].mxu0
      %v6002 = vadd.f32 0.0, %v6001
      %v6003 = vpop.f32.mrb[0].mxu0
      %6004 = vmatprep.mubr.bf16.mxu0 0
      %6005 = vmatmul.mubr.bf16.gmra.mrb[0].mxu0 %v5938
      %v6006 = vpop.f32.mrb[0].mxu0
      %v6007 = vadd.f32 0.0, %v6006
      %v6008 = vpop.f32.mrb[0].mxu0
      %v6009 = vpop.f32.mrb[0].mxu0
      %v6010 = vadd.f32 0.0, %v6009
      %v6011 = vpop.f32.mrb[0].mxu0
      %6012 = vdwg.mxu0
      %v6013 = vadd.f32 %v5867, %v5975
      %v6014 = vadd.f32 %v5868, %v5978
      %v6015 = vadd.f32 %v5869, %v5983
      %v6016 = vadd.f32 %v5870, %v5986
      %v6017 = vadd.f32 %v5871, %v5991
      %v6018 = vadd.f32 %v5872, %v5994
      %v6019 = vadd.f32 %v5873, %v5999
      %v6020 = vadd.f32 %v5874, %v6002
      %v6021 = vadd.f32 %v5875, %v6007
      %v6022 = vadd.f32 %v5876, %v6010
      %v6023 = vld [vmem:[%s5] sm:$0x1]
      %v6025 = vlaneseq
      %v6026 = vshrl.u32 %v6025, 7
      %v6027 = vsub.s32 0, %v6026
      %v6028 = vrot.slane %v6023, %v6027
      %v6030 = vadd.f32 %v6013, %v6028
      %v6031 = vadd.f32 %v6014, %v6028
      %v6032 = vadd.f32 %v6015, %v6028
      %v6033 = vadd.f32 %v6016, %v6028
      %v6034 = vadd.f32 %v6017, %v6028
      %v6035 = vadd.f32 %v6018, %v6028
      %v6036 = vadd.f32 %v6019, %v6028
      %v6037 = vadd.f32 %v6020, %v6028
      %v6038 = vadd.f32 %v6021, %v6028
      %v6039 = vadd.f32 %v6022, %v6028
      %v6040 = vmax.f32 %v6030, 0.0
      %v6041 = vmax.f32 %v6031, 0.0
      %v6042 = vmax.f32 %v6032, 0.0
      %v6043 = vmax.f32 %v6033, 0.0
      %v6044 = vmax.f32 %v6034, 0.0
      %v6045 = vmax.f32 %v6035, 0.0
      %v6046 = vmax.f32 %v6036, 0.0
      %v6047 = vmax.f32 %v6037, 0.0
      %v6048 = vmax.f32 %v6038, 0.0
      %v6049 = vmax.f32 %v6039, 0.0
      %v6050 = vpack.c.bf16 %v6041, %v6040
      %v6051 = vpack.c.bf16 %v6043, %v6042
      %v6052 = vpack.c.bf16 %v6045, %v6044
      %v6053 = vpack.c.bf16 %v6047, %v6046
      %v6054 = vpack.c.bf16 %v6049, %v6048
      %v6055 = vld [vmem:[%s6] sm:$0xf]
      %v6056 = vld [vmem:[%s6 + $0x4] sm:$0xf]
      %v6057 = vld [vmem:[%s6 + $0x8] sm:$0xf]
      %v6058 = vld [vmem:[%s6 + $0xc] sm:$0xf]
      %v6059 = vld [vmem:[%s6 + $0x10] sm:$0x3]
      %v6065 = vunpack.c.l.b16 %v6055
      %v6066 = vunpack.c.l.b16 %v6056
      %v6067 = vunpack.c.l.b16 %v6057
      %v6068 = vunpack.c.l.b16 %v6058
      %v6069 = vunpack.c.l.b16 %v6059
      %v6070 = vpack.c.b16 %v6066, %v6065
      %v6071 = vpack.c.b16 %v6068, %v6067
      %v6072 = vpack.c.b16 %v6069, %v6069
      %vm6073 = vcmask 637952
      %v6075 = vsel %vm6073, %v6070, 0
      %v6078 = vsel %vm6073, %v6071, 0
      %v6081 = vsel %vm6073, %v6072, 0
      %v6084 = vsel %vm3524, %v6054, 0
      %6086 = vmatprep.subr.bf16.mxu0 0
      %6087 = vmatpush1.bf16.msra.mxu0 %v6050
      %6088 = vmatprep.subr.bf16.mxu0 0
      %6089 = vmatpush1.bf16.msra.mxu0 %v6051
      %6090 = vmatprep.subr.bf16.mxu0 0
      %6091 = vmatpush1.bf16.msra.mxu0 %v6052
      %6092 = vmatprep.subr.bf16.mxu0 0
      %6093 = vmatpush1.bf16.msra.mxu0 %v6053
      %6094 = vmatprep.subr.bf16.mxu0 0
      %6095 = vmatpush1.bf16.msra.mxu0 %v6084
      %6096 = vmatprep.subr.bf16.mxu0 0
      %6097 = vmatpush1.bf16.msra.mxu0 0
      %6098 = vmatprep.subr.bf16.mxu0 0
      %6099 = vmatpush1.bf16.msra.mxu0 0
      %6100 = vmatprep.subr.bf16.mxu0 0
      %6101 = vmatpush1.bf16.msra.mxu0 0
      %6102 = vmatprep.subr.bf16.mxu0 0
      %6103 = vmatpush1.bf16.msra.mxu0 0
      %6104 = vmatprep.subr.bf16.mxu0 0
      %6105 = vmatpush1.bf16.msra.mxu0 0
      %6106 = vmatprep.subr.bf16.mxu0 0
      %6107 = vmatpush1.bf16.msra.mxu0 0
      %6108 = vmatprep.subr.bf16.mxu0 0
      %6109 = vmatpush1.bf16.msra.mxu0 0
      %6110 = vmatprep.subr.bf16.mxu0 0
      %6111 = vmatpush1.bf16.msra.mxu0 0
      %6112 = vmatprep.subr.bf16.mxu0 0
      %6113 = vmatpush1.bf16.msra.mxu0 0
      %6114 = vmatprep.subr.bf16.mxu0 0
      %6115 = vmatpush1.bf16.msra.mxu0 0
      %6116 = vmatprep.subr.bf16.mxu0 0
      %6117 = vmatpush1.bf16.msra.mxu0 0
      %6118 = vmatprep.mubr.bf16.mxu0 0
      %6119 = vmatmul.mubr.bf16.gmra.mrb[0].mxu0 %v6075
      %v6120 = vpop.f32.mrb[0].mxu0
      %v6121 = vadd.f32 0.0, %v6120
      %v6122 = vpop.f32.mrb[0].mxu0
      %v6123 = vpop.f32.mrb[0].mxu0
      %v6124 = vadd.f32 0.0, %v6123
      %v6125 = vpop.f32.mrb[0].mxu0
      %6126 = vmatprep.mubr.bf16.mxu0 0
      %6127 = vmatmul.mubr.bf16.gmra.mrb[0].mxu0 %v6078
      %v6128 = vpop.f32.mrb[0].mxu0
      %v6129 = vadd.f32 0.0, %v6128
      %v6130 = vpop.f32.mrb[0].mxu0
      %v6131 = vpop.f32.mrb[0].mxu0
      %v6132 = vadd.f32 0.0, %v6131
      %v6133 = vpop.f32.mrb[0].mxu0
      %6134 = vmatprep.mubr.bf16.mxu0 0
      %6135 = vmatmul.mubr.bf16.gmra.mrb[0].mxu0 %v6081
      %v6136 = vpop.f32.mrb[0].mxu0
      %v6137 = vadd.f32 0.0, %v6136
      %v6138 = vpop.f32.mrb[0].mxu0
      %v6139 = vpop.f32.mrb[0].mxu0
      %v6140 = vpop.f32.mrb[0].mxu0
      %6141 = vdwg.mxu0
      %s6142 = scalar_lea.vmem %s6, 20
      %v6143 = vld [vmem:[%s6142] sm:$0xf]
      %v6144 = vld [vmem:[%s6142 + $0x4] sm:$0xf]
      %v6145 = vld [vmem:[%s6142 + $0x8] sm:$0xf]
      %v6146 = vld [vmem:[%s6142 + $0xc] sm:$0xf]
      %v6147 = vld [vmem:[%s6142 + $0x10] sm:$0x3]
      %v6153 = vunpack.c.l.b16 %v6143
      %v6154 = vunpack.c.l.b16 %v6144
      %v6155 = vunpack.c.l.b16 %v6145
      %v6156 = vunpack.c.l.b16 %v6146
      %v6157 = vunpack.c.l.b16 %v6147
      %v6158 = vpack.c.b16 %v6154, %v6153
      %v6159 = vpack.c.b16 %v6156, %v6155
      %v6160 = vpack.c.b16 %v6157, %v6157
      %v6162 = vsel %vm6073, %v6158, 0
      %v6165 = vsel %vm6073, %v6159, 0
      %v6168 = vsel %vm6073, %v6160, 0
      %6170 = vmatprep.subr.bf16.mxu0 0
      %6171 = vmatpush1.bf16.msra.mxu0 %v6050
      %6172 = vmatprep.subr.bf16.mxu0 0
      %6173 = vmatpush1.bf16.msra.mxu0 %v6051
      %6174 = vmatprep.subr.bf16.mxu0 0
      %6175 = vmatpush1.bf16.msra.mxu0 %v6052
      %6176 = vmatprep.subr.bf16.mxu0 0
      %6177 = vmatpush1.bf16.msra.mxu0 %v6053
      %6178 = vmatprep.subr.bf16.mxu0 0
      %6179 = vmatpush1.bf16.msra.mxu0 %v6084
      %6180 = vmatprep.subr.bf16.mxu0 0
      %6181 = vmatpush1.bf16.msra.mxu0 0
      %6182 = vmatprep.subr.bf16.mxu0 0
      %6183 = vmatpush1.bf16.msra.mxu0 0
      %6184 = vmatprep.subr.bf16.mxu0 0
      %6185 = vmatpush1.bf16.msra.mxu0 0
      %6186 = vmatprep.subr.bf16.mxu0 0
      %6187 = vmatpush1.bf16.msra.mxu0 0
      %6188 = vmatprep.subr.bf16.mxu0 0
      %6189 = vmatpush1.bf16.msra.mxu0 0
      %6190 = vmatprep.subr.bf16.mxu0 0
      %6191 = vmatpush1.bf16.msra.mxu0 0
      %6192 = vmatprep.subr.bf16.mxu0 0
      %6193 = vmatpush1.bf16.msra.mxu0 0
      %6194 = vmatprep.subr.bf16.mxu0 0
      %6195 = vmatpush1.bf16.msra.mxu0 0
      %6196 = vmatprep.subr.bf16.mxu0 0
      %6197 = vmatpush1.bf16.msra.mxu0 0
      %6198 = vmatprep.subr.bf16.mxu0 0
      %6199 = vmatpush1.bf16.msra.mxu0 0
      %6200 = vmatprep.subr.bf16.mxu0 0
      %6201 = vmatpush1.bf16.msra.mxu0 0
      %6202 = vmatprep.mubr.bf16.mxu0 0
      %6203 = vmatmul.mubr.bf16.gmra.mrb[0].mxu0 %v6162
      %v6204 = vpop.f32.mrb[0].mxu0
      %v6205 = vadd.f32 0.0, %v6204
      %v6206 = vpop.f32.mrb[0].mxu0
      %v6207 = vpop.f32.mrb[0].mxu0
      %v6208 = vadd.f32 0.0, %v6207
      %v6209 = vpop.f32.mrb[0].mxu0
      %6210 = vmatprep.mubr.bf16.mxu0 0
      %6211 = vmatmul.mubr.bf16.gmra.mrb[0].mxu0 %v6165
      %v6212 = vpop.f32.mrb[0].mxu0
      %v6213 = vadd.f32 0.0, %v6212
      %v6214 = vpop.f32.mrb[0].mxu0
      %v6215 = vpop.f32.mrb[0].mxu0
      %v6216 = vadd.f32 0.0, %v6215
      %v6217 = vpop.f32.mrb[0].mxu0
      %6218 = vmatprep.mubr.bf16.mxu0 0
      %6219 = vmatmul.mubr.bf16.gmra.mrb[0].mxu0 %v6168
      %v6220 = vpop.f32.mrb[0].mxu0
      %v6221 = vadd.f32 0.0, %v6220
      %v6222 = vpop.f32.mrb[0].mxu0
      %v6223 = vpop.f32.mrb[0].mxu0
      %v6224 = vpop.f32.mrb[0].mxu0
      %6225 = vdwg.mxu0
      %v6226 = vmax.f32 %v6121, %v6205
      %v6227 = vmax.f32 %v6124, %v6208
      %v6228 = vmax.f32 %v6129, %v6213
      %v6229 = vmax.f32 %v6132, %v6216
      %v6230 = vmax.f32 %v6137, %v6221
      %s6231 = scalar_lea.vmem %s6, 40
      %v6232 = vld [vmem:[%s6231] sm:$0xf]
      %v6233 = vld [vmem:[%s6231 + $0x4] sm:$0xf]
      %v6234 = vld [vmem:[%s6231 + $0x8] sm:$0xf]
      %v6235 = vld [vmem:[%s6231 + $0xc] sm:$0xf]
      %v6236 = vld [vmem:[%s6231 + $0x10] sm:$0x3]
      %v6242 = vunpack.c.l.b16 %v6232
      %v6243 = vunpack.c.l.b16 %v6233
      %v6244 = vunpack.c.l.b16 %v6234
      %v6245 = vunpack.c.l.b16 %v6235
      %v6246 = vunpack.c.l.b16 %v6236
      %v6247 = vpack.c.b16 %v6243, %v6242
      %v6248 = vpack.c.b16 %v6245, %v6244
      %v6249 = vpack.c.b16 %v6246, %v6246
      %v6251 = vsel %vm6073, %v6247, 0
      %v6254 = vsel %vm6073, %v6248, 0
      %v6257 = vsel %vm6073, %v6249, 0
      %6259 = vmatprep.subr.bf16.mxu0 0
      %6260 = vmatpush1.bf16.msra.mxu0 %v6050
      %6261 = vmatprep.subr.bf16.mxu0 0
      %6262 = vmatpush1.bf16.msra.mxu0 %v6051
      %6263 = vmatprep.subr.bf16.mxu0 0
      %6264 = vmatpush1.bf16.msra.mxu0 %v6052
      %6265 = vmatprep.subr.bf16.mxu0 0
      %6266 = vmatpush1.bf16.msra.mxu0 %v6053
      %6267 = vmatprep.subr.bf16.mxu0 0
      %6268 = vmatpush1.bf16.msra.mxu0 %v6084
      %6269 = vmatprep.subr.bf16.mxu0 0
      %6270 = vmatpush1.bf16.msra.mxu0 0
      %6271 = vmatprep.subr.bf16.mxu0 0
      %6272 = vmatpush1.bf16.msra.mxu0 0
      %6273 = vmatprep.subr.bf16.mxu0 0
      %6274 = vmatpush1.bf16.msra.mxu0 0
      %6275 = vmatprep.subr.bf16.mxu0 0
      %6276 = vmatpush1.bf16.msra.mxu0 0
      %6277 = vmatprep.subr.bf16.mxu0 0
      %6278 = vmatpush1.bf16.msra.mxu0 0
      %6279 = vmatprep.subr.bf16.mxu0 0
      %6280 = vmatpush1.bf16.msra.mxu0 0
      %6281 = vmatprep.subr.bf16.mxu0 0
      %6282 = vmatpush1.bf16.msra.mxu0 0
      %6283 = vmatprep.subr.bf16.mxu0 0
      %6284 = vmatpush1.bf16.msra.mxu0 0
      %6285 = vmatprep.subr.bf16.mxu0 0
      %6286 = vmatpush1.bf16.msra.mxu0 0
      %6287 = vmatprep.subr.bf16.mxu0 0
      %6288 = vmatpush1.bf16.msra.mxu0 0
      %6289 = vmatprep.subr.bf16.mxu0 0
      %6290 = vmatpush1.bf16.msra.mxu0 0
      %6291 = vmatprep.mubr.bf16.mxu0 0
      %6292 = vmatmul.mubr.bf16.gmra.mrb[0].mxu0 %v6251
      %v6293 = vpop.f32.mrb[0].mxu0
      %v6294 = vadd.f32 0.0, %v6293
      %v6295 = vpop.f32.mrb[0].mxu0
      %v6296 = vpop.f32.mrb[0].mxu0
      %v6297 = vadd.f32 0.0, %v6296
      %v6298 = vpop.f32.mrb[0].mxu0
      %6299 = vmatprep.mubr.bf16.mxu0 0
      %6300 = vmatmul.mubr.bf16.gmra.mrb[0].mxu0 %v6254
      %v6301 = vpop.f32.mrb[0].mxu0
      %v6302 = vadd.f32 0.0, %v6301
      %v6303 = vpop.f32.mrb[0].mxu0
      %v6304 = vpop.f32.mrb[0].mxu0
      %v6305 = vadd.f32 0.0, %v6304
      %v6306 = vpop.f32.mrb[0].mxu0
      %6307 = vmatprep.mubr.bf16.mxu0 0
      %6308 = vmatmul.mubr.bf16.gmra.mrb[0].mxu0 %v6257
      %v6309 = vpop.f32.mrb[0].mxu0
      %v6310 = vadd.f32 0.0, %v6309
      %v6311 = vpop.f32.mrb[0].mxu0
      %v6312 = vpop.f32.mrb[0].mxu0
      %v6313 = vpop.f32.mrb[0].mxu0
      %6314 = vdwg.mxu0
      %v6315 = vmax.f32 %v6226, %v6294
      %v6316 = vmax.f32 %v6227, %v6297
      %v6317 = vmax.f32 %v6228, %v6302
      %v6318 = vmax.f32 %v6229, %v6305
      %v6319 = vmax.f32 %v6230, %v6310
      %s6320 = scalar_lea.vmem %s6, 60
      %v6321 = vld [vmem:[%s6320] sm:$0xf]
      %v6322 = vld [vmem:[%s6320 + $0x4] sm:$0xf]
      %v6323 = vld [vmem:[%s6320 + $0x8] sm:$0xf]
      %v6324 = vld [vmem:[%s6320 + $0xc] sm:$0xf]
      %v6325 = vld [vmem:[%s6320 + $0x10] sm:$0x3]
      %v6331 = vunpack.c.l.b16 %v6321
      %v6332 = vunpack.c.l.b16 %v6322
      %v6333 = vunpack.c.l.b16 %v6323
      %v6334 = vunpack.c.l.b16 %v6324
      %v6335 = vunpack.c.l.b16 %v6325
      %v6336 = vpack.c.b16 %v6332, %v6331
      %v6337 = vpack.c.b16 %v6334, %v6333
      %v6338 = vpack.c.b16 %v6335, %v6335
      %v6340 = vsel %vm6073, %v6336, 0
      %v6343 = vsel %vm6073, %v6337, 0
      %v6346 = vsel %vm6073, %v6338, 0
      %6348 = vmatprep.subr.bf16.mxu0 0
      %6349 = vmatpush1.bf16.msra.mxu0 %v6050
      %6350 = vmatprep.subr.bf16.mxu0 0
      %6351 = vmatpush1.bf16.msra.mxu0 %v6051
      %6352 = vmatprep.subr.bf16.mxu0 0
      %6353 = vmatpush1.bf16.msra.mxu0 %v6052
      %6354 = vmatprep.subr.bf16.mxu0 0
      %6355 = vmatpush1.bf16.msra.mxu0 %v6053
      %6356 = vmatprep.subr.bf16.mxu0 0
      %6357 = vmatpush1.bf16.msra.mxu0 %v6084
      %6358 = vmatprep.subr.bf16.mxu0 0
      %6359 = vmatpush1.bf16.msra.mxu0 0
      %6360 = vmatprep.subr.bf16.mxu0 0
      %6361 = vmatpush1.bf16.msra.mxu0 0
      %6362 = vmatprep.subr.bf16.mxu0 0
      %6363 = vmatpush1.bf16.msra.mxu0 0
      %6364 = vmatprep.subr.bf16.mxu0 0
      %6365 = vmatpush1.bf16.msra.mxu0 0
      %6366 = vmatprep.subr.bf16.mxu0 0
      %6367 = vmatpush1.bf16.msra.mxu0 0
      %6368 = vmatprep.subr.bf16.mxu0 0
      %6369 = vmatpush1.bf16.msra.mxu0 0
      %6370 = vmatprep.subr.bf16.mxu0 0
      %6371 = vmatpush1.bf16.msra.mxu0 0
      %6372 = vmatprep.subr.bf16.mxu0 0
      %6373 = vmatpush1.bf16.msra.mxu0 0
      %6374 = vmatprep.subr.bf16.mxu0 0
      %6375 = vmatpush1.bf16.msra.mxu0 0
      %6376 = vmatprep.subr.bf16.mxu0 0
      %6377 = vmatpush1.bf16.msra.mxu0 0
      %6378 = vmatprep.subr.bf16.mxu0 0
      %6379 = vmatpush1.bf16.msra.mxu0 0
      %6380 = vmatprep.mubr.bf16.mxu0 0
      %6381 = vmatmul.mubr.bf16.gmra.mrb[0].mxu0 %v6340
      %v6382 = vpop.f32.mrb[0].mxu0
      %v6383 = vadd.f32 0.0, %v6382
      %v6384 = vpop.f32.mrb[0].mxu0
      %v6385 = vpop.f32.mrb[0].mxu0
      %v6386 = vadd.f32 0.0, %v6385
      %v6387 = vpop.f32.mrb[0].mxu0
      %6388 = vmatprep.mubr.bf16.mxu0 0
      %6389 = vmatmul.mubr.bf16.gmra.mrb[0].mxu0 %v6343
      %v6390 = vpop.f32.mrb[0].mxu0
      %v6391 = vadd.f32 0.0, %v6390
      %v6392 = vpop.f32.mrb[0].mxu0
      %v6393 = vpop.f32.mrb[0].mxu0
      %v6394 = vadd.f32 0.0, %v6393
      %v6395 = vpop.f32.mrb[0].mxu0
      %6396 = vmatprep.mubr.bf16.mxu0 0
      %6397 = vmatmul.mubr.bf16.gmra.mrb[0].mxu0 %v6346
      %v6398 = vpop.f32.mrb[0].mxu0
      %v6399 = vadd.f32 0.0, %v6398
      %v6400 = vpop.f32.mrb[0].mxu0
      %v6401 = vpop.f32.mrb[0].mxu0
      %v6402 = vpop.f32.mrb[0].mxu0
      %6403 = vdwg.mxu0
      %v6404 = vmax.f32 %v6315, %v6383
      %v6405 = vmax.f32 %v6316, %v6386
      %v6406 = vmax.f32 %v6317, %v6391
      %v6407 = vmax.f32 %v6318, %v6394
      %v6408 = vmax.f32 %v6319, %v6399
      %6409 = vst [vmem:[#allocation3] sm:$0xff] %v6404
      %6410 = vst [vmem:[#allocation3 + $0x8] sm:$0xff] %v6405
      %6411 = vst [vmem:[#allocation3 + $0x10] sm:$0xff] %v6406
      %6412 = vst [vmem:[#allocation3 + $0x18] sm:$0xff] %v6407
      %6413 = vst [vmem:[#allocation3 + $0x20] sm:$0xf] %v6408
      %v6414 = vld [vmem:[#allocation3] sm:$0xff]
      %v6415 = vld [vmem:[#allocation3 + $0x8] sm:$0xff]
      %v6416 = vld [vmem:[#allocation3 + $0x10] sm:$0x3f]
      %v6417 = vpack.c.bf16 %v6415, %v6414
      %v6418 = vpack.c.bf16 %v6416, %v6416
      %v6419 = vld [vmem:[%s7] sm:$0xff]
      %v6420 = vld [vmem:[%s7 + $0x8] sm:$0xff]
      %v6421 = vld [vmem:[%s7 + $0x10] sm:$0xff]
      %v6422 = vld [vmem:[%s7 + $0x18] sm:$0xff]
      %v6423 = vld [vmem:[%s7 + $0x20] sm:$0xff]
      %v6424 = vld [vmem:[%s7 + $0x28] sm:$0xff]
      %v6425 = vld [vmem:[%s7 + $0x30] sm:$0xff]
      %v6426 = vld [vmem:[%s7 + $0x38] sm:$0xff]
      %v6427 = vld [vmem:[%s7 + $0x40] sm:$0xff]
      %v6428 = vld [vmem:[%s7 + $0x48] sm:$0xff]
      %v6429 = vld [vmem:[%s7 + $0x50] sm:$0xff]
      %v6430 = vld [vmem:[%s7 + $0x58] sm:$0xff]
      %v6431 = vld [vmem:[%s7 + $0x60] sm:$0xff]
      %v6432 = vld [vmem:[%s7 + $0x68] sm:$0xff]
      %v6433 = vld [vmem:[%s7 + $0x70] sm:$0xff]
      %v6434 = vld [vmem:[%s7 + $0x78] sm:$0xff]
      %v6435 = vld [vmem:[#allocation3 + $0x1] sm:$0xff]
      %v6436 = vld [vmem:[#allocation3 + $0x9] sm:$0xff]
      %v6437 = vld [vmem:[#allocation3 + $0x11] sm:$0x3f]
      %v6438 = vpack.c.bf16 %v6436, %v6435
      %v6439 = vpack.c.bf16 %v6437, %v6437
      %s6440 = scalar_lea.vmem %s7, 128
      %v6441 = vld [vmem:[%s6440] sm:$0xff]
      %v6442 = vld [vmem:[%s6440 + $0x8] sm:$0xff]
      %v6443 = vld [vmem:[%s6440 + $0x10] sm:$0xff]
      %v6444 = vld [vmem:[%s6440 + $0x18] sm:$0xff]
      %v6445 = vld [vmem:[%s6440 + $0x20] sm:$0xff]
      %v6446 = vld [vmem:[%s6440 + $0x28] sm:$0xff]
      %v6447 = vld [vmem:[%s6440 + $0x30] sm:$0xff]
      %v6448 = vld [vmem:[%s6440 + $0x38] sm:$0xff]
      %v6449 = vld [vmem:[%s6440 + $0x40] sm:$0xff]
      %v6450 = vld [vmem:[%s6440 + $0x48] sm:$0xff]
      %v6451 = vld [vmem:[%s6440 + $0x50] sm:$0xff]
      %v6452 = vld [vmem:[%s6440 + $0x58] sm:$0xff]
      %v6453 = vld [vmem:[%s6440 + $0x60] sm:$0xff]
      %v6454 = vld [vmem:[%s6440 + $0x68] sm:$0xff]
      %v6455 = vld [vmem:[%s6440 + $0x70] sm:$0xff]
      %v6456 = vld [vmem:[%s6440 + $0x78] sm:$0xff]
      %v6473 = vunpack.c.l.b16 %v6441
      %v6474 = vunpack.c.h.b16 %v6441
      %v6475 = vunpack.c.l.b16 %v6442
      %v6476 = vunpack.c.h.b16 %v6442
      %v6477 = vunpack.c.l.b16 %v6443
      %v6478 = vunpack.c.h.b16 %v6443
      %v6479 = vunpack.c.l.b16 %v6444
      %v6480 = vunpack.c.h.b16 %v6444
      %v6481 = vunpack.c.l.b16 %v6445
      %v6482 = vunpack.c.h.b16 %v6445
      %v6483 = vunpack.c.l.b16 %v6446
      %v6484 = vunpack.c.h.b16 %v6446
      %v6485 = vunpack.c.l.b16 %v6447
      %v6486 = vunpack.c.h.b16 %v6447
      %v6487 = vunpack.c.l.b16 %v6448
      %v6488 = vunpack.c.h.b16 %v6448
      %v6489 = vunpack.c.l.b16 %v6449
      %v6490 = vunpack.c.h.b16 %v6449
      %v6491 = vunpack.c.l.b16 %v6450
      %v6492 = vunpack.c.h.b16 %v6450
      %v6493 = vunpack.c.l.b16 %v6451
      %v6494 = vunpack.c.h.b16 %v6451
      %v6495 = vunpack.c.l.b16 %v6452
      %v6496 = vunpack.c.h.b16 %v6452
      %v6497 = vunpack.c.l.b16 %v6453
      %v6498 = vunpack.c.h.b16 %v6453
      %v6499 = vunpack.c.l.b16 %v6454
      %v6500 = vunpack.c.h.b16 %v6454
      %v6501 = vunpack.c.l.b16 %v6455
      %v6502 = vunpack.c.h.b16 %v6455
      %v6503 = vunpack.c.l.b16 %v6456
      %v6504 = vunpack.c.h.b16 %v6456
      %v6505 = vpack.c.b16 %v6475, %v6473
      %v6506 = vpack.c.b16 %v6476, %v6474
      %v6507 = vpack.c.b16 %v6479, %v6477
      %v6508 = vpack.c.b16 %v6480, %v6478
      %v6509 = vpack.c.b16 %v6483, %v6481
      %v6510 = vpack.c.b16 %v6484, %v6482
      %v6511 = vpack.c.b16 %v6487, %v6485
      %v6512 = vpack.c.b16 %v6488, %v6486
      %v6513 = vpack.c.b16 %v6491, %v6489
      %v6514 = vpack.c.b16 %v6492, %v6490
      %v6515 = vpack.c.b16 %v6495, %v6493
      %v6516 = vpack.c.b16 %v6496, %v6494
      %v6517 = vpack.c.b16 %v6499, %v6497
      %v6518 = vpack.c.b16 %v6500, %v6498
      %v6519 = vpack.c.b16 %v6503, %v6501
      %v6520 = vpack.c.b16 %v6504, %v6502
      %6537 = vmatprep.subr.bf16.mxu0 %v6506
      %6538 = vmatpush1.bf16.msra.mxu0 %v6505
      %6539 = vmatprep.subr.bf16.mxu0 %v6508
      %6540 = vmatpush1.bf16.msra.mxu0 %v6507
      %6541 = vmatprep.subr.bf16.mxu0 %v6510
      %6542 = vmatpush1.bf16.msra.mxu0 %v6509
      %6543 = vmatprep.subr.bf16.mxu0 %v6512
      %6544 = vmatpush1.bf16.msra.mxu0 %v6511
      %6545 = vmatprep.subr.bf16.mxu0 %v6514
      %6546 = vmatpush1.bf16.msra.mxu0 %v6513
      %6547 = vmatprep.subr.bf16.mxu0 %v6516
      %6548 = vmatpush1.bf16.msra.mxu0 %v6515
      %6549 = vmatprep.subr.bf16.mxu0 %v6518
      %6550 = vmatpush1.bf16.msra.mxu0 %v6517
      %6551 = vmatprep.subr.bf16.mxu0 %v6520
      %6552 = vmatpush1.bf16.msra.mxu0 %v6519
      %6553 = vmatprep.subr.bf16.mxu0 0
      %6554 = vmatpush1.bf16.msra.mxu0 0
      %6555 = vmatprep.subr.bf16.mxu0 0
      %6556 = vmatpush1.bf16.msra.mxu0 0
      %6557 = vmatprep.subr.bf16.mxu0 0
      %6558 = vmatpush1.bf16.msra.mxu0 0
      %6559 = vmatprep.subr.bf16.mxu0 0
      %6560 = vmatpush1.bf16.msra.mxu0 0
      %6561 = vmatprep.subr.bf16.mxu0 0
      %6562 = vmatpush1.bf16.msra.mxu0 0
      %6563 = vmatprep.subr.bf16.mxu0 0
      %6564 = vmatpush1.bf16.msra.mxu0 0
      %6565 = vmatprep.subr.bf16.mxu0 0
      %6566 = vmatpush1.bf16.msra.mxu0 0
      %6567 = vmatprep.subr.bf16.mxu0 0
      %6568 = vmatpush1.bf16.msra.mxu0 0
      %6569 = vmatprep.mubr.bf16.mxu0 0
      %6570 = vmatmul.mubr.bf16.gmra.mrb[0].mxu0 %v6438
      %v6571 = vpop.f32.mrb[0].mxu0
      %v6572 = vadd.f32 0.0, %v6571
      %v6573 = vpop.f32.mrb[0].mxu0
      %v6574 = vadd.f32 0.0, %v6573
      %v6575 = vpop.f32.mrb[0].mxu0
      %v6576 = vadd.f32 0.0, %v6575
      %v6577 = vpop.f32.mrb[0].mxu0
      %v6578 = vadd.f32 0.0, %v6577
      %6579 = vmatprep.mubr.bf16.mxu0 0
      %6580 = vmatmul.mubr.bf16.gmra.mrb[0].mxu0 %v6439
      %v6581 = vpop.f32.mrb[0].mxu0
      %v6582 = vadd.f32 0.0, %v6581
      %v6583 = vpop.f32.mrb[0].mxu0
      %v6584 = vadd.f32 0.0, %v6583
      %v6585 = vpop.f32.mrb[0].mxu0
      %v6586 = vpop.f32.mrb[0].mxu0
      %6587 = vdwg.mxu0
      %v6604 = vunpack.c.l.b16 %v6419
      %v6605 = vunpack.c.h.b16 %v6419
      %v6606 = vunpack.c.l.b16 %v6420
      %v6607 = vunpack.c.h.b16 %v6420
      %v6608 = vunpack.c.l.b16 %v6421
      %v6609 = vunpack.c.h.b16 %v6421
      %v6610 = vunpack.c.l.b16 %v6422
      %v6611 = vunpack.c.h.b16 %v6422
      %v6612 = vunpack.c.l.b16 %v6423
      %v6613 = vunpack.c.h.b16 %v6423
      %v6614 = vunpack.c.l.b16 %v6424
      %v6615 = vunpack.c.h.b16 %v6424
      %v6616 = vunpack.c.l.b16 %v6425
      %v6617 = vunpack.c.h.b16 %v6425
      %v6618 = vunpack.c.l.b16 %v6426
      %v6619 = vunpack.c.h.b16 %v6426
      %v6620 = vunpack.c.l.b16 %v6427
      %v6621 = vunpack.c.h.b16 %v6427
      %v6622 = vunpack.c.l.b16 %v6428
      %v6623 = vunpack.c.h.b16 %v6428
      %v6624 = vunpack.c.l.b16 %v6429
      %v6625 = vunpack.c.h.b16 %v6429
      %v6626 = vunpack.c.l.b16 %v6430
      %v6627 = vunpack.c.h.b16 %v6430
      %v6628 = vunpack.c.l.b16 %v6431
      %v6629 = vunpack.c.h.b16 %v6431
      %v6630 = vunpack.c.l.b16 %v6432
      %v6631 = vunpack.c.h.b16 %v6432
      %v6632 = vunpack.c.l.b16 %v6433
      %v6633 = vunpack.c.h.b16 %v6433
      %v6634 = vunpack.c.l.b16 %v6434
      %v6635 = vunpack.c.h.b16 %v6434
      %v6636 = vpack.c.b16 %v6606, %v6604
      %v6637 = vpack.c.b16 %v6607, %v6605
      %v6638 = vpack.c.b16 %v6610, %v6608
      %v6639 = vpack.c.b16 %v6611, %v6609
      %v6640 = vpack.c.b16 %v6614, %v6612
      %v6641 = vpack.c.b16 %v6615, %v6613
      %v6642 = vpack.c.b16 %v6618, %v6616
      %v6643 = vpack.c.b16 %v6619, %v6617
      %v6644 = vpack.c.b16 %v6622, %v6620
      %v6645 = vpack.c.b16 %v6623, %v6621
      %v6646 = vpack.c.b16 %v6626, %v6624
      %v6647 = vpack.c.b16 %v6627, %v6625
      %v6648 = vpack.c.b16 %v6630, %v6628
      %v6649 = vpack.c.b16 %v6631, %v6629
      %v6650 = vpack.c.b16 %v6634, %v6632
      %v6651 = vpack.c.b16 %v6635, %v6633
      %6668 = vmatprep.subr.bf16.mxu0 %v6637
      %6669 = vmatpush1.bf16.msra.mxu0 %v6636
      %6670 = vmatprep.subr.bf16.mxu0 %v6639
      %6671 = vmatpush1.bf16.msra.mxu0 %v6638
      %6672 = vmatprep.subr.bf16.mxu0 %v6641
      %6673 = vmatpush1.bf16.msra.mxu0 %v6640
      %6674 = vmatprep.subr.bf16.mxu0 %v6643
      %6675 = vmatpush1.bf16.msra.mxu0 %v6642
      %6676 = vmatprep.subr.bf16.mxu0 %v6645
      %6677 = vmatpush1.bf16.msra.mxu0 %v6644
      %6678 = vmatprep.subr.bf16.mxu0 %v6647
      %6679 = vmatpush1.bf16.msra.mxu0 %v6646
      %6680 = vmatprep.subr.bf16.mxu0 %v6649
      %6681 = vmatpush1.bf16.msra.mxu0 %v6648
      %6682 = vmatprep.subr.bf16.mxu0 %v6651
      %6683 = vmatpush1.bf16.msra.mxu0 %v6650
      %6684 = vmatprep.subr.bf16.mxu0 0
      %6685 = vmatpush1.bf16.msra.mxu0 0
      %6686 = vmatprep.subr.bf16.mxu0 0
      %6687 = vmatpush1.bf16.msra.mxu0 0
      %6688 = vmatprep.subr.bf16.mxu0 0
      %6689 = vmatpush1.bf16.msra.mxu0 0
      %6690 = vmatprep.subr.bf16.mxu0 0
      %6691 = vmatpush1.bf16.msra.mxu0 0
      %6692 = vmatprep.subr.bf16.mxu0 0
      %6693 = vmatpush1.bf16.msra.mxu0 0
      %6694 = vmatprep.subr.bf16.mxu0 0
      %6695 = vmatpush1.bf16.msra.mxu0 0
      %6696 = vmatprep.subr.bf16.mxu0 0
      %6697 = vmatpush1.bf16.msra.mxu0 0
      %6698 = vmatprep.subr.bf16.mxu0 0
      %6699 = vmatpush1.bf16.msra.mxu0 0
      %6700 = vmatprep.mubr.bf16.mxu0 0
      %6701 = vmatmul.mubr.bf16.gmra.mrb[0].mxu0 %v6417
      %v6702 = vpop.f32.mrb[0].mxu0
      %v6703 = vadd.f32 %v6572, %v6702
      %v6704 = vpop.f32.mrb[0].mxu0
      %v6705 = vadd.f32 %v6574, %v6704
      %v6706 = vpop.f32.mrb[0].mxu0
      %v6707 = vadd.f32 %v6576, %v6706
      %v6708 = vpop.f32.mrb[0].mxu0
      %v6709 = vadd.f32 %v6578, %v6708
      %6710 = vmatprep.mubr.bf16.mxu0 0
      %6711 = vmatmul.mubr.bf16.gmra.mrb[0].mxu0 %v6418
      %v6712 = vpop.f32.mrb[0].mxu0
      %v6713 = vadd.f32 %v6582, %v6712
      %v6714 = vpop.f32.mrb[0].mxu0
      %v6715 = vadd.f32 %v6584, %v6714
      %v6716 = vpop.f32.mrb[0].mxu0
      %v6717 = vpop.f32.mrb[0].mxu0
      %6718 = vdwg.mxu0
      %v6719 = vld [vmem:[#allocation3 + $0x2] sm:$0xff]
      %v6720 = vld [vmem:[#allocation3 + $0xa] sm:$0xff]
      %v6721 = vld [vmem:[#allocation3 + $0x12] sm:$0x3f]
      %v6722 = vpack.c.bf16 %v6720, %v6719
      %v6723 = vpack.c.bf16 %v6721, %v6721
      %s6724 = scalar_lea.vmem %s7, 256
      %v6725 = vld [vmem:[%s6724] sm:$0xff]
      %v6726 = vld [vmem:[%s6724 + $0x8] sm:$0xff]
      %v6727 = vld [vmem:[%s6724 + $0x10] sm:$0xff]
      %v6728 = vld [vmem:[%s6724 + $0x18] sm:$0xff]
      %v6729 = vld [vmem:[%s6724 + $0x20] sm:$0xff]
      %v6730 = vld [vmem:[%s6724 + $0x28] sm:$0xff]
      %v6731 = vld [vmem:[%s6724 + $0x30] sm:$0xff]
      %v6732 = vld [vmem:[%s6724 + $0x38] sm:$0xff]
      %v6733 = vld [vmem:[%s6724 + $0x40] sm:$0xff]
      %v6734 = vld [vmem:[%s6724 + $0x48] sm:$0xff]
      %v6735 = vld [vmem:[%s6724 + $0x50] sm:$0xff]
      %v6736 = vld [vmem:[%s6724 + $0x58] sm:$0xff]
      %v6737 = vld [vmem:[%s6724 + $0x60] sm:$0xff]
      %v6738 = vld [vmem:[%s6724 + $0x68] sm:$0xff]
      %v6739 = vld [vmem:[%s6724 + $0x70] sm:$0xff]
      %v6740 = vld [vmem:[%s6724 + $0x78] sm:$0xff]
      %v6757 = vunpack.c.l.b16 %v6725
      %v6758 = vunpack.c.h.b16 %v6725
      %v6759 = vunpack.c.l.b16 %v6726
      %v6760 = vunpack.c.h.b16 %v6726
      %v6761 = vunpack.c.l.b16 %v6727
      %v6762 = vunpack.c.h.b16 %v6727
      %v6763 = vunpack.c.l.b16 %v6728
      %v6764 = vunpack.c.h.b16 %v6728
      %v6765 = vunpack.c.l.b16 %v6729
      %v6766 = vunpack.c.h.b16 %v6729
      %v6767 = vunpack.c.l.b16 %v6730
      %v6768 = vunpack.c.h.b16 %v6730
      %v6769 = vunpack.c.l.b16 %v6731
      %v6770 = vunpack.c.h.b16 %v6731
      %v6771 = vunpack.c.l.b16 %v6732
      %v6772 = vunpack.c.h.b16 %v6732
      %v6773 = vunpack.c.l.b16 %v6733
      %v6774 = vunpack.c.h.b16 %v6733
      %v6775 = vunpack.c.l.b16 %v6734
      %v6776 = vunpack.c.h.b16 %v6734
      %v6777 = vunpack.c.l.b16 %v6735
      %v6778 = vunpack.c.h.b16 %v6735
      %v6779 = vunpack.c.l.b16 %v6736
      %v6780 = vunpack.c.h.b16 %v6736
      %v6781 = vunpack.c.l.b16 %v6737
      %v6782 = vunpack.c.h.b16 %v6737
      %v6783 = vunpack.c.l.b16 %v6738
      %v6784 = vunpack.c.h.b16 %v6738
      %v6785 = vunpack.c.l.b16 %v6739
      %v6786 = vunpack.c.h.b16 %v6739
      %v6787 = vunpack.c.l.b16 %v6740
      %v6788 = vunpack.c.h.b16 %v6740
      %v6789 = vpack.c.b16 %v6759, %v6757
      %v6790 = vpack.c.b16 %v6760, %v6758
      %v6791 = vpack.c.b16 %v6763, %v6761
      %v6792 = vpack.c.b16 %v6764, %v6762
      %v6793 = vpack.c.b16 %v6767, %v6765
      %v6794 = vpack.c.b16 %v6768, %v6766
      %v6795 = vpack.c.b16 %v6771, %v6769
      %v6796 = vpack.c.b16 %v6772, %v6770
      %v6797 = vpack.c.b16 %v6775, %v6773
      %v6798 = vpack.c.b16 %v6776, %v6774
      %v6799 = vpack.c.b16 %v6779, %v6777
      %v6800 = vpack.c.b16 %v6780, %v6778
      %v6801 = vpack.c.b16 %v6783, %v6781
      %v6802 = vpack.c.b16 %v6784, %v6782
      %v6803 = vpack.c.b16 %v6787, %v6785
      %v6804 = vpack.c.b16 %v6788, %v6786
      %6821 = vmatprep.subr.bf16.mxu0 %v6790
      %6822 = vmatpush1.bf16.msra.mxu0 %v6789
      %6823 = vmatprep.subr.bf16.mxu0 %v6792
      %6824 = vmatpush1.bf16.msra.mxu0 %v6791
      %6825 = vmatprep.subr.bf16.mxu0 %v6794
      %6826 = vmatpush1.bf16.msra.mxu0 %v6793
      %6827 = vmatprep.subr.bf16.mxu0 %v6796
      %6828 = vmatpush1.bf16.msra.mxu0 %v6795
      %6829 = vmatprep.subr.bf16.mxu0 %v6798
      %6830 = vmatpush1.bf16.msra.mxu0 %v6797
      %6831 = vmatprep.subr.bf16.mxu0 %v6800
      %6832 = vmatpush1.bf16.msra.mxu0 %v6799
      %6833 = vmatprep.subr.bf16.mxu0 %v6802
      %6834 = vmatpush1.bf16.msra.mxu0 %v6801
      %6835 = vmatprep.subr.bf16.mxu0 %v6804
      %6836 = vmatpush1.bf16.msra.mxu0 %v6803
      %6837 = vmatprep.subr.bf16.mxu0 0
      %6838 = vmatpush1.bf16.msra.mxu0 0
      %6839 = vmatprep.subr.bf16.mxu0 0
      %6840 = vmatpush1.bf16.msra.mxu0 0
      %6841 = vmatprep.subr.bf16.mxu0 0
      %6842 = vmatpush1.bf16.msra.mxu0 0
      %6843 = vmatprep.subr.bf16.mxu0 0
      %6844 = vmatpush1.bf16.msra.mxu0 0
      %6845 = vmatprep.subr.bf16.mxu0 0
      %6846 = vmatpush1.bf16.msra.mxu0 0
      %6847 = vmatprep.subr.bf16.mxu0 0
      %6848 = vmatpush1.bf16.msra.mxu0 0
      %6849 = vmatprep.subr.bf16.mxu0 0
      %6850 = vmatpush1.bf16.msra.mxu0 0
      %6851 = vmatprep.subr.bf16.mxu0 0
      %6852 = vmatpush1.bf16.msra.mxu0 0
      %6853 = vmatprep.mubr.bf16.mxu0 0
      %6854 = vmatmul.mubr.bf16.gmra.mrb[0].mxu0 %v6722
      %v6855 = vpop.f32.mrb[0].mxu0
      %v6856 = vadd.f32 0.0, %v6855
      %v6857 = vpop.f32.mrb[0].mxu0
      %v6858 = vadd.f32 0.0, %v6857
      %v6859 = vpop.f32.mrb[0].mxu0
      %v6860 = vadd.f32 0.0, %v6859
      %v6861 = vpop.f32.mrb[0].mxu0
      %v6862 = vadd.f32 0.0, %v6861
      %6863 = vmatprep.mubr.bf16.mxu0 0
      %6864 = vmatmul.mubr.bf16.gmra.mrb[0].mxu0 %v6723
      %v6865 = vpop.f32.mrb[0].mxu0
      %v6866 = vadd.f32 0.0, %v6865
      %v6867 = vpop.f32.mrb[0].mxu0
      %v6868 = vadd.f32 0.0, %v6867
      %v6869 = vpop.f32.mrb[0].mxu0
      %v6870 = vpop.f32.mrb[0].mxu0
      %6871 = vdwg.mxu0
      %v6872 = vadd.f32 %v6703, %v6856
      %v6873 = vadd.f32 %v6705, %v6858
      %v6874 = vadd.f32 %v6707, %v6860
      %v6875 = vadd.f32 %v6709, %v6862
      %v6876 = vadd.f32 %v6713, %v6866
      %v6877 = vadd.f32 %v6715, %v6868
      %v6878 = vld [vmem:[#allocation3 + $0x6] sm:$0xff]
      %v6879 = vld [vmem:[#allocation3 + $0xe] sm:$0xff]
      %v6880 = vld [vmem:[#allocation3 + $0x16] sm:$0x3f]
      %v6881 = vpack.c.bf16 %v6879, %v6878
      %v6882 = vpack.c.bf16 %v6880, %v6880
      %s6883 = scalar_lea.vmem %s7, 384
      %v6884 = vld [vmem:[%s6883] sm:$0xff]
      %v6885 = vld [vmem:[%s6883 + $0x8] sm:$0xff]
      %v6886 = vld [vmem:[%s6883 + $0x10] sm:$0xff]
      %v6887 = vld [vmem:[%s6883 + $0x18] sm:$0xff]
      %v6888 = vld [vmem:[%s6883 + $0x20] sm:$0xff]
      %v6889 = vld [vmem:[%s6883 + $0x28] sm:$0xff]
      %v6890 = vld [vmem:[%s6883 + $0x30] sm:$0xff]
      %v6891 = vld [vmem:[%s6883 + $0x38] sm:$0xff]
      %v6892 = vld [vmem:[%s6883 + $0x40] sm:$0xff]
      %v6893 = vld [vmem:[%s6883 + $0x48] sm:$0xff]
      %v6894 = vld [vmem:[%s6883 + $0x50] sm:$0xff]
      %v6895 = vld [vmem:[%s6883 + $0x58] sm:$0xff]
      %v6896 = vld [vmem:[%s6883 + $0x60] sm:$0xff]
      %v6897 = vld [vmem:[%s6883 + $0x68] sm:$0xff]
      %v6898 = vld [vmem:[%s6883 + $0x70] sm:$0xff]
      %v6899 = vld [vmem:[%s6883 + $0x78] sm:$0xff]
      %v6916 = vunpack.c.l.b16 %v6884
      %v6917 = vunpack.c.h.b16 %v6884
      %v6918 = vunpack.c.l.b16 %v6885
      %v6919 = vunpack.c.h.b16 %v6885
      %v6920 = vunpack.c.l.b16 %v6886
      %v6921 = vunpack.c.h.b16 %v6886
      %v6922 = vunpack.c.l.b16 %v6887
      %v6923 = vunpack.c.h.b16 %v6887
      %v6924 = vunpack.c.l.b16 %v6888
      %v6925 = vunpack.c.h.b16 %v6888
      %v6926 = vunpack.c.l.b16 %v6889
      %v6927 = vunpack.c.h.b16 %v6889
      %v6928 = vunpack.c.l.b16 %v6890
      %v6929 = vunpack.c.h.b16 %v6890
      %v6930 = vunpack.c.l.b16 %v6891
      %v6931 = vunpack.c.h.b16 %v6891
      %v6932 = vunpack.c.l.b16 %v6892
      %v6933 = vunpack.c.h.b16 %v6892
      %v6934 = vunpack.c.l.b16 %v6893
      %v6935 = vunpack.c.h.b16 %v6893
      %v6936 = vunpack.c.l.b16 %v6894
      %v6937 = vunpack.c.h.b16 %v6894
      %v6938 = vunpack.c.l.b16 %v6895
      %v6939 = vunpack.c.h.b16 %v6895
      %v6940 = vunpack.c.l.b16 %v6896
      %v6941 = vunpack.c.h.b16 %v6896
      %v6942 = vunpack.c.l.b16 %v6897
      %v6943 = vunpack.c.h.b16 %v6897
      %v6944 = vunpack.c.l.b16 %v6898
      %v6945 = vunpack.c.h.b16 %v6898
      %v6946 = vunpack.c.l.b16 %v6899
      %v6947 = vunpack.c.h.b16 %v6899
      %v6948 = vpack.c.b16 %v6918, %v6916
      %v6949 = vpack.c.b16 %v6919, %v6917
      %v6950 = vpack.c.b16 %v6922, %v6920
      %v6951 = vpack.c.b16 %v6923, %v6921
      %v6952 = vpack.c.b16 %v6926, %v6924
      %v6953 = vpack.c.b16 %v6927, %v6925
      %v6954 = vpack.c.b16 %v6930, %v6928
      %v6955 = vpack.c.b16 %v6931, %v6929
      %v6956 = vpack.c.b16 %v6934, %v6932
      %v6957 = vpack.c.b16 %v6935, %v6933
      %v6958 = vpack.c.b16 %v6938, %v6936
      %v6959 = vpack.c.b16 %v6939, %v6937
      %v6960 = vpack.c.b16 %v6942, %v6940
      %v6961 = vpack.c.b16 %v6943, %v6941
      %v6962 = vpack.c.b16 %v6946, %v6944
      %v6963 = vpack.c.b16 %v6947, %v6945
      %6980 = vmatprep.subr.bf16.mxu0 %v6949
      %6981 = vmatpush1.bf16.msra.mxu0 %v6948
      %6982 = vmatprep.subr.bf16.mxu0 %v6951
      %6983 = vmatpush1.bf16.msra.mxu0 %v6950
      %6984 = vmatprep.subr.bf16.mxu0 %v6953
      %6985 = vmatpush1.bf16.msra.mxu0 %v6952
      %6986 = vmatprep.subr.bf16.mxu0 %v6955
      %6987 = vmatpush1.bf16.msra.mxu0 %v6954
      %6988 = vmatprep.subr.bf16.mxu0 %v6957
      %6989 = vmatpush1.bf16.msra.mxu0 %v6956
      %6990 = vmatprep.subr.bf16.mxu0 %v6959
      %6991 = vmatpush1.bf16.msra.mxu0 %v6958
      %6992 = vmatprep.subr.bf16.mxu0 %v6961
      %6993 = vmatpush1.bf16.msra.mxu0 %v6960
      %6994 = vmatprep.subr.bf16.mxu0 %v6963
      %6995 = vmatpush1.bf16.msra.mxu0 %v6962
      %6996 = vmatprep.subr.bf16.mxu0 0
      %6997 = vmatpush1.bf16.msra.mxu0 0
      %6998 = vmatprep.subr.bf16.mxu0 0
      %6999 = vmatpush1.bf16.msra.mxu0 0
      %7000 = vmatprep.subr.bf16.mxu0 0
      %7001 = vmatpush1.bf16.msra.mxu0 0
      %7002 = vmatprep.subr.bf16.mxu0 0
      %7003 = vmatpush1.bf16.msra.mxu0 0
      %7004 = vmatprep.subr.bf16.mxu0 0
      %7005 = vmatpush1.bf16.msra.mxu0 0
      %7006 = vmatprep.subr.bf16.mxu0 0
      %7007 = vmatpush1.bf16.msra.mxu0 0
      %7008 = vmatprep.subr.bf16.mxu0 0
      %7009 = vmatpush1.bf16.msra.mxu0 0
      %7010 = vmatprep.subr.bf16.mxu0 0
      %7011 = vmatpush1.bf16.msra.mxu0 0
      %7012 = vmatprep.mubr.bf16.mxu0 0
      %7013 = vmatmul.mubr.bf16.gmra.mrb[0].mxu0 %v6881
      %v7014 = vpop.f32.mrb[0].mxu0
      %v7015 = vadd.f32 0.0, %v7014
      %v7016 = vpop.f32.mrb[0].mxu0
      %v7017 = vadd.f32 0.0, %v7016
      %v7018 = vpop.f32.mrb[0].mxu0
      %v7019 = vadd.f32 0.0, %v7018
      %v7020 = vpop.f32.mrb[0].mxu0
      %v7021 = vadd.f32 0.0, %v7020
      %7022 = vmatprep.mubr.bf16.mxu0 0
      %7023 = vmatmul.mubr.bf16.gmra.mrb[0].mxu0 %v6882
      %v7024 = vpop.f32.mrb[0].mxu0
      %v7025 = vadd.f32 0.0, %v7024
      %v7026 = vpop.f32.mrb[0].mxu0
      %v7027 = vadd.f32 0.0, %v7026
      %v7028 = vpop.f32.mrb[0].mxu0
      %v7029 = vpop.f32.mrb[0].mxu0
      %7030 = vdwg.mxu0
      %v7031 = vadd.f32 %v6872, %v7015
      %v7032 = vadd.f32 %v6873, %v7017
      %v7033 = vadd.f32 %v6874, %v7019
      %v7034 = vadd.f32 %v6875, %v7021
      %v7035 = vadd.f32 %v6876, %v7025
      %v7036 = vadd.f32 %v6877, %v7027
      %v7037 = vld [vmem:[#allocation3 + $0x7] sm:$0xff]
      %v7038 = vld [vmem:[#allocation3 + $0xf] sm:$0xff]
      %v7039 = vld [vmem:[#allocation3 + $0x17] sm:$0x3f]
      %v7040 = vpack.c.bf16 %v7038, %v7037
      %v7041 = vpack.c.bf16 %v7039, %v7039
      %s7042 = scalar_lea.vmem %s7, 512
      %v7043 = vld [vmem:[%s7042] sm:$0xff]
      %v7044 = vld [vmem:[%s7042 + $0x8] sm:$0xff]
      %v7045 = vld [vmem:[%s7042 + $0x10] sm:$0xff]
      %v7046 = vld [vmem:[%s7042 + $0x18] sm:$0xff]
      %v7047 = vld [vmem:[%s7042 + $0x20] sm:$0xff]
      %v7048 = vld [vmem:[%s7042 + $0x28] sm:$0xff]
      %v7049 = vld [vmem:[%s7042 + $0x30] sm:$0xff]
      %v7050 = vld [vmem:[%s7042 + $0x38] sm:$0xff]
      %v7051 = vld [vmem:[%s7042 + $0x40] sm:$0xff]
      %v7052 = vld [vmem:[%s7042 + $0x48] sm:$0xff]
      %v7053 = vld [vmem:[%s7042 + $0x50] sm:$0xff]
      %v7054 = vld [vmem:[%s7042 + $0x58] sm:$0xff]
      %v7055 = vld [vmem:[%s7042 + $0x60] sm:$0xff]
      %v7056 = vld [vmem:[%s7042 + $0x68] sm:$0xff]
      %v7057 = vld [vmem:[%s7042 + $0x70] sm:$0xff]
      %v7058 = vld [vmem:[%s7042 + $0x78] sm:$0xff]
      %v7075 = vunpack.c.l.b16 %v7043
      %v7076 = vunpack.c.h.b16 %v7043
      %v7077 = vunpack.c.l.b16 %v7044
      %v7078 = vunpack.c.h.b16 %v7044
      %v7079 = vunpack.c.l.b16 %v7045
      %v7080 = vunpack.c.h.b16 %v7045
      %v7081 = vunpack.c.l.b16 %v7046
      %v7082 = vunpack.c.h.b16 %v7046
      %v7083 = vunpack.c.l.b16 %v7047
      %v7084 = vunpack.c.h.b16 %v7047
      %v7085 = vunpack.c.l.b16 %v7048
      %v7086 = vunpack.c.h.b16 %v7048
      %v7087 = vunpack.c.l.b16 %v7049
      %v7088 = vunpack.c.h.b16 %v7049
      %v7089 = vunpack.c.l.b16 %v7050
      %v7090 = vunpack.c.h.b16 %v7050
      %v7091 = vunpack.c.l.b16 %v7051
      %v7092 = vunpack.c.h.b16 %v7051
      %v7093 = vunpack.c.l.b16 %v7052
      %v7094 = vunpack.c.h.b16 %v7052
      %v7095 = vunpack.c.l.b16 %v7053
      %v7096 = vunpack.c.h.b16 %v7053
      %v7097 = vunpack.c.l.b16 %v7054
      %v7098 = vunpack.c.h.b16 %v7054
      %v7099 = vunpack.c.l.b16 %v7055
      %v7100 = vunpack.c.h.b16 %v7055
      %v7101 = vunpack.c.l.b16 %v7056
      %v7102 = vunpack.c.h.b16 %v7056
      %v7103 = vunpack.c.l.b16 %v7057
      %v7104 = vunpack.c.h.b16 %v7057
      %v7105 = vunpack.c.l.b16 %v7058
      %v7106 = vunpack.c.h.b16 %v7058
      %v7107 = vpack.c.b16 %v7077, %v7075
      %v7108 = vpack.c.b16 %v7078, %v7076
      %v7109 = vpack.c.b16 %v7081, %v7079
      %v7110 = vpack.c.b16 %v7082, %v7080
      %v7111 = vpack.c.b16 %v7085, %v7083
      %v7112 = vpack.c.b16 %v7086, %v7084
      %v7113 = vpack.c.b16 %v7089, %v7087
      %v7114 = vpack.c.b16 %v7090, %v7088
      %v7115 = vpack.c.b16 %v7093, %v7091
      %v7116 = vpack.c.b16 %v7094, %v7092
      %v7117 = vpack.c.b16 %v7097, %v7095
      %v7118 = vpack.c.b16 %v7098, %v7096
      %v7119 = vpack.c.b16 %v7101, %v7099
      %v7120 = vpack.c.b16 %v7102, %v7100
      %v7121 = vpack.c.b16 %v7105, %v7103
      %v7122 = vpack.c.b16 %v7106, %v7104
      %7139 = vmatprep.subr.bf16.mxu0 %v7108
      %7140 = vmatpush1.bf16.msra.mxu0 %v7107
      %7141 = vmatprep.subr.bf16.mxu0 %v7110
      %7142 = vmatpush1.bf16.msra.mxu0 %v7109
      %7143 = vmatprep.subr.bf16.mxu0 %v7112
      %7144 = vmatpush1.bf16.msra.mxu0 %v7111
      %7145 = vmatprep.subr.bf16.mxu0 %v7114
      %7146 = vmatpush1.bf16.msra.mxu0 %v7113
      %7147 = vmatprep.subr.bf16.mxu0 %v7116
      %7148 = vmatpush1.bf16.msra.mxu0 %v7115
      %7149 = vmatprep.subr.bf16.mxu0 %v7118
      %7150 = vmatpush1.bf16.msra.mxu0 %v7117
      %7151 = vmatprep.subr.bf16.mxu0 %v7120
      %7152 = vmatpush1.bf16.msra.mxu0 %v7119
      %7153 = vmatprep.subr.bf16.mxu0 %v7122
      %7154 = vmatpush1.bf16.msra.mxu0 %v7121
      %7155 = vmatprep.subr.bf16.mxu0 0
      %7156 = vmatpush1.bf16.msra.mxu0 0
      %7157 = vmatprep.subr.bf16.mxu0 0
      %7158 = vmatpush1.bf16.msra.mxu0 0
      %7159 = vmatprep.subr.bf16.mxu0 0
      %7160 = vmatpush1.bf16.msra.mxu0 0
      %7161 = vmatprep.subr.bf16.mxu0 0
      %7162 = vmatpush1.bf16.msra.mxu0 0
      %7163 = vmatprep.subr.bf16.mxu0 0
      %7164 = vmatpush1.bf16.msra.mxu0 0
      %7165 = vmatprep.subr.bf16.mxu0 0
      %7166 = vmatpush1.bf16.msra.mxu0 0
      %7167 = vmatprep.subr.bf16.mxu0 0
      %7168 = vmatpush1.bf16.msra.mxu0 0
      %7169 = vmatprep.subr.bf16.mxu0 0
      %7170 = vmatpush1.bf16.msra.mxu0 0
      %7171 = vmatprep.mubr.bf16.mxu0 0
      %7172 = vmatmul.mubr.bf16.gmra.mrb[0].mxu0 %v7040
      %v7173 = vpop.f32.mrb[0].mxu0
      %v7174 = vadd.f32 0.0, %v7173
      %v7175 = vpop.f32.mrb[0].mxu0
      %v7176 = vadd.f32 0.0, %v7175
      %v7177 = vpop.f32.mrb[0].mxu0
      %v7178 = vadd.f32 0.0, %v7177
      %v7179 = vpop.f32.mrb[0].mxu0
      %v7180 = vadd.f32 0.0, %v7179
      %7181 = vmatprep.mubr.bf16.mxu0 0
      %7182 = vmatmul.mubr.bf16.gmra.mrb[0].mxu0 %v7041
      %v7183 = vpop.f32.mrb[0].mxu0
      %v7184 = vadd.f32 0.0, %v7183
      %v7185 = vpop.f32.mrb[0].mxu0
      %v7186 = vadd.f32 0.0, %v7185
      %v7187 = vpop.f32.mrb[0].mxu0
      %v7188 = vpop.f32.mrb[0].mxu0
      %7189 = vdwg.mxu0
      %v7190 = vadd.f32 %v7031, %v7174
      %v7191 = vadd.f32 %v7032, %v7176
      %v7192 = vadd.f32 %v7033, %v7178
      %v7193 = vadd.f32 %v7034, %v7180
      %v7194 = vadd.f32 %v7035, %v7184
      %v7195 = vadd.f32 %v7036, %v7186
      %v7196 = vld [vmem:[#allocation3 + $0x8] sm:$0xff]
      %v7197 = vld [vmem:[#allocation3 + $0x10] sm:$0xff]
      %v7198 = vld [vmem:[#allocation3 + $0x18] sm:$0x3f]
      %v7199 = vpack.c.bf16 %v7197, %v7196
      %v7200 = vpack.c.bf16 %v7198, %v7198
      %s7201 = scalar_lea.vmem %s7, 640
      %v7202 = vld [vmem:[%s7201] sm:$0xff]
      %v7203 = vld [vmem:[%s7201 + $0x8] sm:$0xff]
      %v7204 = vld [vmem:[%s7201 + $0x10] sm:$0xff]
      %v7205 = vld [vmem:[%s7201 + $0x18] sm:$0xff]
      %v7206 = vld [vmem:[%s7201 + $0x20] sm:$0xff]
      %v7207 = vld [vmem:[%s7201 + $0x28] sm:$0xff]
      %v7208 = vld [vmem:[%s7201 + $0x30] sm:$0xff]
      %v7209 = vld [vmem:[%s7201 + $0x38] sm:$0xff]
      %v7210 = vld [vmem:[%s7201 + $0x40] sm:$0xff]
      %v7211 = vld [vmem:[%s7201 + $0x48] sm:$0xff]
      %v7212 = vld [vmem:[%s7201 + $0x50] sm:$0xff]
      %v7213 = vld [vmem:[%s7201 + $0x58] sm:$0xff]
      %v7214 = vld [vmem:[%s7201 + $0x60] sm:$0xff]
      %v7215 = vld [vmem:[%s7201 + $0x68] sm:$0xff]
      %v7216 = vld [vmem:[%s7201 + $0x70] sm:$0xff]
      %v7217 = vld [vmem:[%s7201 + $0x78] sm:$0xff]
      %v7234 = vunpack.c.l.b16 %v7202
      %v7235 = vunpack.c.h.b16 %v7202
      %v7236 = vunpack.c.l.b16 %v7203
      %v7237 = vunpack.c.h.b16 %v7203
      %v7238 = vunpack.c.l.b16 %v7204
      %v7239 = vunpack.c.h.b16 %v7204
      %v7240 = vunpack.c.l.b16 %v7205
      %v7241 = vunpack.c.h.b16 %v7205
      %v7242 = vunpack.c.l.b16 %v7206
      %v7243 = vunpack.c.h.b16 %v7206
      %v7244 = vunpack.c.l.b16 %v7207
      %v7245 = vunpack.c.h.b16 %v7207
      %v7246 = vunpack.c.l.b16 %v7208
      %v7247 = vunpack.c.h.b16 %v7208
      %v7248 = vunpack.c.l.b16 %v7209
      %v7249 = vunpack.c.h.b16 %v7209
      %v7250 = vunpack.c.l.b16 %v7210
      %v7251 = vunpack.c.h.b16 %v7210
      %v7252 = vunpack.c.l.b16 %v7211
      %v7253 = vunpack.c.h.b16 %v7211
      %v7254 = vunpack.c.l.b16 %v7212
      %v7255 = vunpack.c.h.b16 %v7212
      %v7256 = vunpack.c.l.b16 %v7213
      %v7257 = vunpack.c.h.b16 %v7213
      %v7258 = vunpack.c.l.b16 %v7214
      %v7259 = vunpack.c.h.b16 %v7214
      %v7260 = vunpack.c.l.b16 %v7215
      %v7261 = vunpack.c.h.b16 %v7215
      %v7262 = vunpack.c.l.b16 %v7216
      %v7263 = vunpack.c.h.b16 %v7216
      %v7264 = vunpack.c.l.b16 %v7217
      %v7265 = vunpack.c.h.b16 %v7217
      %v7266 = vpack.c.b16 %v7236, %v7234
      %v7267 = vpack.c.b16 %v7237, %v7235
      %v7268 = vpack.c.b16 %v7240, %v7238
      %v7269 = vpack.c.b16 %v7241, %v7239
      %v7270 = vpack.c.b16 %v7244, %v7242
      %v7271 = vpack.c.b16 %v7245, %v7243
      %v7272 = vpack.c.b16 %v7248, %v7246
      %v7273 = vpack.c.b16 %v7249, %v7247
      %v7274 = vpack.c.b16 %v7252, %v7250
      %v7275 = vpack.c.b16 %v7253, %v7251
      %v7276 = vpack.c.b16 %v7256, %v7254
      %v7277 = vpack.c.b16 %v7257, %v7255
      %v7278 = vpack.c.b16 %v7260, %v7258
      %v7279 = vpack.c.b16 %v7261, %v7259
      %v7280 = vpack.c.b16 %v7264, %v7262
      %v7281 = vpack.c.b16 %v7265, %v7263
      %7298 = vmatprep.subr.bf16.mxu0 %v7267
      %7299 = vmatpush1.bf16.msra.mxu0 %v7266
      %7300 = vmatprep.subr.bf16.mxu0 %v7269
      %7301 = vmatpush1.bf16.msra.mxu0 %v7268
      %7302 = vmatprep.subr.bf16.mxu0 %v7271
      %7303 = vmatpush1.bf16.msra.mxu0 %v7270
      %7304 = vmatprep.subr.bf16.mxu0 %v7273
      %7305 = vmatpush1.bf16.msra.mxu0 %v7272
      %7306 = vmatprep.subr.bf16.mxu0 %v7275
      %7307 = vmatpush1.bf16.msra.mxu0 %v7274
      %7308 = vmatprep.subr.bf16.mxu0 %v7277
      %7309 = vmatpush1.bf16.msra.mxu0 %v7276
      %7310 = vmatprep.subr.bf16.mxu0 %v7279
      %7311 = vmatpush1.bf16.msra.mxu0 %v7278
      %7312 = vmatprep.subr.bf16.mxu0 %v7281
      %7313 = vmatpush1.bf16.msra.mxu0 %v7280
      %7314 = vmatprep.subr.bf16.mxu0 0
      %7315 = vmatpush1.bf16.msra.mxu0 0
      %7316 = vmatprep.subr.bf16.mxu0 0
      %7317 = vmatpush1.bf16.msra.mxu0 0
      %7318 = vmatprep.subr.bf16.mxu0 0
      %7319 = vmatpush1.bf16.msra.mxu0 0
      %7320 = vmatprep.subr.bf16.mxu0 0
      %7321 = vmatpush1.bf16.msra.mxu0 0
      %7322 = vmatprep.subr.bf16.mxu0 0
      %7323 = vmatpush1.bf16.msra.mxu0 0
      %7324 = vmatprep.subr.bf16.mxu0 0
      %7325 = vmatpush1.bf16.msra.mxu0 0
      %7326 = vmatprep.subr.bf16.mxu0 0
      %7327 = vmatpush1.bf16.msra.mxu0 0
      %7328 = vmatprep.subr.bf16.mxu0 0
      %7329 = vmatpush1.bf16.msra.mxu0 0
      %7330 = vmatprep.mubr.bf16.mxu0 0
      %7331 = vmatmul.mubr.bf16.gmra.mrb[0].mxu0 %v7199
      %v7332 = vpop.f32.mrb[0].mxu0
      %v7333 = vadd.f32 0.0, %v7332
      %v7334 = vpop.f32.mrb[0].mxu0
      %v7335 = vadd.f32 0.0, %v7334
      %v7336 = vpop.f32.mrb[0].mxu0
      %v7337 = vadd.f32 0.0, %v7336
      %v7338 = vpop.f32.mrb[0].mxu0
      %v7339 = vadd.f32 0.0, %v7338
      %7340 = vmatprep.mubr.bf16.mxu0 0
      %7341 = vmatmul.mubr.bf16.gmra.mrb[0].mxu0 %v7200
      %v7342 = vpop.f32.mrb[0].mxu0
      %v7343 = vadd.f32 0.0, %v7342
      %v7344 = vpop.f32.mrb[0].mxu0
      %v7345 = vadd.f32 0.0, %v7344
      %v7346 = vpop.f32.mrb[0].mxu0
      %v7347 = vpop.f32.mrb[0].mxu0
      %7348 = vdwg.mxu0
      %v7349 = vadd.f32 %v7190, %v7333
      %v7350 = vadd.f32 %v7191, %v7335
      %v7351 = vadd.f32 %v7192, %v7337
      %v7352 = vadd.f32 %v7193, %v7339
      %v7353 = vadd.f32 %v7194, %v7343
      %v7354 = vadd.f32 %v7195, %v7345
      %v7355 = vld [vmem:[#allocation3 + $0xc] sm:$0xff]
      %v7356 = vld [vmem:[#allocation3 + $0x14] sm:$0xff]
      %v7357 = vld [vmem:[#allocation3 + $0x1c] sm:$0x3f]
      %v7358 = vpack.c.bf16 %v7356, %v7355
      %v7359 = vpack.c.bf16 %v7357, %v7357
      %s7360 = scalar_lea.vmem %s7, 768
      %v7361 = vld [vmem:[%s7360] sm:$0xff]
      %v7362 = vld [vmem:[%s7360 + $0x8] sm:$0xff]
      %v7363 = vld [vmem:[%s7360 + $0x10] sm:$0xff]
      %v7364 = vld [vmem:[%s7360 + $0x18] sm:$0xff]
      %v7365 = vld [vmem:[%s7360 + $0x20] sm:$0xff]
      %v7366 = vld [vmem:[%s7360 + $0x28] sm:$0xff]
      %v7367 = vld [vmem:[%s7360 + $0x30] sm:$0xff]
      %v7368 = vld [vmem:[%s7360 + $0x38] sm:$0xff]
      %v7369 = vld [vmem:[%s7360 + $0x40] sm:$0xff]
      %v7370 = vld [vmem:[%s7360 + $0x48] sm:$0xff]
      %v7371 = vld [vmem:[%s7360 + $0x50] sm:$0xff]
      %v7372 = vld [vmem:[%s7360 + $0x58] sm:$0xff]
      %v7373 = vld [vmem:[%s7360 + $0x60] sm:$0xff]
      %v7374 = vld [vmem:[%s7360 + $0x68] sm:$0xff]
      %v7375 = vld [vmem:[%s7360 + $0x70] sm:$0xff]
      %v7376 = vld [vmem:[%s7360 + $0x78] sm:$0xff]
      %v7393 = vunpack.c.l.b16 %v7361
      %v7394 = vunpack.c.h.b16 %v7361
      %v7395 = vunpack.c.l.b16 %v7362
      %v7396 = vunpack.c.h.b16 %v7362
      %v7397 = vunpack.c.l.b16 %v7363
      %v7398 = vunpack.c.h.b16 %v7363
      %v7399 = vunpack.c.l.b16 %v7364
      %v7400 = vunpack.c.h.b16 %v7364
      %v7401 = vunpack.c.l.b16 %v7365
      %v7402 = vunpack.c.h.b16 %v7365
      %v7403 = vunpack.c.l.b16 %v7366
      %v7404 = vunpack.c.h.b16 %v7366
      %v7405 = vunpack.c.l.b16 %v7367
      %v7406 = vunpack.c.h.b16 %v7367
      %v7407 = vunpack.c.l.b16 %v7368
      %v7408 = vunpack.c.h.b16 %v7368
      %v7409 = vunpack.c.l.b16 %v7369
      %v7410 = vunpack.c.h.b16 %v7369
      %v7411 = vunpack.c.l.b16 %v7370
      %v7412 = vunpack.c.h.b16 %v7370
      %v7413 = vunpack.c.l.b16 %v7371
      %v7414 = vunpack.c.h.b16 %v7371
      %v7415 = vunpack.c.l.b16 %v7372
      %v7416 = vunpack.c.h.b16 %v7372
      %v7417 = vunpack.c.l.b16 %v7373
      %v7418 = vunpack.c.h.b16 %v7373
      %v7419 = vunpack.c.l.b16 %v7374
      %v7420 = vunpack.c.h.b16 %v7374
      %v7421 = vunpack.c.l.b16 %v7375
      %v7422 = vunpack.c.h.b16 %v7375
      %v7423 = vunpack.c.l.b16 %v7376
      %v7424 = vunpack.c.h.b16 %v7376
      %v7425 = vpack.c.b16 %v7395, %v7393
      %v7426 = vpack.c.b16 %v7396, %v7394
      %v7427 = vpack.c.b16 %v7399, %v7397
      %v7428 = vpack.c.b16 %v7400, %v7398
      %v7429 = vpack.c.b16 %v7403, %v7401
      %v7430 = vpack.c.b16 %v7404, %v7402
      %v7431 = vpack.c.b16 %v7407, %v7405
      %v7432 = vpack.c.b16 %v7408, %v7406
      %v7433 = vpack.c.b16 %v7411, %v7409
      %v7434 = vpack.c.b16 %v7412, %v7410
      %v7435 = vpack.c.b16 %v7415, %v7413
      %v7436 = vpack.c.b16 %v7416, %v7414
      %v7437 = vpack.c.b16 %v7419, %v7417
      %v7438 = vpack.c.b16 %v7420, %v7418
      %v7439 = vpack.c.b16 %v7423, %v7421
      %v7440 = vpack.c.b16 %v7424, %v7422
      %7457 = vmatprep.subr.bf16.mxu0 %v7426
      %7458 = vmatpush1.bf16.msra.mxu0 %v7425
      %7459 = vmatprep.subr.bf16.mxu0 %v7428
      %7460 = vmatpush1.bf16.msra.mxu0 %v7427
      %7461 = vmatprep.subr.bf16.mxu0 %v7430
      %7462 = vmatpush1.bf16.msra.mxu0 %v7429
      %7463 = vmatprep.subr.bf16.mxu0 %v7432
      %7464 = vmatpush1.bf16.msra.mxu0 %v7431
      %7465 = vmatprep.subr.bf16.mxu0 %v7434
      %7466 = vmatpush1.bf16.msra.mxu0 %v7433
      %7467 = vmatprep.subr.bf16.mxu0 %v7436
      %7468 = vmatpush1.bf16.msra.mxu0 %v7435
      %7469 = vmatprep.subr.bf16.mxu0 %v7438
      %7470 = vmatpush1.bf16.msra.mxu0 %v7437
      %7471 = vmatprep.subr.bf16.mxu0 %v7440
      %7472 = vmatpush1.bf16.msra.mxu0 %v7439
      %7473 = vmatprep.subr.bf16.mxu0 0
      %7474 = vmatpush1.bf16.msra.mxu0 0
      %7475 = vmatprep.subr.bf16.mxu0 0
      %7476 = vmatpush1.bf16.msra.mxu0 0
      %7477 = vmatprep.subr.bf16.mxu0 0
      %7478 = vmatpush1.bf16.msra.mxu0 0
      %7479 = vmatprep.subr.bf16.mxu0 0
      %7480 = vmatpush1.bf16.msra.mxu0 0
      %7481 = vmatprep.subr.bf16.mxu0 0
      %7482 = vmatpush1.bf16.msra.mxu0 0
      %7483 = vmatprep.subr.bf16.mxu0 0
      %7484 = vmatpush1.bf16.msra.mxu0 0
      %7485 = vmatprep.subr.bf16.mxu0 0
      %7486 = vmatpush1.bf16.msra.mxu0 0
      %7487 = vmatprep.subr.bf16.mxu0 0
      %7488 = vmatpush1.bf16.msra.mxu0 0
      %7489 = vmatprep.mubr.bf16.mxu0 0
      %7490 = vmatmul.mubr.bf16.gmra.mrb[0].mxu0 %v7358
      %v7491 = vpop.f32.mrb[0].mxu0
      %v7492 = vadd.f32 0.0, %v7491
      %v7493 = vpop.f32.mrb[0].mxu0
      %v7494 = vadd.f32 0.0, %v7493
      %v7495 = vpop.f32.mrb[0].mxu0
      %v7496 = vadd.f32 0.0, %v7495
      %v7497 = vpop.f32.mrb[0].mxu0
      %v7498 = vadd.f32 0.0, %v7497
      %7499 = vmatprep.mubr.bf16.mxu0 0
      %7500 = vmatmul.mubr.bf16.gmra.mrb[0].mxu0 %v7359
      %v7501 = vpop.f32.mrb[0].mxu0
      %v7502 = vadd.f32 0.0, %v7501
      %v7503 = vpop.f32.mrb[0].mxu0
      %v7504 = vadd.f32 0.0, %v7503
      %v7505 = vpop.f32.mrb[0].mxu0
      %v7506 = vpop.f32.mrb[0].mxu0
      %7507 = vdwg.mxu0
      %v7508 = vadd.f32 %v7349, %v7492
      %v7509 = vadd.f32 %v7350, %v7494
      %v7510 = vadd.f32 %v7351, %v7496
      %v7511 = vadd.f32 %v7352, %v7498
      %v7512 = vadd.f32 %v7353, %v7502
      %v7513 = vadd.f32 %v7354, %v7504
      %v7514 = vld [vmem:[#allocation3 + $0xd] sm:$0xff]
      %v7515 = vld [vmem:[#allocation3 + $0x15] sm:$0xff]
      %v7516 = vld [vmem:[#allocation3 + $0x1d] sm:$0x3f]
      %v7517 = vpack.c.bf16 %v7515, %v7514
      %v7518 = vpack.c.bf16 %v7516, %v7516
      %s7519 = scalar_lea.vmem %s7, 896
      %v7520 = vld [vmem:[%s7519] sm:$0xff]
      %v7521 = vld [vmem:[%s7519 + $0x8] sm:$0xff]
      %v7522 = vld [vmem:[%s7519 + $0x10] sm:$0xff]
      %v7523 = vld [vmem:[%s7519 + $0x18] sm:$0xff]
      %v7524 = vld [vmem:[%s7519 + $0x20] sm:$0xff]
      %v7525 = vld [vmem:[%s7519 + $0x28] sm:$0xff]
      %v7526 = vld [vmem:[%s7519 + $0x30] sm:$0xff]
      %v7527 = vld [vmem:[%s7519 + $0x38] sm:$0xff]
      %v7528 = vld [vmem:[%s7519 + $0x40] sm:$0xff]
      %v7529 = vld [vmem:[%s7519 + $0x48] sm:$0xff]
      %v7530 = vld [vmem:[%s7519 + $0x50] sm:$0xff]
      %v7531 = vld [vmem:[%s7519 + $0x58] sm:$0xff]
      %v7532 = vld [vmem:[%s7519 + $0x60] sm:$0xff]
      %v7533 = vld [vmem:[%s7519 + $0x68] sm:$0xff]
      %v7534 = vld [vmem:[%s7519 + $0x70] sm:$0xff]
      %v7535 = vld [vmem:[%s7519 + $0x78] sm:$0xff]
      %v7552 = vunpack.c.l.b16 %v7520
      %v7553 = vunpack.c.h.b16 %v7520
      %v7554 = vunpack.c.l.b16 %v7521
      %v7555 = vunpack.c.h.b16 %v7521
      %v7556 = vunpack.c.l.b16 %v7522
      %v7557 = vunpack.c.h.b16 %v7522
      %v7558 = vunpack.c.l.b16 %v7523
      %v7559 = vunpack.c.h.b16 %v7523
      %v7560 = vunpack.c.l.b16 %v7524
      %v7561 = vunpack.c.h.b16 %v7524
      %v7562 = vunpack.c.l.b16 %v7525
      %v7563 = vunpack.c.h.b16 %v7525
      %v7564 = vunpack.c.l.b16 %v7526
      %v7565 = vunpack.c.h.b16 %v7526
      %v7566 = vunpack.c.l.b16 %v7527
      %v7567 = vunpack.c.h.b16 %v7527
      %v7568 = vunpack.c.l.b16 %v7528
      %v7569 = vunpack.c.h.b16 %v7528
      %v7570 = vunpack.c.l.b16 %v7529
      %v7571 = vunpack.c.h.b16 %v7529
      %v7572 = vunpack.c.l.b16 %v7530
      %v7573 = vunpack.c.h.b16 %v7530
      %v7574 = vunpack.c.l.b16 %v7531
      %v7575 = vunpack.c.h.b16 %v7531
      %v7576 = vunpack.c.l.b16 %v7532
      %v7577 = vunpack.c.h.b16 %v7532
      %v7578 = vunpack.c.l.b16 %v7533
      %v7579 = vunpack.c.h.b16 %v7533
      %v7580 = vunpack.c.l.b16 %v7534
      %v7581 = vunpack.c.h.b16 %v7534
      %v7582 = vunpack.c.l.b16 %v7535
      %v7583 = vunpack.c.h.b16 %v7535
      %v7584 = vpack.c.b16 %v7554, %v7552
      %v7585 = vpack.c.b16 %v7555, %v7553
      %v7586 = vpack.c.b16 %v7558, %v7556
      %v7587 = vpack.c.b16 %v7559, %v7557
      %v7588 = vpack.c.b16 %v7562, %v7560
      %v7589 = vpack.c.b16 %v7563, %v7561
      %v7590 = vpack.c.b16 %v7566, %v7564
      %v7591 = vpack.c.b16 %v7567, %v7565
      %v7592 = vpack.c.b16 %v7570, %v7568
      %v7593 = vpack.c.b16 %v7571, %v7569
      %v7594 = vpack.c.b16 %v7574, %v7572
      %v7595 = vpack.c.b16 %v7575, %v7573
      %v7596 = vpack.c.b16 %v7578, %v7576
      %v7597 = vpack.c.b16 %v7579, %v7577
      %v7598 = vpack.c.b16 %v7582, %v7580
      %v7599 = vpack.c.b16 %v7583, %v7581
      %7616 = vmatprep.subr.bf16.mxu0 %v7585
      %7617 = vmatpush1.bf16.msra.mxu0 %v7584
      %7618 = vmatprep.subr.bf16.mxu0 %v7587
      %7619 = vmatpush1.bf16.msra.mxu0 %v7586
      %7620 = vmatprep.subr.bf16.mxu0 %v7589
      %7621 = vmatpush1.bf16.msra.mxu0 %v7588
      %7622 = vmatprep.subr.bf16.mxu0 %v7591
      %7623 = vmatpush1.bf16.msra.mxu0 %v7590
      %7624 = vmatprep.subr.bf16.mxu0 %v7593
      %7625 = vmatpush1.bf16.msra.mxu0 %v7592
      %7626 = vmatprep.subr.bf16.mxu0 %v7595
      %7627 = vmatpush1.bf16.msra.mxu0 %v7594
      %7628 = vmatprep.subr.bf16.mxu0 %v7597
      %7629 = vmatpush1.bf16.msra.mxu0 %v7596
      %7630 = vmatprep.subr.bf16.mxu0 %v7599
      %7631 = vmatpush1.bf16.msra.mxu0 %v7598
      %7632 = vmatprep.subr.bf16.mxu0 0
      %7633 = vmatpush1.bf16.msra.mxu0 0
      %7634 = vmatprep.subr.bf16.mxu0 0
      %7635 = vmatpush1.bf16.msra.mxu0 0
      %7636 = vmatprep.subr.bf16.mxu0 0
      %7637 = vmatpush1.bf16.msra.mxu0 0
      %7638 = vmatprep.subr.bf16.mxu0 0
      %7639 = vmatpush1.bf16.msra.mxu0 0
      %7640 = vmatprep.subr.bf16.mxu0 0
      %7641 = vmatpush1.bf16.msra.mxu0 0
      %7642 = vmatprep.subr.bf16.mxu0 0
      %7643 = vmatpush1.bf16.msra.mxu0 0
      %7644 = vmatprep.subr.bf16.mxu0 0
      %7645 = vmatpush1.bf16.msra.mxu0 0
      %7646 = vmatprep.subr.bf16.mxu0 0
      %7647 = vmatpush1.bf16.msra.mxu0 0
      %7648 = vmatprep.mubr.bf16.mxu0 0
      %7649 = vmatmul.mubr.bf16.gmra.mrb[0].mxu0 %v7517
      %v7650 = vpop.f32.mrb[0].mxu0
      %v7651 = vadd.f32 0.0, %v7650
      %v7652 = vpop.f32.mrb[0].mxu0
      %v7653 = vadd.f32 0.0, %v7652
      %v7654 = vpop.f32.mrb[0].mxu0
      %v7655 = vadd.f32 0.0, %v7654
      %v7656 = vpop.f32.mrb[0].mxu0
      %v7657 = vadd.f32 0.0, %v7656
      %7658 = vmatprep.mubr.bf16.mxu0 0
      %7659 = vmatmul.mubr.bf16.gmra.mrb[0].mxu0 %v7518
      %v7660 = vpop.f32.mrb[0].mxu0
      %v7661 = vadd.f32 0.0, %v7660
      %v7662 = vpop.f32.mrb[0].mxu0
      %v7663 = vadd.f32 0.0, %v7662
      %v7664 = vpop.f32.mrb[0].mxu0
      %v7665 = vpop.f32.mrb[0].mxu0
      %7666 = vdwg.mxu0
      %v7667 = vadd.f32 %v7508, %v7651
      %v7668 = vadd.f32 %v7509, %v7653
      %v7669 = vadd.f32 %v7510, %v7655
      %v7670 = vadd.f32 %v7511, %v7657
      %v7671 = vadd.f32 %v7512, %v7661
      %v7672 = vadd.f32 %v7513, %v7663
      %v7673 = vld [vmem:[#allocation3 + $0xe] sm:$0xff]
      %v7674 = vld [vmem:[#allocation3 + $0x16] sm:$0xff]
      %v7675 = vld [vmem:[#allocation3 + $0x1e] sm:$0x3f]
      %v7676 = vpack.c.bf16 %v7674, %v7673
      %v7677 = vpack.c.bf16 %v7675, %v7675
      %s7678 = scalar_lea.vmem %s7, 1024
      %v7679 = vld [vmem:[%s7678] sm:$0xff]
      %v7680 = vld [vmem:[%s7678 + $0x8] sm:$0xff]
      %v7681 = vld [vmem:[%s7678 + $0x10] sm:$0xff]
      %v7682 = vld [vmem:[%s7678 + $0x18] sm:$0xff]
      %v7683 = vld [vmem:[%s7678 + $0x20] sm:$0xff]
      %v7684 = vld [vmem:[%s7678 + $0x28] sm:$0xff]
      %v7685 = vld [vmem:[%s7678 + $0x30] sm:$0xff]
      %v7686 = vld [vmem:[%s7678 + $0x38] sm:$0xff]
      %v7687 = vld [vmem:[%s7678 + $0x40] sm:$0xff]
      %v7688 = vld [vmem:[%s7678 + $0x48] sm:$0xff]
      %v7689 = vld [vmem:[%s7678 + $0x50] sm:$0xff]
      %v7690 = vld [vmem:[%s7678 + $0x58] sm:$0xff]
      %v7691 = vld [vmem:[%s7678 + $0x60] sm:$0xff]
      %v7692 = vld [vmem:[%s7678 + $0x68] sm:$0xff]
      %v7693 = vld [vmem:[%s7678 + $0x70] sm:$0xff]
      %v7694 = vld [vmem:[%s7678 + $0x78] sm:$0xff]
      %v7711 = vunpack.c.l.b16 %v7679
      %v7712 = vunpack.c.h.b16 %v7679
      %v7713 = vunpack.c.l.b16 %v7680
      %v7714 = vunpack.c.h.b16 %v7680
      %v7715 = vunpack.c.l.b16 %v7681
      %v7716 = vunpack.c.h.b16 %v7681
      %v7717 = vunpack.c.l.b16 %v7682
      %v7718 = vunpack.c.h.b16 %v7682
      %v7719 = vunpack.c.l.b16 %v7683
      %v7720 = vunpack.c.h.b16 %v7683
      %v7721 = vunpack.c.l.b16 %v7684
      %v7722 = vunpack.c.h.b16 %v7684
      %v7723 = vunpack.c.l.b16 %v7685
      %v7724 = vunpack.c.h.b16 %v7685
      %v7725 = vunpack.c.l.b16 %v7686
      %v7726 = vunpack.c.h.b16 %v7686
      %v7727 = vunpack.c.l.b16 %v7687
      %v7728 = vunpack.c.h.b16 %v7687
      %v7729 = vunpack.c.l.b16 %v7688
      %v7730 = vunpack.c.h.b16 %v7688
      %v7731 = vunpack.c.l.b16 %v7689
      %v7732 = vunpack.c.h.b16 %v7689
      %v7733 = vunpack.c.l.b16 %v7690
      %v7734 = vunpack.c.h.b16 %v7690
      %v7735 = vunpack.c.l.b16 %v7691
      %v7736 = vunpack.c.h.b16 %v7691
      %v7737 = vunpack.c.l.b16 %v7692
      %v7738 = vunpack.c.h.b16 %v7692
      %v7739 = vunpack.c.l.b16 %v7693
      %v7740 = vunpack.c.h.b16 %v7693
      %v7741 = vunpack.c.l.b16 %v7694
      %v7742 = vunpack.c.h.b16 %v7694
      %v7743 = vpack.c.b16 %v7713, %v7711
      %v7744 = vpack.c.b16 %v7714, %v7712
      %v7745 = vpack.c.b16 %v7717, %v7715
      %v7746 = vpack.c.b16 %v7718, %v7716
      %v7747 = vpack.c.b16 %v7721, %v7719
      %v7748 = vpack.c.b16 %v7722, %v7720
      %v7749 = vpack.c.b16 %v7725, %v7723
      %v7750 = vpack.c.b16 %v7726, %v7724
      %v7751 = vpack.c.b16 %v7729, %v7727
      %v7752 = vpack.c.b16 %v7730, %v7728
      %v7753 = vpack.c.b16 %v7733, %v7731
      %v7754 = vpack.c.b16 %v7734, %v7732
      %v7755 = vpack.c.b16 %v7737, %v7735
      %v7756 = vpack.c.b16 %v7738, %v7736
      %v7757 = vpack.c.b16 %v7741, %v7739
      %v7758 = vpack.c.b16 %v7742, %v7740
      %7775 = vmatprep.subr.bf16.mxu0 %v7744
      %7776 = vmatpush1.bf16.msra.mxu0 %v7743
      %7777 = vmatprep.subr.bf16.mxu0 %v7746
      %7778 = vmatpush1.bf16.msra.mxu0 %v7745
      %7779 = vmatprep.subr.bf16.mxu0 %v7748
      %7780 = vmatpush1.bf16.msra.mxu0 %v7747
      %7781 = vmatprep.subr.bf16.mxu0 %v7750
      %7782 = vmatpush1.bf16.msra.mxu0 %v7749
      %7783 = vmatprep.subr.bf16.mxu0 %v7752
      %7784 = vmatpush1.bf16.msra.mxu0 %v7751
      %7785 = vmatprep.subr.bf16.mxu0 %v7754
      %7786 = vmatpush1.bf16.msra.mxu0 %v7753
      %7787 = vmatprep.subr.bf16.mxu0 %v7756
      %7788 = vmatpush1.bf16.msra.mxu0 %v7755
      %7789 = vmatprep.subr.bf16.mxu0 %v7758
      %7790 = vmatpush1.bf16.msra.mxu0 %v7757
      %7791 = vmatprep.subr.bf16.mxu0 0
      %7792 = vmatpush1.bf16.msra.mxu0 0
      %7793 = vmatprep.subr.bf16.mxu0 0
      %7794 = vmatpush1.bf16.msra.mxu0 0
      %7795 = vmatprep.subr.bf16.mxu0 0
      %7796 = vmatpush1.bf16.msra.mxu0 0
      %7797 = vmatprep.subr.bf16.mxu0 0
      %7798 = vmatpush1.bf16.msra.mxu0 0
      %7799 = vmatprep.subr.bf16.mxu0 0
      %7800 = vmatpush1.bf16.msra.mxu0 0
      %7801 = vmatprep.subr.bf16.mxu0 0
      %7802 = vmatpush1.bf16.msra.mxu0 0
      %7803 = vmatprep.subr.bf16.mxu0 0
      %7804 = vmatpush1.bf16.msra.mxu0 0
      %7805 = vmatprep.subr.bf16.mxu0 0
      %7806 = vmatpush1.bf16.msra.mxu0 0
      %7807 = vmatprep.mubr.bf16.mxu0 0
      %7808 = vmatmul.mubr.bf16.gmra.mrb[0].mxu0 %v7676
      %v7809 = vpop.f32.mrb[0].mxu0
      %v7810 = vadd.f32 0.0, %v7809
      %v7811 = vpop.f32.mrb[0].mxu0
      %v7812 = vadd.f32 0.0, %v7811
      %v7813 = vpop.f32.mrb[0].mxu0
      %v7814 = vadd.f32 0.0, %v7813
      %v7815 = vpop.f32.mrb[0].mxu0
      %v7816 = vadd.f32 0.0, %v7815
      %7817 = vmatprep.mubr.bf16.mxu0 0
      %7818 = vmatmul.mubr.bf16.gmra.mrb[0].mxu0 %v7677
      %v7819 = vpop.f32.mrb[0].mxu0
      %v7820 = vadd.f32 0.0, %v7819
      %v7821 = vpop.f32.mrb[0].mxu0
      %v7822 = vadd.f32 0.0, %v7821
      %v7823 = vpop.f32.mrb[0].mxu0
      %v7824 = vpop.f32.mrb[0].mxu0
      %7825 = vdwg.mxu0
      %v7826 = vadd.f32 %v7667, %v7810
      %v7827 = vadd.f32 %v7668, %v7812
      %v7828 = vadd.f32 %v7669, %v7814
      %v7829 = vadd.f32 %v7670, %v7816
      %v7830 = vadd.f32 %v7671, %v7820
      %v7831 = vadd.f32 %v7672, %v7822
      %v7832 = vld [vmem:[%s8] sm:$0x3]
      %v7834 = vlaneseq
      %v7835 = vshrl.u32 %v7834, 7
      %v7836 = vsub.s32 0, %v7835
      %v7837 = vrot.slane %v7832, %v7836
      %v7838 = vlaneseq
      %v7839 = vshrl.u32 %v7838, 7
      %v7840 = vsub.s32 1, %v7839
      %v7841 = vrot.slane %v7832, %v7840
      %v7844 = vadd.f32 %v7826, %v7837
      %v7845 = vadd.f32 %v7827, %v7841
      %v7846 = vadd.f32 %v7828, %v7837
      %v7847 = vadd.f32 %v7829, %v7841
      %v7848 = vadd.f32 %v7830, %v7837
      %v7849 = vadd.f32 %v7831, %v7841
      %v7850 = vmax.f32 %v7844, 0.0
      %v7851 = vmax.f32 %v7845, 0.0
      %v7852 = vmax.f32 %v7846, 0.0
      %v7853 = vmax.f32 %v7847, 0.0
      %v7854 = vmax.f32 %v7848, 0.0
      %v7855 = vmax.f32 %v7849, 0.0
      %v7856 = vpack.c.bf16 %v7852, %v7850
      %v7857 = vpack.c.bf16 %v7853, %v7851
      %v7858 = vpack.c.bf16 %v7854, %v7854
      %v7859 = vpack.c.bf16 %v7855, %v7855
      %v7860 = vld [vmem:[%s9] sm:$0x3]
      %vm7861 = vcmask 179200
      %v7863 = vsel %vm7861, %v7860, 0
      %vm7865 = vcmask 1042432
      %v7867 = vsel %vm7865, %v7858, 0
      %v7870 = vsel %vm7865, %v7859, 0
      %7872 = vmatprep.subr.bf16.mxu0 %v7857
      %7873 = vmatpush1.bf16.msra.mxu0 %v7856
      %7874 = vmatprep.subr.bf16.mxu0 %v7870
      %7875 = vmatpush1.bf16.msra.mxu0 %v7867
      %7876 = vmatprep.subr.bf16.mxu0 0
      %7877 = vmatpush1.bf16.msra.mxu0 0
      %7878 = vmatprep.subr.bf16.mxu0 0
      %7879 = vmatpush1.bf16.msra.mxu0 0
      %7880 = vmatprep.subr.bf16.mxu0 0
      %7881 = vmatpush1.bf16.msra.mxu0 0
      %7882 = vmatprep.subr.bf16.mxu0 0
      %7883 = vmatpush1.bf16.msra.mxu0 0
      %7884 = vmatprep.subr.bf16.mxu0 0
      %7885 = vmatpush1.bf16.msra.mxu0 0
      %7886 = vmatprep.subr.bf16.mxu0 0
      %7887 = vmatpush1.bf16.msra.mxu0 0
      %7888 = vmatprep.subr.bf16.mxu0 0
      %7889 = vmatpush1.bf16.msra.mxu0 0
      %7890 = vmatprep.subr.bf16.mxu0 0
      %7891 = vmatpush1.bf16.msra.mxu0 0
      %7892 = vmatprep.subr.bf16.mxu0 0
      %7893 = vmatpush1.bf16.msra.mxu0 0
      %7894 = vmatprep.subr.bf16.mxu0 0
      %7895 = vmatpush1.bf16.msra.mxu0 0
      %7896 = vmatprep.subr.bf16.mxu0 0
      %7897 = vmatpush1.bf16.msra.mxu0 0
      %7898 = vmatprep.subr.bf16.mxu0 0
      %7899 = vmatpush1.bf16.msra.mxu0 0
      %7900 = vmatprep.subr.bf16.mxu0 0
      %7901 = vmatpush1.bf16.msra.mxu0 0
      %7902 = vmatprep.subr.bf16.mxu0 0
      %7903 = vmatpush1.bf16.msra.mxu0 0
      %7904 = vmatprep.mubr.bf16.mxu0 0
      %7905 = vmatmul.mubr.bf16.gmra.mrb[0].mxu0 %v7863
      %v7906 = vpop.f32.mrb[0].mxu0
      %v7907 = vadd.f32 0.0, %v7906
      %v7908 = vpop.f32.mrb[0].mxu0
      %v7909 = vadd.f32 0.0, %v7908
      %v7910 = vpop.f32.mrb[0].mxu0
      %v7911 = vpop.f32.mrb[0].mxu0
      %7912 = vdwg.mxu0
      %s7913 = scalar_lea.vmem %s9, 2
      %v7914 = vld [vmem:[%s7913] sm:$0x3]
      %v7916 = vsel %vm7861, %v7914, 0
      %7918 = vmatprep.subr.bf16.mxu0 %v7857
      %7919 = vmatpush1.bf16.msra.mxu0 %v7856
      %7920 = vmatprep.subr.bf16.mxu0 %v7870
      %7921 = vmatpush1.bf16.msra.mxu0 %v7867
      %7922 = vmatprep.subr.bf16.mxu0 0
      %7923 = vmatpush1.bf16.msra.mxu0 0
      %7924 = vmatprep.subr.bf16.mxu0 0
      %7925 = vmatpush1.bf16.msra.mxu0 0
      %7926 = vmatprep.subr.bf16.mxu0 0
      %7927 = vmatpush1.bf16.msra.mxu0 0
      %7928 = vmatprep.subr.bf16.mxu0 0
      %7929 = vmatpush1.bf16.msra.mxu0 0
      %7930 = vmatprep.subr.bf16.mxu0 0
      %7931 = vmatpush1.bf16.msra.mxu0 0
      %7932 = vmatprep.subr.bf16.mxu0 0
      %7933 = vmatpush1.bf16.msra.mxu0 0
      %7934 = vmatprep.subr.bf16.mxu0 0
      %7935 = vmatpush1.bf16.msra.mxu0 0
      %7936 = vmatprep.subr.bf16.mxu0 0
      %7937 = vmatpush1.bf16.msra.mxu0 0
      %7938 = vmatprep.subr.bf16.mxu0 0
      %7939 = vmatpush1.bf16.msra.mxu0 0
      %7940 = vmatprep.subr.bf16.mxu0 0
      %7941 = vmatpush1.bf16.msra.mxu0 0
      %7942 = vmatprep.subr.bf16.mxu0 0
      %7943 = vmatpush1.bf16.msra.mxu0 0
      %7944 = vmatprep.subr.bf16.mxu0 0
      %7945 = vmatpush1.bf16.msra.mxu0 0
      %7946 = vmatprep.subr.bf16.mxu0 0
      %7947 = vmatpush1.bf16.msra.mxu0 0
      %7948 = vmatprep.subr.bf16.mxu0 0
      %7949 = vmatpush1.bf16.msra.mxu0 0
      %7950 = vmatprep.mubr.bf16.mxu0 0
      %7951 = vmatmul.mubr.bf16.gmra.mrb[0].mxu0 %v7916
      %v7952 = vpop.f32.mrb[0].mxu0
      %v7953 = vadd.f32 0.0, %v7952
      %v7954 = vpop.f32.mrb[0].mxu0
      %v7955 = vadd.f32 0.0, %v7954
      %v7956 = vpop.f32.mrb[0].mxu0
      %v7957 = vpop.f32.mrb[0].mxu0
      %7958 = vdwg.mxu0
      %v7959 = vmax.f32 %v7907, %v7953
      %v7960 = vmax.f32 %v7909, %v7955
      %s7961 = scalar_lea.vmem %s9, 4
      %v7962 = vld [vmem:[%s7961] sm:$0x3]
      %v7964 = vsel %vm7861, %v7962, 0
      %7966 = vmatprep.subr.bf16.mxu0 %v7857
      %7967 = vmatpush1.bf16.msra.mxu0 %v7856
      %7968 = vmatprep.subr.bf16.mxu0 %v7870
      %7969 = vmatpush1.bf16.msra.mxu0 %v7867
      %7970 = vmatprep.subr.bf16.mxu0 0
      %7971 = vmatpush1.bf16.msra.mxu0 0
      %7972 = vmatprep.subr.bf16.mxu0 0
      %7973 = vmatpush1.bf16.msra.mxu0 0
      %7974 = vmatprep.subr.bf16.mxu0 0
      %7975 = vmatpush1.bf16.msra.mxu0 0
      %7976 = vmatprep.subr.bf16.mxu0 0
      %7977 = vmatpush1.bf16.msra.mxu0 0
      %7978 = vmatprep.subr.bf16.mxu0 0
      %7979 = vmatpush1.bf16.msra.mxu0 0
      %7980 = vmatprep.subr.bf16.mxu0 0
      %7981 = vmatpush1.bf16.msra.mxu0 0
      %7982 = vmatprep.subr.bf16.mxu0 0
      %7983 = vmatpush1.bf16.msra.mxu0 0
      %7984 = vmatprep.subr.bf16.mxu0 0
      %7985 = vmatpush1.bf16.msra.mxu0 0
      %7986 = vmatprep.subr.bf16.mxu0 0
      %7987 = vmatpush1.bf16.msra.mxu0 0
      %7988 = vmatprep.subr.bf16.mxu0 0
      %7989 = vmatpush1.bf16.msra.mxu0 0
      %7990 = vmatprep.subr.bf16.mxu0 0
      %7991 = vmatpush1.bf16.msra.mxu0 0
      %7992 = vmatprep.subr.bf16.mxu0 0
      %7993 = vmatpush1.bf16.msra.mxu0 0
      %7994 = vmatprep.subr.bf16.mxu0 0
      %7995 = vmatpush1.bf16.msra.mxu0 0
      %7996 = vmatprep.subr.bf16.mxu0 0
      %7997 = vmatpush1.bf16.msra.mxu0 0
      %7998 = vmatprep.mubr.bf16.mxu0 0
      %7999 = vmatmul.mubr.bf16.gmra.mrb[0].mxu0 %v7964
      %v8000 = vpop.f32.mrb[0].mxu0
      %v8001 = vadd.f32 0.0, %v8000
      %v8002 = vpop.f32.mrb[0].mxu0
      %v8003 = vadd.f32 0.0, %v8002
      %v8004 = vpop.f32.mrb[0].mxu0
      %v8005 = vpop.f32.mrb[0].mxu0
      %8006 = vdwg.mxu0
      %v8007 = vmax.f32 %v7959, %v8001
      %v8008 = vmax.f32 %v7960, %v8003
      %s8009 = scalar_lea.vmem %s9, 6
      %v8010 = vld [vmem:[%s8009] sm:$0x3]
      %v8012 = vsel %vm7861, %v8010, 0
      %8014 = vmatprep.subr.bf16.mxu0 %v7857
      %8015 = vmatpush1.bf16.msra.mxu0 %v7856
      %8016 = vmatprep.subr.bf16.mxu0 %v7870
      %8017 = vmatpush1.bf16.msra.mxu0 %v7867
      %8018 = vmatprep.subr.bf16.mxu0 0
      %8019 = vmatpush1.bf16.msra.mxu0 0
      %8020 = vmatprep.subr.bf16.mxu0 0
      %8021 = vmatpush1.bf16.msra.mxu0 0
      %8022 = vmatprep.subr.bf16.mxu0 0
      %8023 = vmatpush1.bf16.msra.mxu0 0
      %8024 = vmatprep.subr.bf16.mxu0 0
      %8025 = vmatpush1.bf16.msra.mxu0 0
      %8026 = vmatprep.subr.bf16.mxu0 0
      %8027 = vmatpush1.bf16.msra.mxu0 0
      %8028 = vmatprep.subr.bf16.mxu0 0
      %8029 = vmatpush1.bf16.msra.mxu0 0
      %8030 = vmatprep.subr.bf16.mxu0 0
      %8031 = vmatpush1.bf16.msra.mxu0 0
      %8032 = vmatprep.subr.bf16.mxu0 0
      %8033 = vmatpush1.bf16.msra.mxu0 0
      %8034 = vmatprep.subr.bf16.mxu0 0
      %8035 = vmatpush1.bf16.msra.mxu0 0
      %8036 = vmatprep.subr.bf16.mxu0 0
      %8037 = vmatpush1.bf16.msra.mxu0 0
      %8038 = vmatprep.subr.bf16.mxu0 0
      %8039 = vmatpush1.bf16.msra.mxu0 0
      %8040 = vmatprep.subr.bf16.mxu0 0
      %8041 = vmatpush1.bf16.msra.mxu0 0
      %8042 = vmatprep.subr.bf16.mxu0 0
      %8043 = vmatpush1.bf16.msra.mxu0 0
      %8044 = vmatprep.subr.bf16.mxu0 0
      %8045 = vmatpush1.bf16.msra.mxu0 0
      %8046 = vmatprep.mubr.bf16.mxu0 0
      %8047 = vmatmul.mubr.bf16.gmra.mrb[0].mxu0 %v8012
      %v8048 = vpop.f32.mrb[0].mxu0
      %v8049 = vadd.f32 0.0, %v8048
      %v8050 = vpop.f32.mrb[0].mxu0
      %v8051 = vadd.f32 0.0, %v8050
      %v8052 = vpop.f32.mrb[0].mxu0
      %v8053 = vpop.f32.mrb[0].mxu0
      %8054 = vdwg.mxu0
      %v8055 = vmax.f32 %v8007, %v8049
      %v8056 = vmax.f32 %v8008, %v8051
      %vm8057 = vcmask 1043456
      %v8058 = vsel %vm8057, %v8055, 0.0
      %v8059 = vrot.slane %v8058, 4
      %v8060 = vadd.f32 %v8058, %v8059
      %v8061 = vrot.slane %v8060, 2
      %v8062 = vadd.f32 %v8060, %v8061
      %v8063 = vrot.slane %v8062, 1
      %v8064 = vadd.f32 %v8062, %v8063
      %v8065 = vsel %vm8057, %v8056, 0.0
      %v8066 = vrot.slane %v8065, 4
      %v8067 = vadd.f32 %v8065, %v8066
      %v8068 = vrot.slane %v8067, 2
      %v8069 = vadd.f32 %v8067, %v8068
      %v8070 = vrot.slane %v8069, 1
      %v8071 = vadd.f32 %v8069, %v8070
      %v8072 = vmul.f32 %v8064, 0.25
      %v8073 = vmul.f32 %v8071, 0.25
      %v8074 = vld [vmem:[%s10] sm:$0x3]
      %v8076 = vlaneseq
      %v8077 = vshrl.u32 %v8076, 7
      %v8078 = vsub.s32 0, %v8077
      %v8079 = vrot.slane %v8074, %v8078
      %v8080 = vlaneseq
      %v8081 = vshrl.u32 %v8080, 7
      %v8082 = vsub.s32 1, %v8081
      %v8083 = vrot.slane %v8074, %v8082
      %v8086 = vmul.f32 %v8072, %v8079
      %v8087 = vmul.f32 %v8073, %v8083
      %v8088 = vsel %vm579, %v8086, 0.0
      %v8089 = vsel %vm579, %v8087, 0.0
      %v8090 = vadd.f32 %v8088, %v8089
      %8091 = vadd.xlane.f32.xlu0 %v8090
      %v8092 = vpop.xlane.xlu0 %8091
      %v8093 = vld [vmem:[#allocation4] sm:$0x1]
      %v8094 = vadd.f32 %v8092, %v8093
      %vm8095 = vcmask 0
      %8096 = vst.msk [vmem:[%s411] sm:$0x1] %vm8095, %v8094
      %p8097 = scmp.lt.s32.totalorder %s25, 1
      %s8098 = scalar_select %p8097, %s25, 1
      %s8099 = scalar_lea.vmem %s12, %s8098
      // Predicated region
      $region69: #{model_forward.1} parent=67 // pred_check
        %p8100 = pneg %p300
      $region70: #{model_forward.1} parent=67 // pred_check_branch
        %8102 = sbr.rel (%p8100) target = $region72
      $region71: #{model_forward.1} parent=67 // pred_region
        _
      $region72: #{model_forward.1} parent=67 // pred_fallthru
        _
    $region68: #{model_forward.1} parent=5 // pred_fallthru
      _
    %p8103 = scmp.le.s32.totalorder 2, %s20
    // Predicated region
    $region73: #{model_forward.1} parent=5 // pred_check
      %p8104 = pneg %p8103
    $region74: #{model_forward.1} parent=5 // pred_check_branch
      %8106 = sbr.rel (%p8104) target = $region76
    $region75: #{model_forward.1} parent=5 // pred_region
      %s8107 = ssub.s32 %s20, 2
      // Predicated region
      $region77: #{model_forward.1} parent=75 // pred_check
        %p8108 = pneg %p306
      $region78: #{model_forward.1} parent=75 // pred_check_branch
        %8110 = sbr.rel (%p8108) target = $region80
      $region79: #{model_forward.1} parent=75 // pred_region
        %p8111 = scmp.lt.s32.totalorder %s26, 1
        %s8112 = scalar_select %p8111, %s26, 1
        %s8113 = scalar_lea.vmem %s12, %s8112
      $region80: #{model_forward.1} parent=75 // pred_fallthru
        _
    $region76: #{model_forward.1} parent=5 // pred_fallthru
      _
  $region6: #{model_forward.1} parent=0 // loop_footer
    %s24 = sadd.s32 1, %s20
  $region7: #{model_forward.1} parent=0 // loop_footer_branch
    %19 = sbr.rel target = $region3
  $region8: #{model_forward.1} parent=0 // loop_exit
    _

</llo_original>
